<compile_context>
chip_gen: v7x
topology: tpu7x:2x2x1
jax: 0.10.0
libtpu: 0.0.40
codegen_flags: <defaults>
</compile_context>

<pallas_src>
import functools

import jax
import jax.numpy as jnp
from jax.experimental import pallas as pl
from jax.experimental.pallas import tpu as pltpu

# Model dimensions (fixed by the PyTorch module definition)
C_IN = 1824    # conv2d182 in_channels
C_MID = 512    # conv2d182 out_channels / conv2d183 in_channels
C_OUT = 3072   # conv2d183 out_channels
BN_EPS = 1e-05

C_IN_PAD = 1920          # next multiple of 128 above 1824 (aligned matmul-1 K)
M_PAD = 64               # rows 49 -> 64 (aligns f32 and bf16 sublane tiling)
N_SPLIT = 2              # megacore-parallel grid axis (2 TensorCores on v7x)
TN = C_OUT // N_SPLIT    # 1536 output channels per grid step


def fused_kernel(m_real, x_ref, scale_ref, w1_ref, gamma_ref, beta_ref,
                 w2_ref, o_ref):
    """One grid step = one C_OUT half.  matmul1 + BN are recomputed per step so the
    grid axis carries no state and can be megacore-parallel.

    x_ref:     (M_PAD, C_IN_PAD)  bf16  flattened, zero-padded NHWC input
    scale_ref: (1, C_IN_PAD)      f32   per-channel scale (x542)
    w1_ref:    (C_MID, C_IN_PAD)  bf16  conv2d182 weight (contracted as x @ W1.T)
    gamma_ref: (1, C_MID)         f32   batchnorm weight
    beta_ref:  (1, C_MID)         f32   batchnorm bias
    w2_ref:    (TN, C_MID)        bf16  conv2d183 weight half (contracted as hn @ W2.T)
    o_ref:     (M_PAD, TN)        f32   output half
    """
    # x543 = x537 * x542  (broadcast per-channel scale), bf16 operand for the MXU
    xs = (x_ref[...] * scale_ref[...]).astype(jnp.bfloat16)

    # x544 = conv2d182(x543): (M, Cin) @ (Cmid, Cin)^T -> (M, Cmid), f32 accumulation
    h = jax.lax.dot_general(
        xs, w1_ref[...],
        dimension_numbers=(((1,), (1,)), ((), ())),
        preferred_element_type=jnp.float32)

    # x545 = batchnorm2d108(x544), training mode -> batch statistics over the m_real
    # true rows (padding rows of x are all-zero so they vanish from both sums).
    inv_m = 1.0 / m_real
    mean = jnp.sum(h, axis=0, keepdims=True) * inv_m
    var = jnp.sum(h * h, axis=0, keepdims=True) * inv_m - mean * mean  # biased var
    inv_std = jax.lax.rsqrt(var + BN_EPS)
    a = inv_std * gamma_ref[...]
    b = beta_ref[...] - mean * a
    hn = (h * a + b).astype(jnp.bfloat16)      # single FMA-style pass

    # x546 = conv2d183(x545) for this C_OUT half: (M, Cmid) @ (TN, Cmid)^T
    o_ref[...] = jax.lax.dot_general(
        hn, w2_ref[...],
        dimension_numbers=(((1,), (1,)), ((), ())),
        preferred_element_type=jnp.float32)


def prepare_params(w1, gamma, beta, w2):
    """One-time weight preprocessing (amortized across forward calls):
    bf16 cast, zero-pad C_IN of w1, NO transposes (kernel contracts x @ W.T)."""
    w1_p = jnp.pad(w1.reshape(C_MID, C_IN).astype(jnp.bfloat16),
                   ((0, 0), (0, C_IN_PAD - C_IN)))
    w2_p = w2.reshape(C_OUT, C_MID).astype(jnp.bfloat16)
    gamma_r = gamma.reshape(1, C_MID).astype(jnp.float32)
    beta_r = beta.reshape(1, C_MID).astype(jnp.float32)
    return w1_p, gamma_r, beta_r, w2_p


def model_forward(x537, x542, w1_p, gamma_r, beta_r, w2_p):
    """x537: (N, C_IN, H, W), x542: (N, C_IN, 1, 1)  ->  (N, C_OUT, H, W)."""
    n, c_in, hh, ww = x537.shape
    assert c_in == C_IN and n == 1 and x542.shape == (1, C_IN, 1, 1)
    m = n * hh * ww                       # true row count (49)
    assert m <= M_PAD

    # NCHW -> (M, C_IN) bf16, then zero-pad rows (M -> M_PAD) and lanes
    # (C_IN -> C_IN_PAD).  Transpose + cast + pad fuse into one wrapper pass.
    x_mat = jnp.transpose(x537, (0, 2, 3, 1)).reshape(m, C_IN).astype(jnp.bfloat16)
    x_pad = jnp.pad(x_mat, ((0, M_PAD - m), (0, C_IN_PAD - C_IN)))
    scale_pad = jnp.pad(x542.reshape(1, C_IN).astype(jnp.float32),
                        ((0, 0), (0, C_IN_PAD - C_IN)))

    flops = N_SPLIT * 2 * M_PAD * C_IN_PAD * C_MID + 2 * M_PAD * C_MID * C_OUT
    bytes_accessed = (x_pad.size * 2 + scale_pad.size * 4 + w1_p.size * 2
                      + gamma_r.size * 4 + beta_r.size * 4 + w2_p.size * 2
                      + M_PAD * C_OUT * 4)

    out_mat = pl.pallas_call(
        functools.partial(fused_kernel, float(m)),
        out_shape=jax.ShapeDtypeStruct((M_PAD, C_OUT), jnp.float32),
        grid=(N_SPLIT,),
        in_specs=[
            pl.BlockSpec((M_PAD, C_IN_PAD), lambda i: (0, 0)),   # x (bf16)
            pl.BlockSpec((1, C_IN_PAD), lambda i: (0, 0)),       # scale
            pl.BlockSpec((C_MID, C_IN_PAD), lambda i: (0, 0)),   # w1
            pl.BlockSpec((1, C_MID), lambda i: (0, 0)),          # gamma
            pl.BlockSpec((1, C_MID), lambda i: (0, 0)),          # beta
            pl.BlockSpec((TN, C_MID), lambda i: (i, 0)),         # w2 half (streamed)
        ],
        out_specs=pl.BlockSpec((M_PAD, TN), lambda i: (0, i)),
        compiler_params=pltpu.CompilerParams(
            dimension_semantics=("parallel",)),
        cost_estimate=pl.CostEstimate(
            flops=flops, transcendentals=N_SPLIT * C_MID,
            bytes_accessed=bytes_accessed),
    )(x_pad, scale_pad, w1_p, gamma_r, beta_r, w2_p)

    # drop padded rows, (M, C_OUT) -> NCHW (module contract returns NCHW)
    return jnp.transpose(out_mat[:m].reshape(n, hh, ww, C_OUT), (0, 3, 1, 2))


def reference_forward(x537, x542, w1, gamma, beta, w2):
    """Plain-JAX f32 reference replicating the PyTorch forward (training-mode BN)."""
    x = x537 * x542
    y = jnp.einsum('nchw,oc->nohw', x, w1.reshape(C_MID, C_IN))
    mean = jnp.mean(y, axis=(0, 2, 3), keepdims=True)
    var = jnp.mean((y - mean) ** 2, axis=(0, 2, 3), keepdims=True)
    y = (y - mean) / jnp.sqrt(var + BN_EPS)
    y = y * gamma.reshape(1, C_MID, 1, 1) + beta.reshape(1, C_MID, 1, 1)
    return jnp.einsum('nchw,oc->nohw', y, w2.reshape(C_OUT, C_MID))


if __name__ == "__main__":
    key = jax.random.PRNGKey(0)
    k1, k2, k3, k4, k5, k6 = jax.random.split(key, 6)

    # Inputs (shapes fixed by the module's channel counts; spatial/batch as given)
    x537 = jax.random.normal(k1, (1, C_IN, 7, 7), dtype=jnp.float32)
    x542 = jax.random.normal(k2, (1, C_IN, 1, 1), dtype=jnp.float32)

    # Deterministic synthetic parameters
    w1 = jax.random.normal(k3, (C_MID, C_IN, 1, 1), dtype=jnp.float32) * 0.02
    w2 = jax.random.normal(k4, (C_OUT, C_MID, 1, 1), dtype=jnp.float32) * 0.02
    gamma = 1.0 + 0.1 * jax.random.normal(k5, (C_MID,), dtype=jnp.float32)
    beta = 0.1 * jax.random.normal(k6, (C_MID,), dtype=jnp.float32)

    # One-time weight preprocessing (outside the per-call hot path)
    params = prepare_params(w1, gamma, beta, w2)

    out = jax.jit(model_forward)(x537, x542, *params)
    out = jax.block_until_ready(out)

    ref = reference_forward(x537, x542, w1, gamma, beta, w2)
    assert out.shape == (1, C_OUT, 7, 7), out.shape
    # Tolerance loosened vs the f32 reference: activations AND weights are fed to
    # the MXU in bf16 (f32 accumulation) — a ~1e-3-level precision trade for ~2x
    # less HBM traffic on this memory-bound kernel.
    assert jnp.allclose(out, ref, atol=3e-2, rtol=3e-2), float(
        jnp.max(jnp.abs(out - ref)))

    print("KERNEL_OK")
</pallas_src>

<mosaic_0001>
module attributes {stable_mosaic.version = 11 : i64} {
  func.func @fused_kernel(%arg0: i32, %arg1: memref<64x1920xbf16, #tpu.memory_space<vmem>>, %arg2: memref<1x1920xf32, #tpu.memory_space<vmem>>, %arg3: memref<512x1920xbf16, #tpu.memory_space<vmem>>, %arg4: memref<1x512xf32, #tpu.memory_space<vmem>>, %arg5: memref<1x512xf32, #tpu.memory_space<vmem>>, %arg6: memref<1536x512xbf16, #tpu.memory_space<vmem>>, %arg7: memref<64x1536xf32, #tpu.memory_space<vmem>>) attributes {dimension_semantics = [#tpu.dimension_semantics<parallel>], iteration_bounds = array<i64: 2>, scalar_prefetch = 0 : i64, scratch_operands = 0 : i64, tpu.core_type = #tpu.core_type<tc>, window_params = [{pipeline_mode = #tpu.pipeline_mode<synchronous>, transform_indices = @transform_0, window_bounds = array<i64: 64, 1920>}, {pipeline_mode = #tpu.pipeline_mode<synchronous>, transform_indices = @transform_1, window_bounds = array<i64: 1, 1920>}, {pipeline_mode = #tpu.pipeline_mode<synchronous>, transform_indices = @transform_2, window_bounds = array<i64: 512, 1920>}, {pipeline_mode = #tpu.pipeline_mode<synchronous>, transform_indices = @transform_3, window_bounds = array<i64: 1, 512>}, {pipeline_mode = #tpu.pipeline_mode<synchronous>, transform_indices = @transform_4, window_bounds = array<i64: 1, 512>}, {transform_indices = @transform_5, window_bounds = array<i64: 1536, 512>}, {transform_indices = @transform_6, window_bounds = array<i64: 64, 1536>}]} {
    %c0 = arith.constant 0 : index
    %c0_0 = arith.constant 0 : index
    %0 = vector.load %arg1[%c0, %c0_0] : memref<64x1920xbf16, #tpu.memory_space<vmem>>, vector<64x1920xbf16>
    %c0_1 = arith.constant 0 : index
    %c0_2 = arith.constant 0 : index
    %1 = vector.load %arg2[%c0_1, %c0_2] : memref<1x1920xf32, #tpu.memory_space<vmem>>, vector<1x1920xf32>
    %2 = arith.extf %0 : vector<64x1920xbf16> to vector<64x1920xf32>
    %3 = vector.broadcast %1 : vector<1x1920xf32> to vector<64x1920xf32>
    %4 = arith.mulf %2, %3 : vector<64x1920xf32>
    %5 = arith.truncf %4 : vector<64x1920xf32> to vector<64x1920xbf16>
    %c0_3 = arith.constant 0 : index
    %c0_4 = arith.constant 0 : index
    %6 = vector.load %arg3[%c0_3, %c0_4] : memref<512x1920xbf16, #tpu.memory_space<vmem>>, vector<512x1920xbf16>
    %cst = arith.constant dense<0.000000e+00> : vector<64x512xf32>
    %7 = tpu.matmul %5, %6, %cst {dimension_numbers = #tpu.dot_dimension_numbers<[1], [1], [0], [0], [0, 0, 1, 0], [], []>} : vector<64x1920xbf16>, vector<512x1920xbf16>, vector<64x512xf32> -> vector<64x512xf32>
    %cst_5 = arith.constant dense<0.000000e+00> : vector<512xf32>
    %8 = vector.multi_reduction <add>, %7, %cst_5 [0] : vector<64x512xf32> to vector<512xf32>
    %9 = vector.shape_cast %8 : vector<512xf32> to vector<1x512xf32>
    %cst_6 = arith.constant 0.0204081628 : f32
    %10 = vector.broadcast %cst_6 : f32 to vector<1x512xf32>
    %11 = arith.mulf %9, %10 : vector<1x512xf32>
    %12 = arith.mulf %7, %7 : vector<64x512xf32>
    %cst_7 = arith.constant dense<0.000000e+00> : vector<512xf32>
    %13 = vector.multi_reduction <add>, %12, %cst_7 [0] : vector<64x512xf32> to vector<512xf32>
    %14 = vector.shape_cast %13 : vector<512xf32> to vector<1x512xf32>
    %cst_8 = arith.constant 0.0204081628 : f32
    %15 = vector.broadcast %cst_8 : f32 to vector<1x512xf32>
    %16 = arith.mulf %14, %15 : vector<1x512xf32>
    %17 = arith.mulf %11, %11 : vector<1x512xf32>
    %18 = arith.subf %16, %17 : vector<1x512xf32>
    %cst_9 = arith.constant 9.99999974E-6 : f32
    %19 = vector.broadcast %cst_9 : f32 to vector<1x512xf32>
    %20 = arith.addf %18, %19 : vector<1x512xf32>
    %21 = math.rsqrt %20 : vector<1x512xf32>
    %c0_10 = arith.constant 0 : index
    %c0_11 = arith.constant 0 : index
    %22 = vector.load %arg4[%c0_10, %c0_11] : memref<1x512xf32, #tpu.memory_space<vmem>>, vector<1x512xf32>
    %23 = arith.mulf %21, %22 : vector<1x512xf32>
    %c0_12 = arith.constant 0 : index
    %c0_13 = arith.constant 0 : index
    %24 = vector.load %arg5[%c0_12, %c0_13] : memref<1x512xf32, #tpu.memory_space<vmem>>, vector<1x512xf32>
    %25 = arith.mulf %11, %23 : vector<1x512xf32>
    %26 = arith.subf %24, %25 : vector<1x512xf32>
    %27 = vector.broadcast %23 : vector<1x512xf32> to vector<64x512xf32>
    %28 = arith.mulf %7, %27 : vector<64x512xf32>
    %29 = vector.broadcast %26 : vector<1x512xf32> to vector<64x512xf32>
    %30 = arith.addf %28, %29 : vector<64x512xf32>
    %31 = arith.truncf %30 : vector<64x512xf32> to vector<64x512xbf16>
    %c0_14 = arith.constant 0 : index
    %c0_15 = arith.constant 0 : index
    %32 = vector.load %arg6[%c0_14, %c0_15] : memref<1536x512xbf16, #tpu.memory_space<vmem>>, vector<1536x512xbf16>
    %cst_16 = arith.constant dense<0.000000e+00> : vector<64x1536xf32>
    %33 = tpu.matmul %31, %32, %cst_16 {dimension_numbers = #tpu.dot_dimension_numbers<[1], [1], [0], [0], [0, 0, 1, 0], [], []>} : vector<64x512xbf16>, vector<1536x512xbf16>, vector<64x1536xf32> -> vector<64x1536xf32>
    %c0_17 = arith.constant 0 : index
    %c0_18 = arith.constant 0 : index
    %34 = vector.load %arg7[%c0_17, %c0_18] : memref<64x1536xf32, #tpu.memory_space<vmem>>, vector<64x1536xf32>
    tpu.vector_store %arg7[%c0_17, %c0_18], %33 {strides = array<i32>} : memref<64x1536xf32, #tpu.memory_space<vmem>>, vector<64x1536xf32>,
    return
  }
  func.func @transform_0(%arg0: i32) -> (i32, i32) {
    %c0_i32 = arith.constant 0 : i32
    %c0_i32_0 = arith.constant 0 : i32
    %c0_i32_1 = arith.constant 0 : i32
    return %c0_i32, %c0_i32_0 : i32, i32
  }
  func.func @transform_1(%arg0: i32) -> (i32, i32) {
    %c0_i32 = arith.constant 0 : i32
    %c0_i32_0 = arith.constant 0 : i32
    %c0_i32_1 = arith.constant 0 : i32
    return %c0_i32, %c0_i32_0 : i32, i32
  }
  func.func @transform_2(%arg0: i32) -> (i32, i32) {
    %c0_i32 = arith.constant 0 : i32
    %c0_i32_0 = arith.constant 0 : i32
    %c0_i32_1 = arith.constant 0 : i32
    return %c0_i32, %c0_i32_0 : i32, i32
  }
  func.func @transform_3(%arg0: i32) -> (i32, i32) {
    %c0_i32 = arith.constant 0 : i32
    %c0_i32_0 = arith.constant 0 : i32
    %c0_i32_1 = arith.constant 0 : i32
    return %c0_i32, %c0_i32_0 : i32, i32
  }
  func.func @transform_4(%arg0: i32) -> (i32, i32) {
    %c0_i32 = arith.constant 0 : i32
    %c0_i32_0 = arith.constant 0 : i32
    %c0_i32_1 = arith.constant 0 : i32
    return %c0_i32, %c0_i32_0 : i32, i32
  }
  func.func @transform_5(%arg0: i32) -> (i32, i32) {
    %c0_i32 = arith.constant 0 : i32
    %c0_i32_0 = arith.constant 0 : i32
    return %arg0, %c0_i32 : i32, i32
  }
  func.func @transform_6(%arg0: i32) -> (i32, i32) {
    %c0_i32 = arith.constant 0 : i32
    %c0_i32_0 = arith.constant 0 : i32
    return %c0_i32, %arg0 : i32, i32
  }
}

</mosaic_0001>

<llo_original>
// kernel: model_forward.1
$region0: #{model_forward.1}
  #allocation0 [shape = 'u32[]', space=smem, size = 0x4, offset = 0x4, fixed_abs, tag = 'smem constant byte address 0x4 - core index']
  #allocation1 [shape = 'u32[144,128]{1,0:T(1,128)}', space=vmem, size = 0x12000, scoped, tag = 'internal scratch']
  %s0 = inlined_call_operand.vmem [shape: bf16[64,1920], index: 0, kind: input, shape index: {}]
  %s1 = inlined_call_operand.vmem [shape: f32[1,1920], index: 1, kind: input, shape index: {}]
  %s2 = inlined_call_operand.hbm [shape: bf16[512,1920], index: 2, kind: input, shape index: {}]
  %s3 = inlined_call_operand.hbm [shape: f32[1,512], index: 3, kind: input, shape index: {}]
  %s4 = inlined_call_operand.hbm [shape: f32[1,512], index: 4, kind: input, shape index: {}]
  %s5 = inlined_call_operand.hbm [shape: bf16[3072,512], index: 5, kind: input, shape index: {}]
  %s6 = inlined_call_operand.vmem [shape: f32[64,3072], index: 6, kind: output, shape index: {}]
  %s7 = sld [smem:[#allocation0]]
  $region92: #{model_forward.1} parent=0
    _
  %s9 = ssub.s32 1, %s7
  %s10 = scalar_select 0, %s9, %s7
  $region1: #{model_forward.1} parent=0
    #allocation2 [shape = 'u8[1966080]{0}', space=vmem, size = 0x1e0000, scoped, tag = 'input window, operand 2, single buffered']
    #allocation3 [shape = 's32[2]{0}', space=sflag, size = 0x8, scoped, tag = 'scoped memory for model_forward.1']
    #allocation4 [shape = 'u8[2048]{0}', space=vmem, size = 0x800, scoped, tag = 'input window, operand 3, single buffered']
    #allocation5 [shape = 's32[1]{0}', space=sflag, size = 0x4, scoped, tag = 'scoped memory for model_forward.1']
    #allocation6 [shape = 'u8[2048]{0}', space=vmem, size = 0x800, scoped, tag = 'input window, operand 4, single buffered']
    #allocation7 [shape = 'u8[3145728]{0}', space=vmem, size = 0x300000, scoped, tag = 'input window, operand 5']
    #allocation8 [shape = 's32[2]{0}', space=sflag, size = 0x8, scoped, tag = 'scoped memory for model_forward.1']
    #allocation9 [shape = 'u8[786432]{0}', space=vmem, size = 0xc0000, scoped, tag = 'output window, operand 0']
    %11 = vsyncpa [#allocation3], 0
    %12 = vsyncpa [#allocation5], 0
    %13 = vsyncpa [#allocation8], 0
    %s14 = scalar_lea.sflag [#allocation8], 1
    %15 = vsyncpa %s14, 0
    loop: start=0, step=1, limit=4
    $region2: #{model_forward.1} parent=1 // loop_pre_header
      _
    $region3: #{model_forward.1} parent=1 // loop_header
      %s17 = sphi 0, %s21
      %p18 = scmp.ge.s32.totalorder %s17, 4
      %s25 = sphi 0, %s25
      %s27 = sphi 0, %s25
      %s28 = sphi 0, %s27
      %s42 = sphi 0, %s28
      %s46 = sphi 0, %s46
      %s48 = sphi 0, %s46
      %s49 = sphi 0, %s48
      %s63 = sphi 0, %s49
      %s67 = sphi 0, %s67
      %s69 = sphi 0, %s67
      %s70 = sphi 0, %s69
      %s84 = sphi 0, %s70
      %s88 = sphi 0, %s88
      %s90 = sphi 0, %s88
      %s91 = sphi 0, %s90
      %s105 = sphi 0, %s91
      %s109 = sphi 0, %s109
      %s111 = sphi 0, %s109
      %s112 = sphi 0, %s111
      %s126 = sphi 0, %s112
      %s132 = sphi 0, %s134
      %s135 = sphi 0, %s132
      %s136 = sphi 0, %s135
      %s152 = sphi 0, %s136
      %s158 = sphi 0, %s160
      %s161 = sphi 0, %s158
      %s162 = sphi 0, %s161
      %s178 = sphi 0, %s162
    $region4: #{model_forward.1} parent=1 // loop_header_branch
      %20 = sbr.rel (%p18) target = $region8
    $region5: #{model_forward.1} parent=1 // loop_body
      %s22 = ssub.s32 %s17, 1
      %s23 = ssub.s32 %s17, 2
      %s24 = sadd.s32 %s17, 1
      %s26 = sadd.s32 %s25, 1
      %p29 = scmp.eq.s32.totalorder %s17, 1
      %p30 = scmp.ne.s32.totalorder %s25, %s27
      %p31 = scmp.eq.s32.totalorder %s17, 0
      %p32 = por %p30, %p31
      %p33 = scmp.ne.s32.totalorder %s25, %s27
      %p34 = scmp.eq.s32.totalorder %s22, 1
      %p35 = por %p33, %p34
      %p36 = scmp.ne.s32.totalorder %s27, %s28
      %p37 = scmp.eq.s32.totalorder %s22, 0
      %p38 = por %p36, %p37
      %p39 = scmp.ne.s32.totalorder %s27, %s28
      %p40 = scmp.eq.s32.totalorder %s23, 1
      %p41 = por %p39, %p40
      %p43 = scmp.ne.s32.totalorder %s28, %s42
      %p44 = scmp.eq.s32.totalorder %s23, 0
      %p45 = por %p43, %p44
      %s47 = sadd.s32 %s46, 1
      %p50 = scmp.eq.s32.totalorder %s17, 1
      %p51 = scmp.ne.s32.totalorder %s46, %s48
      %p52 = scmp.eq.s32.totalorder %s17, 0
      %p53 = por %p51, %p52
      %p54 = scmp.ne.s32.totalorder %s46, %s48
      %p55 = scmp.eq.s32.totalorder %s22, 1
      %p56 = por %p54, %p55
      %p57 = scmp.ne.s32.totalorder %s48, %s49
      %p58 = scmp.eq.s32.totalorder %s22, 0
      %p59 = por %p57, %p58
      %p60 = scmp.ne.s32.totalorder %s48, %s49
      %p61 = scmp.eq.s32.totalorder %s23, 1
      %p62 = por %p60, %p61
      %p64 = scmp.ne.s32.totalorder %s49, %s63
      %p65 = scmp.eq.s32.totalorder %s23, 0
      %p66 = por %p64, %p65
      %s68 = sadd.s32 %s67, 1
      %p71 = scmp.eq.s32.totalorder %s17, 1
      %p72 = scmp.ne.s32.totalorder %s67, %s69
      %p73 = scmp.eq.s32.totalorder %s17, 0
      %p74 = por %p72, %p73
      %p75 = scmp.ne.s32.totalorder %s67, %s69
      %p76 = scmp.eq.s32.totalorder %s22, 1
      %p77 = por %p75, %p76
      %p78 = scmp.ne.s32.totalorder %s69, %s70
      %p79 = scmp.eq.s32.totalorder %s22, 0
      %p80 = por %p78, %p79
      %p81 = scmp.ne.s32.totalorder %s69, %s70
      %p82 = scmp.eq.s32.totalorder %s23, 1
      %p83 = por %p81, %p82
      %p85 = scmp.ne.s32.totalorder %s70, %s84
      %p86 = scmp.eq.s32.totalorder %s23, 0
      %p87 = por %p85, %p86
      %s89 = sadd.s32 %s88, 1
      %p92 = scmp.eq.s32.totalorder %s17, 1
      %p93 = scmp.ne.s32.totalorder %s88, %s90
      %p94 = scmp.eq.s32.totalorder %s17, 0
      %p95 = por %p93, %p94
      %p96 = scmp.ne.s32.totalorder %s88, %s90
      %p97 = scmp.eq.s32.totalorder %s22, 1
      %p98 = por %p96, %p97
      %p99 = scmp.ne.s32.totalorder %s90, %s91
      %p100 = scmp.eq.s32.totalorder %s22, 0
      %p101 = por %p99, %p100
      %p102 = scmp.ne.s32.totalorder %s90, %s91
      %p103 = scmp.eq.s32.totalorder %s23, 1
      %p104 = por %p102, %p103
      %p106 = scmp.ne.s32.totalorder %s91, %s105
      %p107 = scmp.eq.s32.totalorder %s23, 0
      %p108 = por %p106, %p107
      %s110 = sadd.s32 %s109, 1
      %p113 = scmp.eq.s32.totalorder %s17, 1
      %p114 = scmp.ne.s32.totalorder %s109, %s111
      %p115 = scmp.eq.s32.totalorder %s17, 0
      %p116 = por %p114, %p115
      %p117 = scmp.ne.s32.totalorder %s109, %s111
      %p118 = scmp.eq.s32.totalorder %s22, 1
      %p119 = por %p117, %p118
      %p120 = scmp.ne.s32.totalorder %s111, %s112
      %p121 = scmp.eq.s32.totalorder %s22, 0
      %p122 = por %p120, %p121
      %p123 = scmp.ne.s32.totalorder %s111, %s112
      %p124 = scmp.eq.s32.totalorder %s23, 1
      %p125 = por %p123, %p124
      %p127 = scmp.ne.s32.totalorder %s112, %s126
      %p128 = scmp.eq.s32.totalorder %s23, 0
      %p129 = por %p127, %p128
      %s130 = ssub.s32 %s17, %s24
      %p131 = scmp.eq.s32.totalorder %s130, 0
      %s133 = sadd.s32 %s132, 1
      %s134 = scalar_select %p131, %s132, %s133
      %p137 = pneg %p131
      %p138 = scmp.eq.s32.totalorder %s17, 1
      %p139 = por %p137, %p138
      %p140 = scmp.ne.s32.totalorder %s132, %s135
      %p141 = scmp.eq.s32.totalorder %s17, 0
      %p142 = por %p140, %p141
      %p143 = scmp.ne.s32.totalorder %s132, %s135
      %p144 = scmp.eq.s32.totalorder %s22, 1
      %p145 = por %p143, %p144
      %p146 = scmp.ne.s32.totalorder %s135, %s136
      %p147 = scmp.eq.s32.totalorder %s22, 0
      %p148 = por %p146, %p147
      %p149 = scmp.ne.s32.totalorder %s135, %s136
      %p150 = scmp.eq.s32.totalorder %s23, 1
      %p151 = por %p149, %p150
      %p153 = scmp.ne.s32.totalorder %s136, %s152
      %p154 = scmp.eq.s32.totalorder %s23, 0
      %p155 = por %p153, %p154
      %s156 = ssub.s32 %s17, %s24
      %p157 = scmp.eq.s32.totalorder %s156, 0
      %s159 = sadd.s32 %s158, 1
      %s160 = scalar_select %p157, %s158, %s159
      %p163 = pneg %p157
      %p164 = scmp.eq.s32.totalorder %s17, 1
      %p165 = por %p163, %p164
      %p166 = scmp.ne.s32.totalorder %s158, %s161
      %p167 = scmp.eq.s32.totalorder %s17, 0
      %p168 = por %p166, %p167
      %p169 = scmp.ne.s32.totalorder %s158, %s161
      %p170 = scmp.eq.s32.totalorder %s22, 1
      %p171 = por %p169, %p170
      %p172 = scmp.ne.s32.totalorder %s161, %s162
      %p173 = scmp.eq.s32.totalorder %s22, 0
      %p174 = por %p172, %p173
      %p175 = scmp.ne.s32.totalorder %s161, %s162
      %p176 = scmp.eq.s32.totalorder %s23, 1
      %p177 = por %p175, %p176
      %p179 = scmp.ne.s32.totalorder %s162, %s178
      %p180 = scmp.eq.s32.totalorder %s23, 0
      %p181 = por %p179, %p180
      %p182 = scmp.le.s32.totalorder 1, %s17
      %p183 = scmp.lt.s32.totalorder %s17, 3
      %p184 = pnand %p182, %p183
      %p185 = pneg %p184
      // Predicated region
      $region9: #{model_forward.1} parent=5 // pred_check
        _
      $region10: #{model_forward.1} parent=5 // pred_check_branch
        %187 = sbr.rel (%p184) target = $region12
      $region11: #{model_forward.1} parent=5 // pred_region
        %s188 = ssub.s32 %s17, 1
        // Predicated region
        $region13: #{model_forward.1} parent=11 // pred_check
          %p189 = pneg %p38
        $region14: #{model_forward.1} parent=11 // pred_check_branch
          %191 = sbr.rel (%p189) target = $region16
        $region15: #{model_forward.1} parent=11 // pred_region
          _
        $region16: #{model_forward.1} parent=11 // pred_fallthru
          _
        // Predicated region
        $region17: #{model_forward.1} parent=11 // pred_check
          %p192 = pneg %p59
        $region18: #{model_forward.1} parent=11 // pred_check_branch
          %194 = sbr.rel (%p192) target = $region20
        $region19: #{model_forward.1} parent=11 // pred_region
          _
        $region20: #{model_forward.1} parent=11 // pred_fallthru
          _
        // Predicated region
        $region21: #{model_forward.1} parent=11 // pred_check
          %p195 = pneg %p80
        $region22: #{model_forward.1} parent=11 // pred_check_branch
          %197 = sbr.rel (%p195) target = $region24
        $region23: #{model_forward.1} parent=11 // pred_region
          %s199 = ssub.s32 61440, 61440
          %200 = vsyncadd [#allocation3], %s199
          %s201 = sshll.u32 [#allocation2], 4
          %s202 = int_to_ptr.vmem [resolvable:$true] %s201
          %207 = dma.hbm_to_vmem [thread:$0]  %s2, 61440, %s202, [#allocation3], 960, 960, 60
        $region24: #{model_forward.1} parent=11 // pred_fallthru
          _
        // Predicated region
        $region25: #{model_forward.1} parent=11 // pred_check
          %p208 = pneg %p101
        $region26: #{model_forward.1} parent=11 // pred_check_branch
          %210 = sbr.rel (%p208) target = $region28
        $region27: #{model_forward.1} parent=11 // pred_region
          %s212 = ssub.s32 64, 64
          %213 = vsyncadd [#allocation5], %s212
          %s215 = sshll.u32 [#allocation4], 4
          %s216 = int_to_ptr.vmem [resolvable:$true] %s215
          %218 = dma.hbm_to_vmem [thread:$0]  %s3, 64, %s216, [#allocation5]
        $region28: #{model_forward.1} parent=11 // pred_fallthru
          _
        // Predicated region
        $region29: #{model_forward.1} parent=11 // pred_check
          %p219 = pneg %p122
        $region30: #{model_forward.1} parent=11 // pred_check_branch
          %221 = sbr.rel (%p219) target = $region32
        $region31: #{model_forward.1} parent=11 // pred_region
          %s223 = ssub.s32 64, 64
          %224 = vsyncadd [#allocation5], %s223
          %s226 = sshll.u32 [#allocation6], 4
          %s227 = int_to_ptr.vmem [resolvable:$true] %s226
          %229 = dma.hbm_to_vmem [thread:$0]  %s4, 64, %s227, [#allocation5]
        $region32: #{model_forward.1} parent=11 // pred_fallthru
          _
      $region12: #{model_forward.1} parent=5 // pred_fallthru
        _
      %p230 = scmp.lt.s32.totalorder %s17, 2
      // Predicated region
      $region33: #{model_forward.1} parent=5 // pred_check
        %p231 = pneg %p230
      $region34: #{model_forward.1} parent=5 // pred_check_branch
        %233 = sbr.rel (%p231) target = $region36
      $region35: #{model_forward.1} parent=5 // pred_region
        // Predicated region
        $region37: #{model_forward.1} parent=35 // pred_check
          %p234 = pneg %p142
        $region38: #{model_forward.1} parent=35 // pred_check_branch
          %236 = sbr.rel (%p234) target = $region40
        $region39: #{model_forward.1} parent=35 // pred_region
          %s237 = sand.u32 %s132, 1
          %s238 = scalar_lea.sflag [#allocation8], %s237
          %s239 = sand.u32 %s132, 1
          %s240 = smul.addr %s239, 3072
          %s241 = scalar_lea.vmem [#allocation7], %s240
          %s242 = smul.u32 192, %s17
          %s244 = ssub.s32 49152, 49152
          %245 = vsyncadd %s238, %s244
          %s246 = smul.addr %s242, 4
          %s247 = smul.addr %s246, 64
          %s248 = scalar_lea.hbm %s5, %s247
          %s249 = sshll.u32 %s241, 4
          %s250 = int_to_ptr.vmem [resolvable:$true] %s249
          %255 = dma.hbm_to_vmem [thread:$0]  %s248, 49152, %s250, %s238, 256, 256, 16
        $region40: #{model_forward.1} parent=35 // pred_fallthru
          _
      $region36: #{model_forward.1} parent=5 // pred_fallthru
        _
      %p256 = scmp.le.s32.totalorder 1, %s17
      %p257 = scmp.lt.s32.totalorder %s17, 3
      %p258 = pnand %p256, %p257
      %p259 = pneg %p258
      // Predicated region
      $region41: #{model_forward.1} parent=5 // pred_check
        _
      $region42: #{model_forward.1} parent=5 // pred_check_branch
        %261 = sbr.rel (%p258) target = $region44
      $region43: #{model_forward.1} parent=5 // pred_region
        %s262 = ssub.s32 %s17, 1
        // Predicated region
        $region45: #{model_forward.1} parent=43 // pred_check
          %p263 = pneg %p80
        $region46: #{model_forward.1} parent=43 // pred_check_branch
          %265 = sbr.rel (%p263) target = $region48
        $region47: #{model_forward.1} parent=43 // pred_region
          %266 = dma.done [#allocation3], 61440
        $region48: #{model_forward.1} parent=43 // pred_fallthru
          _
        // Predicated region
        $region49: #{model_forward.1} parent=43 // pred_check
          %p267 = pneg %p101
        $region50: #{model_forward.1} parent=43 // pred_check_branch
          %269 = sbr.rel (%p267) target = $region52
        $region51: #{model_forward.1} parent=43 // pred_region
          %270 = dma.done [#allocation5], 64
        $region52: #{model_forward.1} parent=43 // pred_fallthru
          _
        // Predicated region
        $region53: #{model_forward.1} parent=43 // pred_check
          %p271 = pneg %p122
        $region54: #{model_forward.1} parent=43 // pred_check_branch
          %273 = sbr.rel (%p271) target = $region56
        $region55: #{model_forward.1} parent=43 // pred_region
          %274 = dma.done [#allocation5], 64
        $region56: #{model_forward.1} parent=43 // pred_fallthru
          _
        %s275 = sand.u32 %s135, 1
        %s276 = scalar_lea.sflag [#allocation8], %s275
        %s277 = sand.u32 %s135, 1
        %s278 = smul.addr %s277, 3072
        %s279 = scalar_lea.vmem [#allocation7], %s278
        // Predicated region
        $region57: #{model_forward.1} parent=43 // pred_check
          %p280 = pneg %p148
        $region58: #{model_forward.1} parent=43 // pred_check_branch
          %282 = sbr.rel (%p280) target = $region60
        $region59: #{model_forward.1} parent=43 // pred_region
          %283 = dma.done %s276, 49152
        $region60: #{model_forward.1} parent=43 // pred_fallthru
          _
        %p284 = pneg %p38
        %p285 = pneg %p35
        %p286 = pneg %p59
        %p287 = pneg %p56
        %p288 = pneg %p80
        %p289 = pneg %p77
        %p290 = pneg %p101
        %p291 = pneg %p98
        %p292 = pneg %p122
        %p293 = pneg %p119
        %s294 = sand.u32 %s135, 1
        %s295 = scalar_lea.sflag [#allocation8], %s294
        %s296 = sand.u32 %s135, 1
        %s297 = smul.addr %s296, 3072
        %s298 = scalar_lea.vmem [#allocation7], %s297
        %p299 = pneg %p148
        %p300 = pneg %p145
        %p301 = pneg %p174
        %p302 = pneg %p171
        %s303 = sand.u32 %s161, 1
        %s304 = sand.u32 %s161, 1
        %s305 = smul.addr %s304, 768
        %s306 = scalar_lea.vmem [#allocation9], %s305
        %s307 = smul.u32 192, %s22
        %s308 = smul.u32 12, %s22
        %v310 = vld [vmem:[%s0] sm:$0xff]
        %v311 = vld [vmem:[%s0 + $0x8] sm:$0xff]
        %v312 = vld [vmem:[%s0 + $0x10] sm:$0xff]
        %v313 = vld [vmem:[%s0 + $0x18] sm:$0xff]
        %v314 = vld [vmem:[%s0 + $0x20] sm:$0xff]
        %v315 = vld [vmem:[%s0 + $0x28] sm:$0xff]
        %v316 = vld [vmem:[%s0 + $0x30] sm:$0xff]
        %v317 = vld [vmem:[%s0 + $0x38] sm:$0xf]
        %v318 = vld [vmem:[%s0 + $0x3c] sm:$0xff]
        %v319 = vld [vmem:[%s0 + $0x44] sm:$0xff]
        %v320 = vld [vmem:[%s0 + $0x4c] sm:$0xff]
        %v321 = vld [vmem:[%s0 + $0x54] sm:$0xff]
        %v322 = vld [vmem:[%s0 + $0x5c] sm:$0xff]
        %v323 = vld [vmem:[%s0 + $0x64] sm:$0xff]
        %v324 = vld [vmem:[%s0 + $0x6c] sm:$0xff]
        %v325 = vld [vmem:[%s0 + $0x74] sm:$0xf]
        %v326 = vld [vmem:[%s0 + $0x78] sm:$0xff]
        %v327 = vld [vmem:[%s0 + $0x80] sm:$0xff]
        %v328 = vld [vmem:[%s0 + $0x88] sm:$0xff]
        %v329 = vld [vmem:[%s0 + $0x90] sm:$0xff]
        %v330 = vld [vmem:[%s0 + $0x98] sm:$0xff]
        %v331 = vld [vmem:[%s0 + $0xa0] sm:$0xff]
        %v332 = vld [vmem:[%s0 + $0xa8] sm:$0xff]
        %v333 = vld [vmem:[%s0 + $0xb0] sm:$0xf]
        %v334 = vld [vmem:[%s0 + $0xb4] sm:$0xff]
        %v335 = vld [vmem:[%s0 + $0xbc] sm:$0xff]
        %v336 = vld [vmem:[%s0 + $0xc4] sm:$0xff]
        %v337 = vld [vmem:[%s0 + $0xcc] sm:$0xff]
        %v338 = vld [vmem:[%s0 + $0xd4] sm:$0xff]
        %v339 = vld [vmem:[%s0 + $0xdc] sm:$0xff]
        %v340 = vld [vmem:[%s0 + $0xe4] sm:$0xff]
        %v341 = vld [vmem:[%s0 + $0xec] sm:$0xf]
        %v342 = vld [vmem:[%s0 + $0xf0] sm:$0xff]
        %v343 = vld [vmem:[%s0 + $0xf8] sm:$0xff]
        %v344 = vld [vmem:[%s0 + $0x100] sm:$0xff]
        %v345 = vld [vmem:[%s0 + $0x108] sm:$0xff]
        %v346 = vld [vmem:[%s0 + $0x110] sm:$0xff]
        %v347 = vld [vmem:[%s0 + $0x118] sm:$0xff]
        %v348 = vld [vmem:[%s0 + $0x120] sm:$0xff]
        %v349 = vld [vmem:[%s0 + $0x128] sm:$0xf]
        %v350 = vld [vmem:[%s0 + $0x12c] sm:$0xff]
        %v351 = vld [vmem:[%s0 + $0x134] sm:$0xff]
        %v352 = vld [vmem:[%s0 + $0x13c] sm:$0xff]
        %v353 = vld [vmem:[%s0 + $0x144] sm:$0xff]
        %v354 = vld [vmem:[%s0 + $0x14c] sm:$0xff]
        %v355 = vld [vmem:[%s0 + $0x154] sm:$0xff]
        %v356 = vld [vmem:[%s0 + $0x15c] sm:$0xff]
        %v357 = vld [vmem:[%s0 + $0x164] sm:$0xf]
        %v358 = vld [vmem:[%s0 + $0x168] sm:$0xff]
        %v359 = vld [vmem:[%s0 + $0x170] sm:$0xff]
        %v360 = vld [vmem:[%s0 + $0x178] sm:$0xff]
        %v361 = vld [vmem:[%s0 + $0x180] sm:$0xff]
        %v362 = vld [vmem:[%s0 + $0x188] sm:$0xff]
        %v363 = vld [vmem:[%s0 + $0x190] sm:$0xff]
        %v364 = vld [vmem:[%s0 + $0x198] sm:$0xff]
        %v365 = vld [vmem:[%s0 + $0x1a0] sm:$0xf]
        %v366 = vld [vmem:[%s0 + $0x1a4] sm:$0xff]
        %v367 = vld [vmem:[%s0 + $0x1ac] sm:$0xff]
        %v368 = vld [vmem:[%s0 + $0x1b4] sm:$0xff]
        %v369 = vld [vmem:[%s0 + $0x1bc] sm:$0xff]
        %v370 = vld [vmem:[%s0 + $0x1c4] sm:$0xff]
        %v371 = vld [vmem:[%s0 + $0x1cc] sm:$0xff]
        %v372 = vld [vmem:[%s0 + $0x1d4] sm:$0xff]
        %v373 = vld [vmem:[%s0 + $0x1dc] sm:$0xf]
        %v374 = vld [vmem:[%s1] sm:$0xff]
        %v375 = vld [vmem:[%s1 + $0x8] sm:$0xff]
        %v376 = vunpack.c.l.bf16 %v310
        %v377 = vunpack.c.h.bf16 %v310
        %v378 = vunpack.c.l.bf16 %v311
        %v379 = vunpack.c.h.bf16 %v311
        %v380 = vunpack.c.l.bf16 %v312
        %v381 = vunpack.c.h.bf16 %v312
        %v382 = vunpack.c.l.bf16 %v313
        %v383 = vunpack.c.h.bf16 %v313
        %v384 = vunpack.c.l.bf16 %v314
        %v385 = vunpack.c.h.bf16 %v314
        %v386 = vunpack.c.l.bf16 %v315
        %v387 = vunpack.c.h.bf16 %v315
        %v388 = vunpack.c.l.bf16 %v316
        %v389 = vunpack.c.h.bf16 %v316
        %v390 = vunpack.c.l.bf16 %v317
        %v391 = vunpack.c.l.bf16 %v318
        %v392 = vunpack.c.h.bf16 %v318
        %v393 = vunpack.c.l.bf16 %v319
        %v394 = vunpack.c.h.bf16 %v319
        %v395 = vunpack.c.l.bf16 %v320
        %v396 = vunpack.c.h.bf16 %v320
        %v397 = vunpack.c.l.bf16 %v321
        %v398 = vunpack.c.h.bf16 %v321
        %v399 = vunpack.c.l.bf16 %v322
        %v400 = vunpack.c.h.bf16 %v322
        %v401 = vunpack.c.l.bf16 %v323
        %v402 = vunpack.c.h.bf16 %v323
        %v403 = vunpack.c.l.bf16 %v324
        %v404 = vunpack.c.h.bf16 %v324
        %v405 = vunpack.c.l.bf16 %v325
        %v406 = vunpack.c.l.bf16 %v326
        %v407 = vunpack.c.h.bf16 %v326
        %v408 = vunpack.c.l.bf16 %v327
        %v409 = vunpack.c.h.bf16 %v327
        %v410 = vunpack.c.l.bf16 %v328
        %v411 = vunpack.c.h.bf16 %v328
        %v412 = vunpack.c.l.bf16 %v329
        %v413 = vunpack.c.h.bf16 %v329
        %v414 = vunpack.c.l.bf16 %v330
        %v415 = vunpack.c.h.bf16 %v330
        %v416 = vunpack.c.l.bf16 %v331
        %v417 = vunpack.c.h.bf16 %v331
        %v418 = vunpack.c.l.bf16 %v332
        %v419 = vunpack.c.h.bf16 %v332
        %v420 = vunpack.c.l.bf16 %v333
        %v421 = vunpack.c.l.bf16 %v334
        %v422 = vunpack.c.h.bf16 %v334
        %v423 = vunpack.c.l.bf16 %v335
        %v424 = vunpack.c.h.bf16 %v335
        %v425 = vunpack.c.l.bf16 %v336
        %v426 = vunpack.c.h.bf16 %v336
        %v427 = vunpack.c.l.bf16 %v337
        %v428 = vunpack.c.h.bf16 %v337
        %v429 = vunpack.c.l.bf16 %v338
        %v430 = vunpack.c.h.bf16 %v338
        %v431 = vunpack.c.l.bf16 %v339
        %v432 = vunpack.c.h.bf16 %v339
        %v433 = vunpack.c.l.bf16 %v340
        %v434 = vunpack.c.h.bf16 %v340
        %v435 = vunpack.c.l.bf16 %v341
        %v436 = vunpack.c.l.bf16 %v342
        %v437 = vunpack.c.h.bf16 %v342
        %v438 = vunpack.c.l.bf16 %v343
        %v439 = vunpack.c.h.bf16 %v343
        %v440 = vunpack.c.l.bf16 %v344
        %v441 = vunpack.c.h.bf16 %v344
        %v442 = vunpack.c.l.bf16 %v345
        %v443 = vunpack.c.h.bf16 %v345
        %v444 = vunpack.c.l.bf16 %v346
        %v445 = vunpack.c.h.bf16 %v346
        %v446 = vunpack.c.l.bf16 %v347
        %v447 = vunpack.c.h.bf16 %v347
        %v448 = vunpack.c.l.bf16 %v348
        %v449 = vunpack.c.h.bf16 %v348
        %v450 = vunpack.c.l.bf16 %v349
        %v451 = vunpack.c.l.bf16 %v350
        %v452 = vunpack.c.h.bf16 %v350
        %v453 = vunpack.c.l.bf16 %v351
        %v454 = vunpack.c.h.bf16 %v351
        %v455 = vunpack.c.l.bf16 %v352
        %v456 = vunpack.c.h.bf16 %v352
        %v457 = vunpack.c.l.bf16 %v353
        %v458 = vunpack.c.h.bf16 %v353
        %v459 = vunpack.c.l.bf16 %v354
        %v460 = vunpack.c.h.bf16 %v354
        %v461 = vunpack.c.l.bf16 %v355
        %v462 = vunpack.c.h.bf16 %v355
        %v463 = vunpack.c.l.bf16 %v356
        %v464 = vunpack.c.h.bf16 %v356
        %v465 = vunpack.c.l.bf16 %v357
        %v466 = vunpack.c.l.bf16 %v358
        %v467 = vunpack.c.h.bf16 %v358
        %v468 = vunpack.c.l.bf16 %v359
        %v469 = vunpack.c.h.bf16 %v359
        %v470 = vunpack.c.l.bf16 %v360
        %v471 = vunpack.c.h.bf16 %v360
        %v472 = vunpack.c.l.bf16 %v361
        %v473 = vunpack.c.h.bf16 %v361
        %v474 = vunpack.c.l.bf16 %v362
        %v475 = vunpack.c.h.bf16 %v362
        %v476 = vunpack.c.l.bf16 %v363
        %v477 = vunpack.c.h.bf16 %v363
        %v478 = vunpack.c.l.bf16 %v364
        %v479 = vunpack.c.h.bf16 %v364
        %v480 = vunpack.c.l.bf16 %v365
        %v481 = vunpack.c.l.bf16 %v366
        %v482 = vunpack.c.h.bf16 %v366
        %v483 = vunpack.c.l.bf16 %v367
        %v484 = vunpack.c.h.bf16 %v367
        %v485 = vunpack.c.l.bf16 %v368
        %v486 = vunpack.c.h.bf16 %v368
        %v487 = vunpack.c.l.bf16 %v369
        %v488 = vunpack.c.h.bf16 %v369
        %v489 = vunpack.c.l.bf16 %v370
        %v490 = vunpack.c.h.bf16 %v370
        %v491 = vunpack.c.l.bf16 %v371
        %v492 = vunpack.c.h.bf16 %v371
        %v493 = vunpack.c.l.bf16 %v372
        %v494 = vunpack.c.h.bf16 %v372
        %v495 = vunpack.c.l.bf16 %v373
        %v498 = vlaneseq
        %v499 = vshrl.u32 %v498, 7
        %v500 = vsub.s32 0, %v499
        %v501 = vrot.slane %v374, %v500
        %v502 = vlaneseq
        %v503 = vshrl.u32 %v502, 7
        %v504 = vsub.s32 1, %v503
        %v505 = vrot.slane %v374, %v504
        %v506 = vlaneseq
        %v507 = vshrl.u32 %v506, 7
        %v508 = vsub.s32 2, %v507
        %v509 = vrot.slane %v374, %v508
        %v510 = vlaneseq
        %v511 = vshrl.u32 %v510, 7
        %v512 = vsub.s32 3, %v511
        %v513 = vrot.slane %v374, %v512
        %v514 = vlaneseq
        %v515 = vshrl.u32 %v514, 7
        %v516 = vsub.s32 4, %v515
        %v517 = vrot.slane %v374, %v516
        %v518 = vlaneseq
        %v519 = vshrl.u32 %v518, 7
        %v520 = vsub.s32 5, %v519
        %v521 = vrot.slane %v374, %v520
        %v522 = vlaneseq
        %v523 = vshrl.u32 %v522, 7
        %v524 = vsub.s32 6, %v523
        %v525 = vrot.slane %v374, %v524
        %v526 = vlaneseq
        %v527 = vshrl.u32 %v526, 7
        %v528 = vsub.s32 7, %v527
        %v529 = vrot.slane %v374, %v528
        %v530 = vlaneseq
        %v531 = vshrl.u32 %v530, 7
        %v532 = vsub.s32 0, %v531
        %v533 = vrot.slane %v375, %v532
        %v534 = vlaneseq
        %v535 = vshrl.u32 %v534, 7
        %v536 = vsub.s32 1, %v535
        %v537 = vrot.slane %v375, %v536
        %v538 = vlaneseq
        %v539 = vshrl.u32 %v538, 7
        %v540 = vsub.s32 2, %v539
        %v541 = vrot.slane %v375, %v540
        %v542 = vlaneseq
        %v543 = vshrl.u32 %v542, 7
        %v544 = vsub.s32 3, %v543
        %v545 = vrot.slane %v375, %v544
        %v546 = vlaneseq
        %v547 = vshrl.u32 %v546, 7
        %v548 = vsub.s32 4, %v547
        %v549 = vrot.slane %v375, %v548
        %v550 = vlaneseq
        %v551 = vshrl.u32 %v550, 7
        %v552 = vsub.s32 5, %v551
        %v553 = vrot.slane %v375, %v552
        %v554 = vlaneseq
        %v555 = vshrl.u32 %v554, 7
        %v556 = vsub.s32 6, %v555
        %v557 = vrot.slane %v375, %v556
        %v573 = vmul.f32 %v376, %v501
        %v574 = vmul.f32 %v377, %v505
        %v575 = vmul.f32 %v378, %v509
        %v576 = vmul.f32 %v379, %v513
        %v577 = vmul.f32 %v380, %v517
        %v578 = vmul.f32 %v381, %v521
        %v579 = vmul.f32 %v382, %v525
        %v580 = vmul.f32 %v383, %v529
        %v581 = vmul.f32 %v384, %v533
        %v582 = vmul.f32 %v385, %v537
        %v583 = vmul.f32 %v386, %v541
        %v584 = vmul.f32 %v387, %v545
        %v585 = vmul.f32 %v388, %v549
        %v586 = vmul.f32 %v389, %v553
        %v587 = vmul.f32 %v390, %v557
        %v588 = vmul.f32 %v391, %v501
        %v589 = vmul.f32 %v392, %v505
        %v590 = vmul.f32 %v393, %v509
        %v591 = vmul.f32 %v394, %v513
        %v592 = vmul.f32 %v395, %v517
        %v593 = vmul.f32 %v396, %v521
        %v594 = vmul.f32 %v397, %v525
        %v595 = vmul.f32 %v398, %v529
        %v596 = vmul.f32 %v399, %v533
        %v597 = vmul.f32 %v400, %v537
        %v598 = vmul.f32 %v401, %v541
        %v599 = vmul.f32 %v402, %v545
        %v600 = vmul.f32 %v403, %v549
        %v601 = vmul.f32 %v404, %v553
        %v602 = vmul.f32 %v405, %v557
        %v603 = vmul.f32 %v406, %v501
        %v604 = vmul.f32 %v407, %v505
        %v605 = vmul.f32 %v408, %v509
        %v606 = vmul.f32 %v409, %v513
        %v607 = vmul.f32 %v410, %v517
        %v608 = vmul.f32 %v411, %v521
        %v609 = vmul.f32 %v412, %v525
        %v610 = vmul.f32 %v413, %v529
        %v611 = vmul.f32 %v414, %v533
        %v612 = vmul.f32 %v415, %v537
        %v613 = vmul.f32 %v416, %v541
        %v614 = vmul.f32 %v417, %v545
        %v615 = vmul.f32 %v418, %v549
        %v616 = vmul.f32 %v419, %v553
        %v617 = vmul.f32 %v420, %v557
        %v618 = vmul.f32 %v421, %v501
        %v619 = vmul.f32 %v422, %v505
        %v620 = vmul.f32 %v423, %v509
        %v621 = vmul.f32 %v424, %v513
        %v622 = vmul.f32 %v425, %v517
        %v623 = vmul.f32 %v426, %v521
        %v624 = vmul.f32 %v427, %v525
        %v625 = vmul.f32 %v428, %v529
        %v626 = vmul.f32 %v429, %v533
        %v627 = vmul.f32 %v430, %v537
        %v628 = vmul.f32 %v431, %v541
        %v629 = vmul.f32 %v432, %v545
        %v630 = vmul.f32 %v433, %v549
        %v631 = vmul.f32 %v434, %v553
        %v632 = vmul.f32 %v435, %v557
        %v633 = vmul.f32 %v436, %v501
        %v634 = vmul.f32 %v437, %v505
        %v635 = vmul.f32 %v438, %v509
        %v636 = vmul.f32 %v439, %v513
        %v637 = vmul.f32 %v440, %v517
        %v638 = vmul.f32 %v441, %v521
        %v639 = vmul.f32 %v442, %v525
        %v640 = vmul.f32 %v443, %v529
        %v641 = vmul.f32 %v444, %v533
        %v642 = vmul.f32 %v445, %v537
        %v643 = vmul.f32 %v446, %v541
        %v644 = vmul.f32 %v447, %v545
        %v645 = vmul.f32 %v448, %v549
        %v646 = vmul.f32 %v449, %v553
        %v647 = vmul.f32 %v450, %v557
        %v648 = vmul.f32 %v451, %v501
        %v649 = vmul.f32 %v452, %v505
        %v650 = vmul.f32 %v453, %v509
        %v651 = vmul.f32 %v454, %v513
        %v652 = vmul.f32 %v455, %v517
        %v653 = vmul.f32 %v456, %v521
        %v654 = vmul.f32 %v457, %v525
        %v655 = vmul.f32 %v458, %v529
        %v656 = vmul.f32 %v459, %v533
        %v657 = vmul.f32 %v460, %v537
        %v658 = vmul.f32 %v461, %v541
        %v659 = vmul.f32 %v462, %v545
        %v660 = vmul.f32 %v463, %v549
        %v661 = vmul.f32 %v464, %v553
        %v662 = vmul.f32 %v465, %v557
        %v663 = vmul.f32 %v466, %v501
        %v664 = vmul.f32 %v467, %v505
        %v665 = vmul.f32 %v468, %v509
        %v666 = vmul.f32 %v469, %v513
        %v667 = vmul.f32 %v470, %v517
        %v668 = vmul.f32 %v471, %v521
        %v669 = vmul.f32 %v472, %v525
        %v670 = vmul.f32 %v473, %v529
        %v671 = vmul.f32 %v474, %v533
        %v672 = vmul.f32 %v475, %v537
        %v673 = vmul.f32 %v476, %v541
        %v674 = vmul.f32 %v477, %v545
        %v675 = vmul.f32 %v478, %v549
        %v676 = vmul.f32 %v479, %v553
        %v677 = vmul.f32 %v480, %v557
        %v678 = vmul.f32 %v481, %v501
        %v679 = vmul.f32 %v482, %v505
        %v680 = vmul.f32 %v483, %v509
        %v681 = vmul.f32 %v484, %v513
        %v682 = vmul.f32 %v485, %v517
        %v683 = vmul.f32 %v486, %v521
        %v684 = vmul.f32 %v487, %v525
        %v685 = vmul.f32 %v488, %v529
        %v686 = vmul.f32 %v489, %v533
        %v687 = vmul.f32 %v490, %v537
        %v688 = vmul.f32 %v491, %v541
        %v689 = vmul.f32 %v492, %v545
        %v690 = vmul.f32 %v493, %v549
        %v691 = vmul.f32 %v494, %v553
        %v692 = vmul.f32 %v495, %v557
        %v693 = vpack.c.bf16 %v588, %v573
        %v694 = vpack.c.bf16 %v589, %v574
        %v695 = vpack.c.bf16 %v590, %v575
        %v696 = vpack.c.bf16 %v591, %v576
        %v697 = vpack.c.bf16 %v592, %v577
        %v698 = vpack.c.bf16 %v593, %v578
        %v699 = vpack.c.bf16 %v594, %v579
        %v700 = vpack.c.bf16 %v595, %v580
        %v701 = vpack.c.bf16 %v596, %v581
        %v702 = vpack.c.bf16 %v597, %v582
        %v703 = vpack.c.bf16 %v598, %v583
        %v704 = vpack.c.bf16 %v599, %v584
        %v705 = vpack.c.bf16 %v600, %v585
        %v706 = vpack.c.bf16 %v601, %v586
        %v707 = vpack.c.bf16 %v602, %v587
        %v708 = vpack.c.bf16 %v618, %v603
        %v709 = vpack.c.bf16 %v619, %v604
        %v710 = vpack.c.bf16 %v620, %v605
        %v711 = vpack.c.bf16 %v621, %v606
        %v712 = vpack.c.bf16 %v622, %v607
        %v713 = vpack.c.bf16 %v623, %v608
        %v714 = vpack.c.bf16 %v624, %v609
        %v715 = vpack.c.bf16 %v625, %v610
        %v716 = vpack.c.bf16 %v626, %v611
        %v717 = vpack.c.bf16 %v627, %v612
        %v718 = vpack.c.bf16 %v628, %v613
        %v719 = vpack.c.bf16 %v629, %v614
        %v720 = vpack.c.bf16 %v630, %v615
        %v721 = vpack.c.bf16 %v631, %v616
        %v722 = vpack.c.bf16 %v632, %v617
        %v723 = vpack.c.bf16 %v648, %v633
        %v724 = vpack.c.bf16 %v649, %v634
        %v725 = vpack.c.bf16 %v650, %v635
        %v726 = vpack.c.bf16 %v651, %v636
        %v727 = vpack.c.bf16 %v652, %v637
        %v728 = vpack.c.bf16 %v653, %v638
        %v729 = vpack.c.bf16 %v654, %v639
        %v730 = vpack.c.bf16 %v655, %v640
        %v731 = vpack.c.bf16 %v656, %v641
        %v732 = vpack.c.bf16 %v657, %v642
        %v733 = vpack.c.bf16 %v658, %v643
        %v734 = vpack.c.bf16 %v659, %v644
        %v735 = vpack.c.bf16 %v660, %v645
        %v736 = vpack.c.bf16 %v661, %v646
        %v737 = vpack.c.bf16 %v662, %v647
        %v738 = vpack.c.bf16 %v678, %v663
        %v739 = vpack.c.bf16 %v679, %v664
        %v740 = vpack.c.bf16 %v680, %v665
        %v741 = vpack.c.bf16 %v681, %v666
        %v742 = vpack.c.bf16 %v682, %v667
        %v743 = vpack.c.bf16 %v683, %v668
        %v744 = vpack.c.bf16 %v684, %v669
        %v745 = vpack.c.bf16 %v685, %v670
        %v746 = vpack.c.bf16 %v686, %v671
        %v747 = vpack.c.bf16 %v687, %v672
        %v748 = vpack.c.bf16 %v688, %v673
        %v749 = vpack.c.bf16 %v689, %v674
        %v750 = vpack.c.bf16 %v690, %v675
        %v751 = vpack.c.bf16 %v691, %v676
        %v752 = vpack.c.bf16 %v692, %v677
        %v753 = vld [vmem:[#allocation2] sm:$0xff]
        %v754 = vld [vmem:[#allocation2 + $0x8] sm:$0xff]
        %v755 = vld [vmem:[#allocation2 + $0x10] sm:$0xff]
        %v756 = vld [vmem:[#allocation2 + $0x18] sm:$0xff]
        %v757 = vld [vmem:[#allocation2 + $0x20] sm:$0xff]
        %v758 = vld [vmem:[#allocation2 + $0x28] sm:$0xff]
        %v759 = vld [vmem:[#allocation2 + $0x30] sm:$0xff]
        %v760 = vld [vmem:[#allocation2 + $0x38] sm:$0xf]
        %v761 = vld [vmem:[#allocation2 + $0x3c] sm:$0xff]
        %v762 = vld [vmem:[#allocation2 + $0x44] sm:$0xff]
        %v763 = vld [vmem:[#allocation2 + $0x4c] sm:$0xff]
        %v764 = vld [vmem:[#allocation2 + $0x54] sm:$0xff]
        %v765 = vld [vmem:[#allocation2 + $0x5c] sm:$0xff]
        %v766 = vld [vmem:[#allocation2 + $0x64] sm:$0xff]
        %v767 = vld [vmem:[#allocation2 + $0x6c] sm:$0xff]
        %v768 = vld [vmem:[#allocation2 + $0x74] sm:$0xf]
        %v769 = vld [vmem:[#allocation2 + $0x78] sm:$0xff]
        %v770 = vld [vmem:[#allocation2 + $0x80] sm:$0xff]
        %v771 = vld [vmem:[#allocation2 + $0x88] sm:$0xff]
        %v772 = vld [vmem:[#allocation2 + $0x90] sm:$0xff]
        %v773 = vld [vmem:[#allocation2 + $0x98] sm:$0xff]
        %v774 = vld [vmem:[#allocation2 + $0xa0] sm:$0xff]
        %v775 = vld [vmem:[#allocation2 + $0xa8] sm:$0xff]
        %v776 = vld [vmem:[#allocation2 + $0xb0] sm:$0xf]
        %v777 = vld [vmem:[#allocation2 + $0xb4] sm:$0xff]
        %v778 = vld [vmem:[#allocation2 + $0xbc] sm:$0xff]
        %v779 = vld [vmem:[#allocation2 + $0xc4] sm:$0xff]
        %v780 = vld [vmem:[#allocation2 + $0xcc] sm:$0xff]
        %v781 = vld [vmem:[#allocation2 + $0xd4] sm:$0xff]
        %v782 = vld [vmem:[#allocation2 + $0xdc] sm:$0xff]
        %v783 = vld [vmem:[#allocation2 + $0xe4] sm:$0xff]
        %v784 = vld [vmem:[#allocation2 + $0xec] sm:$0xf]
        %v785 = vld [vmem:[#allocation2 + $0xf0] sm:$0xff]
        %v786 = vld [vmem:[#allocation2 + $0xf8] sm:$0xff]
        %v787 = vld [vmem:[#allocation2 + $0x100] sm:$0xff]
        %v788 = vld [vmem:[#allocation2 + $0x108] sm:$0xff]
        %v789 = vld [vmem:[#allocation2 + $0x110] sm:$0xff]
        %v790 = vld [vmem:[#allocation2 + $0x118] sm:$0xff]
        %v791 = vld [vmem:[#allocation2 + $0x120] sm:$0xff]
        %v792 = vld [vmem:[#allocation2 + $0x128] sm:$0xf]
        %v793 = vld [vmem:[#allocation2 + $0x12c] sm:$0xff]
        %v794 = vld [vmem:[#allocation2 + $0x134] sm:$0xff]
        %v795 = vld [vmem:[#allocation2 + $0x13c] sm:$0xff]
        %v796 = vld [vmem:[#allocation2 + $0x144] sm:$0xff]
        %v797 = vld [vmem:[#allocation2 + $0x14c] sm:$0xff]
        %v798 = vld [vmem:[#allocation2 + $0x154] sm:$0xff]
        %v799 = vld [vmem:[#allocation2 + $0x15c] sm:$0xff]
        %v800 = vld [vmem:[#allocation2 + $0x164] sm:$0xf]
        %v801 = vld [vmem:[#allocation2 + $0x168] sm:$0xff]
        %v802 = vld [vmem:[#allocation2 + $0x170] sm:$0xff]
        %v803 = vld [vmem:[#allocation2 + $0x178] sm:$0xff]
        %v804 = vld [vmem:[#allocation2 + $0x180] sm:$0xff]
        %v805 = vld [vmem:[#allocation2 + $0x188] sm:$0xff]
        %v806 = vld [vmem:[#allocation2 + $0x190] sm:$0xff]
        %v807 = vld [vmem:[#allocation2 + $0x198] sm:$0xff]
        %v808 = vld [vmem:[#allocation2 + $0x1a0] sm:$0xf]
        %v809 = vld [vmem:[#allocation2 + $0x1a4] sm:$0xff]
        %v810 = vld [vmem:[#allocation2 + $0x1ac] sm:$0xff]
        %v811 = vld [vmem:[#allocation2 + $0x1b4] sm:$0xff]
        %v812 = vld [vmem:[#allocation2 + $0x1bc] sm:$0xff]
        %v813 = vld [vmem:[#allocation2 + $0x1c4] sm:$0xff]
        %v814 = vld [vmem:[#allocation2 + $0x1cc] sm:$0xff]
        %v815 = vld [vmem:[#allocation2 + $0x1d4] sm:$0xff]
        %v816 = vld [vmem:[#allocation2 + $0x1dc] sm:$0xf]
        %v817 = vld [vmem:[#allocation2 + $0x1e0] sm:$0xff]
        %v818 = vld [vmem:[#allocation2 + $0x1e8] sm:$0xff]
        %v819 = vld [vmem:[#allocation2 + $0x1f0] sm:$0xff]
        %v820 = vld [vmem:[#allocation2 + $0x1f8] sm:$0xff]
        %v821 = vld [vmem:[#allocation2 + $0x200] sm:$0xff]
        %v822 = vld [vmem:[#allocation2 + $0x208] sm:$0xff]
        %v823 = vld [vmem:[#allocation2 + $0x210] sm:$0xff]
        %v824 = vld [vmem:[#allocation2 + $0x218] sm:$0xf]
        %v825 = vld [vmem:[#allocation2 + $0x21c] sm:$0xff]
        %v826 = vld [vmem:[#allocation2 + $0x224] sm:$0xff]
        %v827 = vld [vmem:[#allocation2 + $0x22c] sm:$0xff]
        %v828 = vld [vmem:[#allocation2 + $0x234] sm:$0xff]
        %v829 = vld [vmem:[#allocation2 + $0x23c] sm:$0xff]
        %v830 = vld [vmem:[#allocation2 + $0x244] sm:$0xff]
        %v831 = vld [vmem:[#allocation2 + $0x24c] sm:$0xff]
        %v832 = vld [vmem:[#allocation2 + $0x254] sm:$0xf]
        %v833 = vld [vmem:[#allocation2 + $0x258] sm:$0xff]
        %v834 = vld [vmem:[#allocation2 + $0x260] sm:$0xff]
        %v835 = vld [vmem:[#allocation2 + $0x268] sm:$0xff]
        %v836 = vld [vmem:[#allocation2 + $0x270] sm:$0xff]
        %v837 = vld [vmem:[#allocation2 + $0x278] sm:$0xff]
        %v838 = vld [vmem:[#allocation2 + $0x280] sm:$0xff]
        %v839 = vld [vmem:[#allocation2 + $0x288] sm:$0xff]
        %v840 = vld [vmem:[#allocation2 + $0x290] sm:$0xf]
        %v841 = vld [vmem:[#allocation2 + $0x294] sm:$0xff]
        %v842 = vld [vmem:[#allocation2 + $0x29c] sm:$0xff]
        %v843 = vld [vmem:[#allocation2 + $0x2a4] sm:$0xff]
        %v844 = vld [vmem:[#allocation2 + $0x2ac] sm:$0xff]
        %v845 = vld [vmem:[#allocation2 + $0x2b4] sm:$0xff]
        %v846 = vld [vmem:[#allocation2 + $0x2bc] sm:$0xff]
        %v847 = vld [vmem:[#allocation2 + $0x2c4] sm:$0xff]
        %v848 = vld [vmem:[#allocation2 + $0x2cc] sm:$0xf]
        %v849 = vld [vmem:[#allocation2 + $0x2d0] sm:$0xff]
        %v850 = vld [vmem:[#allocation2 + $0x2d8] sm:$0xff]
        %v851 = vld [vmem:[#allocation2 + $0x2e0] sm:$0xff]
        %v852 = vld [vmem:[#allocation2 + $0x2e8] sm:$0xff]
        %v853 = vld [vmem:[#allocation2 + $0x2f0] sm:$0xff]
        %v854 = vld [vmem:[#allocation2 + $0x2f8] sm:$0xff]
        %v855 = vld [vmem:[#allocation2 + $0x300] sm:$0xff]
        %v856 = vld [vmem:[#allocation2 + $0x308] sm:$0xf]
        %v857 = vld [vmem:[#allocation2 + $0x30c] sm:$0xff]
        %v858 = vld [vmem:[#allocation2 + $0x314] sm:$0xff]
        %v859 = vld [vmem:[#allocation2 + $0x31c] sm:$0xff]
        %v860 = vld [vmem:[#allocation2 + $0x324] sm:$0xff]
        %v861 = vld [vmem:[#allocation2 + $0x32c] sm:$0xff]
        %v862 = vld [vmem:[#allocation2 + $0x334] sm:$0xff]
        %v863 = vld [vmem:[#allocation2 + $0x33c] sm:$0xff]
        %v864 = vld [vmem:[#allocation2 + $0x344] sm:$0xf]
        %v865 = vld [vmem:[#allocation2 + $0x348] sm:$0xff]
        %v866 = vld [vmem:[#allocation2 + $0x350] sm:$0xff]
        %v867 = vld [vmem:[#allocation2 + $0x358] sm:$0xff]
        %v868 = vld [vmem:[#allocation2 + $0x360] sm:$0xff]
        %v869 = vld [vmem:[#allocation2 + $0x368] sm:$0xff]
        %v870 = vld [vmem:[#allocation2 + $0x370] sm:$0xff]
        %v871 = vld [vmem:[#allocation2 + $0x378] sm:$0xff]
        %v872 = vld [vmem:[#allocation2 + $0x380] sm:$0xf]
        %v873 = vld [vmem:[#allocation2 + $0x384] sm:$0xff]
        %v874 = vld [vmem:[#allocation2 + $0x38c] sm:$0xff]
        %v875 = vld [vmem:[#allocation2 + $0x394] sm:$0xff]
        %v876 = vld [vmem:[#allocation2 + $0x39c] sm:$0xff]
        %v877 = vld [vmem:[#allocation2 + $0x3a4] sm:$0xff]
        %v878 = vld [vmem:[#allocation2 + $0x3ac] sm:$0xff]
        %v879 = vld [vmem:[#allocation2 + $0x3b4] sm:$0xff]
        %v880 = vld [vmem:[#allocation2 + $0x3bc] sm:$0xf]
        %v881 = vld [vmem:[#allocation2 + $0x3c0] sm:$0xff]
        %v882 = vld [vmem:[#allocation2 + $0x3c8] sm:$0xff]
        %v883 = vld [vmem:[#allocation2 + $0x3d0] sm:$0xff]
        %v884 = vld [vmem:[#allocation2 + $0x3d8] sm:$0xff]
        %v885 = vld [vmem:[#allocation2 + $0x3e0] sm:$0xff]
        %v886 = vld [vmem:[#allocation2 + $0x3e8] sm:$0xff]
        %v887 = vld [vmem:[#allocation2 + $0x3f0] sm:$0xff]
        %v888 = vld [vmem:[#allocation2 + $0x3f8] sm:$0xf]
        %v889 = vld [vmem:[#allocation2 + $0x3fc] sm:$0xff]
        %v890 = vld [vmem:[#allocation2 + $0x404] sm:$0xff]
        %v891 = vld [vmem:[#allocation2 + $0x40c] sm:$0xff]
        %v892 = vld [vmem:[#allocation2 + $0x414] sm:$0xff]
        %v893 = vld [vmem:[#allocation2 + $0x41c] sm:$0xff]
        %v894 = vld [vmem:[#allocation2 + $0x424] sm:$0xff]
        %v895 = vld [vmem:[#allocation2 + $0x42c] sm:$0xff]
        %v896 = vld [vmem:[#allocation2 + $0x434] sm:$0xf]
        %v897 = vld [vmem:[#allocation2 + $0x438] sm:$0xff]
        %v898 = vld [vmem:[#allocation2 + $0x440] sm:$0xff]
        %v899 = vld [vmem:[#allocation2 + $0x448] sm:$0xff]
        %v900 = vld [vmem:[#allocation2 + $0x450] sm:$0xff]
        %v901 = vld [vmem:[#allocation2 + $0x458] sm:$0xff]
        %v902 = vld [vmem:[#allocation2 + $0x460] sm:$0xff]
        %v903 = vld [vmem:[#allocation2 + $0x468] sm:$0xff]
        %v904 = vld [vmem:[#allocation2 + $0x470] sm:$0xf]
        %v905 = vld [vmem:[#allocation2 + $0x474] sm:$0xff]
        %v906 = vld [vmem:[#allocation2 + $0x47c] sm:$0xff]
        %v907 = vld [vmem:[#allocation2 + $0x484] sm:$0xff]
        %v908 = vld [vmem:[#allocation2 + $0x48c] sm:$0xff]
        %v909 = vld [vmem:[#allocation2 + $0x494] sm:$0xff]
        %v910 = vld [vmem:[#allocation2 + $0x49c] sm:$0xff]
        %v911 = vld [vmem:[#allocation2 + $0x4a4] sm:$0xff]
        %v912 = vld [vmem:[#allocation2 + $0x4ac] sm:$0xf]
        %v913 = vld [vmem:[#allocation2 + $0x4b0] sm:$0xff]
        %v914 = vld [vmem:[#allocation2 + $0x4b8] sm:$0xff]
        %v915 = vld [vmem:[#allocation2 + $0x4c0] sm:$0xff]
        %v916 = vld [vmem:[#allocation2 + $0x4c8] sm:$0xff]
        %v917 = vld [vmem:[#allocation2 + $0x4d0] sm:$0xff]
        %v918 = vld [vmem:[#allocation2 + $0x4d8] sm:$0xff]
        %v919 = vld [vmem:[#allocation2 + $0x4e0] sm:$0xff]
        %v920 = vld [vmem:[#allocation2 + $0x4e8] sm:$0xf]
        %v921 = vld [vmem:[#allocation2 + $0x4ec] sm:$0xff]
        %v922 = vld [vmem:[#allocation2 + $0x4f4] sm:$0xff]
        %v923 = vld [vmem:[#allocation2 + $0x4fc] sm:$0xff]
        %v924 = vld [vmem:[#allocation2 + $0x504] sm:$0xff]
        %v925 = vld [vmem:[#allocation2 + $0x50c] sm:$0xff]
        %v926 = vld [vmem:[#allocation2 + $0x514] sm:$0xff]
        %v927 = vld [vmem:[#allocation2 + $0x51c] sm:$0xff]
        %v928 = vld [vmem:[#allocation2 + $0x524] sm:$0xf]
        %v929 = vld [vmem:[#allocation2 + $0x528] sm:$0xff]
        %v930 = vld [vmem:[#allocation2 + $0x530] sm:$0xff]
        %v931 = vld [vmem:[#allocation2 + $0x538] sm:$0xff]
        %v932 = vld [vmem:[#allocation2 + $0x540] sm:$0xff]
        %v933 = vld [vmem:[#allocation2 + $0x548] sm:$0xff]
        %v934 = vld [vmem:[#allocation2 + $0x550] sm:$0xff]
        %v935 = vld [vmem:[#allocation2 + $0x558] sm:$0xff]
        %v936 = vld [vmem:[#allocation2 + $0x560] sm:$0xf]
        %v937 = vld [vmem:[#allocation2 + $0x564] sm:$0xff]
        %v938 = vld [vmem:[#allocation2 + $0x56c] sm:$0xff]
        %v939 = vld [vmem:[#allocation2 + $0x574] sm:$0xff]
        %v940 = vld [vmem:[#allocation2 + $0x57c] sm:$0xff]
        %v941 = vld [vmem:[#allocation2 + $0x584] sm:$0xff]
        %v942 = vld [vmem:[#allocation2 + $0x58c] sm:$0xff]
        %v943 = vld [vmem:[#allocation2 + $0x594] sm:$0xff]
        %v944 = vld [vmem:[#allocation2 + $0x59c] sm:$0xf]
        %v945 = vld [vmem:[#allocation2 + $0x5a0] sm:$0xff]
        %v946 = vld [vmem:[#allocation2 + $0x5a8] sm:$0xff]
        %v947 = vld [vmem:[#allocation2 + $0x5b0] sm:$0xff]
        %v948 = vld [vmem:[#allocation2 + $0x5b8] sm:$0xff]
        %v949 = vld [vmem:[#allocation2 + $0x5c0] sm:$0xff]
        %v950 = vld [vmem:[#allocation2 + $0x5c8] sm:$0xff]
        %v951 = vld [vmem:[#allocation2 + $0x5d0] sm:$0xff]
        %v952 = vld [vmem:[#allocation2 + $0x5d8] sm:$0xf]
        %v953 = vld [vmem:[#allocation2 + $0x5dc] sm:$0xff]
        %v954 = vld [vmem:[#allocation2 + $0x5e4] sm:$0xff]
        %v955 = vld [vmem:[#allocation2 + $0x5ec] sm:$0xff]
        %v956 = vld [vmem:[#allocation2 + $0x5f4] sm:$0xff]
        %v957 = vld [vmem:[#allocation2 + $0x5fc] sm:$0xff]
        %v958 = vld [vmem:[#allocation2 + $0x604] sm:$0xff]
        %v959 = vld [vmem:[#allocation2 + $0x60c] sm:$0xff]
        %v960 = vld [vmem:[#allocation2 + $0x614] sm:$0xf]
        %v961 = vld [vmem:[#allocation2 + $0x618] sm:$0xff]
        %v962 = vld [vmem:[#allocation2 + $0x620] sm:$0xff]
        %v963 = vld [vmem:[#allocation2 + $0x628] sm:$0xff]
        %v964 = vld [vmem:[#allocation2 + $0x630] sm:$0xff]
        %v965 = vld [vmem:[#allocation2 + $0x638] sm:$0xff]
        %v966 = vld [vmem:[#allocation2 + $0x640] sm:$0xff]
        %v967 = vld [vmem:[#allocation2 + $0x648] sm:$0xff]
        %v968 = vld [vmem:[#allocation2 + $0x650] sm:$0xf]
        %v969 = vld [vmem:[#allocation2 + $0x654] sm:$0xff]
        %v970 = vld [vmem:[#allocation2 + $0x65c] sm:$0xff]
        %v971 = vld [vmem:[#allocation2 + $0x664] sm:$0xff]
        %v972 = vld [vmem:[#allocation2 + $0x66c] sm:$0xff]
        %v973 = vld [vmem:[#allocation2 + $0x674] sm:$0xff]
        %v974 = vld [vmem:[#allocation2 + $0x67c] sm:$0xff]
        %v975 = vld [vmem:[#allocation2 + $0x684] sm:$0xff]
        %v976 = vld [vmem:[#allocation2 + $0x68c] sm:$0xf]
        %v977 = vld [vmem:[#allocation2 + $0x690] sm:$0xff]
        %v978 = vld [vmem:[#allocation2 + $0x698] sm:$0xff]
        %v979 = vld [vmem:[#allocation2 + $0x6a0] sm:$0xff]
        %v980 = vld [vmem:[#allocation2 + $0x6a8] sm:$0xff]
        %v981 = vld [vmem:[#allocation2 + $0x6b0] sm:$0xff]
        %v982 = vld [vmem:[#allocation2 + $0x6b8] sm:$0xff]
        %v983 = vld [vmem:[#allocation2 + $0x6c0] sm:$0xff]
        %v984 = vld [vmem:[#allocation2 + $0x6c8] sm:$0xf]
        %v985 = vld [vmem:[#allocation2 + $0x6cc] sm:$0xff]
        %v986 = vld [vmem:[#allocation2 + $0x6d4] sm:$0xff]
        %v987 = vld [vmem:[#allocation2 + $0x6dc] sm:$0xff]
        %v988 = vld [vmem:[#allocation2 + $0x6e4] sm:$0xff]
        %v989 = vld [vmem:[#allocation2 + $0x6ec] sm:$0xff]
        %v990 = vld [vmem:[#allocation2 + $0x6f4] sm:$0xff]
        %v991 = vld [vmem:[#allocation2 + $0x6fc] sm:$0xff]
        %v992 = vld [vmem:[#allocation2 + $0x704] sm:$0xf]
        %v993 = vld [vmem:[#allocation2 + $0x708] sm:$0xff]
        %v994 = vld [vmem:[#allocation2 + $0x710] sm:$0xff]
        %v995 = vld [vmem:[#allocation2 + $0x718] sm:$0xff]
        %v996 = vld [vmem:[#allocation2 + $0x720] sm:$0xff]
        %v997 = vld [vmem:[#allocation2 + $0x728] sm:$0xff]
        %v998 = vld [vmem:[#allocation2 + $0x730] sm:$0xff]
        %v999 = vld [vmem:[#allocation2 + $0x738] sm:$0xff]
        %v1000 = vld [vmem:[#allocation2 + $0x740] sm:$0xf]
        %v1001 = vld [vmem:[#allocation2 + $0x744] sm:$0xff]
        %v1002 = vld [vmem:[#allocation2 + $0x74c] sm:$0xff]
        %v1003 = vld [vmem:[#allocation2 + $0x754] sm:$0xff]
        %v1004 = vld [vmem:[#allocation2 + $0x75c] sm:$0xff]
        %v1005 = vld [vmem:[#allocation2 + $0x764] sm:$0xff]
        %v1006 = vld [vmem:[#allocation2 + $0x76c] sm:$0xff]
        %v1007 = vld [vmem:[#allocation2 + $0x774] sm:$0xff]
        %v1008 = vld [vmem:[#allocation2 + $0x77c] sm:$0xf]
        %v1009 = vld [vmem:[#allocation2 + $0x780] sm:$0xff]
        %v1010 = vld [vmem:[#allocation2 + $0x788] sm:$0xff]
        %v1011 = vld [vmem:[#allocation2 + $0x790] sm:$0xff]
        %v1012 = vld [vmem:[#allocation2 + $0x798] sm:$0xff]
        %v1013 = vld [vmem:[#allocation2 + $0x7a0] sm:$0xff]
        %v1014 = vld [vmem:[#allocation2 + $0x7a8] sm:$0xff]
        %v1015 = vld [vmem:[#allocation2 + $0x7b0] sm:$0xff]
        %v1016 = vld [vmem:[#allocation2 + $0x7b8] sm:$0xf]
        %v1017 = vld [vmem:[#allocation2 + $0x7bc] sm:$0xff]
        %v1018 = vld [vmem:[#allocation2 + $0x7c4] sm:$0xff]
        %v1019 = vld [vmem:[#allocation2 + $0x7cc] sm:$0xff]
        %v1020 = vld [vmem:[#allocation2 + $0x7d4] sm:$0xff]
        %v1021 = vld [vmem:[#allocation2 + $0x7dc] sm:$0xff]
        %v1022 = vld [vmem:[#allocation2 + $0x7e4] sm:$0xff]
        %v1023 = vld [vmem:[#allocation2 + $0x7ec] sm:$0xff]
        %v1024 = vld [vmem:[#allocation2 + $0x7f4] sm:$0xf]
        %v1025 = vld [vmem:[#allocation2 + $0x7f8] sm:$0xff]
        %v1026 = vld [vmem:[#allocation2 + $0x800] sm:$0xff]
        %v1027 = vld [vmem:[#allocation2 + $0x808] sm:$0xff]
        %v1028 = vld [vmem:[#allocation2 + $0x810] sm:$0xff]
        %v1029 = vld [vmem:[#allocation2 + $0x818] sm:$0xff]
        %v1030 = vld [vmem:[#allocation2 + $0x820] sm:$0xff]
        %v1031 = vld [vmem:[#allocation2 + $0x828] sm:$0xff]
        %v1032 = vld [vmem:[#allocation2 + $0x830] sm:$0xf]
        %v1033 = vld [vmem:[#allocation2 + $0x834] sm:$0xff]
        %v1034 = vld [vmem:[#allocation2 + $0x83c] sm:$0xff]
        %v1035 = vld [vmem:[#allocation2 + $0x844] sm:$0xff]
        %v1036 = vld [vmem:[#allocation2 + $0x84c] sm:$0xff]
        %v1037 = vld [vmem:[#allocation2 + $0x854] sm:$0xff]
        %v1038 = vld [vmem:[#allocation2 + $0x85c] sm:$0xff]
        %v1039 = vld [vmem:[#allocation2 + $0x864] sm:$0xff]
        %v1040 = vld [vmem:[#allocation2 + $0x86c] sm:$0xf]
        %v1041 = vld [vmem:[#allocation2 + $0x870] sm:$0xff]
        %v1042 = vld [vmem:[#allocation2 + $0x878] sm:$0xff]
        %v1043 = vld [vmem:[#allocation2 + $0x880] sm:$0xff]
        %v1044 = vld [vmem:[#allocation2 + $0x888] sm:$0xff]
        %v1045 = vld [vmem:[#allocation2 + $0x890] sm:$0xff]
        %v1046 = vld [vmem:[#allocation2 + $0x898] sm:$0xff]
        %v1047 = vld [vmem:[#allocation2 + $0x8a0] sm:$0xff]
        %v1048 = vld [vmem:[#allocation2 + $0x8a8] sm:$0xf]
        %v1049 = vld [vmem:[#allocation2 + $0x8ac] sm:$0xff]
        %v1050 = vld [vmem:[#allocation2 + $0x8b4] sm:$0xff]
        %v1051 = vld [vmem:[#allocation2 + $0x8bc] sm:$0xff]
        %v1052 = vld [vmem:[#allocation2 + $0x8c4] sm:$0xff]
        %v1053 = vld [vmem:[#allocation2 + $0x8cc] sm:$0xff]
        %v1054 = vld [vmem:[#allocation2 + $0x8d4] sm:$0xff]
        %v1055 = vld [vmem:[#allocation2 + $0x8dc] sm:$0xff]
        %v1056 = vld [vmem:[#allocation2 + $0x8e4] sm:$0xf]
        %v1057 = vld [vmem:[#allocation2 + $0x8e8] sm:$0xff]
        %v1058 = vld [vmem:[#allocation2 + $0x8f0] sm:$0xff]
        %v1059 = vld [vmem:[#allocation2 + $0x8f8] sm:$0xff]
        %v1060 = vld [vmem:[#allocation2 + $0x900] sm:$0xff]
        %v1061 = vld [vmem:[#allocation2 + $0x908] sm:$0xff]
        %v1062 = vld [vmem:[#allocation2 + $0x910] sm:$0xff]
        %v1063 = vld [vmem:[#allocation2 + $0x918] sm:$0xff]
        %v1064 = vld [vmem:[#allocation2 + $0x920] sm:$0xf]
        %v1065 = vld [vmem:[#allocation2 + $0x924] sm:$0xff]
        %v1066 = vld [vmem:[#allocation2 + $0x92c] sm:$0xff]
        %v1067 = vld [vmem:[#allocation2 + $0x934] sm:$0xff]
        %v1068 = vld [vmem:[#allocation2 + $0x93c] sm:$0xff]
        %v1069 = vld [vmem:[#allocation2 + $0x944] sm:$0xff]
        %v1070 = vld [vmem:[#allocation2 + $0x94c] sm:$0xff]
        %v1071 = vld [vmem:[#allocation2 + $0x954] sm:$0xff]
        %v1072 = vld [vmem:[#allocation2 + $0x95c] sm:$0xf]
        %v1073 = vld [vmem:[#allocation2 + $0x960] sm:$0xff]
        %v1074 = vld [vmem:[#allocation2 + $0x968] sm:$0xff]
        %v1075 = vld [vmem:[#allocation2 + $0x970] sm:$0xff]
        %v1076 = vld [vmem:[#allocation2 + $0x978] sm:$0xff]
        %v1077 = vld [vmem:[#allocation2 + $0x980] sm:$0xff]
        %v1078 = vld [vmem:[#allocation2 + $0x988] sm:$0xff]
        %v1079 = vld [vmem:[#allocation2 + $0x990] sm:$0xff]
        %v1080 = vld [vmem:[#allocation2 + $0x998] sm:$0xf]
        %v1081 = vld [vmem:[#allocation2 + $0x99c] sm:$0xff]
        %v1082 = vld [vmem:[#allocation2 + $0x9a4] sm:$0xff]
        %v1083 = vld [vmem:[#allocation2 + $0x9ac] sm:$0xff]
        %v1084 = vld [vmem:[#allocation2 + $0x9b4] sm:$0xff]
        %v1085 = vld [vmem:[#allocation2 + $0x9bc] sm:$0xff]
        %v1086 = vld [vmem:[#allocation2 + $0x9c4] sm:$0xff]
        %v1087 = vld [vmem:[#allocation2 + $0x9cc] sm:$0xff]
        %v1088 = vld [vmem:[#allocation2 + $0x9d4] sm:$0xf]
        %v1089 = vld [vmem:[#allocation2 + $0x9d8] sm:$0xff]
        %v1090 = vld [vmem:[#allocation2 + $0x9e0] sm:$0xff]
        %v1091 = vld [vmem:[#allocation2 + $0x9e8] sm:$0xff]
        %v1092 = vld [vmem:[#allocation2 + $0x9f0] sm:$0xff]
        %v1093 = vld [vmem:[#allocation2 + $0x9f8] sm:$0xff]
        %v1094 = vld [vmem:[#allocation2 + $0xa00] sm:$0xff]
        %v1095 = vld [vmem:[#allocation2 + $0xa08] sm:$0xff]
        %v1096 = vld [vmem:[#allocation2 + $0xa10] sm:$0xf]
        %v1097 = vld [vmem:[#allocation2 + $0xa14] sm:$0xff]
        %v1098 = vld [vmem:[#allocation2 + $0xa1c] sm:$0xff]
        %v1099 = vld [vmem:[#allocation2 + $0xa24] sm:$0xff]
        %v1100 = vld [vmem:[#allocation2 + $0xa2c] sm:$0xff]
        %v1101 = vld [vmem:[#allocation2 + $0xa34] sm:$0xff]
        %v1102 = vld [vmem:[#allocation2 + $0xa3c] sm:$0xff]
        %v1103 = vld [vmem:[#allocation2 + $0xa44] sm:$0xff]
        %v1104 = vld [vmem:[#allocation2 + $0xa4c] sm:$0xf]
        %v1105 = vld [vmem:[#allocation2 + $0xa50] sm:$0xff]
        %v1106 = vld [vmem:[#allocation2 + $0xa58] sm:$0xff]
        %v1107 = vld [vmem:[#allocation2 + $0xa60] sm:$0xff]
        %v1108 = vld [vmem:[#allocation2 + $0xa68] sm:$0xff]
        %v1109 = vld [vmem:[#allocation2 + $0xa70] sm:$0xff]
        %v1110 = vld [vmem:[#allocation2 + $0xa78] sm:$0xff]
        %v1111 = vld [vmem:[#allocation2 + $0xa80] sm:$0xff]
        %v1112 = vld [vmem:[#allocation2 + $0xa88] sm:$0xf]
        %v1113 = vld [vmem:[#allocation2 + $0xa8c] sm:$0xff]
        %v1114 = vld [vmem:[#allocation2 + $0xa94] sm:$0xff]
        %v1115 = vld [vmem:[#allocation2 + $0xa9c] sm:$0xff]
        %v1116 = vld [vmem:[#allocation2 + $0xaa4] sm:$0xff]
        %v1117 = vld [vmem:[#allocation2 + $0xaac] sm:$0xff]
        %v1118 = vld [vmem:[#allocation2 + $0xab4] sm:$0xff]
        %v1119 = vld [vmem:[#allocation2 + $0xabc] sm:$0xff]
        %v1120 = vld [vmem:[#allocation2 + $0xac4] sm:$0xf]
        %v1121 = vld [vmem:[#allocation2 + $0xac8] sm:$0xff]
        %v1122 = vld [vmem:[#allocation2 + $0xad0] sm:$0xff]
        %v1123 = vld [vmem:[#allocation2 + $0xad8] sm:$0xff]
        %v1124 = vld [vmem:[#allocation2 + $0xae0] sm:$0xff]
        %v1125 = vld [vmem:[#allocation2 + $0xae8] sm:$0xff]
        %v1126 = vld [vmem:[#allocation2 + $0xaf0] sm:$0xff]
        %v1127 = vld [vmem:[#allocation2 + $0xaf8] sm:$0xff]
        %v1128 = vld [vmem:[#allocation2 + $0xb00] sm:$0xf]
        %v1129 = vld [vmem:[#allocation2 + $0xb04] sm:$0xff]
        %v1130 = vld [vmem:[#allocation2 + $0xb0c] sm:$0xff]
        %v1131 = vld [vmem:[#allocation2 + $0xb14] sm:$0xff]
        %v1132 = vld [vmem:[#allocation2 + $0xb1c] sm:$0xff]
        %v1133 = vld [vmem:[#allocation2 + $0xb24] sm:$0xff]
        %v1134 = vld [vmem:[#allocation2 + $0xb2c] sm:$0xff]
        %v1135 = vld [vmem:[#allocation2 + $0xb34] sm:$0xff]
        %v1136 = vld [vmem:[#allocation2 + $0xb3c] sm:$0xf]
        %v1137 = vld [vmem:[#allocation2 + $0xb40] sm:$0xff]
        %v1138 = vld [vmem:[#allocation2 + $0xb48] sm:$0xff]
        %v1139 = vld [vmem:[#allocation2 + $0xb50] sm:$0xff]
        %v1140 = vld [vmem:[#allocation2 + $0xb58] sm:$0xff]
        %v1141 = vld [vmem:[#allocation2 + $0xb60] sm:$0xff]
        %v1142 = vld [vmem:[#allocation2 + $0xb68] sm:$0xff]
        %v1143 = vld [vmem:[#allocation2 + $0xb70] sm:$0xff]
        %v1144 = vld [vmem:[#allocation2 + $0xb78] sm:$0xf]
        %v1145 = vld [vmem:[#allocation2 + $0xb7c] sm:$0xff]
        %v1146 = vld [vmem:[#allocation2 + $0xb84] sm:$0xff]
        %v1147 = vld [vmem:[#allocation2 + $0xb8c] sm:$0xff]
        %v1148 = vld [vmem:[#allocation2 + $0xb94] sm:$0xff]
        %v1149 = vld [vmem:[#allocation2 + $0xb9c] sm:$0xff]
        %v1150 = vld [vmem:[#allocation2 + $0xba4] sm:$0xff]
        %v1151 = vld [vmem:[#allocation2 + $0xbac] sm:$0xff]
        %v1152 = vld [vmem:[#allocation2 + $0xbb4] sm:$0xf]
        %v1153 = vld [vmem:[#allocation2 + $0xbb8] sm:$0xff]
        %v1154 = vld [vmem:[#allocation2 + $0xbc0] sm:$0xff]
        %v1155 = vld [vmem:[#allocation2 + $0xbc8] sm:$0xff]
        %v1156 = vld [vmem:[#allocation2 + $0xbd0] sm:$0xff]
        %v1157 = vld [vmem:[#allocation2 + $0xbd8] sm:$0xff]
        %v1158 = vld [vmem:[#allocation2 + $0xbe0] sm:$0xff]
        %v1159 = vld [vmem:[#allocation2 + $0xbe8] sm:$0xff]
        %v1160 = vld [vmem:[#allocation2 + $0xbf0] sm:$0xf]
        %v1161 = vld [vmem:[#allocation2 + $0xbf4] sm:$0xff]
        %v1162 = vld [vmem:[#allocation2 + $0xbfc] sm:$0xff]
        %v1163 = vld [vmem:[#allocation2 + $0xc04] sm:$0xff]
        %v1164 = vld [vmem:[#allocation2 + $0xc0c] sm:$0xff]
        %v1165 = vld [vmem:[#allocation2 + $0xc14] sm:$0xff]
        %v1166 = vld [vmem:[#allocation2 + $0xc1c] sm:$0xff]
        %v1167 = vld [vmem:[#allocation2 + $0xc24] sm:$0xff]
        %v1168 = vld [vmem:[#allocation2 + $0xc2c] sm:$0xf]
        %v1169 = vld [vmem:[#allocation2 + $0xc30] sm:$0xff]
        %v1170 = vld [vmem:[#allocation2 + $0xc38] sm:$0xff]
        %v1171 = vld [vmem:[#allocation2 + $0xc40] sm:$0xff]
        %v1172 = vld [vmem:[#allocation2 + $0xc48] sm:$0xff]
        %v1173 = vld [vmem:[#allocation2 + $0xc50] sm:$0xff]
        %v1174 = vld [vmem:[#allocation2 + $0xc58] sm:$0xff]
        %v1175 = vld [vmem:[#allocation2 + $0xc60] sm:$0xff]
        %v1176 = vld [vmem:[#allocation2 + $0xc68] sm:$0xf]
        %v1177 = vld [vmem:[#allocation2 + $0xc6c] sm:$0xff]
        %v1178 = vld [vmem:[#allocation2 + $0xc74] sm:$0xff]
        %v1179 = vld [vmem:[#allocation2 + $0xc7c] sm:$0xff]
        %v1180 = vld [vmem:[#allocation2 + $0xc84] sm:$0xff]
        %v1181 = vld [vmem:[#allocation2 + $0xc8c] sm:$0xff]
        %v1182 = vld [vmem:[#allocation2 + $0xc94] sm:$0xff]
        %v1183 = vld [vmem:[#allocation2 + $0xc9c] sm:$0xff]
        %v1184 = vld [vmem:[#allocation2 + $0xca4] sm:$0xf]
        %v1185 = vld [vmem:[#allocation2 + $0xca8] sm:$0xff]
        %v1186 = vld [vmem:[#allocation2 + $0xcb0] sm:$0xff]
        %v1187 = vld [vmem:[#allocation2 + $0xcb8] sm:$0xff]
        %v1188 = vld [vmem:[#allocation2 + $0xcc0] sm:$0xff]
        %v1189 = vld [vmem:[#allocation2 + $0xcc8] sm:$0xff]
        %v1190 = vld [vmem:[#allocation2 + $0xcd0] sm:$0xff]
        %v1191 = vld [vmem:[#allocation2 + $0xcd8] sm:$0xff]
        %v1192 = vld [vmem:[#allocation2 + $0xce0] sm:$0xf]
        %v1193 = vld [vmem:[#allocation2 + $0xce4] sm:$0xff]
        %v1194 = vld [vmem:[#allocation2 + $0xcec] sm:$0xff]
        %v1195 = vld [vmem:[#allocation2 + $0xcf4] sm:$0xff]
        %v1196 = vld [vmem:[#allocation2 + $0xcfc] sm:$0xff]
        %v1197 = vld [vmem:[#allocation2 + $0xd04] sm:$0xff]
        %v1198 = vld [vmem:[#allocation2 + $0xd0c] sm:$0xff]
        %v1199 = vld [vmem:[#allocation2 + $0xd14] sm:$0xff]
        %v1200 = vld [vmem:[#allocation2 + $0xd1c] sm:$0xf]
        %v1201 = vld [vmem:[#allocation2 + $0xd20] sm:$0xff]
        %v1202 = vld [vmem:[#allocation2 + $0xd28] sm:$0xff]
        %v1203 = vld [vmem:[#allocation2 + $0xd30] sm:$0xff]
        %v1204 = vld [vmem:[#allocation2 + $0xd38] sm:$0xff]
        %v1205 = vld [vmem:[#allocation2 + $0xd40] sm:$0xff]
        %v1206 = vld [vmem:[#allocation2 + $0xd48] sm:$0xff]
        %v1207 = vld [vmem:[#allocation2 + $0xd50] sm:$0xff]
        %v1208 = vld [vmem:[#allocation2 + $0xd58] sm:$0xf]
        %v1209 = vld [vmem:[#allocation2 + $0xd5c] sm:$0xff]
        %v1210 = vld [vmem:[#allocation2 + $0xd64] sm:$0xff]
        %v1211 = vld [vmem:[#allocation2 + $0xd6c] sm:$0xff]
        %v1212 = vld [vmem:[#allocation2 + $0xd74] sm:$0xff]
        %v1213 = vld [vmem:[#allocation2 + $0xd7c] sm:$0xff]
        %v1214 = vld [vmem:[#allocation2 + $0xd84] sm:$0xff]
        %v1215 = vld [vmem:[#allocation2 + $0xd8c] sm:$0xff]
        %v1216 = vld [vmem:[#allocation2 + $0xd94] sm:$0xf]
        %v1217 = vld [vmem:[#allocation2 + $0xd98] sm:$0xff]
        %v1218 = vld [vmem:[#allocation2 + $0xda0] sm:$0xff]
        %v1219 = vld [vmem:[#allocation2 + $0xda8] sm:$0xff]
        %v1220 = vld [vmem:[#allocation2 + $0xdb0] sm:$0xff]
        %v1221 = vld [vmem:[#allocation2 + $0xdb8] sm:$0xff]
        %v1222 = vld [vmem:[#allocation2 + $0xdc0] sm:$0xff]
        %v1223 = vld [vmem:[#allocation2 + $0xdc8] sm:$0xff]
        %v1224 = vld [vmem:[#allocation2 + $0xdd0] sm:$0xf]
        %v1225 = vld [vmem:[#allocation2 + $0xdd4] sm:$0xff]
        %v1226 = vld [vmem:[#allocation2 + $0xddc] sm:$0xff]
        %v1227 = vld [vmem:[#allocation2 + $0xde4] sm:$0xff]
        %v1228 = vld [vmem:[#allocation2 + $0xdec] sm:$0xff]
        %v1229 = vld [vmem:[#allocation2 + $0xdf4] sm:$0xff]
        %v1230 = vld [vmem:[#allocation2 + $0xdfc] sm:$0xff]
        %v1231 = vld [vmem:[#allocation2 + $0xe04] sm:$0xff]
        %v1232 = vld [vmem:[#allocation2 + $0xe0c] sm:$0xf]
        %v1233 = vld [vmem:[#allocation2 + $0xe10] sm:$0xff]
        %v1234 = vld [vmem:[#allocation2 + $0xe18] sm:$0xff]
        %v1235 = vld [vmem:[#allocation2 + $0xe20] sm:$0xff]
        %v1236 = vld [vmem:[#allocation2 + $0xe28] sm:$0xff]
        %v1237 = vld [vmem:[#allocation2 + $0xe30] sm:$0xff]
        %v1238 = vld [vmem:[#allocation2 + $0xe38] sm:$0xff]
        %v1239 = vld [vmem:[#allocation2 + $0xe40] sm:$0xff]
        %v1240 = vld [vmem:[#allocation2 + $0xe48] sm:$0xf]
        %v1241 = vld [vmem:[#allocation2 + $0xe4c] sm:$0xff]
        %v1242 = vld [vmem:[#allocation2 + $0xe54] sm:$0xff]
        %v1243 = vld [vmem:[#allocation2 + $0xe5c] sm:$0xff]
        %v1244 = vld [vmem:[#allocation2 + $0xe64] sm:$0xff]
        %v1245 = vld [vmem:[#allocation2 + $0xe6c] sm:$0xff]
        %v1246 = vld [vmem:[#allocation2 + $0xe74] sm:$0xff]
        %v1247 = vld [vmem:[#allocation2 + $0xe7c] sm:$0xff]
        %v1248 = vld [vmem:[#allocation2 + $0xe84] sm:$0xf]
        %v1249 = vld [vmem:[#allocation2 + $0xe88] sm:$0xff]
        %v1250 = vld [vmem:[#allocation2 + $0xe90] sm:$0xff]
        %v1251 = vld [vmem:[#allocation2 + $0xe98] sm:$0xff]
        %v1252 = vld [vmem:[#allocation2 + $0xea0] sm:$0xff]
        %v1253 = vld [vmem:[#allocation2 + $0xea8] sm:$0xff]
        %v1254 = vld [vmem:[#allocation2 + $0xeb0] sm:$0xff]
        %v1255 = vld [vmem:[#allocation2 + $0xeb8] sm:$0xff]
        %v1256 = vld [vmem:[#allocation2 + $0xec0] sm:$0xf]
        %v1257 = vld [vmem:[#allocation2 + $0xec4] sm:$0xff]
        %v1258 = vld [vmem:[#allocation2 + $0xecc] sm:$0xff]
        %v1259 = vld [vmem:[#allocation2 + $0xed4] sm:$0xff]
        %v1260 = vld [vmem:[#allocation2 + $0xedc] sm:$0xff]
        %v1261 = vld [vmem:[#allocation2 + $0xee4] sm:$0xff]
        %v1262 = vld [vmem:[#allocation2 + $0xeec] sm:$0xff]
        %v1263 = vld [vmem:[#allocation2 + $0xef4] sm:$0xff]
        %v1264 = vld [vmem:[#allocation2 + $0xefc] sm:$0xf]
        %v1777 = vunpack.c.l.b16 %v753
        %v1778 = vunpack.c.h.b16 %v753
        %v1779 = vunpack.c.l.b16 %v754
        %v1780 = vunpack.c.h.b16 %v754
        %v1781 = vunpack.c.l.b16 %v755
        %v1782 = vunpack.c.h.b16 %v755
        %v1783 = vunpack.c.l.b16 %v756
        %v1784 = vunpack.c.h.b16 %v756
        %v1785 = vunpack.c.l.b16 %v757
        %v1786 = vunpack.c.h.b16 %v757
        %v1787 = vunpack.c.l.b16 %v758
        %v1788 = vunpack.c.h.b16 %v758
        %v1789 = vunpack.c.l.b16 %v759
        %v1790 = vunpack.c.h.b16 %v759
        %v1791 = vunpack.c.l.b16 %v760
        %v1792 = vunpack.c.l.b16 %v761
        %v1793 = vunpack.c.h.b16 %v761
        %v1794 = vunpack.c.l.b16 %v762
        %v1795 = vunpack.c.h.b16 %v762
        %v1796 = vunpack.c.l.b16 %v763
        %v1797 = vunpack.c.h.b16 %v763
        %v1798 = vunpack.c.l.b16 %v764
        %v1799 = vunpack.c.h.b16 %v764
        %v1800 = vunpack.c.l.b16 %v765
        %v1801 = vunpack.c.h.b16 %v765
        %v1802 = vunpack.c.l.b16 %v766
        %v1803 = vunpack.c.h.b16 %v766
        %v1804 = vunpack.c.l.b16 %v767
        %v1805 = vunpack.c.h.b16 %v767
        %v1806 = vunpack.c.l.b16 %v768
        %v1807 = vunpack.c.l.b16 %v769
        %v1808 = vunpack.c.h.b16 %v769
        %v1809 = vunpack.c.l.b16 %v770
        %v1810 = vunpack.c.h.b16 %v770
        %v1811 = vunpack.c.l.b16 %v771
        %v1812 = vunpack.c.h.b16 %v771
        %v1813 = vunpack.c.l.b16 %v772
        %v1814 = vunpack.c.h.b16 %v772
        %v1815 = vunpack.c.l.b16 %v773
        %v1816 = vunpack.c.h.b16 %v773
        %v1817 = vunpack.c.l.b16 %v774
        %v1818 = vunpack.c.h.b16 %v774
        %v1819 = vunpack.c.l.b16 %v775
        %v1820 = vunpack.c.h.b16 %v775
        %v1821 = vunpack.c.l.b16 %v776
        %v1822 = vunpack.c.l.b16 %v777
        %v1823 = vunpack.c.h.b16 %v777
        %v1824 = vunpack.c.l.b16 %v778
        %v1825 = vunpack.c.h.b16 %v778
        %v1826 = vunpack.c.l.b16 %v779
        %v1827 = vunpack.c.h.b16 %v779
        %v1828 = vunpack.c.l.b16 %v780
        %v1829 = vunpack.c.h.b16 %v780
        %v1830 = vunpack.c.l.b16 %v781
        %v1831 = vunpack.c.h.b16 %v781
        %v1832 = vunpack.c.l.b16 %v782
        %v1833 = vunpack.c.h.b16 %v782
        %v1834 = vunpack.c.l.b16 %v783
        %v1835 = vunpack.c.h.b16 %v783
        %v1836 = vunpack.c.l.b16 %v784
        %v1837 = vunpack.c.l.b16 %v785
        %v1838 = vunpack.c.h.b16 %v785
        %v1839 = vunpack.c.l.b16 %v786
        %v1840 = vunpack.c.h.b16 %v786
        %v1841 = vunpack.c.l.b16 %v787
        %v1842 = vunpack.c.h.b16 %v787
        %v1843 = vunpack.c.l.b16 %v788
        %v1844 = vunpack.c.h.b16 %v788
        %v1845 = vunpack.c.l.b16 %v789
        %v1846 = vunpack.c.h.b16 %v789
        %v1847 = vunpack.c.l.b16 %v790
        %v1848 = vunpack.c.h.b16 %v790
        %v1849 = vunpack.c.l.b16 %v791
        %v1850 = vunpack.c.h.b16 %v791
        %v1851 = vunpack.c.l.b16 %v792
        %v1852 = vunpack.c.l.b16 %v793
        %v1853 = vunpack.c.h.b16 %v793
        %v1854 = vunpack.c.l.b16 %v794
        %v1855 = vunpack.c.h.b16 %v794
        %v1856 = vunpack.c.l.b16 %v795
        %v1857 = vunpack.c.h.b16 %v795
        %v1858 = vunpack.c.l.b16 %v796
        %v1859 = vunpack.c.h.b16 %v796
        %v1860 = vunpack.c.l.b16 %v797
        %v1861 = vunpack.c.h.b16 %v797
        %v1862 = vunpack.c.l.b16 %v798
        %v1863 = vunpack.c.h.b16 %v798
        %v1864 = vunpack.c.l.b16 %v799
        %v1865 = vunpack.c.h.b16 %v799
        %v1866 = vunpack.c.l.b16 %v800
        %v1867 = vunpack.c.l.b16 %v801
        %v1868 = vunpack.c.h.b16 %v801
        %v1869 = vunpack.c.l.b16 %v802
        %v1870 = vunpack.c.h.b16 %v802
        %v1871 = vunpack.c.l.b16 %v803
        %v1872 = vunpack.c.h.b16 %v803
        %v1873 = vunpack.c.l.b16 %v804
        %v1874 = vunpack.c.h.b16 %v804
        %v1875 = vunpack.c.l.b16 %v805
        %v1876 = vunpack.c.h.b16 %v805
        %v1877 = vunpack.c.l.b16 %v806
        %v1878 = vunpack.c.h.b16 %v806
        %v1879 = vunpack.c.l.b16 %v807
        %v1880 = vunpack.c.h.b16 %v807
        %v1881 = vunpack.c.l.b16 %v808
        %v1882 = vunpack.c.l.b16 %v809
        %v1883 = vunpack.c.h.b16 %v809
        %v1884 = vunpack.c.l.b16 %v810
        %v1885 = vunpack.c.h.b16 %v810
        %v1886 = vunpack.c.l.b16 %v811
        %v1887 = vunpack.c.h.b16 %v811
        %v1888 = vunpack.c.l.b16 %v812
        %v1889 = vunpack.c.h.b16 %v812
        %v1890 = vunpack.c.l.b16 %v813
        %v1891 = vunpack.c.h.b16 %v813
        %v1892 = vunpack.c.l.b16 %v814
        %v1893 = vunpack.c.h.b16 %v814
        %v1894 = vunpack.c.l.b16 %v815
        %v1895 = vunpack.c.h.b16 %v815
        %v1896 = vunpack.c.l.b16 %v816
        %v1897 = vunpack.c.l.b16 %v817
        %v1898 = vunpack.c.h.b16 %v817
        %v1899 = vunpack.c.l.b16 %v818
        %v1900 = vunpack.c.h.b16 %v818
        %v1901 = vunpack.c.l.b16 %v819
        %v1902 = vunpack.c.h.b16 %v819
        %v1903 = vunpack.c.l.b16 %v820
        %v1904 = vunpack.c.h.b16 %v820
        %v1905 = vunpack.c.l.b16 %v821
        %v1906 = vunpack.c.h.b16 %v821
        %v1907 = vunpack.c.l.b16 %v822
        %v1908 = vunpack.c.h.b16 %v822
        %v1909 = vunpack.c.l.b16 %v823
        %v1910 = vunpack.c.h.b16 %v823
        %v1911 = vunpack.c.l.b16 %v824
        %v1912 = vunpack.c.l.b16 %v825
        %v1913 = vunpack.c.h.b16 %v825
        %v1914 = vunpack.c.l.b16 %v826
        %v1915 = vunpack.c.h.b16 %v826
        %v1916 = vunpack.c.l.b16 %v827
        %v1917 = vunpack.c.h.b16 %v827
        %v1918 = vunpack.c.l.b16 %v828
        %v1919 = vunpack.c.h.b16 %v828
        %v1920 = vunpack.c.l.b16 %v829
        %v1921 = vunpack.c.h.b16 %v829
        %v1922 = vunpack.c.l.b16 %v830
        %v1923 = vunpack.c.h.b16 %v830
        %v1924 = vunpack.c.l.b16 %v831
        %v1925 = vunpack.c.h.b16 %v831
        %v1926 = vunpack.c.l.b16 %v832
        %v1927 = vunpack.c.l.b16 %v833
        %v1928 = vunpack.c.h.b16 %v833
        %v1929 = vunpack.c.l.b16 %v834
        %v1930 = vunpack.c.h.b16 %v834
        %v1931 = vunpack.c.l.b16 %v835
        %v1932 = vunpack.c.h.b16 %v835
        %v1933 = vunpack.c.l.b16 %v836
        %v1934 = vunpack.c.h.b16 %v836
        %v1935 = vunpack.c.l.b16 %v837
        %v1936 = vunpack.c.h.b16 %v837
        %v1937 = vunpack.c.l.b16 %v838
        %v1938 = vunpack.c.h.b16 %v838
        %v1939 = vunpack.c.l.b16 %v839
        %v1940 = vunpack.c.h.b16 %v839
        %v1941 = vunpack.c.l.b16 %v840
        %v1942 = vunpack.c.l.b16 %v841
        %v1943 = vunpack.c.h.b16 %v841
        %v1944 = vunpack.c.l.b16 %v842
        %v1945 = vunpack.c.h.b16 %v842
        %v1946 = vunpack.c.l.b16 %v843
        %v1947 = vunpack.c.h.b16 %v843
        %v1948 = vunpack.c.l.b16 %v844
        %v1949 = vunpack.c.h.b16 %v844
        %v1950 = vunpack.c.l.b16 %v845
        %v1951 = vunpack.c.h.b16 %v845
        %v1952 = vunpack.c.l.b16 %v846
        %v1953 = vunpack.c.h.b16 %v846
        %v1954 = vunpack.c.l.b16 %v847
        %v1955 = vunpack.c.h.b16 %v847
        %v1956 = vunpack.c.l.b16 %v848
        %v1957 = vunpack.c.l.b16 %v849
        %v1958 = vunpack.c.h.b16 %v849
        %v1959 = vunpack.c.l.b16 %v850
        %v1960 = vunpack.c.h.b16 %v850
        %v1961 = vunpack.c.l.b16 %v851
        %v1962 = vunpack.c.h.b16 %v851
        %v1963 = vunpack.c.l.b16 %v852
        %v1964 = vunpack.c.h.b16 %v852
        %v1965 = vunpack.c.l.b16 %v853
        %v1966 = vunpack.c.h.b16 %v853
        %v1967 = vunpack.c.l.b16 %v854
        %v1968 = vunpack.c.h.b16 %v854
        %v1969 = vunpack.c.l.b16 %v855
        %v1970 = vunpack.c.h.b16 %v855
        %v1971 = vunpack.c.l.b16 %v856
        %v1972 = vunpack.c.l.b16 %v857
        %v1973 = vunpack.c.h.b16 %v857
        %v1974 = vunpack.c.l.b16 %v858
        %v1975 = vunpack.c.h.b16 %v858
        %v1976 = vunpack.c.l.b16 %v859
        %v1977 = vunpack.c.h.b16 %v859
        %v1978 = vunpack.c.l.b16 %v860
        %v1979 = vunpack.c.h.b16 %v860
        %v1980 = vunpack.c.l.b16 %v861
        %v1981 = vunpack.c.h.b16 %v861
        %v1982 = vunpack.c.l.b16 %v862
        %v1983 = vunpack.c.h.b16 %v862
        %v1984 = vunpack.c.l.b16 %v863
        %v1985 = vunpack.c.h.b16 %v863
        %v1986 = vunpack.c.l.b16 %v864
        %v1987 = vunpack.c.l.b16 %v865
        %v1988 = vunpack.c.h.b16 %v865
        %v1989 = vunpack.c.l.b16 %v866
        %v1990 = vunpack.c.h.b16 %v866
        %v1991 = vunpack.c.l.b16 %v867
        %v1992 = vunpack.c.h.b16 %v867
        %v1993 = vunpack.c.l.b16 %v868
        %v1994 = vunpack.c.h.b16 %v868
        %v1995 = vunpack.c.l.b16 %v869
        %v1996 = vunpack.c.h.b16 %v869
        %v1997 = vunpack.c.l.b16 %v870
        %v1998 = vunpack.c.h.b16 %v870
        %v1999 = vunpack.c.l.b16 %v871
        %v2000 = vunpack.c.h.b16 %v871
        %v2001 = vunpack.c.l.b16 %v872
        %v2002 = vunpack.c.l.b16 %v873
        %v2003 = vunpack.c.h.b16 %v873
        %v2004 = vunpack.c.l.b16 %v874
        %v2005 = vunpack.c.h.b16 %v874
        %v2006 = vunpack.c.l.b16 %v875
        %v2007 = vunpack.c.h.b16 %v875
        %v2008 = vunpack.c.l.b16 %v876
        %v2009 = vunpack.c.h.b16 %v876
        %v2010 = vunpack.c.l.b16 %v877
        %v2011 = vunpack.c.h.b16 %v877
        %v2012 = vunpack.c.l.b16 %v878
        %v2013 = vunpack.c.h.b16 %v878
        %v2014 = vunpack.c.l.b16 %v879
        %v2015 = vunpack.c.h.b16 %v879
        %v2016 = vunpack.c.l.b16 %v880
        %v2017 = vunpack.c.l.b16 %v881
        %v2018 = vunpack.c.h.b16 %v881
        %v2019 = vunpack.c.l.b16 %v882
        %v2020 = vunpack.c.h.b16 %v882
        %v2021 = vunpack.c.l.b16 %v883
        %v2022 = vunpack.c.h.b16 %v883
        %v2023 = vunpack.c.l.b16 %v884
        %v2024 = vunpack.c.h.b16 %v884
        %v2025 = vunpack.c.l.b16 %v885
        %v2026 = vunpack.c.h.b16 %v885
        %v2027 = vunpack.c.l.b16 %v886
        %v2028 = vunpack.c.h.b16 %v886
        %v2029 = vunpack.c.l.b16 %v887
        %v2030 = vunpack.c.h.b16 %v887
        %v2031 = vunpack.c.l.b16 %v888
        %v2032 = vunpack.c.l.b16 %v889
        %v2033 = vunpack.c.h.b16 %v889
        %v2034 = vunpack.c.l.b16 %v890
        %v2035 = vunpack.c.h.b16 %v890
        %v2036 = vunpack.c.l.b16 %v891
        %v2037 = vunpack.c.h.b16 %v891
        %v2038 = vunpack.c.l.b16 %v892
        %v2039 = vunpack.c.h.b16 %v892
        %v2040 = vunpack.c.l.b16 %v893
        %v2041 = vunpack.c.h.b16 %v893
        %v2042 = vunpack.c.l.b16 %v894
        %v2043 = vunpack.c.h.b16 %v894
        %v2044 = vunpack.c.l.b16 %v895
        %v2045 = vunpack.c.h.b16 %v895
        %v2046 = vunpack.c.l.b16 %v896
        %v2047 = vunpack.c.l.b16 %v897
        %v2048 = vunpack.c.h.b16 %v897
        %v2049 = vunpack.c.l.b16 %v898
        %v2050 = vunpack.c.h.b16 %v898
        %v2051 = vunpack.c.l.b16 %v899
        %v2052 = vunpack.c.h.b16 %v899
        %v2053 = vunpack.c.l.b16 %v900
        %v2054 = vunpack.c.h.b16 %v900
        %v2055 = vunpack.c.l.b16 %v901
        %v2056 = vunpack.c.h.b16 %v901
        %v2057 = vunpack.c.l.b16 %v902
        %v2058 = vunpack.c.h.b16 %v902
        %v2059 = vunpack.c.l.b16 %v903
        %v2060 = vunpack.c.h.b16 %v903
        %v2061 = vunpack.c.l.b16 %v904
        %v2062 = vunpack.c.l.b16 %v905
        %v2063 = vunpack.c.h.b16 %v905
        %v2064 = vunpack.c.l.b16 %v906
        %v2065 = vunpack.c.h.b16 %v906
        %v2066 = vunpack.c.l.b16 %v907
        %v2067 = vunpack.c.h.b16 %v907
        %v2068 = vunpack.c.l.b16 %v908
        %v2069 = vunpack.c.h.b16 %v908
        %v2070 = vunpack.c.l.b16 %v909
        %v2071 = vunpack.c.h.b16 %v909
        %v2072 = vunpack.c.l.b16 %v910
        %v2073 = vunpack.c.h.b16 %v910
        %v2074 = vunpack.c.l.b16 %v911
        %v2075 = vunpack.c.h.b16 %v911
        %v2076 = vunpack.c.l.b16 %v912
        %v2077 = vunpack.c.l.b16 %v913
        %v2078 = vunpack.c.h.b16 %v913
        %v2079 = vunpack.c.l.b16 %v914
        %v2080 = vunpack.c.h.b16 %v914
        %v2081 = vunpack.c.l.b16 %v915
        %v2082 = vunpack.c.h.b16 %v915
        %v2083 = vunpack.c.l.b16 %v916
        %v2084 = vunpack.c.h.b16 %v916
        %v2085 = vunpack.c.l.b16 %v917
        %v2086 = vunpack.c.h.b16 %v917
        %v2087 = vunpack.c.l.b16 %v918
        %v2088 = vunpack.c.h.b16 %v918
        %v2089 = vunpack.c.l.b16 %v919
        %v2090 = vunpack.c.h.b16 %v919
        %v2091 = vunpack.c.l.b16 %v920
        %v2092 = vunpack.c.l.b16 %v921
        %v2093 = vunpack.c.h.b16 %v921
        %v2094 = vunpack.c.l.b16 %v922
        %v2095 = vunpack.c.h.b16 %v922
        %v2096 = vunpack.c.l.b16 %v923
        %v2097 = vunpack.c.h.b16 %v923
        %v2098 = vunpack.c.l.b16 %v924
        %v2099 = vunpack.c.h.b16 %v924
        %v2100 = vunpack.c.l.b16 %v925
        %v2101 = vunpack.c.h.b16 %v925
        %v2102 = vunpack.c.l.b16 %v926
        %v2103 = vunpack.c.h.b16 %v926
        %v2104 = vunpack.c.l.b16 %v927
        %v2105 = vunpack.c.h.b16 %v927
        %v2106 = vunpack.c.l.b16 %v928
        %v2107 = vunpack.c.l.b16 %v929
        %v2108 = vunpack.c.h.b16 %v929
        %v2109 = vunpack.c.l.b16 %v930
        %v2110 = vunpack.c.h.b16 %v930
        %v2111 = vunpack.c.l.b16 %v931
        %v2112 = vunpack.c.h.b16 %v931
        %v2113 = vunpack.c.l.b16 %v932
        %v2114 = vunpack.c.h.b16 %v932
        %v2115 = vunpack.c.l.b16 %v933
        %v2116 = vunpack.c.h.b16 %v933
        %v2117 = vunpack.c.l.b16 %v934
        %v2118 = vunpack.c.h.b16 %v934
        %v2119 = vunpack.c.l.b16 %v935
        %v2120 = vunpack.c.h.b16 %v935
        %v2121 = vunpack.c.l.b16 %v936
        %v2122 = vunpack.c.l.b16 %v937
        %v2123 = vunpack.c.h.b16 %v937
        %v2124 = vunpack.c.l.b16 %v938
        %v2125 = vunpack.c.h.b16 %v938
        %v2126 = vunpack.c.l.b16 %v939
        %v2127 = vunpack.c.h.b16 %v939
        %v2128 = vunpack.c.l.b16 %v940
        %v2129 = vunpack.c.h.b16 %v940
        %v2130 = vunpack.c.l.b16 %v941
        %v2131 = vunpack.c.h.b16 %v941
        %v2132 = vunpack.c.l.b16 %v942
        %v2133 = vunpack.c.h.b16 %v942
        %v2134 = vunpack.c.l.b16 %v943
        %v2135 = vunpack.c.h.b16 %v943
        %v2136 = vunpack.c.l.b16 %v944
        %v2137 = vunpack.c.l.b16 %v945
        %v2138 = vunpack.c.h.b16 %v945
        %v2139 = vunpack.c.l.b16 %v946
        %v2140 = vunpack.c.h.b16 %v946
        %v2141 = vunpack.c.l.b16 %v947
        %v2142 = vunpack.c.h.b16 %v947
        %v2143 = vunpack.c.l.b16 %v948
        %v2144 = vunpack.c.h.b16 %v948
        %v2145 = vunpack.c.l.b16 %v949
        %v2146 = vunpack.c.h.b16 %v949
        %v2147 = vunpack.c.l.b16 %v950
        %v2148 = vunpack.c.h.b16 %v950
        %v2149 = vunpack.c.l.b16 %v951
        %v2150 = vunpack.c.h.b16 %v951
        %v2151 = vunpack.c.l.b16 %v952
        %v2152 = vunpack.c.l.b16 %v953
        %v2153 = vunpack.c.h.b16 %v953
        %v2154 = vunpack.c.l.b16 %v954
        %v2155 = vunpack.c.h.b16 %v954
        %v2156 = vunpack.c.l.b16 %v955
        %v2157 = vunpack.c.h.b16 %v955
        %v2158 = vunpack.c.l.b16 %v956
        %v2159 = vunpack.c.h.b16 %v956
        %v2160 = vunpack.c.l.b16 %v957
        %v2161 = vunpack.c.h.b16 %v957
        %v2162 = vunpack.c.l.b16 %v958
        %v2163 = vunpack.c.h.b16 %v958
        %v2164 = vunpack.c.l.b16 %v959
        %v2165 = vunpack.c.h.b16 %v959
        %v2166 = vunpack.c.l.b16 %v960
        %v2167 = vunpack.c.l.b16 %v961
        %v2168 = vunpack.c.h.b16 %v961
        %v2169 = vunpack.c.l.b16 %v962
        %v2170 = vunpack.c.h.b16 %v962
        %v2171 = vunpack.c.l.b16 %v963
        %v2172 = vunpack.c.h.b16 %v963
        %v2173 = vunpack.c.l.b16 %v964
        %v2174 = vunpack.c.h.b16 %v964
        %v2175 = vunpack.c.l.b16 %v965
        %v2176 = vunpack.c.h.b16 %v965
        %v2177 = vunpack.c.l.b16 %v966
        %v2178 = vunpack.c.h.b16 %v966
        %v2179 = vunpack.c.l.b16 %v967
        %v2180 = vunpack.c.h.b16 %v967
        %v2181 = vunpack.c.l.b16 %v968
        %v2182 = vunpack.c.l.b16 %v969
        %v2183 = vunpack.c.h.b16 %v969
        %v2184 = vunpack.c.l.b16 %v970
        %v2185 = vunpack.c.h.b16 %v970
        %v2186 = vunpack.c.l.b16 %v971
        %v2187 = vunpack.c.h.b16 %v971
        %v2188 = vunpack.c.l.b16 %v972
        %v2189 = vunpack.c.h.b16 %v972
        %v2190 = vunpack.c.l.b16 %v973
        %v2191 = vunpack.c.h.b16 %v973
        %v2192 = vunpack.c.l.b16 %v974
        %v2193 = vunpack.c.h.b16 %v974
        %v2194 = vunpack.c.l.b16 %v975
        %v2195 = vunpack.c.h.b16 %v975
        %v2196 = vunpack.c.l.b16 %v976
        %v2197 = vunpack.c.l.b16 %v977
        %v2198 = vunpack.c.h.b16 %v977
        %v2199 = vunpack.c.l.b16 %v978
        %v2200 = vunpack.c.h.b16 %v978
        %v2201 = vunpack.c.l.b16 %v979
        %v2202 = vunpack.c.h.b16 %v979
        %v2203 = vunpack.c.l.b16 %v980
        %v2204 = vunpack.c.h.b16 %v980
        %v2205 = vunpack.c.l.b16 %v981
        %v2206 = vunpack.c.h.b16 %v981
        %v2207 = vunpack.c.l.b16 %v982
        %v2208 = vunpack.c.h.b16 %v982
        %v2209 = vunpack.c.l.b16 %v983
        %v2210 = vunpack.c.h.b16 %v983
        %v2211 = vunpack.c.l.b16 %v984
        %v2212 = vunpack.c.l.b16 %v985
        %v2213 = vunpack.c.h.b16 %v985
        %v2214 = vunpack.c.l.b16 %v986
        %v2215 = vunpack.c.h.b16 %v986
        %v2216 = vunpack.c.l.b16 %v987
        %v2217 = vunpack.c.h.b16 %v987
        %v2218 = vunpack.c.l.b16 %v988
        %v2219 = vunpack.c.h.b16 %v988
        %v2220 = vunpack.c.l.b16 %v989
        %v2221 = vunpack.c.h.b16 %v989
        %v2222 = vunpack.c.l.b16 %v990
        %v2223 = vunpack.c.h.b16 %v990
        %v2224 = vunpack.c.l.b16 %v991
        %v2225 = vunpack.c.h.b16 %v991
        %v2226 = vunpack.c.l.b16 %v992
        %v2227 = vunpack.c.l.b16 %v993
        %v2228 = vunpack.c.h.b16 %v993
        %v2229 = vunpack.c.l.b16 %v994
        %v2230 = vunpack.c.h.b16 %v994
        %v2231 = vunpack.c.l.b16 %v995
        %v2232 = vunpack.c.h.b16 %v995
        %v2233 = vunpack.c.l.b16 %v996
        %v2234 = vunpack.c.h.b16 %v996
        %v2235 = vunpack.c.l.b16 %v997
        %v2236 = vunpack.c.h.b16 %v997
        %v2237 = vunpack.c.l.b16 %v998
        %v2238 = vunpack.c.h.b16 %v998
        %v2239 = vunpack.c.l.b16 %v999
        %v2240 = vunpack.c.h.b16 %v999
        %v2241 = vunpack.c.l.b16 %v1000
        %v2242 = vunpack.c.l.b16 %v1001
        %v2243 = vunpack.c.h.b16 %v1001
        %v2244 = vunpack.c.l.b16 %v1002
        %v2245 = vunpack.c.h.b16 %v1002
        %v2246 = vunpack.c.l.b16 %v1003
        %v2247 = vunpack.c.h.b16 %v1003
        %v2248 = vunpack.c.l.b16 %v1004
        %v2249 = vunpack.c.h.b16 %v1004
        %v2250 = vunpack.c.l.b16 %v1005
        %v2251 = vunpack.c.h.b16 %v1005
        %v2252 = vunpack.c.l.b16 %v1006
        %v2253 = vunpack.c.h.b16 %v1006
        %v2254 = vunpack.c.l.b16 %v1007
        %v2255 = vunpack.c.h.b16 %v1007
        %v2256 = vunpack.c.l.b16 %v1008
        %v2257 = vunpack.c.l.b16 %v1009
        %v2258 = vunpack.c.h.b16 %v1009
        %v2259 = vunpack.c.l.b16 %v1010
        %v2260 = vunpack.c.h.b16 %v1010
        %v2261 = vunpack.c.l.b16 %v1011
        %v2262 = vunpack.c.h.b16 %v1011
        %v2263 = vunpack.c.l.b16 %v1012
        %v2264 = vunpack.c.h.b16 %v1012
        %v2265 = vunpack.c.l.b16 %v1013
        %v2266 = vunpack.c.h.b16 %v1013
        %v2267 = vunpack.c.l.b16 %v1014
        %v2268 = vunpack.c.h.b16 %v1014
        %v2269 = vunpack.c.l.b16 %v1015
        %v2270 = vunpack.c.h.b16 %v1015
        %v2271 = vunpack.c.l.b16 %v1016
        %v2272 = vunpack.c.l.b16 %v1017
        %v2273 = vunpack.c.h.b16 %v1017
        %v2274 = vunpack.c.l.b16 %v1018
        %v2275 = vunpack.c.h.b16 %v1018
        %v2276 = vunpack.c.l.b16 %v1019
        %v2277 = vunpack.c.h.b16 %v1019
        %v2278 = vunpack.c.l.b16 %v1020
        %v2279 = vunpack.c.h.b16 %v1020
        %v2280 = vunpack.c.l.b16 %v1021
        %v2281 = vunpack.c.h.b16 %v1021
        %v2282 = vunpack.c.l.b16 %v1022
        %v2283 = vunpack.c.h.b16 %v1022
        %v2284 = vunpack.c.l.b16 %v1023
        %v2285 = vunpack.c.h.b16 %v1023
        %v2286 = vunpack.c.l.b16 %v1024
        %v2287 = vunpack.c.l.b16 %v1025
        %v2288 = vunpack.c.h.b16 %v1025
        %v2289 = vunpack.c.l.b16 %v1026
        %v2290 = vunpack.c.h.b16 %v1026
        %v2291 = vunpack.c.l.b16 %v1027
        %v2292 = vunpack.c.h.b16 %v1027
        %v2293 = vunpack.c.l.b16 %v1028
        %v2294 = vunpack.c.h.b16 %v1028
        %v2295 = vunpack.c.l.b16 %v1029
        %v2296 = vunpack.c.h.b16 %v1029
        %v2297 = vunpack.c.l.b16 %v1030
        %v2298 = vunpack.c.h.b16 %v1030
        %v2299 = vunpack.c.l.b16 %v1031
        %v2300 = vunpack.c.h.b16 %v1031
        %v2301 = vunpack.c.l.b16 %v1032
        %v2302 = vunpack.c.l.b16 %v1033
        %v2303 = vunpack.c.h.b16 %v1033
        %v2304 = vunpack.c.l.b16 %v1034
        %v2305 = vunpack.c.h.b16 %v1034
        %v2306 = vunpack.c.l.b16 %v1035
        %v2307 = vunpack.c.h.b16 %v1035
        %v2308 = vunpack.c.l.b16 %v1036
        %v2309 = vunpack.c.h.b16 %v1036
        %v2310 = vunpack.c.l.b16 %v1037
        %v2311 = vunpack.c.h.b16 %v1037
        %v2312 = vunpack.c.l.b16 %v1038
        %v2313 = vunpack.c.h.b16 %v1038
        %v2314 = vunpack.c.l.b16 %v1039
        %v2315 = vunpack.c.h.b16 %v1039
        %v2316 = vunpack.c.l.b16 %v1040
        %v2317 = vunpack.c.l.b16 %v1041
        %v2318 = vunpack.c.h.b16 %v1041
        %v2319 = vunpack.c.l.b16 %v1042
        %v2320 = vunpack.c.h.b16 %v1042
        %v2321 = vunpack.c.l.b16 %v1043
        %v2322 = vunpack.c.h.b16 %v1043
        %v2323 = vunpack.c.l.b16 %v1044
        %v2324 = vunpack.c.h.b16 %v1044
        %v2325 = vunpack.c.l.b16 %v1045
        %v2326 = vunpack.c.h.b16 %v1045
        %v2327 = vunpack.c.l.b16 %v1046
        %v2328 = vunpack.c.h.b16 %v1046
        %v2329 = vunpack.c.l.b16 %v1047
        %v2330 = vunpack.c.h.b16 %v1047
        %v2331 = vunpack.c.l.b16 %v1048
        %v2332 = vunpack.c.l.b16 %v1049
        %v2333 = vunpack.c.h.b16 %v1049
        %v2334 = vunpack.c.l.b16 %v1050
        %v2335 = vunpack.c.h.b16 %v1050
        %v2336 = vunpack.c.l.b16 %v1051
        %v2337 = vunpack.c.h.b16 %v1051
        %v2338 = vunpack.c.l.b16 %v1052
        %v2339 = vunpack.c.h.b16 %v1052
        %v2340 = vunpack.c.l.b16 %v1053
        %v2341 = vunpack.c.h.b16 %v1053
        %v2342 = vunpack.c.l.b16 %v1054
        %v2343 = vunpack.c.h.b16 %v1054
        %v2344 = vunpack.c.l.b16 %v1055
        %v2345 = vunpack.c.h.b16 %v1055
        %v2346 = vunpack.c.l.b16 %v1056
        %v2347 = vunpack.c.l.b16 %v1057
        %v2348 = vunpack.c.h.b16 %v1057
        %v2349 = vunpack.c.l.b16 %v1058
        %v2350 = vunpack.c.h.b16 %v1058
        %v2351 = vunpack.c.l.b16 %v1059
        %v2352 = vunpack.c.h.b16 %v1059
        %v2353 = vunpack.c.l.b16 %v1060
        %v2354 = vunpack.c.h.b16 %v1060
        %v2355 = vunpack.c.l.b16 %v1061
        %v2356 = vunpack.c.h.b16 %v1061
        %v2357 = vunpack.c.l.b16 %v1062
        %v2358 = vunpack.c.h.b16 %v1062
        %v2359 = vunpack.c.l.b16 %v1063
        %v2360 = vunpack.c.h.b16 %v1063
        %v2361 = vunpack.c.l.b16 %v1064
        %v2362 = vunpack.c.l.b16 %v1065
        %v2363 = vunpack.c.h.b16 %v1065
        %v2364 = vunpack.c.l.b16 %v1066
        %v2365 = vunpack.c.h.b16 %v1066
        %v2366 = vunpack.c.l.b16 %v1067
        %v2367 = vunpack.c.h.b16 %v1067
        %v2368 = vunpack.c.l.b16 %v1068
        %v2369 = vunpack.c.h.b16 %v1068
        %v2370 = vunpack.c.l.b16 %v1069
        %v2371 = vunpack.c.h.b16 %v1069
        %v2372 = vunpack.c.l.b16 %v1070
        %v2373 = vunpack.c.h.b16 %v1070
        %v2374 = vunpack.c.l.b16 %v1071
        %v2375 = vunpack.c.h.b16 %v1071
        %v2376 = vunpack.c.l.b16 %v1072
        %v2377 = vunpack.c.l.b16 %v1073
        %v2378 = vunpack.c.h.b16 %v1073
        %v2379 = vunpack.c.l.b16 %v1074
        %v2380 = vunpack.c.h.b16 %v1074
        %v2381 = vunpack.c.l.b16 %v1075
        %v2382 = vunpack.c.h.b16 %v1075
        %v2383 = vunpack.c.l.b16 %v1076
        %v2384 = vunpack.c.h.b16 %v1076
        %v2385 = vunpack.c.l.b16 %v1077
        %v2386 = vunpack.c.h.b16 %v1077
        %v2387 = vunpack.c.l.b16 %v1078
        %v2388 = vunpack.c.h.b16 %v1078
        %v2389 = vunpack.c.l.b16 %v1079
        %v2390 = vunpack.c.h.b16 %v1079
        %v2391 = vunpack.c.l.b16 %v1080
        %v2392 = vunpack.c.l.b16 %v1081
        %v2393 = vunpack.c.h.b16 %v1081
        %v2394 = vunpack.c.l.b16 %v1082
        %v2395 = vunpack.c.h.b16 %v1082
        %v2396 = vunpack.c.l.b16 %v1083
        %v2397 = vunpack.c.h.b16 %v1083
        %v2398 = vunpack.c.l.b16 %v1084
        %v2399 = vunpack.c.h.b16 %v1084
        %v2400 = vunpack.c.l.b16 %v1085
        %v2401 = vunpack.c.h.b16 %v1085
        %v2402 = vunpack.c.l.b16 %v1086
        %v2403 = vunpack.c.h.b16 %v1086
        %v2404 = vunpack.c.l.b16 %v1087
        %v2405 = vunpack.c.h.b16 %v1087
        %v2406 = vunpack.c.l.b16 %v1088
        %v2407 = vunpack.c.l.b16 %v1089
        %v2408 = vunpack.c.h.b16 %v1089
        %v2409 = vunpack.c.l.b16 %v1090
        %v2410 = vunpack.c.h.b16 %v1090
        %v2411 = vunpack.c.l.b16 %v1091
        %v2412 = vunpack.c.h.b16 %v1091
        %v2413 = vunpack.c.l.b16 %v1092
        %v2414 = vunpack.c.h.b16 %v1092
        %v2415 = vunpack.c.l.b16 %v1093
        %v2416 = vunpack.c.h.b16 %v1093
        %v2417 = vunpack.c.l.b16 %v1094
        %v2418 = vunpack.c.h.b16 %v1094
        %v2419 = vunpack.c.l.b16 %v1095
        %v2420 = vunpack.c.h.b16 %v1095
        %v2421 = vunpack.c.l.b16 %v1096
        %v2422 = vunpack.c.l.b16 %v1097
        %v2423 = vunpack.c.h.b16 %v1097
        %v2424 = vunpack.c.l.b16 %v1098
        %v2425 = vunpack.c.h.b16 %v1098
        %v2426 = vunpack.c.l.b16 %v1099
        %v2427 = vunpack.c.h.b16 %v1099
        %v2428 = vunpack.c.l.b16 %v1100
        %v2429 = vunpack.c.h.b16 %v1100
        %v2430 = vunpack.c.l.b16 %v1101
        %v2431 = vunpack.c.h.b16 %v1101
        %v2432 = vunpack.c.l.b16 %v1102
        %v2433 = vunpack.c.h.b16 %v1102
        %v2434 = vunpack.c.l.b16 %v1103
        %v2435 = vunpack.c.h.b16 %v1103
        %v2436 = vunpack.c.l.b16 %v1104
        %v2437 = vunpack.c.l.b16 %v1105
        %v2438 = vunpack.c.h.b16 %v1105
        %v2439 = vunpack.c.l.b16 %v1106
        %v2440 = vunpack.c.h.b16 %v1106
        %v2441 = vunpack.c.l.b16 %v1107
        %v2442 = vunpack.c.h.b16 %v1107
        %v2443 = vunpack.c.l.b16 %v1108
        %v2444 = vunpack.c.h.b16 %v1108
        %v2445 = vunpack.c.l.b16 %v1109
        %v2446 = vunpack.c.h.b16 %v1109
        %v2447 = vunpack.c.l.b16 %v1110
        %v2448 = vunpack.c.h.b16 %v1110
        %v2449 = vunpack.c.l.b16 %v1111
        %v2450 = vunpack.c.h.b16 %v1111
        %v2451 = vunpack.c.l.b16 %v1112
        %v2452 = vunpack.c.l.b16 %v1113
        %v2453 = vunpack.c.h.b16 %v1113
        %v2454 = vunpack.c.l.b16 %v1114
        %v2455 = vunpack.c.h.b16 %v1114
        %v2456 = vunpack.c.l.b16 %v1115
        %v2457 = vunpack.c.h.b16 %v1115
        %v2458 = vunpack.c.l.b16 %v1116
        %v2459 = vunpack.c.h.b16 %v1116
        %v2460 = vunpack.c.l.b16 %v1117
        %v2461 = vunpack.c.h.b16 %v1117
        %v2462 = vunpack.c.l.b16 %v1118
        %v2463 = vunpack.c.h.b16 %v1118
        %v2464 = vunpack.c.l.b16 %v1119
        %v2465 = vunpack.c.h.b16 %v1119
        %v2466 = vunpack.c.l.b16 %v1120
        %v2467 = vunpack.c.l.b16 %v1121
        %v2468 = vunpack.c.h.b16 %v1121
        %v2469 = vunpack.c.l.b16 %v1122
        %v2470 = vunpack.c.h.b16 %v1122
        %v2471 = vunpack.c.l.b16 %v1123
        %v2472 = vunpack.c.h.b16 %v1123
        %v2473 = vunpack.c.l.b16 %v1124
        %v2474 = vunpack.c.h.b16 %v1124
        %v2475 = vunpack.c.l.b16 %v1125
        %v2476 = vunpack.c.h.b16 %v1125
        %v2477 = vunpack.c.l.b16 %v1126
        %v2478 = vunpack.c.h.b16 %v1126
        %v2479 = vunpack.c.l.b16 %v1127
        %v2480 = vunpack.c.h.b16 %v1127
        %v2481 = vunpack.c.l.b16 %v1128
        %v2482 = vunpack.c.l.b16 %v1129
        %v2483 = vunpack.c.h.b16 %v1129
        %v2484 = vunpack.c.l.b16 %v1130
        %v2485 = vunpack.c.h.b16 %v1130
        %v2486 = vunpack.c.l.b16 %v1131
        %v2487 = vunpack.c.h.b16 %v1131
        %v2488 = vunpack.c.l.b16 %v1132
        %v2489 = vunpack.c.h.b16 %v1132
        %v2490 = vunpack.c.l.b16 %v1133
        %v2491 = vunpack.c.h.b16 %v1133
        %v2492 = vunpack.c.l.b16 %v1134
        %v2493 = vunpack.c.h.b16 %v1134
        %v2494 = vunpack.c.l.b16 %v1135
        %v2495 = vunpack.c.h.b16 %v1135
        %v2496 = vunpack.c.l.b16 %v1136
        %v2497 = vunpack.c.l.b16 %v1137
        %v2498 = vunpack.c.h.b16 %v1137
        %v2499 = vunpack.c.l.b16 %v1138
        %v2500 = vunpack.c.h.b16 %v1138
        %v2501 = vunpack.c.l.b16 %v1139
        %v2502 = vunpack.c.h.b16 %v1139
        %v2503 = vunpack.c.l.b16 %v1140
        %v2504 = vunpack.c.h.b16 %v1140
        %v2505 = vunpack.c.l.b16 %v1141
        %v2506 = vunpack.c.h.b16 %v1141
        %v2507 = vunpack.c.l.b16 %v1142
        %v2508 = vunpack.c.h.b16 %v1142
        %v2509 = vunpack.c.l.b16 %v1143
        %v2510 = vunpack.c.h.b16 %v1143
        %v2511 = vunpack.c.l.b16 %v1144
        %v2512 = vunpack.c.l.b16 %v1145
        %v2513 = vunpack.c.h.b16 %v1145
        %v2514 = vunpack.c.l.b16 %v1146
        %v2515 = vunpack.c.h.b16 %v1146
        %v2516 = vunpack.c.l.b16 %v1147
        %v2517 = vunpack.c.h.b16 %v1147
        %v2518 = vunpack.c.l.b16 %v1148
        %v2519 = vunpack.c.h.b16 %v1148
        %v2520 = vunpack.c.l.b16 %v1149
        %v2521 = vunpack.c.h.b16 %v1149
        %v2522 = vunpack.c.l.b16 %v1150
        %v2523 = vunpack.c.h.b16 %v1150
        %v2524 = vunpack.c.l.b16 %v1151
        %v2525 = vunpack.c.h.b16 %v1151
        %v2526 = vunpack.c.l.b16 %v1152
        %v2527 = vunpack.c.l.b16 %v1153
        %v2528 = vunpack.c.h.b16 %v1153
        %v2529 = vunpack.c.l.b16 %v1154
        %v2530 = vunpack.c.h.b16 %v1154
        %v2531 = vunpack.c.l.b16 %v1155
        %v2532 = vunpack.c.h.b16 %v1155
        %v2533 = vunpack.c.l.b16 %v1156
        %v2534 = vunpack.c.h.b16 %v1156
        %v2535 = vunpack.c.l.b16 %v1157
        %v2536 = vunpack.c.h.b16 %v1157
        %v2537 = vunpack.c.l.b16 %v1158
        %v2538 = vunpack.c.h.b16 %v1158
        %v2539 = vunpack.c.l.b16 %v1159
        %v2540 = vunpack.c.h.b16 %v1159
        %v2541 = vunpack.c.l.b16 %v1160
        %v2542 = vunpack.c.l.b16 %v1161
        %v2543 = vunpack.c.h.b16 %v1161
        %v2544 = vunpack.c.l.b16 %v1162
        %v2545 = vunpack.c.h.b16 %v1162
        %v2546 = vunpack.c.l.b16 %v1163
        %v2547 = vunpack.c.h.b16 %v1163
        %v2548 = vunpack.c.l.b16 %v1164
        %v2549 = vunpack.c.h.b16 %v1164
        %v2550 = vunpack.c.l.b16 %v1165
        %v2551 = vunpack.c.h.b16 %v1165
        %v2552 = vunpack.c.l.b16 %v1166
        %v2553 = vunpack.c.h.b16 %v1166
        %v2554 = vunpack.c.l.b16 %v1167
        %v2555 = vunpack.c.h.b16 %v1167
        %v2556 = vunpack.c.l.b16 %v1168
        %v2557 = vunpack.c.l.b16 %v1169
        %v2558 = vunpack.c.h.b16 %v1169
        %v2559 = vunpack.c.l.b16 %v1170
        %v2560 = vunpack.c.h.b16 %v1170
        %v2561 = vunpack.c.l.b16 %v1171
        %v2562 = vunpack.c.h.b16 %v1171
        %v2563 = vunpack.c.l.b16 %v1172
        %v2564 = vunpack.c.h.b16 %v1172
        %v2565 = vunpack.c.l.b16 %v1173
        %v2566 = vunpack.c.h.b16 %v1173
        %v2567 = vunpack.c.l.b16 %v1174
        %v2568 = vunpack.c.h.b16 %v1174
        %v2569 = vunpack.c.l.b16 %v1175
        %v2570 = vunpack.c.h.b16 %v1175
        %v2571 = vunpack.c.l.b16 %v1176
        %v2572 = vunpack.c.l.b16 %v1177
        %v2573 = vunpack.c.h.b16 %v1177
        %v2574 = vunpack.c.l.b16 %v1178
        %v2575 = vunpack.c.h.b16 %v1178
        %v2576 = vunpack.c.l.b16 %v1179
        %v2577 = vunpack.c.h.b16 %v1179
        %v2578 = vunpack.c.l.b16 %v1180
        %v2579 = vunpack.c.h.b16 %v1180
        %v2580 = vunpack.c.l.b16 %v1181
        %v2581 = vunpack.c.h.b16 %v1181
        %v2582 = vunpack.c.l.b16 %v1182
        %v2583 = vunpack.c.h.b16 %v1182
        %v2584 = vunpack.c.l.b16 %v1183
        %v2585 = vunpack.c.h.b16 %v1183
        %v2586 = vunpack.c.l.b16 %v1184
        %v2587 = vunpack.c.l.b16 %v1185
        %v2588 = vunpack.c.h.b16 %v1185
        %v2589 = vunpack.c.l.b16 %v1186
        %v2590 = vunpack.c.h.b16 %v1186
        %v2591 = vunpack.c.l.b16 %v1187
        %v2592 = vunpack.c.h.b16 %v1187
        %v2593 = vunpack.c.l.b16 %v1188
        %v2594 = vunpack.c.h.b16 %v1188
        %v2595 = vunpack.c.l.b16 %v1189
        %v2596 = vunpack.c.h.b16 %v1189
        %v2597 = vunpack.c.l.b16 %v1190
        %v2598 = vunpack.c.h.b16 %v1190
        %v2599 = vunpack.c.l.b16 %v1191
        %v2600 = vunpack.c.h.b16 %v1191
        %v2601 = vunpack.c.l.b16 %v1192
        %v2602 = vunpack.c.l.b16 %v1193
        %v2603 = vunpack.c.h.b16 %v1193
        %v2604 = vunpack.c.l.b16 %v1194
        %v2605 = vunpack.c.h.b16 %v1194
        %v2606 = vunpack.c.l.b16 %v1195
        %v2607 = vunpack.c.h.b16 %v1195
        %v2608 = vunpack.c.l.b16 %v1196
        %v2609 = vunpack.c.h.b16 %v1196
        %v2610 = vunpack.c.l.b16 %v1197
        %v2611 = vunpack.c.h.b16 %v1197
        %v2612 = vunpack.c.l.b16 %v1198
        %v2613 = vunpack.c.h.b16 %v1198
        %v2614 = vunpack.c.l.b16 %v1199
        %v2615 = vunpack.c.h.b16 %v1199
        %v2616 = vunpack.c.l.b16 %v1200
        %v2617 = vunpack.c.l.b16 %v1201
        %v2618 = vunpack.c.h.b16 %v1201
        %v2619 = vunpack.c.l.b16 %v1202
        %v2620 = vunpack.c.h.b16 %v1202
        %v2621 = vunpack.c.l.b16 %v1203
        %v2622 = vunpack.c.h.b16 %v1203
        %v2623 = vunpack.c.l.b16 %v1204
        %v2624 = vunpack.c.h.b16 %v1204
        %v2625 = vunpack.c.l.b16 %v1205
        %v2626 = vunpack.c.h.b16 %v1205
        %v2627 = vunpack.c.l.b16 %v1206
        %v2628 = vunpack.c.h.b16 %v1206
        %v2629 = vunpack.c.l.b16 %v1207
        %v2630 = vunpack.c.h.b16 %v1207
        %v2631 = vunpack.c.l.b16 %v1208
        %v2632 = vunpack.c.l.b16 %v1209
        %v2633 = vunpack.c.h.b16 %v1209
        %v2634 = vunpack.c.l.b16 %v1210
        %v2635 = vunpack.c.h.b16 %v1210
        %v2636 = vunpack.c.l.b16 %v1211
        %v2637 = vunpack.c.h.b16 %v1211
        %v2638 = vunpack.c.l.b16 %v1212
        %v2639 = vunpack.c.h.b16 %v1212
        %v2640 = vunpack.c.l.b16 %v1213
        %v2641 = vunpack.c.h.b16 %v1213
        %v2642 = vunpack.c.l.b16 %v1214
        %v2643 = vunpack.c.h.b16 %v1214
        %v2644 = vunpack.c.l.b16 %v1215
        %v2645 = vunpack.c.h.b16 %v1215
        %v2646 = vunpack.c.l.b16 %v1216
        %v2647 = vunpack.c.l.b16 %v1217
        %v2648 = vunpack.c.h.b16 %v1217
        %v2649 = vunpack.c.l.b16 %v1218
        %v2650 = vunpack.c.h.b16 %v1218
        %v2651 = vunpack.c.l.b16 %v1219
        %v2652 = vunpack.c.h.b16 %v1219
        %v2653 = vunpack.c.l.b16 %v1220
        %v2654 = vunpack.c.h.b16 %v1220
        %v2655 = vunpack.c.l.b16 %v1221
        %v2656 = vunpack.c.h.b16 %v1221
        %v2657 = vunpack.c.l.b16 %v1222
        %v2658 = vunpack.c.h.b16 %v1222
        %v2659 = vunpack.c.l.b16 %v1223
        %v2660 = vunpack.c.h.b16 %v1223
        %v2661 = vunpack.c.l.b16 %v1224
        %v2662 = vunpack.c.l.b16 %v1225
        %v2663 = vunpack.c.h.b16 %v1225
        %v2664 = vunpack.c.l.b16 %v1226
        %v2665 = vunpack.c.h.b16 %v1226
        %v2666 = vunpack.c.l.b16 %v1227
        %v2667 = vunpack.c.h.b16 %v1227
        %v2668 = vunpack.c.l.b16 %v1228
        %v2669 = vunpack.c.h.b16 %v1228
        %v2670 = vunpack.c.l.b16 %v1229
        %v2671 = vunpack.c.h.b16 %v1229
        %v2672 = vunpack.c.l.b16 %v1230
        %v2673 = vunpack.c.h.b16 %v1230
        %v2674 = vunpack.c.l.b16 %v1231
        %v2675 = vunpack.c.h.b16 %v1231
        %v2676 = vunpack.c.l.b16 %v1232
        %v2677 = vunpack.c.l.b16 %v1233
        %v2678 = vunpack.c.h.b16 %v1233
        %v2679 = vunpack.c.l.b16 %v1234
        %v2680 = vunpack.c.h.b16 %v1234
        %v2681 = vunpack.c.l.b16 %v1235
        %v2682 = vunpack.c.h.b16 %v1235
        %v2683 = vunpack.c.l.b16 %v1236
        %v2684 = vunpack.c.h.b16 %v1236
        %v2685 = vunpack.c.l.b16 %v1237
        %v2686 = vunpack.c.h.b16 %v1237
        %v2687 = vunpack.c.l.b16 %v1238
        %v2688 = vunpack.c.h.b16 %v1238
        %v2689 = vunpack.c.l.b16 %v1239
        %v2690 = vunpack.c.h.b16 %v1239
        %v2691 = vunpack.c.l.b16 %v1240
        %v2692 = vunpack.c.l.b16 %v1241
        %v2693 = vunpack.c.h.b16 %v1241
        %v2694 = vunpack.c.l.b16 %v1242
        %v2695 = vunpack.c.h.b16 %v1242
        %v2696 = vunpack.c.l.b16 %v1243
        %v2697 = vunpack.c.h.b16 %v1243
        %v2698 = vunpack.c.l.b16 %v1244
        %v2699 = vunpack.c.h.b16 %v1244
        %v2700 = vunpack.c.l.b16 %v1245
        %v2701 = vunpack.c.h.b16 %v1245
        %v2702 = vunpack.c.l.b16 %v1246
        %v2703 = vunpack.c.h.b16 %v1246
        %v2704 = vunpack.c.l.b16 %v1247
        %v2705 = vunpack.c.h.b16 %v1247
        %v2706 = vunpack.c.l.b16 %v1248
        %v2707 = vunpack.c.l.b16 %v1249
        %v2708 = vunpack.c.h.b16 %v1249
        %v2709 = vunpack.c.l.b16 %v1250
        %v2710 = vunpack.c.h.b16 %v1250
        %v2711 = vunpack.c.l.b16 %v1251
        %v2712 = vunpack.c.h.b16 %v1251
        %v2713 = vunpack.c.l.b16 %v1252
        %v2714 = vunpack.c.h.b16 %v1252
        %v2715 = vunpack.c.l.b16 %v1253
        %v2716 = vunpack.c.h.b16 %v1253
        %v2717 = vunpack.c.l.b16 %v1254
        %v2718 = vunpack.c.h.b16 %v1254
        %v2719 = vunpack.c.l.b16 %v1255
        %v2720 = vunpack.c.h.b16 %v1255
        %v2721 = vunpack.c.l.b16 %v1256
        %v2722 = vunpack.c.l.b16 %v1257
        %v2723 = vunpack.c.h.b16 %v1257
        %v2724 = vunpack.c.l.b16 %v1258
        %v2725 = vunpack.c.h.b16 %v1258
        %v2726 = vunpack.c.l.b16 %v1259
        %v2727 = vunpack.c.h.b16 %v1259
        %v2728 = vunpack.c.l.b16 %v1260
        %v2729 = vunpack.c.h.b16 %v1260
        %v2730 = vunpack.c.l.b16 %v1261
        %v2731 = vunpack.c.h.b16 %v1261
        %v2732 = vunpack.c.l.b16 %v1262
        %v2733 = vunpack.c.h.b16 %v1262
        %v2734 = vunpack.c.l.b16 %v1263
        %v2735 = vunpack.c.h.b16 %v1263
        %v2736 = vunpack.c.l.b16 %v1264
        %v2737 = vpack.c.b16 %v1792, %v1777
        %v2738 = vpack.c.b16 %v1793, %v1778
        %v2739 = vpack.c.b16 %v1794, %v1779
        %v2740 = vpack.c.b16 %v1795, %v1780
        %v2741 = vpack.c.b16 %v1796, %v1781
        %v2742 = vpack.c.b16 %v1797, %v1782
        %v2743 = vpack.c.b16 %v1798, %v1783
        %v2744 = vpack.c.b16 %v1799, %v1784
        %v2745 = vpack.c.b16 %v1800, %v1785
        %v2746 = vpack.c.b16 %v1801, %v1786
        %v2747 = vpack.c.b16 %v1802, %v1787
        %v2748 = vpack.c.b16 %v1803, %v1788
        %v2749 = vpack.c.b16 %v1804, %v1789
        %v2750 = vpack.c.b16 %v1805, %v1790
        %v2751 = vpack.c.b16 %v1806, %v1791
        %v2752 = vpack.c.b16 %v1822, %v1807
        %v2753 = vpack.c.b16 %v1823, %v1808
        %v2754 = vpack.c.b16 %v1824, %v1809
        %v2755 = vpack.c.b16 %v1825, %v1810
        %v2756 = vpack.c.b16 %v1826, %v1811
        %v2757 = vpack.c.b16 %v1827, %v1812
        %v2758 = vpack.c.b16 %v1828, %v1813
        %v2759 = vpack.c.b16 %v1829, %v1814
        %v2760 = vpack.c.b16 %v1830, %v1815
        %v2761 = vpack.c.b16 %v1831, %v1816
        %v2762 = vpack.c.b16 %v1832, %v1817
        %v2763 = vpack.c.b16 %v1833, %v1818
        %v2764 = vpack.c.b16 %v1834, %v1819
        %v2765 = vpack.c.b16 %v1835, %v1820
        %v2766 = vpack.c.b16 %v1836, %v1821
        %v2767 = vpack.c.b16 %v1852, %v1837
        %v2768 = vpack.c.b16 %v1853, %v1838
        %v2769 = vpack.c.b16 %v1854, %v1839
        %v2770 = vpack.c.b16 %v1855, %v1840
        %v2771 = vpack.c.b16 %v1856, %v1841
        %v2772 = vpack.c.b16 %v1857, %v1842
        %v2773 = vpack.c.b16 %v1858, %v1843
        %v2774 = vpack.c.b16 %v1859, %v1844
        %v2775 = vpack.c.b16 %v1860, %v1845
        %v2776 = vpack.c.b16 %v1861, %v1846
        %v2777 = vpack.c.b16 %v1862, %v1847
        %v2778 = vpack.c.b16 %v1863, %v1848
        %v2779 = vpack.c.b16 %v1864, %v1849
        %v2780 = vpack.c.b16 %v1865, %v1850
        %v2781 = vpack.c.b16 %v1866, %v1851
        %v2782 = vpack.c.b16 %v1882, %v1867
        %v2783 = vpack.c.b16 %v1883, %v1868
        %v2784 = vpack.c.b16 %v1884, %v1869
        %v2785 = vpack.c.b16 %v1885, %v1870
        %v2786 = vpack.c.b16 %v1886, %v1871
        %v2787 = vpack.c.b16 %v1887, %v1872
        %v2788 = vpack.c.b16 %v1888, %v1873
        %v2789 = vpack.c.b16 %v1889, %v1874
        %v2790 = vpack.c.b16 %v1890, %v1875
        %v2791 = vpack.c.b16 %v1891, %v1876
        %v2792 = vpack.c.b16 %v1892, %v1877
        %v2793 = vpack.c.b16 %v1893, %v1878
        %v2794 = vpack.c.b16 %v1894, %v1879
        %v2795 = vpack.c.b16 %v1895, %v1880
        %v2796 = vpack.c.b16 %v1896, %v1881
        %v2797 = vpack.c.b16 %v1912, %v1897
        %v2798 = vpack.c.b16 %v1913, %v1898
        %v2799 = vpack.c.b16 %v1914, %v1899
        %v2800 = vpack.c.b16 %v1915, %v1900
        %v2801 = vpack.c.b16 %v1916, %v1901
        %v2802 = vpack.c.b16 %v1917, %v1902
        %v2803 = vpack.c.b16 %v1918, %v1903
        %v2804 = vpack.c.b16 %v1919, %v1904
        %v2805 = vpack.c.b16 %v1920, %v1905
        %v2806 = vpack.c.b16 %v1921, %v1906
        %v2807 = vpack.c.b16 %v1922, %v1907
        %v2808 = vpack.c.b16 %v1923, %v1908
        %v2809 = vpack.c.b16 %v1924, %v1909
        %v2810 = vpack.c.b16 %v1925, %v1910
        %v2811 = vpack.c.b16 %v1926, %v1911
        %v2812 = vpack.c.b16 %v1942, %v1927
        %v2813 = vpack.c.b16 %v1943, %v1928
        %v2814 = vpack.c.b16 %v1944, %v1929
        %v2815 = vpack.c.b16 %v1945, %v1930
        %v2816 = vpack.c.b16 %v1946, %v1931
        %v2817 = vpack.c.b16 %v1947, %v1932
        %v2818 = vpack.c.b16 %v1948, %v1933
        %v2819 = vpack.c.b16 %v1949, %v1934
        %v2820 = vpack.c.b16 %v1950, %v1935
        %v2821 = vpack.c.b16 %v1951, %v1936
        %v2822 = vpack.c.b16 %v1952, %v1937
        %v2823 = vpack.c.b16 %v1953, %v1938
        %v2824 = vpack.c.b16 %v1954, %v1939
        %v2825 = vpack.c.b16 %v1955, %v1940
        %v2826 = vpack.c.b16 %v1956, %v1941
        %v2827 = vpack.c.b16 %v1972, %v1957
        %v2828 = vpack.c.b16 %v1973, %v1958
        %v2829 = vpack.c.b16 %v1974, %v1959
        %v2830 = vpack.c.b16 %v1975, %v1960
        %v2831 = vpack.c.b16 %v1976, %v1961
        %v2832 = vpack.c.b16 %v1977, %v1962
        %v2833 = vpack.c.b16 %v1978, %v1963
        %v2834 = vpack.c.b16 %v1979, %v1964
        %v2835 = vpack.c.b16 %v1980, %v1965
        %v2836 = vpack.c.b16 %v1981, %v1966
        %v2837 = vpack.c.b16 %v1982, %v1967
        %v2838 = vpack.c.b16 %v1983, %v1968
        %v2839 = vpack.c.b16 %v1984, %v1969
        %v2840 = vpack.c.b16 %v1985, %v1970
        %v2841 = vpack.c.b16 %v1986, %v1971
        %v2842 = vpack.c.b16 %v2002, %v1987
        %v2843 = vpack.c.b16 %v2003, %v1988
        %v2844 = vpack.c.b16 %v2004, %v1989
        %v2845 = vpack.c.b16 %v2005, %v1990
        %v2846 = vpack.c.b16 %v2006, %v1991
        %v2847 = vpack.c.b16 %v2007, %v1992
        %v2848 = vpack.c.b16 %v2008, %v1993
        %v2849 = vpack.c.b16 %v2009, %v1994
        %v2850 = vpack.c.b16 %v2010, %v1995
        %v2851 = vpack.c.b16 %v2011, %v1996
        %v2852 = vpack.c.b16 %v2012, %v1997
        %v2853 = vpack.c.b16 %v2013, %v1998
        %v2854 = vpack.c.b16 %v2014, %v1999
        %v2855 = vpack.c.b16 %v2015, %v2000
        %v2856 = vpack.c.b16 %v2016, %v2001
        %v2857 = vpack.c.b16 %v2032, %v2017
        %v2858 = vpack.c.b16 %v2033, %v2018
        %v2859 = vpack.c.b16 %v2034, %v2019
        %v2860 = vpack.c.b16 %v2035, %v2020
        %v2861 = vpack.c.b16 %v2036, %v2021
        %v2862 = vpack.c.b16 %v2037, %v2022
        %v2863 = vpack.c.b16 %v2038, %v2023
        %v2864 = vpack.c.b16 %v2039, %v2024
        %v2865 = vpack.c.b16 %v2040, %v2025
        %v2866 = vpack.c.b16 %v2041, %v2026
        %v2867 = vpack.c.b16 %v2042, %v2027
        %v2868 = vpack.c.b16 %v2043, %v2028
        %v2869 = vpack.c.b16 %v2044, %v2029
        %v2870 = vpack.c.b16 %v2045, %v2030
        %v2871 = vpack.c.b16 %v2046, %v2031
        %v2872 = vpack.c.b16 %v2062, %v2047
        %v2873 = vpack.c.b16 %v2063, %v2048
        %v2874 = vpack.c.b16 %v2064, %v2049
        %v2875 = vpack.c.b16 %v2065, %v2050
        %v2876 = vpack.c.b16 %v2066, %v2051
        %v2877 = vpack.c.b16 %v2067, %v2052
        %v2878 = vpack.c.b16 %v2068, %v2053
        %v2879 = vpack.c.b16 %v2069, %v2054
        %v2880 = vpack.c.b16 %v2070, %v2055
        %v2881 = vpack.c.b16 %v2071, %v2056
        %v2882 = vpack.c.b16 %v2072, %v2057
        %v2883 = vpack.c.b16 %v2073, %v2058
        %v2884 = vpack.c.b16 %v2074, %v2059
        %v2885 = vpack.c.b16 %v2075, %v2060
        %v2886 = vpack.c.b16 %v2076, %v2061
        %v2887 = vpack.c.b16 %v2092, %v2077
        %v2888 = vpack.c.b16 %v2093, %v2078
        %v2889 = vpack.c.b16 %v2094, %v2079
        %v2890 = vpack.c.b16 %v2095, %v2080
        %v2891 = vpack.c.b16 %v2096, %v2081
        %v2892 = vpack.c.b16 %v2097, %v2082
        %v2893 = vpack.c.b16 %v2098, %v2083
        %v2894 = vpack.c.b16 %v2099, %v2084
        %v2895 = vpack.c.b16 %v2100, %v2085
        %v2896 = vpack.c.b16 %v2101, %v2086
        %v2897 = vpack.c.b16 %v2102, %v2087
        %v2898 = vpack.c.b16 %v2103, %v2088
        %v2899 = vpack.c.b16 %v2104, %v2089
        %v2900 = vpack.c.b16 %v2105, %v2090
        %v2901 = vpack.c.b16 %v2106, %v2091
        %v2902 = vpack.c.b16 %v2122, %v2107
        %v2903 = vpack.c.b16 %v2123, %v2108
        %v2904 = vpack.c.b16 %v2124, %v2109
        %v2905 = vpack.c.b16 %v2125, %v2110
        %v2906 = vpack.c.b16 %v2126, %v2111
        %v2907 = vpack.c.b16 %v2127, %v2112
        %v2908 = vpack.c.b16 %v2128, %v2113
        %v2909 = vpack.c.b16 %v2129, %v2114
        %v2910 = vpack.c.b16 %v2130, %v2115
        %v2911 = vpack.c.b16 %v2131, %v2116
        %v2912 = vpack.c.b16 %v2132, %v2117
        %v2913 = vpack.c.b16 %v2133, %v2118
        %v2914 = vpack.c.b16 %v2134, %v2119
        %v2915 = vpack.c.b16 %v2135, %v2120
        %v2916 = vpack.c.b16 %v2136, %v2121
        %v2917 = vpack.c.b16 %v2152, %v2137
        %v2918 = vpack.c.b16 %v2153, %v2138
        %v2919 = vpack.c.b16 %v2154, %v2139
        %v2920 = vpack.c.b16 %v2155, %v2140
        %v2921 = vpack.c.b16 %v2156, %v2141
        %v2922 = vpack.c.b16 %v2157, %v2142
        %v2923 = vpack.c.b16 %v2158, %v2143
        %v2924 = vpack.c.b16 %v2159, %v2144
        %v2925 = vpack.c.b16 %v2160, %v2145
        %v2926 = vpack.c.b16 %v2161, %v2146
        %v2927 = vpack.c.b16 %v2162, %v2147
        %v2928 = vpack.c.b16 %v2163, %v2148
        %v2929 = vpack.c.b16 %v2164, %v2149
        %v2930 = vpack.c.b16 %v2165, %v2150
        %v2931 = vpack.c.b16 %v2166, %v2151
        %v2932 = vpack.c.b16 %v2182, %v2167
        %v2933 = vpack.c.b16 %v2183, %v2168
        %v2934 = vpack.c.b16 %v2184, %v2169
        %v2935 = vpack.c.b16 %v2185, %v2170
        %v2936 = vpack.c.b16 %v2186, %v2171
        %v2937 = vpack.c.b16 %v2187, %v2172
        %v2938 = vpack.c.b16 %v2188, %v2173
        %v2939 = vpack.c.b16 %v2189, %v2174
        %v2940 = vpack.c.b16 %v2190, %v2175
        %v2941 = vpack.c.b16 %v2191, %v2176
        %v2942 = vpack.c.b16 %v2192, %v2177
        %v2943 = vpack.c.b16 %v2193, %v2178
        %v2944 = vpack.c.b16 %v2194, %v2179
        %v2945 = vpack.c.b16 %v2195, %v2180
        %v2946 = vpack.c.b16 %v2196, %v2181
        %v2947 = vpack.c.b16 %v2212, %v2197
        %v2948 = vpack.c.b16 %v2213, %v2198
        %v2949 = vpack.c.b16 %v2214, %v2199
        %v2950 = vpack.c.b16 %v2215, %v2200
        %v2951 = vpack.c.b16 %v2216, %v2201
        %v2952 = vpack.c.b16 %v2217, %v2202
        %v2953 = vpack.c.b16 %v2218, %v2203
        %v2954 = vpack.c.b16 %v2219, %v2204
        %v2955 = vpack.c.b16 %v2220, %v2205
        %v2956 = vpack.c.b16 %v2221, %v2206
        %v2957 = vpack.c.b16 %v2222, %v2207
        %v2958 = vpack.c.b16 %v2223, %v2208
        %v2959 = vpack.c.b16 %v2224, %v2209
        %v2960 = vpack.c.b16 %v2225, %v2210
        %v2961 = vpack.c.b16 %v2226, %v2211
        %v2962 = vpack.c.b16 %v2242, %v2227
        %v2963 = vpack.c.b16 %v2243, %v2228
        %v2964 = vpack.c.b16 %v2244, %v2229
        %v2965 = vpack.c.b16 %v2245, %v2230
        %v2966 = vpack.c.b16 %v2246, %v2231
        %v2967 = vpack.c.b16 %v2247, %v2232
        %v2968 = vpack.c.b16 %v2248, %v2233
        %v2969 = vpack.c.b16 %v2249, %v2234
        %v2970 = vpack.c.b16 %v2250, %v2235
        %v2971 = vpack.c.b16 %v2251, %v2236
        %v2972 = vpack.c.b16 %v2252, %v2237
        %v2973 = vpack.c.b16 %v2253, %v2238
        %v2974 = vpack.c.b16 %v2254, %v2239
        %v2975 = vpack.c.b16 %v2255, %v2240
        %v2976 = vpack.c.b16 %v2256, %v2241
        %v2977 = vpack.c.b16 %v2272, %v2257
        %v2978 = vpack.c.b16 %v2273, %v2258
        %v2979 = vpack.c.b16 %v2274, %v2259
        %v2980 = vpack.c.b16 %v2275, %v2260
        %v2981 = vpack.c.b16 %v2276, %v2261
        %v2982 = vpack.c.b16 %v2277, %v2262
        %v2983 = vpack.c.b16 %v2278, %v2263
        %v2984 = vpack.c.b16 %v2279, %v2264
        %v2985 = vpack.c.b16 %v2280, %v2265
        %v2986 = vpack.c.b16 %v2281, %v2266
        %v2987 = vpack.c.b16 %v2282, %v2267
        %v2988 = vpack.c.b16 %v2283, %v2268
        %v2989 = vpack.c.b16 %v2284, %v2269
        %v2990 = vpack.c.b16 %v2285, %v2270
        %v2991 = vpack.c.b16 %v2286, %v2271
        %v2992 = vpack.c.b16 %v2302, %v2287
        %v2993 = vpack.c.b16 %v2303, %v2288
        %v2994 = vpack.c.b16 %v2304, %v2289
        %v2995 = vpack.c.b16 %v2305, %v2290
        %v2996 = vpack.c.b16 %v2306, %v2291
        %v2997 = vpack.c.b16 %v2307, %v2292
        %v2998 = vpack.c.b16 %v2308, %v2293
        %v2999 = vpack.c.b16 %v2309, %v2294
        %v3000 = vpack.c.b16 %v2310, %v2295
        %v3001 = vpack.c.b16 %v2311, %v2296
        %v3002 = vpack.c.b16 %v2312, %v2297
        %v3003 = vpack.c.b16 %v2313, %v2298
        %v3004 = vpack.c.b16 %v2314, %v2299
        %v3005 = vpack.c.b16 %v2315, %v2300
        %v3006 = vpack.c.b16 %v2316, %v2301
        %v3007 = vpack.c.b16 %v2332, %v2317
        %v3008 = vpack.c.b16 %v2333, %v2318
        %v3009 = vpack.c.b16 %v2334, %v2319
        %v3010 = vpack.c.b16 %v2335, %v2320
        %v3011 = vpack.c.b16 %v2336, %v2321
        %v3012 = vpack.c.b16 %v2337, %v2322
        %v3013 = vpack.c.b16 %v2338, %v2323
        %v3014 = vpack.c.b16 %v2339, %v2324
        %v3015 = vpack.c.b16 %v2340, %v2325
        %v3016 = vpack.c.b16 %v2341, %v2326
        %v3017 = vpack.c.b16 %v2342, %v2327
        %v3018 = vpack.c.b16 %v2343, %v2328
        %v3019 = vpack.c.b16 %v2344, %v2329
        %v3020 = vpack.c.b16 %v2345, %v2330
        %v3021 = vpack.c.b16 %v2346, %v2331
        %v3022 = vpack.c.b16 %v2362, %v2347
        %v3023 = vpack.c.b16 %v2363, %v2348
        %v3024 = vpack.c.b16 %v2364, %v2349
        %v3025 = vpack.c.b16 %v2365, %v2350
        %v3026 = vpack.c.b16 %v2366, %v2351
        %v3027 = vpack.c.b16 %v2367, %v2352
        %v3028 = vpack.c.b16 %v2368, %v2353
        %v3029 = vpack.c.b16 %v2369, %v2354
        %v3030 = vpack.c.b16 %v2370, %v2355
        %v3031 = vpack.c.b16 %v2371, %v2356
        %v3032 = vpack.c.b16 %v2372, %v2357
        %v3033 = vpack.c.b16 %v2373, %v2358
        %v3034 = vpack.c.b16 %v2374, %v2359
        %v3035 = vpack.c.b16 %v2375, %v2360
        %v3036 = vpack.c.b16 %v2376, %v2361
        %v3037 = vpack.c.b16 %v2392, %v2377
        %v3038 = vpack.c.b16 %v2393, %v2378
        %v3039 = vpack.c.b16 %v2394, %v2379
        %v3040 = vpack.c.b16 %v2395, %v2380
        %v3041 = vpack.c.b16 %v2396, %v2381
        %v3042 = vpack.c.b16 %v2397, %v2382
        %v3043 = vpack.c.b16 %v2398, %v2383
        %v3044 = vpack.c.b16 %v2399, %v2384
        %v3045 = vpack.c.b16 %v2400, %v2385
        %v3046 = vpack.c.b16 %v2401, %v2386
        %v3047 = vpack.c.b16 %v2402, %v2387
        %v3048 = vpack.c.b16 %v2403, %v2388
        %v3049 = vpack.c.b16 %v2404, %v2389
        %v3050 = vpack.c.b16 %v2405, %v2390
        %v3051 = vpack.c.b16 %v2406, %v2391
        %v3052 = vpack.c.b16 %v2422, %v2407
        %v3053 = vpack.c.b16 %v2423, %v2408
        %v3054 = vpack.c.b16 %v2424, %v2409
        %v3055 = vpack.c.b16 %v2425, %v2410
        %v3056 = vpack.c.b16 %v2426, %v2411
        %v3057 = vpack.c.b16 %v2427, %v2412
        %v3058 = vpack.c.b16 %v2428, %v2413
        %v3059 = vpack.c.b16 %v2429, %v2414
        %v3060 = vpack.c.b16 %v2430, %v2415
        %v3061 = vpack.c.b16 %v2431, %v2416
        %v3062 = vpack.c.b16 %v2432, %v2417
        %v3063 = vpack.c.b16 %v2433, %v2418
        %v3064 = vpack.c.b16 %v2434, %v2419
        %v3065 = vpack.c.b16 %v2435, %v2420
        %v3066 = vpack.c.b16 %v2436, %v2421
        %v3067 = vpack.c.b16 %v2452, %v2437
        %v3068 = vpack.c.b16 %v2453, %v2438
        %v3069 = vpack.c.b16 %v2454, %v2439
        %v3070 = vpack.c.b16 %v2455, %v2440
        %v3071 = vpack.c.b16 %v2456, %v2441
        %v3072 = vpack.c.b16 %v2457, %v2442
        %v3073 = vpack.c.b16 %v2458, %v2443
        %v3074 = vpack.c.b16 %v2459, %v2444
        %v3075 = vpack.c.b16 %v2460, %v2445
        %v3076 = vpack.c.b16 %v2461, %v2446
        %v3077 = vpack.c.b16 %v2462, %v2447
        %v3078 = vpack.c.b16 %v2463, %v2448
        %v3079 = vpack.c.b16 %v2464, %v2449
        %v3080 = vpack.c.b16 %v2465, %v2450
        %v3081 = vpack.c.b16 %v2466, %v2451
        %v3082 = vpack.c.b16 %v2482, %v2467
        %v3083 = vpack.c.b16 %v2483, %v2468
        %v3084 = vpack.c.b16 %v2484, %v2469
        %v3085 = vpack.c.b16 %v2485, %v2470
        %v3086 = vpack.c.b16 %v2486, %v2471
        %v3087 = vpack.c.b16 %v2487, %v2472
        %v3088 = vpack.c.b16 %v2488, %v2473
        %v3089 = vpack.c.b16 %v2489, %v2474
        %v3090 = vpack.c.b16 %v2490, %v2475
        %v3091 = vpack.c.b16 %v2491, %v2476
        %v3092 = vpack.c.b16 %v2492, %v2477
        %v3093 = vpack.c.b16 %v2493, %v2478
        %v3094 = vpack.c.b16 %v2494, %v2479
        %v3095 = vpack.c.b16 %v2495, %v2480
        %v3096 = vpack.c.b16 %v2496, %v2481
        %v3097 = vpack.c.b16 %v2512, %v2497
        %v3098 = vpack.c.b16 %v2513, %v2498
        %v3099 = vpack.c.b16 %v2514, %v2499
        %v3100 = vpack.c.b16 %v2515, %v2500
        %v3101 = vpack.c.b16 %v2516, %v2501
        %v3102 = vpack.c.b16 %v2517, %v2502
        %v3103 = vpack.c.b16 %v2518, %v2503
        %v3104 = vpack.c.b16 %v2519, %v2504
        %v3105 = vpack.c.b16 %v2520, %v2505
        %v3106 = vpack.c.b16 %v2521, %v2506
        %v3107 = vpack.c.b16 %v2522, %v2507
        %v3108 = vpack.c.b16 %v2523, %v2508
        %v3109 = vpack.c.b16 %v2524, %v2509
        %v3110 = vpack.c.b16 %v2525, %v2510
        %v3111 = vpack.c.b16 %v2526, %v2511
        %v3112 = vpack.c.b16 %v2542, %v2527
        %v3113 = vpack.c.b16 %v2543, %v2528
        %v3114 = vpack.c.b16 %v2544, %v2529
        %v3115 = vpack.c.b16 %v2545, %v2530
        %v3116 = vpack.c.b16 %v2546, %v2531
        %v3117 = vpack.c.b16 %v2547, %v2532
        %v3118 = vpack.c.b16 %v2548, %v2533
        %v3119 = vpack.c.b16 %v2549, %v2534
        %v3120 = vpack.c.b16 %v2550, %v2535
        %v3121 = vpack.c.b16 %v2551, %v2536
        %v3122 = vpack.c.b16 %v2552, %v2537
        %v3123 = vpack.c.b16 %v2553, %v2538
        %v3124 = vpack.c.b16 %v2554, %v2539
        %v3125 = vpack.c.b16 %v2555, %v2540
        %v3126 = vpack.c.b16 %v2556, %v2541
        %v3127 = vpack.c.b16 %v2572, %v2557
        %v3128 = vpack.c.b16 %v2573, %v2558
        %v3129 = vpack.c.b16 %v2574, %v2559
        %v3130 = vpack.c.b16 %v2575, %v2560
        %v3131 = vpack.c.b16 %v2576, %v2561
        %v3132 = vpack.c.b16 %v2577, %v2562
        %v3133 = vpack.c.b16 %v2578, %v2563
        %v3134 = vpack.c.b16 %v2579, %v2564
        %v3135 = vpack.c.b16 %v2580, %v2565
        %v3136 = vpack.c.b16 %v2581, %v2566
        %v3137 = vpack.c.b16 %v2582, %v2567
        %v3138 = vpack.c.b16 %v2583, %v2568
        %v3139 = vpack.c.b16 %v2584, %v2569
        %v3140 = vpack.c.b16 %v2585, %v2570
        %v3141 = vpack.c.b16 %v2586, %v2571
        %v3142 = vpack.c.b16 %v2602, %v2587
        %v3143 = vpack.c.b16 %v2603, %v2588
        %v3144 = vpack.c.b16 %v2604, %v2589
        %v3145 = vpack.c.b16 %v2605, %v2590
        %v3146 = vpack.c.b16 %v2606, %v2591
        %v3147 = vpack.c.b16 %v2607, %v2592
        %v3148 = vpack.c.b16 %v2608, %v2593
        %v3149 = vpack.c.b16 %v2609, %v2594
        %v3150 = vpack.c.b16 %v2610, %v2595
        %v3151 = vpack.c.b16 %v2611, %v2596
        %v3152 = vpack.c.b16 %v2612, %v2597
        %v3153 = vpack.c.b16 %v2613, %v2598
        %v3154 = vpack.c.b16 %v2614, %v2599
        %v3155 = vpack.c.b16 %v2615, %v2600
        %v3156 = vpack.c.b16 %v2616, %v2601
        %v3157 = vpack.c.b16 %v2632, %v2617
        %v3158 = vpack.c.b16 %v2633, %v2618
        %v3159 = vpack.c.b16 %v2634, %v2619
        %v3160 = vpack.c.b16 %v2635, %v2620
        %v3161 = vpack.c.b16 %v2636, %v2621
        %v3162 = vpack.c.b16 %v2637, %v2622
        %v3163 = vpack.c.b16 %v2638, %v2623
        %v3164 = vpack.c.b16 %v2639, %v2624
        %v3165 = vpack.c.b16 %v2640, %v2625
        %v3166 = vpack.c.b16 %v2641, %v2626
        %v3167 = vpack.c.b16 %v2642, %v2627
        %v3168 = vpack.c.b16 %v2643, %v2628
        %v3169 = vpack.c.b16 %v2644, %v2629
        %v3170 = vpack.c.b16 %v2645, %v2630
        %v3171 = vpack.c.b16 %v2646, %v2631
        %v3172 = vpack.c.b16 %v2662, %v2647
        %v3173 = vpack.c.b16 %v2663, %v2648
        %v3174 = vpack.c.b16 %v2664, %v2649
        %v3175 = vpack.c.b16 %v2665, %v2650
        %v3176 = vpack.c.b16 %v2666, %v2651
        %v3177 = vpack.c.b16 %v2667, %v2652
        %v3178 = vpack.c.b16 %v2668, %v2653
        %v3179 = vpack.c.b16 %v2669, %v2654
        %v3180 = vpack.c.b16 %v2670, %v2655
        %v3181 = vpack.c.b16 %v2671, %v2656
        %v3182 = vpack.c.b16 %v2672, %v2657
        %v3183 = vpack.c.b16 %v2673, %v2658
        %v3184 = vpack.c.b16 %v2674, %v2659
        %v3185 = vpack.c.b16 %v2675, %v2660
        %v3186 = vpack.c.b16 %v2676, %v2661
        %v3187 = vpack.c.b16 %v2692, %v2677
        %v3188 = vpack.c.b16 %v2693, %v2678
        %v3189 = vpack.c.b16 %v2694, %v2679
        %v3190 = vpack.c.b16 %v2695, %v2680
        %v3191 = vpack.c.b16 %v2696, %v2681
        %v3192 = vpack.c.b16 %v2697, %v2682
        %v3193 = vpack.c.b16 %v2698, %v2683
        %v3194 = vpack.c.b16 %v2699, %v2684
        %v3195 = vpack.c.b16 %v2700, %v2685
        %v3196 = vpack.c.b16 %v2701, %v2686
        %v3197 = vpack.c.b16 %v2702, %v2687
        %v3198 = vpack.c.b16 %v2703, %v2688
        %v3199 = vpack.c.b16 %v2704, %v2689
        %v3200 = vpack.c.b16 %v2705, %v2690
        %v3201 = vpack.c.b16 %v2706, %v2691
        %v3202 = vpack.c.b16 %v2722, %v2707
        %v3203 = vpack.c.b16 %v2723, %v2708
        %v3204 = vpack.c.b16 %v2724, %v2709
        %v3205 = vpack.c.b16 %v2725, %v2710
        %v3206 = vpack.c.b16 %v2726, %v2711
        %v3207 = vpack.c.b16 %v2727, %v2712
        %v3208 = vpack.c.b16 %v2728, %v2713
        %v3209 = vpack.c.b16 %v2729, %v2714
        %v3210 = vpack.c.b16 %v2730, %v2715
        %v3211 = vpack.c.b16 %v2731, %v2716
        %v3212 = vpack.c.b16 %v2732, %v2717
        %v3213 = vpack.c.b16 %v2733, %v2718
        %v3214 = vpack.c.b16 %v2734, %v2719
        %v3215 = vpack.c.b16 %v2735, %v2720
        %v3216 = vpack.c.b16 %v2736, %v2721
        %3697 = vmatprep.subr.bf16.mxu0 %v2738
        %3698 = vmatpush1.bf16.xpose.msra.mxu0 %v2737
        %3699 = vmatprep.subr.bf16.mxu0 %v2753
        %3700 = vmatpush1.bf16.xpose.msra.mxu0 %v2752
        %3701 = vmatprep.subr.bf16.mxu0 %v2768
        %3702 = vmatpush1.bf16.xpose.msra.mxu0 %v2767
        %3703 = vmatprep.subr.bf16.mxu0 %v2783
        %3704 = vmatpush1.bf16.xpose.msra.mxu0 %v2782
        %3705 = vmatprep.subr.bf16.mxu0 %v2798
        %3706 = vmatpush1.bf16.xpose.msra.mxu0 %v2797
        %3707 = vmatprep.subr.bf16.mxu0 %v2813
        %3708 = vmatpush1.bf16.xpose.msra.mxu0 %v2812
        %3709 = vmatprep.subr.bf16.mxu0 %v2828
        %3710 = vmatpush1.bf16.xpose.msra.mxu0 %v2827
        %3711 = vmatprep.subr.bf16.mxu0 %v2843
        %3712 = vmatpush1.bf16.xpose.msra.mxu0 %v2842
        %3713 = vmatprep.subr.bf16.mxu0 %v2858
        %3714 = vmatpush1.bf16.xpose.msra.mxu0 %v2857
        %3715 = vmatprep.subr.bf16.mxu0 %v2873
        %3716 = vmatpush1.bf16.xpose.msra.mxu0 %v2872
        %3717 = vmatprep.subr.bf16.mxu0 %v2888
        %3718 = vmatpush1.bf16.xpose.msra.mxu0 %v2887
        %3719 = vmatprep.subr.bf16.mxu0 %v2903
        %3720 = vmatpush1.bf16.xpose.msra.mxu0 %v2902
        %3721 = vmatprep.subr.bf16.mxu0 %v2918
        %3722 = vmatpush1.bf16.xpose.msra.mxu0 %v2917
        %3723 = vmatprep.subr.bf16.mxu0 %v2933
        %3724 = vmatpush1.bf16.xpose.msra.mxu0 %v2932
        %3725 = vmatprep.subr.bf16.mxu0 %v2948
        %3726 = vmatpush1.bf16.xpose.msra.mxu0 %v2947
        %3727 = vmatprep.subr.bf16.mxu0 %v2963
        %3728 = vmatpush1.bf16.xpose.msra.mxu0 %v2962
        %3729 = vmatprep.mubr.bf16.mxu0 %v694
        %3730 = vmatmul.mubr.bf16.gmra.mrb[0].mxu0 %v693
        %v3731 = vpop.f32.mrb[0].mxu0
        %v3732 = vadd.f32 0.0, %v3731
        %v3733 = vpop.f32.mrb[0].mxu0
        %v3734 = vadd.f32 0.0, %v3733
        %v3735 = vpop.f32.mrb[0].mxu0
        %v3736 = vadd.f32 0.0, %v3735
        %v3737 = vpop.f32.mrb[0].mxu0
        %v3738 = vadd.f32 0.0, %v3737
        %3739 = vmatprep.mubr.bf16.mxu0 %v709
        %3740 = vmatmul.mubr.bf16.gmra.mrb[0].mxu0 %v708
        %v3741 = vpop.f32.mrb[0].mxu0
        %v3742 = vadd.f32 0.0, %v3741
        %v3743 = vpop.f32.mrb[0].mxu0
        %v3744 = vadd.f32 0.0, %v3743
        %v3745 = vpop.f32.mrb[0].mxu0
        %v3746 = vadd.f32 0.0, %v3745
        %v3747 = vpop.f32.mrb[0].mxu0
        %v3748 = vadd.f32 0.0, %v3747
        %3749 = vmatprep.mubr.bf16.mxu0 %v724
        %3750 = vmatmul.mubr.bf16.gmra.mrb[0].mxu0 %v723
        %v3751 = vpop.f32.mrb[0].mxu0
        %v3752 = vadd.f32 0.0, %v3751
        %v3753 = vpop.f32.mrb[0].mxu0
        %v3754 = vadd.f32 0.0, %v3753
        %v3755 = vpop.f32.mrb[0].mxu0
        %v3756 = vadd.f32 0.0, %v3755
        %v3757 = vpop.f32.mrb[0].mxu0
        %v3758 = vadd.f32 0.0, %v3757
        %3759 = vmatprep.mubr.bf16.mxu0 %v739
        %3760 = vmatmul.mubr.bf16.gmra.mrb[0].mxu0 %v738
        %v3761 = vpop.f32.mrb[0].mxu0
        %v3762 = vadd.f32 0.0, %v3761
        %v3763 = vpop.f32.mrb[0].mxu0
        %v3764 = vadd.f32 0.0, %v3763
        %v3765 = vpop.f32.mrb[0].mxu0
        %v3766 = vadd.f32 0.0, %v3765
        %v3767 = vpop.f32.mrb[0].mxu0
        %v3768 = vadd.f32 0.0, %v3767
        %3769 = vdwg.mxu0
        %3770 = vmatprep.subr.bf16.mxu0 %v2740
        %3771 = vmatpush1.bf16.xpose.msra.mxu0 %v2739
        %3772 = vmatprep.subr.bf16.mxu0 %v2755
        %3773 = vmatpush1.bf16.xpose.msra.mxu0 %v2754
        %3774 = vmatprep.subr.bf16.mxu0 %v2770
        %3775 = vmatpush1.bf16.xpose.msra.mxu0 %v2769
        %3776 = vmatprep.subr.bf16.mxu0 %v2785
        %3777 = vmatpush1.bf16.xpose.msra.mxu0 %v2784
        %3778 = vmatprep.subr.bf16.mxu0 %v2800
        %3779 = vmatpush1.bf16.xpose.msra.mxu0 %v2799
        %3780 = vmatprep.subr.bf16.mxu0 %v2815
        %3781 = vmatpush1.bf16.xpose.msra.mxu0 %v2814
        %3782 = vmatprep.subr.bf16.mxu0 %v2830
        %3783 = vmatpush1.bf16.xpose.msra.mxu0 %v2829
        %3784 = vmatprep.subr.bf16.mxu0 %v2845
        %3785 = vmatpush1.bf16.xpose.msra.mxu0 %v2844
        %3786 = vmatprep.subr.bf16.mxu0 %v2860
        %3787 = vmatpush1.bf16.xpose.msra.mxu0 %v2859
        %3788 = vmatprep.subr.bf16.mxu0 %v2875
        %3789 = vmatpush1.bf16.xpose.msra.mxu0 %v2874
        %3790 = vmatprep.subr.bf16.mxu0 %v2890
        %3791 = vmatpush1.bf16.xpose.msra.mxu0 %v2889
        %3792 = vmatprep.subr.bf16.mxu0 %v2905
        %3793 = vmatpush1.bf16.xpose.msra.mxu0 %v2904
        %3794 = vmatprep.subr.bf16.mxu0 %v2920
        %3795 = vmatpush1.bf16.xpose.msra.mxu0 %v2919
        %3796 = vmatprep.subr.bf16.mxu0 %v2935
        %3797 = vmatpush1.bf16.xpose.msra.mxu0 %v2934
        %3798 = vmatprep.subr.bf16.mxu0 %v2950
        %3799 = vmatpush1.bf16.xpose.msra.mxu0 %v2949
        %3800 = vmatprep.subr.bf16.mxu0 %v2965
        %3801 = vmatpush1.bf16.xpose.msra.mxu0 %v2964
        %3802 = vmatprep.mubr.bf16.mxu0 %v696
        %3803 = vmatmul.mubr.bf16.gmra.mrb[0].mxu0 %v695
        %v3804 = vpop.f32.mrb[0].mxu0
        %v3805 = vadd.f32 %v3732, %v3804
        %v3806 = vpop.f32.mrb[0].mxu0
        %v3807 = vadd.f32 %v3734, %v3806
        %v3808 = vpop.f32.mrb[0].mxu0
        %v3809 = vadd.f32 %v3736, %v3808
        %v3810 = vpop.f32.mrb[0].mxu0
        %v3811 = vadd.f32 %v3738, %v3810
        %3812 = vmatprep.mubr.bf16.mxu0 %v711
        %3813 = vmatmul.mubr.bf16.gmra.mrb[0].mxu0 %v710
        %v3814 = vpop.f32.mrb[0].mxu0
        %v3815 = vadd.f32 %v3742, %v3814
        %v3816 = vpop.f32.mrb[0].mxu0
        %v3817 = vadd.f32 %v3744, %v3816
        %v3818 = vpop.f32.mrb[0].mxu0
        %v3819 = vadd.f32 %v3746, %v3818
        %v3820 = vpop.f32.mrb[0].mxu0
        %v3821 = vadd.f32 %v3748, %v3820
        %3822 = vmatprep.mubr.bf16.mxu0 %v726
        %3823 = vmatmul.mubr.bf16.gmra.mrb[0].mxu0 %v725
        %v3824 = vpop.f32.mrb[0].mxu0
        %v3825 = vadd.f32 %v3752, %v3824
        %v3826 = vpop.f32.mrb[0].mxu0
        %v3827 = vadd.f32 %v3754, %v3826
        %v3828 = vpop.f32.mrb[0].mxu0
        %v3829 = vadd.f32 %v3756, %v3828
        %v3830 = vpop.f32.mrb[0].mxu0
        %v3831 = vadd.f32 %v3758, %v3830
        %3832 = vmatprep.mubr.bf16.mxu0 %v741
        %3833 = vmatmul.mubr.bf16.gmra.mrb[0].mxu0 %v740
        %v3834 = vpop.f32.mrb[0].mxu0
        %v3835 = vadd.f32 %v3762, %v3834
        %v3836 = vpop.f32.mrb[0].mxu0
        %v3837 = vadd.f32 %v3764, %v3836
        %v3838 = vpop.f32.mrb[0].mxu0
        %v3839 = vadd.f32 %v3766, %v3838
        %v3840 = vpop.f32.mrb[0].mxu0
        %v3841 = vadd.f32 %v3768, %v3840
        %3842 = vdwg.mxu0
        %3843 = vmatprep.subr.bf16.mxu0 %v2742
        %3844 = vmatpush1.bf16.xpose.msra.mxu0 %v2741
        %3845 = vmatprep.subr.bf16.mxu0 %v2757
        %3846 = vmatpush1.bf16.xpose.msra.mxu0 %v2756
        %3847 = vmatprep.subr.bf16.mxu0 %v2772
        %3848 = vmatpush1.bf16.xpose.msra.mxu0 %v2771
        %3849 = vmatprep.subr.bf16.mxu0 %v2787
        %3850 = vmatpush1.bf16.xpose.msra.mxu0 %v2786
        %3851 = vmatprep.subr.bf16.mxu0 %v2802
        %3852 = vmatpush1.bf16.xpose.msra.mxu0 %v2801
        %3853 = vmatprep.subr.bf16.mxu0 %v2817
        %3854 = vmatpush1.bf16.xpose.msra.mxu0 %v2816
        %3855 = vmatprep.subr.bf16.mxu0 %v2832
        %3856 = vmatpush1.bf16.xpose.msra.mxu0 %v2831
        %3857 = vmatprep.subr.bf16.mxu0 %v2847
        %3858 = vmatpush1.bf16.xpose.msra.mxu0 %v2846
        %3859 = vmatprep.subr.bf16.mxu0 %v2862
        %3860 = vmatpush1.bf16.xpose.msra.mxu0 %v2861
        %3861 = vmatprep.subr.bf16.mxu0 %v2877
        %3862 = vmatpush1.bf16.xpose.msra.mxu0 %v2876
        %3863 = vmatprep.subr.bf16.mxu0 %v2892
        %3864 = vmatpush1.bf16.xpose.msra.mxu0 %v2891
        %3865 = vmatprep.subr.bf16.mxu0 %v2907
        %3866 = vmatpush1.bf16.xpose.msra.mxu0 %v2906
        %3867 = vmatprep.subr.bf16.mxu0 %v2922
        %3868 = vmatpush1.bf16.xpose.msra.mxu0 %v2921
        %3869 = vmatprep.subr.bf16.mxu0 %v2937
        %3870 = vmatpush1.bf16.xpose.msra.mxu0 %v2936
        %3871 = vmatprep.subr.bf16.mxu0 %v2952
        %3872 = vmatpush1.bf16.xpose.msra.mxu0 %v2951
        %3873 = vmatprep.subr.bf16.mxu0 %v2967
        %3874 = vmatpush1.bf16.xpose.msra.mxu0 %v2966
        %3875 = vmatprep.mubr.bf16.mxu0 %v698
        %3876 = vmatmul.mubr.bf16.gmra.mrb[0].mxu0 %v697
        %v3877 = vpop.f32.mrb[0].mxu0
        %v3878 = vadd.f32 %v3805, %v3877
        %v3879 = vpop.f32.mrb[0].mxu0
        %v3880 = vadd.f32 %v3807, %v3879
        %v3881 = vpop.f32.mrb[0].mxu0
        %v3882 = vadd.f32 %v3809, %v3881
        %v3883 = vpop.f32.mrb[0].mxu0
        %v3884 = vadd.f32 %v3811, %v3883
        %3885 = vmatprep.mubr.bf16.mxu0 %v713
        %3886 = vmatmul.mubr.bf16.gmra.mrb[0].mxu0 %v712
        %v3887 = vpop.f32.mrb[0].mxu0
        %v3888 = vadd.f32 %v3815, %v3887
        %v3889 = vpop.f32.mrb[0].mxu0
        %v3890 = vadd.f32 %v3817, %v3889
        %v3891 = vpop.f32.mrb[0].mxu0
        %v3892 = vadd.f32 %v3819, %v3891
        %v3893 = vpop.f32.mrb[0].mxu0
        %v3894 = vadd.f32 %v3821, %v3893
        %3895 = vmatprep.mubr.bf16.mxu0 %v728
        %3896 = vmatmul.mubr.bf16.gmra.mrb[0].mxu0 %v727
        %v3897 = vpop.f32.mrb[0].mxu0
        %v3898 = vadd.f32 %v3825, %v3897
        %v3899 = vpop.f32.mrb[0].mxu0
        %v3900 = vadd.f32 %v3827, %v3899
        %v3901 = vpop.f32.mrb[0].mxu0
        %v3902 = vadd.f32 %v3829, %v3901
        %v3903 = vpop.f32.mrb[0].mxu0
        %v3904 = vadd.f32 %v3831, %v3903
        %3905 = vmatprep.mubr.bf16.mxu0 %v743
        %3906 = vmatmul.mubr.bf16.gmra.mrb[0].mxu0 %v742
        %v3907 = vpop.f32.mrb[0].mxu0
        %v3908 = vadd.f32 %v3835, %v3907
        %v3909 = vpop.f32.mrb[0].mxu0
        %v3910 = vadd.f32 %v3837, %v3909
        %v3911 = vpop.f32.mrb[0].mxu0
        %v3912 = vadd.f32 %v3839, %v3911
        %v3913 = vpop.f32.mrb[0].mxu0
        %v3914 = vadd.f32 %v3841, %v3913
        %3915 = vdwg.mxu0
        %3916 = vmatprep.subr.bf16.mxu0 %v2744
        %3917 = vmatpush1.bf16.xpose.msra.mxu0 %v2743
        %3918 = vmatprep.subr.bf16.mxu0 %v2759
        %3919 = vmatpush1.bf16.xpose.msra.mxu0 %v2758
        %3920 = vmatprep.subr.bf16.mxu0 %v2774
        %3921 = vmatpush1.bf16.xpose.msra.mxu0 %v2773
        %3922 = vmatprep.subr.bf16.mxu0 %v2789
        %3923 = vmatpush1.bf16.xpose.msra.mxu0 %v2788
        %3924 = vmatprep.subr.bf16.mxu0 %v2804
        %3925 = vmatpush1.bf16.xpose.msra.mxu0 %v2803
        %3926 = vmatprep.subr.bf16.mxu0 %v2819
        %3927 = vmatpush1.bf16.xpose.msra.mxu0 %v2818
        %3928 = vmatprep.subr.bf16.mxu0 %v2834
        %3929 = vmatpush1.bf16.xpose.msra.mxu0 %v2833
        %3930 = vmatprep.subr.bf16.mxu0 %v2849
        %3931 = vmatpush1.bf16.xpose.msra.mxu0 %v2848
        %3932 = vmatprep.subr.bf16.mxu0 %v2864
        %3933 = vmatpush1.bf16.xpose.msra.mxu0 %v2863
        %3934 = vmatprep.subr.bf16.mxu0 %v2879
        %3935 = vmatpush1.bf16.xpose.msra.mxu0 %v2878
        %3936 = vmatprep.subr.bf16.mxu0 %v2894
        %3937 = vmatpush1.bf16.xpose.msra.mxu0 %v2893
        %3938 = vmatprep.subr.bf16.mxu0 %v2909
        %3939 = vmatpush1.bf16.xpose.msra.mxu0 %v2908
        %3940 = vmatprep.subr.bf16.mxu0 %v2924
        %3941 = vmatpush1.bf16.xpose.msra.mxu0 %v2923
        %3942 = vmatprep.subr.bf16.mxu0 %v2939
        %3943 = vmatpush1.bf16.xpose.msra.mxu0 %v2938
        %3944 = vmatprep.subr.bf16.mxu0 %v2954
        %3945 = vmatpush1.bf16.xpose.msra.mxu0 %v2953
        %3946 = vmatprep.subr.bf16.mxu0 %v2969
        %3947 = vmatpush1.bf16.xpose.msra.mxu0 %v2968
        %3948 = vmatprep.mubr.bf16.mxu0 %v700
        %3949 = vmatmul.mubr.bf16.gmra.mrb[0].mxu0 %v699
        %v3950 = vpop.f32.mrb[0].mxu0
        %v3951 = vadd.f32 %v3878, %v3950
        %v3952 = vpop.f32.mrb[0].mxu0
        %v3953 = vadd.f32 %v3880, %v3952
        %v3954 = vpop.f32.mrb[0].mxu0
        %v3955 = vadd.f32 %v3882, %v3954
        %v3956 = vpop.f32.mrb[0].mxu0
        %v3957 = vadd.f32 %v3884, %v3956
        %3958 = vmatprep.mubr.bf16.mxu0 %v715
        %3959 = vmatmul.mubr.bf16.gmra.mrb[0].mxu0 %v714
        %v3960 = vpop.f32.mrb[0].mxu0
        %v3961 = vadd.f32 %v3888, %v3960
        %v3962 = vpop.f32.mrb[0].mxu0
        %v3963 = vadd.f32 %v3890, %v3962
        %v3964 = vpop.f32.mrb[0].mxu0
        %v3965 = vadd.f32 %v3892, %v3964
        %v3966 = vpop.f32.mrb[0].mxu0
        %v3967 = vadd.f32 %v3894, %v3966
        %3968 = vmatprep.mubr.bf16.mxu0 %v730
        %3969 = vmatmul.mubr.bf16.gmra.mrb[0].mxu0 %v729
        %v3970 = vpop.f32.mrb[0].mxu0
        %v3971 = vadd.f32 %v3898, %v3970
        %v3972 = vpop.f32.mrb[0].mxu0
        %v3973 = vadd.f32 %v3900, %v3972
        %v3974 = vpop.f32.mrb[0].mxu0
        %v3975 = vadd.f32 %v3902, %v3974
        %v3976 = vpop.f32.mrb[0].mxu0
        %v3977 = vadd.f32 %v3904, %v3976
        %3978 = vmatprep.mubr.bf16.mxu0 %v745
        %3979 = vmatmul.mubr.bf16.gmra.mrb[0].mxu0 %v744
        %v3980 = vpop.f32.mrb[0].mxu0
        %v3981 = vadd.f32 %v3908, %v3980
        %v3982 = vpop.f32.mrb[0].mxu0
        %v3983 = vadd.f32 %v3910, %v3982
        %v3984 = vpop.f32.mrb[0].mxu0
        %v3985 = vadd.f32 %v3912, %v3984
        %v3986 = vpop.f32.mrb[0].mxu0
        %v3987 = vadd.f32 %v3914, %v3986
        %3988 = vdwg.mxu0
        %3989 = vmatprep.subr.bf16.mxu0 %v2746
        %3990 = vmatpush1.bf16.xpose.msra.mxu0 %v2745
        %3991 = vmatprep.subr.bf16.mxu0 %v2761
        %3992 = vmatpush1.bf16.xpose.msra.mxu0 %v2760
        %3993 = vmatprep.subr.bf16.mxu0 %v2776
        %3994 = vmatpush1.bf16.xpose.msra.mxu0 %v2775
        %3995 = vmatprep.subr.bf16.mxu0 %v2791
        %3996 = vmatpush1.bf16.xpose.msra.mxu0 %v2790
        %3997 = vmatprep.subr.bf16.mxu0 %v2806
        %3998 = vmatpush1.bf16.xpose.msra.mxu0 %v2805
        %3999 = vmatprep.subr.bf16.mxu0 %v2821
        %4000 = vmatpush1.bf16.xpose.msra.mxu0 %v2820
        %4001 = vmatprep.subr.bf16.mxu0 %v2836
        %4002 = vmatpush1.bf16.xpose.msra.mxu0 %v2835
        %4003 = vmatprep.subr.bf16.mxu0 %v2851
        %4004 = vmatpush1.bf16.xpose.msra.mxu0 %v2850
        %4005 = vmatprep.subr.bf16.mxu0 %v2866
        %4006 = vmatpush1.bf16.xpose.msra.mxu0 %v2865
        %4007 = vmatprep.subr.bf16.mxu0 %v2881
        %4008 = vmatpush1.bf16.xpose.msra.mxu0 %v2880
        %4009 = vmatprep.subr.bf16.mxu0 %v2896
        %4010 = vmatpush1.bf16.xpose.msra.mxu0 %v2895
        %4011 = vmatprep.subr.bf16.mxu0 %v2911
        %4012 = vmatpush1.bf16.xpose.msra.mxu0 %v2910
        %4013 = vmatprep.subr.bf16.mxu0 %v2926
        %4014 = vmatpush1.bf16.xpose.msra.mxu0 %v2925
        %4015 = vmatprep.subr.bf16.mxu0 %v2941
        %4016 = vmatpush1.bf16.xpose.msra.mxu0 %v2940
        %4017 = vmatprep.subr.bf16.mxu0 %v2956
        %4018 = vmatpush1.bf16.xpose.msra.mxu0 %v2955
        %4019 = vmatprep.subr.bf16.mxu0 %v2971
        %4020 = vmatpush1.bf16.xpose.msra.mxu0 %v2970
        %4021 = vmatprep.mubr.bf16.mxu0 %v702
        %4022 = vmatmul.mubr.bf16.gmra.mrb[0].mxu0 %v701
        %v4023 = vpop.f32.mrb[0].mxu0
        %v4024 = vadd.f32 %v3951, %v4023
        %v4025 = vpop.f32.mrb[0].mxu0
        %v4026 = vadd.f32 %v3953, %v4025
        %v4027 = vpop.f32.mrb[0].mxu0
        %v4028 = vadd.f32 %v3955, %v4027
        %v4029 = vpop.f32.mrb[0].mxu0
        %v4030 = vadd.f32 %v3957, %v4029
        %4031 = vmatprep.mubr.bf16.mxu0 %v717
        %4032 = vmatmul.mubr.bf16.gmra.mrb[0].mxu0 %v716
        %v4033 = vpop.f32.mrb[0].mxu0
        %v4034 = vadd.f32 %v3961, %v4033
        %v4035 = vpop.f32.mrb[0].mxu0
        %v4036 = vadd.f32 %v3963, %v4035
        %v4037 = vpop.f32.mrb[0].mxu0
        %v4038 = vadd.f32 %v3965, %v4037
        %v4039 = vpop.f32.mrb[0].mxu0
        %v4040 = vadd.f32 %v3967, %v4039
        %4041 = vmatprep.mubr.bf16.mxu0 %v732
        %4042 = vmatmul.mubr.bf16.gmra.mrb[0].mxu0 %v731
        %v4043 = vpop.f32.mrb[0].mxu0
        %v4044 = vadd.f32 %v3971, %v4043
        %v4045 = vpop.f32.mrb[0].mxu0
        %v4046 = vadd.f32 %v3973, %v4045
        %v4047 = vpop.f32.mrb[0].mxu0
        %v4048 = vadd.f32 %v3975, %v4047
        %v4049 = vpop.f32.mrb[0].mxu0
        %v4050 = vadd.f32 %v3977, %v4049
        %4051 = vmatprep.mubr.bf16.mxu0 %v747
        %4052 = vmatmul.mubr.bf16.gmra.mrb[0].mxu0 %v746
        %v4053 = vpop.f32.mrb[0].mxu0
        %v4054 = vadd.f32 %v3981, %v4053
        %v4055 = vpop.f32.mrb[0].mxu0
        %v4056 = vadd.f32 %v3983, %v4055
        %v4057 = vpop.f32.mrb[0].mxu0
        %v4058 = vadd.f32 %v3985, %v4057
        %v4059 = vpop.f32.mrb[0].mxu0
        %v4060 = vadd.f32 %v3987, %v4059
        %4061 = vdwg.mxu0
        %4062 = vmatprep.subr.bf16.mxu0 %v2748
        %4063 = vmatpush1.bf16.xpose.msra.mxu0 %v2747
        %4064 = vmatprep.subr.bf16.mxu0 %v2763
        %4065 = vmatpush1.bf16.xpose.msra.mxu0 %v2762
        %4066 = vmatprep.subr.bf16.mxu0 %v2778
        %4067 = vmatpush1.bf16.xpose.msra.mxu0 %v2777
        %4068 = vmatprep.subr.bf16.mxu0 %v2793
        %4069 = vmatpush1.bf16.xpose.msra.mxu0 %v2792
        %4070 = vmatprep.subr.bf16.mxu0 %v2808
        %4071 = vmatpush1.bf16.xpose.msra.mxu0 %v2807
        %4072 = vmatprep.subr.bf16.mxu0 %v2823
        %4073 = vmatpush1.bf16.xpose.msra.mxu0 %v2822
        %4074 = vmatprep.subr.bf16.mxu0 %v2838
        %4075 = vmatpush1.bf16.xpose.msra.mxu0 %v2837
        %4076 = vmatprep.subr.bf16.mxu0 %v2853
        %4077 = vmatpush1.bf16.xpose.msra.mxu0 %v2852
        %4078 = vmatprep.subr.bf16.mxu0 %v2868
        %4079 = vmatpush1.bf16.xpose.msra.mxu0 %v2867
        %4080 = vmatprep.subr.bf16.mxu0 %v2883
        %4081 = vmatpush1.bf16.xpose.msra.mxu0 %v2882
        %4082 = vmatprep.subr.bf16.mxu0 %v2898
        %4083 = vmatpush1.bf16.xpose.msra.mxu0 %v2897
        %4084 = vmatprep.subr.bf16.mxu0 %v2913
        %4085 = vmatpush1.bf16.xpose.msra.mxu0 %v2912
        %4086 = vmatprep.subr.bf16.mxu0 %v2928
        %4087 = vmatpush1.bf16.xpose.msra.mxu0 %v2927
        %4088 = vmatprep.subr.bf16.mxu0 %v2943
        %4089 = vmatpush1.bf16.xpose.msra.mxu0 %v2942
        %4090 = vmatprep.subr.bf16.mxu0 %v2958
        %4091 = vmatpush1.bf16.xpose.msra.mxu0 %v2957
        %4092 = vmatprep.subr.bf16.mxu0 %v2973
        %4093 = vmatpush1.bf16.xpose.msra.mxu0 %v2972
        %4094 = vmatprep.mubr.bf16.mxu0 %v704
        %4095 = vmatmul.mubr.bf16.gmra.mrb[0].mxu0 %v703
        %v4096 = vpop.f32.mrb[0].mxu0
        %v4097 = vadd.f32 %v4024, %v4096
        %v4098 = vpop.f32.mrb[0].mxu0
        %v4099 = vadd.f32 %v4026, %v4098
        %v4100 = vpop.f32.mrb[0].mxu0
        %v4101 = vadd.f32 %v4028, %v4100
        %v4102 = vpop.f32.mrb[0].mxu0
        %v4103 = vadd.f32 %v4030, %v4102
        %4104 = vmatprep.mubr.bf16.mxu0 %v719
        %4105 = vmatmul.mubr.bf16.gmra.mrb[0].mxu0 %v718
        %v4106 = vpop.f32.mrb[0].mxu0
        %v4107 = vadd.f32 %v4034, %v4106
        %v4108 = vpop.f32.mrb[0].mxu0
        %v4109 = vadd.f32 %v4036, %v4108
        %v4110 = vpop.f32.mrb[0].mxu0
        %v4111 = vadd.f32 %v4038, %v4110
        %v4112 = vpop.f32.mrb[0].mxu0
        %v4113 = vadd.f32 %v4040, %v4112
        %4114 = vmatprep.mubr.bf16.mxu0 %v734
        %4115 = vmatmul.mubr.bf16.gmra.mrb[0].mxu0 %v733
        %v4116 = vpop.f32.mrb[0].mxu0
        %v4117 = vadd.f32 %v4044, %v4116
        %v4118 = vpop.f32.mrb[0].mxu0
        %v4119 = vadd.f32 %v4046, %v4118
        %v4120 = vpop.f32.mrb[0].mxu0
        %v4121 = vadd.f32 %v4048, %v4120
        %v4122 = vpop.f32.mrb[0].mxu0
        %v4123 = vadd.f32 %v4050, %v4122
        %4124 = vmatprep.mubr.bf16.mxu0 %v749
        %4125 = vmatmul.mubr.bf16.gmra.mrb[0].mxu0 %v748
        %v4126 = vpop.f32.mrb[0].mxu0
        %v4127 = vadd.f32 %v4054, %v4126
        %v4128 = vpop.f32.mrb[0].mxu0
        %v4129 = vadd.f32 %v4056, %v4128
        %v4130 = vpop.f32.mrb[0].mxu0
        %v4131 = vadd.f32 %v4058, %v4130
        %v4132 = vpop.f32.mrb[0].mxu0
        %v4133 = vadd.f32 %v4060, %v4132
        %4134 = vdwg.mxu0
        %4135 = vmatprep.subr.bf16.mxu0 %v2750
        %4136 = vmatpush1.bf16.xpose.msra.mxu0 %v2749
        %4137 = vmatprep.subr.bf16.mxu0 %v2765
        %4138 = vmatpush1.bf16.xpose.msra.mxu0 %v2764
        %4139 = vmatprep.subr.bf16.mxu0 %v2780
        %4140 = vmatpush1.bf16.xpose.msra.mxu0 %v2779
        %4141 = vmatprep.subr.bf16.mxu0 %v2795
        %4142 = vmatpush1.bf16.xpose.msra.mxu0 %v2794
        %4143 = vmatprep.subr.bf16.mxu0 %v2810
        %4144 = vmatpush1.bf16.xpose.msra.mxu0 %v2809
        %4145 = vmatprep.subr.bf16.mxu0 %v2825
        %4146 = vmatpush1.bf16.xpose.msra.mxu0 %v2824
        %4147 = vmatprep.subr.bf16.mxu0 %v2840
        %4148 = vmatpush1.bf16.xpose.msra.mxu0 %v2839
        %4149 = vmatprep.subr.bf16.mxu0 %v2855
        %4150 = vmatpush1.bf16.xpose.msra.mxu0 %v2854
        %4151 = vmatprep.subr.bf16.mxu0 %v2870
        %4152 = vmatpush1.bf16.xpose.msra.mxu0 %v2869
        %4153 = vmatprep.subr.bf16.mxu0 %v2885
        %4154 = vmatpush1.bf16.xpose.msra.mxu0 %v2884
        %4155 = vmatprep.subr.bf16.mxu0 %v2900
        %4156 = vmatpush1.bf16.xpose.msra.mxu0 %v2899
        %4157 = vmatprep.subr.bf16.mxu0 %v2915
        %4158 = vmatpush1.bf16.xpose.msra.mxu0 %v2914
        %4159 = vmatprep.subr.bf16.mxu0 %v2930
        %4160 = vmatpush1.bf16.xpose.msra.mxu0 %v2929
        %4161 = vmatprep.subr.bf16.mxu0 %v2945
        %4162 = vmatpush1.bf16.xpose.msra.mxu0 %v2944
        %4163 = vmatprep.subr.bf16.mxu0 %v2960
        %4164 = vmatpush1.bf16.xpose.msra.mxu0 %v2959
        %4165 = vmatprep.subr.bf16.mxu0 %v2975
        %4166 = vmatpush1.bf16.xpose.msra.mxu0 %v2974
        %4167 = vmatprep.mubr.bf16.mxu0 %v706
        %4168 = vmatmul.mubr.bf16.gmra.mrb[0].mxu0 %v705
        %v4169 = vpop.f32.mrb[0].mxu0
        %v4170 = vadd.f32 %v4097, %v4169
        %v4171 = vpop.f32.mrb[0].mxu0
        %v4172 = vadd.f32 %v4099, %v4171
        %v4173 = vpop.f32.mrb[0].mxu0
        %v4174 = vadd.f32 %v4101, %v4173
        %v4175 = vpop.f32.mrb[0].mxu0
        %v4176 = vadd.f32 %v4103, %v4175
        %4177 = vmatprep.mubr.bf16.mxu0 %v721
        %4178 = vmatmul.mubr.bf16.gmra.mrb[0].mxu0 %v720
        %v4179 = vpop.f32.mrb[0].mxu0
        %v4180 = vadd.f32 %v4107, %v4179
        %v4181 = vpop.f32.mrb[0].mxu0
        %v4182 = vadd.f32 %v4109, %v4181
        %v4183 = vpop.f32.mrb[0].mxu0
        %v4184 = vadd.f32 %v4111, %v4183
        %v4185 = vpop.f32.mrb[0].mxu0
        %v4186 = vadd.f32 %v4113, %v4185
        %4187 = vmatprep.mubr.bf16.mxu0 %v736
        %4188 = vmatmul.mubr.bf16.gmra.mrb[0].mxu0 %v735
        %v4189 = vpop.f32.mrb[0].mxu0
        %v4190 = vadd.f32 %v4117, %v4189
        %v4191 = vpop.f32.mrb[0].mxu0
        %v4192 = vadd.f32 %v4119, %v4191
        %v4193 = vpop.f32.mrb[0].mxu0
        %v4194 = vadd.f32 %v4121, %v4193
        %v4195 = vpop.f32.mrb[0].mxu0
        %v4196 = vadd.f32 %v4123, %v4195
        %4197 = vmatprep.mubr.bf16.mxu0 %v751
        %4198 = vmatmul.mubr.bf16.gmra.mrb[0].mxu0 %v750
        %v4199 = vpop.f32.mrb[0].mxu0
        %v4200 = vadd.f32 %v4127, %v4199
        %v4201 = vpop.f32.mrb[0].mxu0
        %v4202 = vadd.f32 %v4129, %v4201
        %v4203 = vpop.f32.mrb[0].mxu0
        %v4204 = vadd.f32 %v4131, %v4203
        %v4205 = vpop.f32.mrb[0].mxu0
        %v4206 = vadd.f32 %v4133, %v4205
        %4207 = vdwg.mxu0
        %4208 = vmatprep.subr.bf16.mxu0 0
        %4209 = vmatpush1.bf16.xpose.msra.mxu0 %v2751
        %4210 = vmatprep.subr.bf16.mxu0 0
        %4211 = vmatpush1.bf16.xpose.msra.mxu0 %v2766
        %4212 = vmatprep.subr.bf16.mxu0 0
        %4213 = vmatpush1.bf16.xpose.msra.mxu0 %v2781
        %4214 = vmatprep.subr.bf16.mxu0 0
        %4215 = vmatpush1.bf16.xpose.msra.mxu0 %v2796
        %4216 = vmatprep.subr.bf16.mxu0 0
        %4217 = vmatpush1.bf16.xpose.msra.mxu0 %v2811
        %4218 = vmatprep.subr.bf16.mxu0 0
        %4219 = vmatpush1.bf16.xpose.msra.mxu0 %v2826
        %4220 = vmatprep.subr.bf16.mxu0 0
        %4221 = vmatpush1.bf16.xpose.msra.mxu0 %v2841
        %4222 = vmatprep.subr.bf16.mxu0 0
        %4223 = vmatpush1.bf16.xpose.msra.mxu0 %v2856
        %4224 = vmatprep.subr.bf16.mxu0 0
        %4225 = vmatpush1.bf16.xpose.msra.mxu0 %v2871
        %4226 = vmatprep.subr.bf16.mxu0 0
        %4227 = vmatpush1.bf16.xpose.msra.mxu0 %v2886
        %4228 = vmatprep.subr.bf16.mxu0 0
        %4229 = vmatpush1.bf16.xpose.msra.mxu0 %v2901
        %4230 = vmatprep.subr.bf16.mxu0 0
        %4231 = vmatpush1.bf16.xpose.msra.mxu0 %v2916
        %4232 = vmatprep.subr.bf16.mxu0 0
        %4233 = vmatpush1.bf16.xpose.msra.mxu0 %v2931
        %4234 = vmatprep.subr.bf16.mxu0 0
        %4235 = vmatpush1.bf16.xpose.msra.mxu0 %v2946
        %4236 = vmatprep.subr.bf16.mxu0 0
        %4237 = vmatpush1.bf16.xpose.msra.mxu0 %v2961
        %4238 = vmatprep.subr.bf16.mxu0 0
        %4239 = vmatpush1.bf16.xpose.msra.mxu0 %v2976
        %4240 = vmatprep.mubr.bf16.mxu0 0
        %4241 = vmatmul.mubr.bf16.gmra.mrb[0].mxu0 %v707
        %v4242 = vpop.f32.mrb[0].mxu0
        %v4243 = vadd.f32 %v4170, %v4242
        %v4244 = vpop.f32.mrb[0].mxu0
        %v4245 = vadd.f32 %v4172, %v4244
        %v4246 = vpop.f32.mrb[0].mxu0
        %v4247 = vadd.f32 %v4174, %v4246
        %v4248 = vpop.f32.mrb[0].mxu0
        %v4249 = vadd.f32 %v4176, %v4248
        %4250 = vmatprep.mubr.bf16.mxu0 0
        %4251 = vmatmul.mubr.bf16.gmra.mrb[0].mxu0 %v722
        %v4252 = vpop.f32.mrb[0].mxu0
        %v4253 = vadd.f32 %v4180, %v4252
        %v4254 = vpop.f32.mrb[0].mxu0
        %v4255 = vadd.f32 %v4182, %v4254
        %v4256 = vpop.f32.mrb[0].mxu0
        %v4257 = vadd.f32 %v4184, %v4256
        %v4258 = vpop.f32.mrb[0].mxu0
        %v4259 = vadd.f32 %v4186, %v4258
        %4260 = vmatprep.mubr.bf16.mxu0 0
        %4261 = vmatmul.mubr.bf16.gmra.mrb[0].mxu0 %v737
        %v4262 = vpop.f32.mrb[0].mxu0
        %v4263 = vadd.f32 %v4190, %v4262
        %v4264 = vpop.f32.mrb[0].mxu0
        %v4265 = vadd.f32 %v4192, %v4264
        %v4266 = vpop.f32.mrb[0].mxu0
        %v4267 = vadd.f32 %v4194, %v4266
        %v4268 = vpop.f32.mrb[0].mxu0
        %v4269 = vadd.f32 %v4196, %v4268
        %4270 = vmatprep.mubr.bf16.mxu0 0
        %4271 = vmatmul.mubr.bf16.gmra.mrb[0].mxu0 %v752
        %v4272 = vpop.f32.mrb[0].mxu0
        %v4273 = vadd.f32 %v4200, %v4272
        %v4274 = vpop.f32.mrb[0].mxu0
        %v4275 = vadd.f32 %v4202, %v4274
        %v4276 = vpop.f32.mrb[0].mxu0
        %v4277 = vadd.f32 %v4204, %v4276
        %v4278 = vpop.f32.mrb[0].mxu0
        %v4279 = vadd.f32 %v4206, %v4278
        %4280 = vdwg.mxu0
        %4281 = vmatprep.subr.bf16.mxu0 %v2978
        %4282 = vmatpush1.bf16.xpose.msra.mxu0 %v2977
        %4283 = vmatprep.subr.bf16.mxu0 %v2993
        %4284 = vmatpush1.bf16.xpose.msra.mxu0 %v2992
        %4285 = vmatprep.subr.bf16.mxu0 %v3008
        %4286 = vmatpush1.bf16.xpose.msra.mxu0 %v3007
        %4287 = vmatprep.subr.bf16.mxu0 %v3023
        %4288 = vmatpush1.bf16.xpose.msra.mxu0 %v3022
        %4289 = vmatprep.subr.bf16.mxu0 %v3038
        %4290 = vmatpush1.bf16.xpose.msra.mxu0 %v3037
        %4291 = vmatprep.subr.bf16.mxu0 %v3053
        %4292 = vmatpush1.bf16.xpose.msra.mxu0 %v3052
        %4293 = vmatprep.subr.bf16.mxu0 %v3068
        %4294 = vmatpush1.bf16.xpose.msra.mxu0 %v3067
        %4295 = vmatprep.subr.bf16.mxu0 %v3083
        %4296 = vmatpush1.bf16.xpose.msra.mxu0 %v3082
        %4297 = vmatprep.subr.bf16.mxu0 %v3098
        %4298 = vmatpush1.bf16.xpose.msra.mxu0 %v3097
        %4299 = vmatprep.subr.bf16.mxu0 %v3113
        %4300 = vmatpush1.bf16.xpose.msra.mxu0 %v3112
        %4301 = vmatprep.subr.bf16.mxu0 %v3128
        %4302 = vmatpush1.bf16.xpose.msra.mxu0 %v3127
        %4303 = vmatprep.subr.bf16.mxu0 %v3143
        %4304 = vmatpush1.bf16.xpose.msra.mxu0 %v3142
        %4305 = vmatprep.subr.bf16.mxu0 %v3158
        %4306 = vmatpush1.bf16.xpose.msra.mxu0 %v3157
        %4307 = vmatprep.subr.bf16.mxu0 %v3173
        %4308 = vmatpush1.bf16.xpose.msra.mxu0 %v3172
        %4309 = vmatprep.subr.bf16.mxu0 %v3188
        %4310 = vmatpush1.bf16.xpose.msra.mxu0 %v3187
        %4311 = vmatprep.subr.bf16.mxu0 %v3203
        %4312 = vmatpush1.bf16.xpose.msra.mxu0 %v3202
        %4313 = vmatprep.mubr.bf16.mxu0 %v694
        %4314 = vmatmul.mubr.bf16.gmra.mrb[0].mxu0 %v693
        %v4315 = vpop.f32.mrb[0].mxu0
        %v4316 = vadd.f32 0.0, %v4315
        %v4317 = vpop.f32.mrb[0].mxu0
        %v4318 = vadd.f32 0.0, %v4317
        %v4319 = vpop.f32.mrb[0].mxu0
        %v4320 = vadd.f32 0.0, %v4319
        %v4321 = vpop.f32.mrb[0].mxu0
        %v4322 = vadd.f32 0.0, %v4321
        %4323 = vmatprep.mubr.bf16.mxu0 %v709
        %4324 = vmatmul.mubr.bf16.gmra.mrb[0].mxu0 %v708
        %v4325 = vpop.f32.mrb[0].mxu0
        %v4326 = vadd.f32 0.0, %v4325
        %v4327 = vpop.f32.mrb[0].mxu0
        %v4328 = vadd.f32 0.0, %v4327
        %v4329 = vpop.f32.mrb[0].mxu0
        %v4330 = vadd.f32 0.0, %v4329
        %v4331 = vpop.f32.mrb[0].mxu0
        %v4332 = vadd.f32 0.0, %v4331
        %4333 = vmatprep.mubr.bf16.mxu0 %v724
        %4334 = vmatmul.mubr.bf16.gmra.mrb[0].mxu0 %v723
        %v4335 = vpop.f32.mrb[0].mxu0
        %v4336 = vadd.f32 0.0, %v4335
        %v4337 = vpop.f32.mrb[0].mxu0
        %v4338 = vadd.f32 0.0, %v4337
        %v4339 = vpop.f32.mrb[0].mxu0
        %v4340 = vadd.f32 0.0, %v4339
        %v4341 = vpop.f32.mrb[0].mxu0
        %v4342 = vadd.f32 0.0, %v4341
        %4343 = vmatprep.mubr.bf16.mxu0 %v739
        %4344 = vmatmul.mubr.bf16.gmra.mrb[0].mxu0 %v738
        %v4345 = vpop.f32.mrb[0].mxu0
        %v4346 = vadd.f32 0.0, %v4345
        %v4347 = vpop.f32.mrb[0].mxu0
        %v4348 = vadd.f32 0.0, %v4347
        %v4349 = vpop.f32.mrb[0].mxu0
        %v4350 = vadd.f32 0.0, %v4349
        %v4351 = vpop.f32.mrb[0].mxu0
        %v4352 = vadd.f32 0.0, %v4351
        %4353 = vdwg.mxu0
        %4354 = vmatprep.subr.bf16.mxu0 %v2980
        %4355 = vmatpush1.bf16.xpose.msra.mxu0 %v2979
        %4356 = vmatprep.subr.bf16.mxu0 %v2995
        %4357 = vmatpush1.bf16.xpose.msra.mxu0 %v2994
        %4358 = vmatprep.subr.bf16.mxu0 %v3010
        %4359 = vmatpush1.bf16.xpose.msra.mxu0 %v3009
        %4360 = vmatprep.subr.bf16.mxu0 %v3025
        %4361 = vmatpush1.bf16.xpose.msra.mxu0 %v3024
        %4362 = vmatprep.subr.bf16.mxu0 %v3040
        %4363 = vmatpush1.bf16.xpose.msra.mxu0 %v3039
        %4364 = vmatprep.subr.bf16.mxu0 %v3055
        %4365 = vmatpush1.bf16.xpose.msra.mxu0 %v3054
        %4366 = vmatprep.subr.bf16.mxu0 %v3070
        %4367 = vmatpush1.bf16.xpose.msra.mxu0 %v3069
        %4368 = vmatprep.subr.bf16.mxu0 %v3085
        %4369 = vmatpush1.bf16.xpose.msra.mxu0 %v3084
        %4370 = vmatprep.subr.bf16.mxu0 %v3100
        %4371 = vmatpush1.bf16.xpose.msra.mxu0 %v3099
        %4372 = vmatprep.subr.bf16.mxu0 %v3115
        %4373 = vmatpush1.bf16.xpose.msra.mxu0 %v3114
        %4374 = vmatprep.subr.bf16.mxu0 %v3130
        %4375 = vmatpush1.bf16.xpose.msra.mxu0 %v3129
        %4376 = vmatprep.subr.bf16.mxu0 %v3145
        %4377 = vmatpush1.bf16.xpose.msra.mxu0 %v3144
        %4378 = vmatprep.subr.bf16.mxu0 %v3160
        %4379 = vmatpush1.bf16.xpose.msra.mxu0 %v3159
        %4380 = vmatprep.subr.bf16.mxu0 %v3175
        %4381 = vmatpush1.bf16.xpose.msra.mxu0 %v3174
        %4382 = vmatprep.subr.bf16.mxu0 %v3190
        %4383 = vmatpush1.bf16.xpose.msra.mxu0 %v3189
        %4384 = vmatprep.subr.bf16.mxu0 %v3205
        %4385 = vmatpush1.bf16.xpose.msra.mxu0 %v3204
        %4386 = vmatprep.mubr.bf16.mxu0 %v696
        %4387 = vmatmul.mubr.bf16.gmra.mrb[0].mxu0 %v695
        %v4388 = vpop.f32.mrb[0].mxu0
        %v4389 = vadd.f32 %v4316, %v4388
        %v4390 = vpop.f32.mrb[0].mxu0
        %v4391 = vadd.f32 %v4318, %v4390
        %v4392 = vpop.f32.mrb[0].mxu0
        %v4393 = vadd.f32 %v4320, %v4392
        %v4394 = vpop.f32.mrb[0].mxu0
        %v4395 = vadd.f32 %v4322, %v4394
        %4396 = vmatprep.mubr.bf16.mxu0 %v711
        %4397 = vmatmul.mubr.bf16.gmra.mrb[0].mxu0 %v710
        %v4398 = vpop.f32.mrb[0].mxu0
        %v4399 = vadd.f32 %v4326, %v4398
        %v4400 = vpop.f32.mrb[0].mxu0
        %v4401 = vadd.f32 %v4328, %v4400
        %v4402 = vpop.f32.mrb[0].mxu0
        %v4403 = vadd.f32 %v4330, %v4402
        %v4404 = vpop.f32.mrb[0].mxu0
        %v4405 = vadd.f32 %v4332, %v4404
        %4406 = vmatprep.mubr.bf16.mxu0 %v726
        %4407 = vmatmul.mubr.bf16.gmra.mrb[0].mxu0 %v725
        %v4408 = vpop.f32.mrb[0].mxu0
        %v4409 = vadd.f32 %v4336, %v4408
        %v4410 = vpop.f32.mrb[0].mxu0
        %v4411 = vadd.f32 %v4338, %v4410
        %v4412 = vpop.f32.mrb[0].mxu0
        %v4413 = vadd.f32 %v4340, %v4412
        %v4414 = vpop.f32.mrb[0].mxu0
        %v4415 = vadd.f32 %v4342, %v4414
        %4416 = vmatprep.mubr.bf16.mxu0 %v741
        %4417 = vmatmul.mubr.bf16.gmra.mrb[0].mxu0 %v740
        %v4418 = vpop.f32.mrb[0].mxu0
        %v4419 = vadd.f32 %v4346, %v4418
        %v4420 = vpop.f32.mrb[0].mxu0
        %v4421 = vadd.f32 %v4348, %v4420
        %v4422 = vpop.f32.mrb[0].mxu0
        %v4423 = vadd.f32 %v4350, %v4422
        %v4424 = vpop.f32.mrb[0].mxu0
        %v4425 = vadd.f32 %v4352, %v4424
        %4426 = vdwg.mxu0
        %4427 = vmatprep.subr.bf16.mxu0 %v2982
        %4428 = vmatpush1.bf16.xpose.msra.mxu0 %v2981
        %4429 = vmatprep.subr.bf16.mxu0 %v2997
        %4430 = vmatpush1.bf16.xpose.msra.mxu0 %v2996
        %4431 = vmatprep.subr.bf16.mxu0 %v3012
        %4432 = vmatpush1.bf16.xpose.msra.mxu0 %v3011
        %4433 = vmatprep.subr.bf16.mxu0 %v3027
        %4434 = vmatpush1.bf16.xpose.msra.mxu0 %v3026
        %4435 = vmatprep.subr.bf16.mxu0 %v3042
        %4436 = vmatpush1.bf16.xpose.msra.mxu0 %v3041
        %4437 = vmatprep.subr.bf16.mxu0 %v3057
        %4438 = vmatpush1.bf16.xpose.msra.mxu0 %v3056
        %4439 = vmatprep.subr.bf16.mxu0 %v3072
        %4440 = vmatpush1.bf16.xpose.msra.mxu0 %v3071
        %4441 = vmatprep.subr.bf16.mxu0 %v3087
        %4442 = vmatpush1.bf16.xpose.msra.mxu0 %v3086
        %4443 = vmatprep.subr.bf16.mxu0 %v3102
        %4444 = vmatpush1.bf16.xpose.msra.mxu0 %v3101
        %4445 = vmatprep.subr.bf16.mxu0 %v3117
        %4446 = vmatpush1.bf16.xpose.msra.mxu0 %v3116
        %4447 = vmatprep.subr.bf16.mxu0 %v3132
        %4448 = vmatpush1.bf16.xpose.msra.mxu0 %v3131
        %4449 = vmatprep.subr.bf16.mxu0 %v3147
        %4450 = vmatpush1.bf16.xpose.msra.mxu0 %v3146
        %4451 = vmatprep.subr.bf16.mxu0 %v3162
        %4452 = vmatpush1.bf16.xpose.msra.mxu0 %v3161
        %4453 = vmatprep.subr.bf16.mxu0 %v3177
        %4454 = vmatpush1.bf16.xpose.msra.mxu0 %v3176
        %4455 = vmatprep.subr.bf16.mxu0 %v3192
        %4456 = vmatpush1.bf16.xpose.msra.mxu0 %v3191
        %4457 = vmatprep.subr.bf16.mxu0 %v3207
        %4458 = vmatpush1.bf16.xpose.msra.mxu0 %v3206
        %4459 = vmatprep.mubr.bf16.mxu0 %v698
        %4460 = vmatmul.mubr.bf16.gmra.mrb[0].mxu0 %v697
        %v4461 = vpop.f32.mrb[0].mxu0
        %v4462 = vadd.f32 %v4389, %v4461
        %v4463 = vpop.f32.mrb[0].mxu0
        %v4464 = vadd.f32 %v4391, %v4463
        %v4465 = vpop.f32.mrb[0].mxu0
        %v4466 = vadd.f32 %v4393, %v4465
        %v4467 = vpop.f32.mrb[0].mxu0
        %v4468 = vadd.f32 %v4395, %v4467
        %4469 = vmatprep.mubr.bf16.mxu0 %v713
        %4470 = vmatmul.mubr.bf16.gmra.mrb[0].mxu0 %v712
        %v4471 = vpop.f32.mrb[0].mxu0
        %v4472 = vadd.f32 %v4399, %v4471
        %v4473 = vpop.f32.mrb[0].mxu0
        %v4474 = vadd.f32 %v4401, %v4473
        %v4475 = vpop.f32.mrb[0].mxu0
        %v4476 = vadd.f32 %v4403, %v4475
        %v4477 = vpop.f32.mrb[0].mxu0
        %v4478 = vadd.f32 %v4405, %v4477
        %4479 = vmatprep.mubr.bf16.mxu0 %v728
        %4480 = vmatmul.mubr.bf16.gmra.mrb[0].mxu0 %v727
        %v4481 = vpop.f32.mrb[0].mxu0
        %v4482 = vadd.f32 %v4409, %v4481
        %v4483 = vpop.f32.mrb[0].mxu0
        %v4484 = vadd.f32 %v4411, %v4483
        %v4485 = vpop.f32.mrb[0].mxu0
        %v4486 = vadd.f32 %v4413, %v4485
        %v4487 = vpop.f32.mrb[0].mxu0
        %v4488 = vadd.f32 %v4415, %v4487
        %4489 = vmatprep.mubr.bf16.mxu0 %v743
        %4490 = vmatmul.mubr.bf16.gmra.mrb[0].mxu0 %v742
        %v4491 = vpop.f32.mrb[0].mxu0
        %v4492 = vadd.f32 %v4419, %v4491
        %v4493 = vpop.f32.mrb[0].mxu0
        %v4494 = vadd.f32 %v4421, %v4493
        %v4495 = vpop.f32.mrb[0].mxu0
        %v4496 = vadd.f32 %v4423, %v4495
        %v4497 = vpop.f32.mrb[0].mxu0
        %v4498 = vadd.f32 %v4425, %v4497
        %4499 = vdwg.mxu0
        %4500 = vmatprep.subr.bf16.mxu0 %v2984
        %4501 = vmatpush1.bf16.xpose.msra.mxu0 %v2983
        %4502 = vmatprep.subr.bf16.mxu0 %v2999
        %4503 = vmatpush1.bf16.xpose.msra.mxu0 %v2998
        %4504 = vmatprep.subr.bf16.mxu0 %v3014
        %4505 = vmatpush1.bf16.xpose.msra.mxu0 %v3013
        %4506 = vmatprep.subr.bf16.mxu0 %v3029
        %4507 = vmatpush1.bf16.xpose.msra.mxu0 %v3028
        %4508 = vmatprep.subr.bf16.mxu0 %v3044
        %4509 = vmatpush1.bf16.xpose.msra.mxu0 %v3043
        %4510 = vmatprep.subr.bf16.mxu0 %v3059
        %4511 = vmatpush1.bf16.xpose.msra.mxu0 %v3058
        %4512 = vmatprep.subr.bf16.mxu0 %v3074
        %4513 = vmatpush1.bf16.xpose.msra.mxu0 %v3073
        %4514 = vmatprep.subr.bf16.mxu0 %v3089
        %4515 = vmatpush1.bf16.xpose.msra.mxu0 %v3088
        %4516 = vmatprep.subr.bf16.mxu0 %v3104
        %4517 = vmatpush1.bf16.xpose.msra.mxu0 %v3103
        %4518 = vmatprep.subr.bf16.mxu0 %v3119
        %4519 = vmatpush1.bf16.xpose.msra.mxu0 %v3118
        %4520 = vmatprep.subr.bf16.mxu0 %v3134
        %4521 = vmatpush1.bf16.xpose.msra.mxu0 %v3133
        %4522 = vmatprep.subr.bf16.mxu0 %v3149
        %4523 = vmatpush1.bf16.xpose.msra.mxu0 %v3148
        %4524 = vmatprep.subr.bf16.mxu0 %v3164
        %4525 = vmatpush1.bf16.xpose.msra.mxu0 %v3163
        %4526 = vmatprep.subr.bf16.mxu0 %v3179
        %4527 = vmatpush1.bf16.xpose.msra.mxu0 %v3178
        %4528 = vmatprep.subr.bf16.mxu0 %v3194
        %4529 = vmatpush1.bf16.xpose.msra.mxu0 %v3193
        %4530 = vmatprep.subr.bf16.mxu0 %v3209
        %4531 = vmatpush1.bf16.xpose.msra.mxu0 %v3208
        %4532 = vmatprep.mubr.bf16.mxu0 %v700
        %4533 = vmatmul.mubr.bf16.gmra.mrb[0].mxu0 %v699
        %v4534 = vpop.f32.mrb[0].mxu0
        %v4535 = vadd.f32 %v4462, %v4534
        %v4536 = vpop.f32.mrb[0].mxu0
        %v4537 = vadd.f32 %v4464, %v4536
        %v4538 = vpop.f32.mrb[0].mxu0
        %v4539 = vadd.f32 %v4466, %v4538
        %v4540 = vpop.f32.mrb[0].mxu0
        %v4541 = vadd.f32 %v4468, %v4540
        %4542 = vmatprep.mubr.bf16.mxu0 %v715
        %4543 = vmatmul.mubr.bf16.gmra.mrb[0].mxu0 %v714
        %v4544 = vpop.f32.mrb[0].mxu0
        %v4545 = vadd.f32 %v4472, %v4544
        %v4546 = vpop.f32.mrb[0].mxu0
        %v4547 = vadd.f32 %v4474, %v4546
        %v4548 = vpop.f32.mrb[0].mxu0
        %v4549 = vadd.f32 %v4476, %v4548
        %v4550 = vpop.f32.mrb[0].mxu0
        %v4551 = vadd.f32 %v4478, %v4550
        %4552 = vmatprep.mubr.bf16.mxu0 %v730
        %4553 = vmatmul.mubr.bf16.gmra.mrb[0].mxu0 %v729
        %v4554 = vpop.f32.mrb[0].mxu0
        %v4555 = vadd.f32 %v4482, %v4554
        %v4556 = vpop.f32.mrb[0].mxu0
        %v4557 = vadd.f32 %v4484, %v4556
        %v4558 = vpop.f32.mrb[0].mxu0
        %v4559 = vadd.f32 %v4486, %v4558
        %v4560 = vpop.f32.mrb[0].mxu0
        %v4561 = vadd.f32 %v4488, %v4560
        %4562 = vmatprep.mubr.bf16.mxu0 %v745
        %4563 = vmatmul.mubr.bf16.gmra.mrb[0].mxu0 %v744
        %v4564 = vpop.f32.mrb[0].mxu0
        %v4565 = vadd.f32 %v4492, %v4564
        %v4566 = vpop.f32.mrb[0].mxu0
        %v4567 = vadd.f32 %v4494, %v4566
        %v4568 = vpop.f32.mrb[0].mxu0
        %v4569 = vadd.f32 %v4496, %v4568
        %v4570 = vpop.f32.mrb[0].mxu0
        %v4571 = vadd.f32 %v4498, %v4570
        %4572 = vdwg.mxu0
        %4573 = vmatprep.subr.bf16.mxu0 %v2986
        %4574 = vmatpush1.bf16.xpose.msra.mxu0 %v2985
        %4575 = vmatprep.subr.bf16.mxu0 %v3001
        %4576 = vmatpush1.bf16.xpose.msra.mxu0 %v3000
        %4577 = vmatprep.subr.bf16.mxu0 %v3016
        %4578 = vmatpush1.bf16.xpose.msra.mxu0 %v3015
        %4579 = vmatprep.subr.bf16.mxu0 %v3031
        %4580 = vmatpush1.bf16.xpose.msra.mxu0 %v3030
        %4581 = vmatprep.subr.bf16.mxu0 %v3046
        %4582 = vmatpush1.bf16.xpose.msra.mxu0 %v3045
        %4583 = vmatprep.subr.bf16.mxu0 %v3061
        %4584 = vmatpush1.bf16.xpose.msra.mxu0 %v3060
        %4585 = vmatprep.subr.bf16.mxu0 %v3076
        %4586 = vmatpush1.bf16.xpose.msra.mxu0 %v3075
        %4587 = vmatprep.subr.bf16.mxu0 %v3091
        %4588 = vmatpush1.bf16.xpose.msra.mxu0 %v3090
        %4589 = vmatprep.subr.bf16.mxu0 %v3106
        %4590 = vmatpush1.bf16.xpose.msra.mxu0 %v3105
        %4591 = vmatprep.subr.bf16.mxu0 %v3121
        %4592 = vmatpush1.bf16.xpose.msra.mxu0 %v3120
        %4593 = vmatprep.subr.bf16.mxu0 %v3136
        %4594 = vmatpush1.bf16.xpose.msra.mxu0 %v3135
        %4595 = vmatprep.subr.bf16.mxu0 %v3151
        %4596 = vmatpush1.bf16.xpose.msra.mxu0 %v3150
        %4597 = vmatprep.subr.bf16.mxu0 %v3166
        %4598 = vmatpush1.bf16.xpose.msra.mxu0 %v3165
        %4599 = vmatprep.subr.bf16.mxu0 %v3181
        %4600 = vmatpush1.bf16.xpose.msra.mxu0 %v3180
        %4601 = vmatprep.subr.bf16.mxu0 %v3196
        %4602 = vmatpush1.bf16.xpose.msra.mxu0 %v3195
        %4603 = vmatprep.subr.bf16.mxu0 %v3211
        %4604 = vmatpush1.bf16.xpose.msra.mxu0 %v3210
        %4605 = vmatprep.mubr.bf16.mxu0 %v702
        %4606 = vmatmul.mubr.bf16.gmra.mrb[0].mxu0 %v701
        %v4607 = vpop.f32.mrb[0].mxu0
        %v4608 = vadd.f32 %v4535, %v4607
        %v4609 = vpop.f32.mrb[0].mxu0
        %v4610 = vadd.f32 %v4537, %v4609
        %v4611 = vpop.f32.mrb[0].mxu0
        %v4612 = vadd.f32 %v4539, %v4611
        %v4613 = vpop.f32.mrb[0].mxu0
        %v4614 = vadd.f32 %v4541, %v4613
        %4615 = vmatprep.mubr.bf16.mxu0 %v717
        %4616 = vmatmul.mubr.bf16.gmra.mrb[0].mxu0 %v716
        %v4617 = vpop.f32.mrb[0].mxu0
        %v4618 = vadd.f32 %v4545, %v4617
        %v4619 = vpop.f32.mrb[0].mxu0
        %v4620 = vadd.f32 %v4547, %v4619
        %v4621 = vpop.f32.mrb[0].mxu0
        %v4622 = vadd.f32 %v4549, %v4621
        %v4623 = vpop.f32.mrb[0].mxu0
        %v4624 = vadd.f32 %v4551, %v4623
        %4625 = vmatprep.mubr.bf16.mxu0 %v732
        %4626 = vmatmul.mubr.bf16.gmra.mrb[0].mxu0 %v731
        %v4627 = vpop.f32.mrb[0].mxu0
        %v4628 = vadd.f32 %v4555, %v4627
        %v4629 = vpop.f32.mrb[0].mxu0
        %v4630 = vadd.f32 %v4557, %v4629
        %v4631 = vpop.f32.mrb[0].mxu0
        %v4632 = vadd.f32 %v4559, %v4631
        %v4633 = vpop.f32.mrb[0].mxu0
        %v4634 = vadd.f32 %v4561, %v4633
        %4635 = vmatprep.mubr.bf16.mxu0 %v747
        %4636 = vmatmul.mubr.bf16.gmra.mrb[0].mxu0 %v746
        %v4637 = vpop.f32.mrb[0].mxu0
        %v4638 = vadd.f32 %v4565, %v4637
        %v4639 = vpop.f32.mrb[0].mxu0
        %v4640 = vadd.f32 %v4567, %v4639
        %v4641 = vpop.f32.mrb[0].mxu0
        %v4642 = vadd.f32 %v4569, %v4641
        %v4643 = vpop.f32.mrb[0].mxu0
        %v4644 = vadd.f32 %v4571, %v4643
        %4645 = vdwg.mxu0
        %4646 = vmatprep.subr.bf16.mxu0 %v2988
        %4647 = vmatpush1.bf16.xpose.msra.mxu0 %v2987
        %4648 = vmatprep.subr.bf16.mxu0 %v3003
        %4649 = vmatpush1.bf16.xpose.msra.mxu0 %v3002
        %4650 = vmatprep.subr.bf16.mxu0 %v3018
        %4651 = vmatpush1.bf16.xpose.msra.mxu0 %v3017
        %4652 = vmatprep.subr.bf16.mxu0 %v3033
        %4653 = vmatpush1.bf16.xpose.msra.mxu0 %v3032
        %4654 = vmatprep.subr.bf16.mxu0 %v3048
        %4655 = vmatpush1.bf16.xpose.msra.mxu0 %v3047
        %4656 = vmatprep.subr.bf16.mxu0 %v3063
        %4657 = vmatpush1.bf16.xpose.msra.mxu0 %v3062
        %4658 = vmatprep.subr.bf16.mxu0 %v3078
        %4659 = vmatpush1.bf16.xpose.msra.mxu0 %v3077
        %4660 = vmatprep.subr.bf16.mxu0 %v3093
        %4661 = vmatpush1.bf16.xpose.msra.mxu0 %v3092
        %4662 = vmatprep.subr.bf16.mxu0 %v3108
        %4663 = vmatpush1.bf16.xpose.msra.mxu0 %v3107
        %4664 = vmatprep.subr.bf16.mxu0 %v3123
        %4665 = vmatpush1.bf16.xpose.msra.mxu0 %v3122
        %4666 = vmatprep.subr.bf16.mxu0 %v3138
        %4667 = vmatpush1.bf16.xpose.msra.mxu0 %v3137
        %4668 = vmatprep.subr.bf16.mxu0 %v3153
        %4669 = vmatpush1.bf16.xpose.msra.mxu0 %v3152
        %4670 = vmatprep.subr.bf16.mxu0 %v3168
        %4671 = vmatpush1.bf16.xpose.msra.mxu0 %v3167
        %4672 = vmatprep.subr.bf16.mxu0 %v3183
        %4673 = vmatpush1.bf16.xpose.msra.mxu0 %v3182
        %4674 = vmatprep.subr.bf16.mxu0 %v3198
        %4675 = vmatpush1.bf16.xpose.msra.mxu0 %v3197
        %4676 = vmatprep.subr.bf16.mxu0 %v3213
        %4677 = vmatpush1.bf16.xpose.msra.mxu0 %v3212
        %4678 = vmatprep.mubr.bf16.mxu0 %v704
        %4679 = vmatmul.mubr.bf16.gmra.mrb[0].mxu0 %v703
        %v4680 = vpop.f32.mrb[0].mxu0
        %v4681 = vadd.f32 %v4608, %v4680
        %v4682 = vpop.f32.mrb[0].mxu0
        %v4683 = vadd.f32 %v4610, %v4682
        %v4684 = vpop.f32.mrb[0].mxu0
        %v4685 = vadd.f32 %v4612, %v4684
        %v4686 = vpop.f32.mrb[0].mxu0
        %v4687 = vadd.f32 %v4614, %v4686
        %4688 = vmatprep.mubr.bf16.mxu0 %v719
        %4689 = vmatmul.mubr.bf16.gmra.mrb[0].mxu0 %v718
        %v4690 = vpop.f32.mrb[0].mxu0
        %v4691 = vadd.f32 %v4618, %v4690
        %v4692 = vpop.f32.mrb[0].mxu0
        %v4693 = vadd.f32 %v4620, %v4692
        %v4694 = vpop.f32.mrb[0].mxu0
        %v4695 = vadd.f32 %v4622, %v4694
        %v4696 = vpop.f32.mrb[0].mxu0
        %v4697 = vadd.f32 %v4624, %v4696
        %4698 = vmatprep.mubr.bf16.mxu0 %v734
        %4699 = vmatmul.mubr.bf16.gmra.mrb[0].mxu0 %v733
        %v4700 = vpop.f32.mrb[0].mxu0
        %v4701 = vadd.f32 %v4628, %v4700
        %v4702 = vpop.f32.mrb[0].mxu0
        %v4703 = vadd.f32 %v4630, %v4702
        %v4704 = vpop.f32.mrb[0].mxu0
        %v4705 = vadd.f32 %v4632, %v4704
        %v4706 = vpop.f32.mrb[0].mxu0
        %v4707 = vadd.f32 %v4634, %v4706
        %4708 = vmatprep.mubr.bf16.mxu0 %v749
        %4709 = vmatmul.mubr.bf16.gmra.mrb[0].mxu0 %v748
        %v4710 = vpop.f32.mrb[0].mxu0
        %v4711 = vadd.f32 %v4638, %v4710
        %v4712 = vpop.f32.mrb[0].mxu0
        %v4713 = vadd.f32 %v4640, %v4712
        %v4714 = vpop.f32.mrb[0].mxu0
        %v4715 = vadd.f32 %v4642, %v4714
        %v4716 = vpop.f32.mrb[0].mxu0
        %v4717 = vadd.f32 %v4644, %v4716
        %4718 = vdwg.mxu0
        %4719 = vmatprep.subr.bf16.mxu0 %v2990
        %4720 = vmatpush1.bf16.xpose.msra.mxu0 %v2989
        %4721 = vmatprep.subr.bf16.mxu0 %v3005
        %4722 = vmatpush1.bf16.xpose.msra.mxu0 %v3004
        %4723 = vmatprep.subr.bf16.mxu0 %v3020
        %4724 = vmatpush1.bf16.xpose.msra.mxu0 %v3019
        %4725 = vmatprep.subr.bf16.mxu0 %v3035
        %4726 = vmatpush1.bf16.xpose.msra.mxu0 %v3034
        %4727 = vmatprep.subr.bf16.mxu0 %v3050
        %4728 = vmatpush1.bf16.xpose.msra.mxu0 %v3049
        %4729 = vmatprep.subr.bf16.mxu0 %v3065
        %4730 = vmatpush1.bf16.xpose.msra.mxu0 %v3064
        %4731 = vmatprep.subr.bf16.mxu0 %v3080
        %4732 = vmatpush1.bf16.xpose.msra.mxu0 %v3079
        %4733 = vmatprep.subr.bf16.mxu0 %v3095
        %4734 = vmatpush1.bf16.xpose.msra.mxu0 %v3094
        %4735 = vmatprep.subr.bf16.mxu0 %v3110
        %4736 = vmatpush1.bf16.xpose.msra.mxu0 %v3109
        %4737 = vmatprep.subr.bf16.mxu0 %v3125
        %4738 = vmatpush1.bf16.xpose.msra.mxu0 %v3124
        %4739 = vmatprep.subr.bf16.mxu0 %v3140
        %4740 = vmatpush1.bf16.xpose.msra.mxu0 %v3139
        %4741 = vmatprep.subr.bf16.mxu0 %v3155
        %4742 = vmatpush1.bf16.xpose.msra.mxu0 %v3154
        %4743 = vmatprep.subr.bf16.mxu0 %v3170
        %4744 = vmatpush1.bf16.xpose.msra.mxu0 %v3169
        %4745 = vmatprep.subr.bf16.mxu0 %v3185
        %4746 = vmatpush1.bf16.xpose.msra.mxu0 %v3184
        %4747 = vmatprep.subr.bf16.mxu0 %v3200
        %4748 = vmatpush1.bf16.xpose.msra.mxu0 %v3199
        %4749 = vmatprep.subr.bf16.mxu0 %v3215
        %4750 = vmatpush1.bf16.xpose.msra.mxu0 %v3214
        %4751 = vmatprep.mubr.bf16.mxu0 %v706
        %4752 = vmatmul.mubr.bf16.gmra.mrb[0].mxu0 %v705
        %v4753 = vpop.f32.mrb[0].mxu0
        %v4754 = vadd.f32 %v4681, %v4753
        %v4755 = vpop.f32.mrb[0].mxu0
        %v4756 = vadd.f32 %v4683, %v4755
        %v4757 = vpop.f32.mrb[0].mxu0
        %v4758 = vadd.f32 %v4685, %v4757
        %v4759 = vpop.f32.mrb[0].mxu0
        %v4760 = vadd.f32 %v4687, %v4759
        %4761 = vmatprep.mubr.bf16.mxu0 %v721
        %4762 = vmatmul.mubr.bf16.gmra.mrb[0].mxu0 %v720
        %v4763 = vpop.f32.mrb[0].mxu0
        %v4764 = vadd.f32 %v4691, %v4763
        %v4765 = vpop.f32.mrb[0].mxu0
        %v4766 = vadd.f32 %v4693, %v4765
        %v4767 = vpop.f32.mrb[0].mxu0
        %v4768 = vadd.f32 %v4695, %v4767
        %v4769 = vpop.f32.mrb[0].mxu0
        %v4770 = vadd.f32 %v4697, %v4769
        %4771 = vmatprep.mubr.bf16.mxu0 %v736
        %4772 = vmatmul.mubr.bf16.gmra.mrb[0].mxu0 %v735
        %v4773 = vpop.f32.mrb[0].mxu0
        %v4774 = vadd.f32 %v4701, %v4773
        %v4775 = vpop.f32.mrb[0].mxu0
        %v4776 = vadd.f32 %v4703, %v4775
        %v4777 = vpop.f32.mrb[0].mxu0
        %v4778 = vadd.f32 %v4705, %v4777
        %v4779 = vpop.f32.mrb[0].mxu0
        %v4780 = vadd.f32 %v4707, %v4779
        %4781 = vmatprep.mubr.bf16.mxu0 %v751
        %4782 = vmatmul.mubr.bf16.gmra.mrb[0].mxu0 %v750
        %v4783 = vpop.f32.mrb[0].mxu0
        %v4784 = vadd.f32 %v4711, %v4783
        %v4785 = vpop.f32.mrb[0].mxu0
        %v4786 = vadd.f32 %v4713, %v4785
        %v4787 = vpop.f32.mrb[0].mxu0
        %v4788 = vadd.f32 %v4715, %v4787
        %v4789 = vpop.f32.mrb[0].mxu0
        %v4790 = vadd.f32 %v4717, %v4789
        %4791 = vdwg.mxu0
        %4792 = vmatprep.subr.bf16.mxu0 0
        %4793 = vmatpush1.bf16.xpose.msra.mxu0 %v2991
        %4794 = vmatprep.subr.bf16.mxu0 0
        %4795 = vmatpush1.bf16.xpose.msra.mxu0 %v3006
        %4796 = vmatprep.subr.bf16.mxu0 0
        %4797 = vmatpush1.bf16.xpose.msra.mxu0 %v3021
        %4798 = vmatprep.subr.bf16.mxu0 0
        %4799 = vmatpush1.bf16.xpose.msra.mxu0 %v3036
        %4800 = vmatprep.subr.bf16.mxu0 0
        %4801 = vmatpush1.bf16.xpose.msra.mxu0 %v3051
        %4802 = vmatprep.subr.bf16.mxu0 0
        %4803 = vmatpush1.bf16.xpose.msra.mxu0 %v3066
        %4804 = vmatprep.subr.bf16.mxu0 0
        %4805 = vmatpush1.bf16.xpose.msra.mxu0 %v3081
        %4806 = vmatprep.subr.bf16.mxu0 0
        %4807 = vmatpush1.bf16.xpose.msra.mxu0 %v3096
        %4808 = vmatprep.subr.bf16.mxu0 0
        %4809 = vmatpush1.bf16.xpose.msra.mxu0 %v3111
        %4810 = vmatprep.subr.bf16.mxu0 0
        %4811 = vmatpush1.bf16.xpose.msra.mxu0 %v3126
        %4812 = vmatprep.subr.bf16.mxu0 0
        %4813 = vmatpush1.bf16.xpose.msra.mxu0 %v3141
        %4814 = vmatprep.subr.bf16.mxu0 0
        %4815 = vmatpush1.bf16.xpose.msra.mxu0 %v3156
        %4816 = vmatprep.subr.bf16.mxu0 0
        %4817 = vmatpush1.bf16.xpose.msra.mxu0 %v3171
        %4818 = vmatprep.subr.bf16.mxu0 0
        %4819 = vmatpush1.bf16.xpose.msra.mxu0 %v3186
        %4820 = vmatprep.subr.bf16.mxu0 0
        %4821 = vmatpush1.bf16.xpose.msra.mxu0 %v3201
        %4822 = vmatprep.subr.bf16.mxu0 0
        %4823 = vmatpush1.bf16.xpose.msra.mxu0 %v3216
        %4824 = vmatprep.mubr.bf16.mxu0 0
        %4825 = vmatmul.mubr.bf16.gmra.mrb[0].mxu0 %v707
        %v4826 = vpop.f32.mrb[0].mxu0
        %v4827 = vadd.f32 %v4754, %v4826
        %v4828 = vpop.f32.mrb[0].mxu0
        %v4829 = vadd.f32 %v4756, %v4828
        %v4830 = vpop.f32.mrb[0].mxu0
        %v4831 = vadd.f32 %v4758, %v4830
        %v4832 = vpop.f32.mrb[0].mxu0
        %v4833 = vadd.f32 %v4760, %v4832
        %4834 = vmatprep.mubr.bf16.mxu0 0
        %4835 = vmatmul.mubr.bf16.gmra.mrb[0].mxu0 %v722
        %v4836 = vpop.f32.mrb[0].mxu0
        %v4837 = vadd.f32 %v4764, %v4836
        %v4838 = vpop.f32.mrb[0].mxu0
        %v4839 = vadd.f32 %v4766, %v4838
        %v4840 = vpop.f32.mrb[0].mxu0
        %v4841 = vadd.f32 %v4768, %v4840
        %v4842 = vpop.f32.mrb[0].mxu0
        %v4843 = vadd.f32 %v4770, %v4842
        %4844 = vmatprep.mubr.bf16.mxu0 0
        %4845 = vmatmul.mubr.bf16.gmra.mrb[0].mxu0 %v737
        %v4846 = vpop.f32.mrb[0].mxu0
        %v4847 = vadd.f32 %v4774, %v4846
        %v4848 = vpop.f32.mrb[0].mxu0
        %v4849 = vadd.f32 %v4776, %v4848
        %v4850 = vpop.f32.mrb[0].mxu0
        %v4851 = vadd.f32 %v4778, %v4850
        %v4852 = vpop.f32.mrb[0].mxu0
        %v4853 = vadd.f32 %v4780, %v4852
        %4854 = vmatprep.mubr.bf16.mxu0 0
        %4855 = vmatmul.mubr.bf16.gmra.mrb[0].mxu0 %v752
        %v4856 = vpop.f32.mrb[0].mxu0
        %v4857 = vadd.f32 %v4784, %v4856
        %v4858 = vpop.f32.mrb[0].mxu0
        %v4859 = vadd.f32 %v4786, %v4858
        %v4860 = vpop.f32.mrb[0].mxu0
        %v4861 = vadd.f32 %v4788, %v4860
        %v4862 = vpop.f32.mrb[0].mxu0
        %v4863 = vadd.f32 %v4790, %v4862
        %4864 = vdwg.mxu0
        %v4865 = vadd.f32 %v4243, %v4247
        %v4866 = vadd.f32 %v4865, %v4253
        %v4867 = vadd.f32 %v4866, %v4257
        %v4868 = vadd.f32 %v4867, %v4263
        %v4869 = vadd.f32 %v4868, %v4267
        %v4870 = vadd.f32 %v4869, %v4273
        %v4871 = vadd.f32 %v4870, %v4277
        %v4872 = vrot.slane %v4871, 4
        %v4873 = vadd.f32 %v4871, %v4872
        %v4874 = vrot.slane %v4873, 2
        %v4875 = vadd.f32 %v4873, %v4874
        %v4876 = vrot.slane %v4875, 1
        %v4877 = vadd.f32 %v4875, %v4876
        %v4878 = vadd.f32 %v4245, %v4249
        %v4879 = vadd.f32 %v4878, %v4255
        %v4880 = vadd.f32 %v4879, %v4259
        %v4881 = vadd.f32 %v4880, %v4265
        %v4882 = vadd.f32 %v4881, %v4269
        %v4883 = vadd.f32 %v4882, %v4275
        %v4884 = vadd.f32 %v4883, %v4279
        %v4885 = vrot.slane %v4884, 4
        %v4886 = vadd.f32 %v4884, %v4885
        %v4887 = vrot.slane %v4886, 2
        %v4888 = vadd.f32 %v4886, %v4887
        %v4889 = vrot.slane %v4888, 1
        %v4890 = vadd.f32 %v4888, %v4889
        %v4891 = vadd.f32 %v4827, %v4831
        %v4892 = vadd.f32 %v4891, %v4837
        %v4893 = vadd.f32 %v4892, %v4841
        %v4894 = vadd.f32 %v4893, %v4847
        %v4895 = vadd.f32 %v4894, %v4851
        %v4896 = vadd.f32 %v4895, %v4857
        %v4897 = vadd.f32 %v4896, %v4861
        %v4898 = vrot.slane %v4897, 4
        %v4899 = vadd.f32 %v4897, %v4898
        %v4900 = vrot.slane %v4899, 2
        %v4901 = vadd.f32 %v4899, %v4900
        %v4902 = vrot.slane %v4901, 1
        %v4903 = vadd.f32 %v4901, %v4902
        %v4904 = vadd.f32 %v4829, %v4833
        %v4905 = vadd.f32 %v4904, %v4839
        %v4906 = vadd.f32 %v4905, %v4843
        %v4907 = vadd.f32 %v4906, %v4849
        %v4908 = vadd.f32 %v4907, %v4853
        %v4909 = vadd.f32 %v4908, %v4859
        %v4910 = vadd.f32 %v4909, %v4863
        %v4911 = vrot.slane %v4910, 4
        %v4912 = vadd.f32 %v4910, %v4911
        %v4913 = vrot.slane %v4912, 2
        %v4914 = vadd.f32 %v4912, %v4913
        %v4915 = vrot.slane %v4914, 1
        %v4916 = vadd.f32 %v4914, %v4915
        %v4917 = vmul.f32 %v4877, 0.020408163
        %v4918 = vmul.f32 %v4890, 0.020408163
        %v4919 = vmul.f32 %v4903, 0.020408163
        %v4920 = vmul.f32 %v4916, 0.020408163
        %v4921 = vmul.f32 %v4243, %v4243
        %v4922 = vmul.f32 %v4245, %v4245
        %v4923 = vmul.f32 %v4827, %v4827
        %v4924 = vmul.f32 %v4829, %v4829
        %v4925 = vmul.f32 %v4247, %v4247
        %v4926 = vmul.f32 %v4249, %v4249
        %v4927 = vmul.f32 %v4831, %v4831
        %v4928 = vmul.f32 %v4833, %v4833
        %v4929 = vmul.f32 %v4253, %v4253
        %v4930 = vmul.f32 %v4255, %v4255
        %v4931 = vmul.f32 %v4837, %v4837
        %v4932 = vmul.f32 %v4839, %v4839
        %v4933 = vmul.f32 %v4257, %v4257
        %v4934 = vmul.f32 %v4259, %v4259
        %v4935 = vmul.f32 %v4841, %v4841
        %v4936 = vmul.f32 %v4843, %v4843
        %v4937 = vmul.f32 %v4263, %v4263
        %v4938 = vmul.f32 %v4265, %v4265
        %v4939 = vmul.f32 %v4847, %v4847
        %v4940 = vmul.f32 %v4849, %v4849
        %v4941 = vmul.f32 %v4267, %v4267
        %v4942 = vmul.f32 %v4269, %v4269
        %v4943 = vmul.f32 %v4851, %v4851
        %v4944 = vmul.f32 %v4853, %v4853
        %v4945 = vmul.f32 %v4273, %v4273
        %v4946 = vmul.f32 %v4275, %v4275
        %v4947 = vmul.f32 %v4857, %v4857
        %v4948 = vmul.f32 %v4859, %v4859
        %v4949 = vmul.f32 %v4277, %v4277
        %v4950 = vmul.f32 %v4279, %v4279
        %v4951 = vmul.f32 %v4861, %v4861
        %v4952 = vmul.f32 %v4863, %v4863
        %v4953 = vadd.f32 %v4921, %v4925
        %v4954 = vadd.f32 %v4953, %v4929
        %v4955 = vadd.f32 %v4954, %v4933
        %v4956 = vadd.f32 %v4955, %v4937
        %v4957 = vadd.f32 %v4956, %v4941
        %v4958 = vadd.f32 %v4957, %v4945
        %v4959 = vadd.f32 %v4958, %v4949
        %v4960 = vrot.slane %v4959, 4
        %v4961 = vadd.f32 %v4959, %v4960
        %v4962 = vrot.slane %v4961, 2
        %v4963 = vadd.f32 %v4961, %v4962
        %v4964 = vrot.slane %v4963, 1
        %v4965 = vadd.f32 %v4963, %v4964
        %v4966 = vadd.f32 %v4922, %v4926
        %v4967 = vadd.f32 %v4966, %v4930
        %v4968 = vadd.f32 %v4967, %v4934
        %v4969 = vadd.f32 %v4968, %v4938
        %v4970 = vadd.f32 %v4969, %v4942
        %v4971 = vadd.f32 %v4970, %v4946
        %v4972 = vadd.f32 %v4971, %v4950
        %v4973 = vrot.slane %v4972, 4
        %v4974 = vadd.f32 %v4972, %v4973
        %v4975 = vrot.slane %v4974, 2
        %v4976 = vadd.f32 %v4974, %v4975
        %v4977 = vrot.slane %v4976, 1
        %v4978 = vadd.f32 %v4976, %v4977
        %v4979 = vadd.f32 %v4923, %v4927
        %v4980 = vadd.f32 %v4979, %v4931
        %v4981 = vadd.f32 %v4980, %v4935
        %v4982 = vadd.f32 %v4981, %v4939
        %v4983 = vadd.f32 %v4982, %v4943
        %v4984 = vadd.f32 %v4983, %v4947
        %v4985 = vadd.f32 %v4984, %v4951
        %v4986 = vrot.slane %v4985, 4
        %v4987 = vadd.f32 %v4985, %v4986
        %v4988 = vrot.slane %v4987, 2
        %v4989 = vadd.f32 %v4987, %v4988
        %v4990 = vrot.slane %v4989, 1
        %v4991 = vadd.f32 %v4989, %v4990
        %v4992 = vadd.f32 %v4924, %v4928
        %v4993 = vadd.f32 %v4992, %v4932
        %v4994 = vadd.f32 %v4993, %v4936
        %v4995 = vadd.f32 %v4994, %v4940
        %v4996 = vadd.f32 %v4995, %v4944
        %v4997 = vadd.f32 %v4996, %v4948
        %v4998 = vadd.f32 %v4997, %v4952
        %v4999 = vrot.slane %v4998, 4
        %v5000 = vadd.f32 %v4998, %v4999
        %v5001 = vrot.slane %v5000, 2
        %v5002 = vadd.f32 %v5000, %v5001
        %v5003 = vrot.slane %v5002, 1
        %v5004 = vadd.f32 %v5002, %v5003
        %v5005 = vmul.f32 %v4965, 0.020408163
        %v5006 = vmul.f32 %v4978, 0.020408163
        %v5007 = vmul.f32 %v4991, 0.020408163
        %v5008 = vmul.f32 %v5004, 0.020408163
        %v5009 = vmul.f32 %v4917, %v4917
        %v5010 = vmul.f32 %v4918, %v4918
        %v5011 = vmul.f32 %v4919, %v4919
        %v5012 = vmul.f32 %v4920, %v4920
        %v5013 = vsub.f32 %v5005, %v5009
        %v5014 = vsub.f32 %v5006, %v5010
        %v5015 = vsub.f32 %v5007, %v5011
        %v5016 = vsub.f32 %v5008, %v5012
        %v5017 = vadd.f32 %v5013, 1e-05
        %v5018 = vadd.f32 %v5014, 1e-05
        %v5019 = vadd.f32 %v5015, 1e-05
        %v5020 = vadd.f32 %v5016, 1e-05
        %v5021 = vrsqrt.pop %v5017
        %v5022 = vrsqrt.pop %v5018
        %v5023 = vrsqrt.pop %v5019
        %v5024 = vrsqrt.pop %v5020
        %v5025 = vld [vmem:[#allocation4] sm:$0xf]
        %v5027 = vlaneseq
        %v5028 = vshrl.u32 %v5027, 7
        %v5029 = vsub.s32 0, %v5028
        %v5030 = vrot.slane %v5025, %v5029
        %v5031 = vlaneseq
        %v5032 = vshrl.u32 %v5031, 7
        %v5033 = vsub.s32 1, %v5032
        %v5034 = vrot.slane %v5025, %v5033
        %v5035 = vlaneseq
        %v5036 = vshrl.u32 %v5035, 7
        %v5037 = vsub.s32 2, %v5036
        %v5038 = vrot.slane %v5025, %v5037
        %v5039 = vlaneseq
        %v5040 = vshrl.u32 %v5039, 7
        %v5041 = vsub.s32 3, %v5040
        %v5042 = vrot.slane %v5025, %v5041
        %v5047 = vmul.f32 %v5021, %v5030
        %v5048 = vmul.f32 %v5022, %v5034
        %v5049 = vmul.f32 %v5023, %v5038
        %v5050 = vmul.f32 %v5024, %v5042
        %v5051 = vld [vmem:[#allocation6] sm:$0xf]
        %v5052 = vmul.f32 %v4917, %v5047
        %v5053 = vmul.f32 %v4918, %v5048
        %v5054 = vmul.f32 %v4919, %v5049
        %v5055 = vmul.f32 %v4920, %v5050
        %v5060 = vcombine.low %v5052, %v5053
        %v5061 = vcombine.low %v5054, %v5055
        %v5063 = vunpack.c.l.s4 1966171168
        %v5064 = vunpack.c.0.s8 %v5063
        %v5065 = vlaneseq
        %v5066 = vshrl.u32 %v5065, 7
        %v5067 = vsub.s32 %v5064, %v5066
        %v5068 = vrot.slane %v5060, %v5067
        %v5070 = vunpack.c.l.s4 1966171168
        %v5071 = vunpack.c.0.s8 %v5070
        %v5072 = vlaneseq
        %v5073 = vshrl.u32 %v5072, 7
        %v5074 = vsub.s32 %v5071, %v5073
        %v5075 = vrot.slane %v5061, %v5074
        %v5076 = vcombine.low %v5068, %v5075
        %v5078 = vunpack.c.l.s4 1966171168
        %v5079 = vunpack.c.0.s8 %v5078
        %v5080 = vlaneseq
        %v5081 = vshrl.u32 %v5080, 7
        %v5082 = vsub.s32 %v5079, %v5081
        %v5083 = vrot.slane %v5076, %v5082
        %v5085 = vsub.f32 %v5051, %v5083
        %v5086 = vlaneseq
        %v5087 = vshrl.u32 %v5086, 7
        %v5088 = vsub.s32 0, %v5087
        %v5089 = vrot.slane %v5047, %v5088
        %v5090 = vlaneseq
        %v5091 = vshrl.u32 %v5090, 7
        %v5092 = vsub.s32 0, %v5091
        %v5093 = vrot.slane %v5048, %v5092
        %v5094 = vlaneseq
        %v5095 = vshrl.u32 %v5094, 7
        %v5096 = vsub.s32 0, %v5095
        %v5097 = vrot.slane %v5049, %v5096
        %v5098 = vlaneseq
        %v5099 = vshrl.u32 %v5098, 7
        %v5100 = vsub.s32 0, %v5099
        %v5101 = vrot.slane %v5050, %v5100
        %v5102 = vmul.f32 %v4243, %v5089
        %v5103 = vmul.f32 %v4245, %v5093
        %v5104 = vmul.f32 %v4827, %v5097
        %v5105 = vmul.f32 %v4829, %v5101
        %v5106 = vmul.f32 %v4247, %v5089
        %v5107 = vmul.f32 %v4249, %v5093
        %v5108 = vmul.f32 %v4831, %v5097
        %v5109 = vmul.f32 %v4833, %v5101
        %v5110 = vmul.f32 %v4253, %v5089
        %v5111 = vmul.f32 %v4255, %v5093
        %v5112 = vmul.f32 %v4837, %v5097
        %v5113 = vmul.f32 %v4839, %v5101
        %v5114 = vmul.f32 %v4257, %v5089
        %v5115 = vmul.f32 %v4259, %v5093
        %v5116 = vmul.f32 %v4841, %v5097
        %v5117 = vmul.f32 %v4843, %v5101
        %v5118 = vmul.f32 %v4263, %v5089
        %v5119 = vmul.f32 %v4265, %v5093
        %v5120 = vmul.f32 %v4847, %v5097
        %v5121 = vmul.f32 %v4849, %v5101
        %v5122 = vmul.f32 %v4267, %v5089
        %v5123 = vmul.f32 %v4269, %v5093
        %v5124 = vmul.f32 %v4851, %v5097
        %v5125 = vmul.f32 %v4853, %v5101
        %v5126 = vmul.f32 %v4273, %v5089
        %v5127 = vmul.f32 %v4275, %v5093
        %v5128 = vmul.f32 %v4857, %v5097
        %v5129 = vmul.f32 %v4859, %v5101
        %v5130 = vmul.f32 %v4277, %v5089
        %v5131 = vmul.f32 %v4279, %v5093
        %v5132 = vmul.f32 %v4861, %v5097
        %v5133 = vmul.f32 %v4863, %v5101
        %v5135 = vlaneseq
        %v5136 = vshrl.u32 %v5135, 7
        %v5137 = vsub.s32 0, %v5136
        %v5138 = vrot.slane %v5085, %v5137
        %v5139 = vlaneseq
        %v5140 = vshrl.u32 %v5139, 7
        %v5141 = vsub.s32 1, %v5140
        %v5142 = vrot.slane %v5085, %v5141
        %v5143 = vlaneseq
        %v5144 = vshrl.u32 %v5143, 7
        %v5145 = vsub.s32 2, %v5144
        %v5146 = vrot.slane %v5085, %v5145
        %v5147 = vlaneseq
        %v5148 = vshrl.u32 %v5147, 7
        %v5149 = vsub.s32 3, %v5148
        %v5150 = vrot.slane %v5085, %v5149
        %v5155 = vadd.f32 %v5102, %v5138
        %v5156 = vadd.f32 %v5103, %v5142
        %v5157 = vadd.f32 %v5104, %v5146
        %v5158 = vadd.f32 %v5105, %v5150
        %v5159 = vadd.f32 %v5106, %v5138
        %v5160 = vadd.f32 %v5107, %v5142
        %v5161 = vadd.f32 %v5108, %v5146
        %v5162 = vadd.f32 %v5109, %v5150
        %v5163 = vadd.f32 %v5110, %v5138
        %v5164 = vadd.f32 %v5111, %v5142
        %v5165 = vadd.f32 %v5112, %v5146
        %v5166 = vadd.f32 %v5113, %v5150
        %v5167 = vadd.f32 %v5114, %v5138
        %v5168 = vadd.f32 %v5115, %v5142
        %v5169 = vadd.f32 %v5116, %v5146
        %v5170 = vadd.f32 %v5117, %v5150
        %v5171 = vadd.f32 %v5118, %v5138
        %v5172 = vadd.f32 %v5119, %v5142
        %v5173 = vadd.f32 %v5120, %v5146
        %v5174 = vadd.f32 %v5121, %v5150
        %v5175 = vadd.f32 %v5122, %v5138
        %v5176 = vadd.f32 %v5123, %v5142
        %v5177 = vadd.f32 %v5124, %v5146
        %v5178 = vadd.f32 %v5125, %v5150
        %v5179 = vadd.f32 %v5126, %v5138
        %v5180 = vadd.f32 %v5127, %v5142
        %v5181 = vadd.f32 %v5128, %v5146
        %v5182 = vadd.f32 %v5129, %v5150
        %v5183 = vadd.f32 %v5130, %v5138
        %v5184 = vadd.f32 %v5131, %v5142
        %v5185 = vadd.f32 %v5132, %v5146
        %v5186 = vadd.f32 %v5133, %v5150
        %v5187 = vpack.c.bf16 %v5159, %v5155
        %v5188 = vpack.c.bf16 %v5160, %v5156
        %v5189 = vpack.c.bf16 %v5161, %v5157
        %v5190 = vpack.c.bf16 %v5162, %v5158
        %v5191 = vpack.c.bf16 %v5167, %v5163
        %v5192 = vpack.c.bf16 %v5168, %v5164
        %v5193 = vpack.c.bf16 %v5169, %v5165
        %v5194 = vpack.c.bf16 %v5170, %v5166
        %v5195 = vpack.c.bf16 %v5175, %v5171
        %v5196 = vpack.c.bf16 %v5176, %v5172
        %v5197 = vpack.c.bf16 %v5177, %v5173
        %v5198 = vpack.c.bf16 %v5178, %v5174
        %v5199 = vpack.c.bf16 %v5183, %v5179
        %v5200 = vpack.c.bf16 %v5184, %v5180
        %v5201 = vpack.c.bf16 %v5185, %v5181
        %v5202 = vpack.c.bf16 %v5186, %v5182
        %v5203 = vld [vmem:[%s279] sm:$0xff]
        %v5204 = vld [vmem:[%s279 + $0x8] sm:$0xff]
        %v5205 = vld [vmem:[%s279 + $0x10] sm:$0xff]
        %v5206 = vld [vmem:[%s279 + $0x18] sm:$0xff]
        %v5207 = vld [vmem:[%s279 + $0x20] sm:$0xff]
        %v5208 = vld [vmem:[%s279 + $0x28] sm:$0xff]
        %v5209 = vld [vmem:[%s279 + $0x30] sm:$0xff]
        %v5210 = vld [vmem:[%s279 + $0x38] sm:$0xff]
        %v5211 = vld [vmem:[%s279 + $0x40] sm:$0xff]
        %v5212 = vld [vmem:[%s279 + $0x48] sm:$0xff]
        %v5213 = vld [vmem:[%s279 + $0x50] sm:$0xff]
        %v5214 = vld [vmem:[%s279 + $0x58] sm:$0xff]
        %v5215 = vld [vmem:[%s279 + $0x60] sm:$0xff]
        %v5216 = vld [vmem:[%s279 + $0x68] sm:$0xff]
        %v5217 = vld [vmem:[%s279 + $0x70] sm:$0xff]
        %v5218 = vld [vmem:[%s279 + $0x78] sm:$0xff]
        %v5219 = vld [vmem:[%s279 + $0x80] sm:$0xff]
        %v5220 = vld [vmem:[%s279 + $0x88] sm:$0xff]
        %v5221 = vld [vmem:[%s279 + $0x90] sm:$0xff]
        %v5222 = vld [vmem:[%s279 + $0x98] sm:$0xff]
        %v5223 = vld [vmem:[%s279 + $0xa0] sm:$0xff]
        %v5224 = vld [vmem:[%s279 + $0xa8] sm:$0xff]
        %v5225 = vld [vmem:[%s279 + $0xb0] sm:$0xff]
        %v5226 = vld [vmem:[%s279 + $0xb8] sm:$0xff]
        %v5227 = vld [vmem:[%s279 + $0xc0] sm:$0xff]
        %v5228 = vld [vmem:[%s279 + $0xc8] sm:$0xff]
        %v5229 = vld [vmem:[%s279 + $0xd0] sm:$0xff]
        %v5230 = vld [vmem:[%s279 + $0xd8] sm:$0xff]
        %v5231 = vld [vmem:[%s279 + $0xe0] sm:$0xff]
        %v5232 = vld [vmem:[%s279 + $0xe8] sm:$0xff]
        %v5233 = vld [vmem:[%s279 + $0xf0] sm:$0xff]
        %v5234 = vld [vmem:[%s279 + $0xf8] sm:$0xff]
        %v5235 = vld [vmem:[%s279 + $0x100] sm:$0xff]
        %v5236 = vld [vmem:[%s279 + $0x108] sm:$0xff]
        %v5237 = vld [vmem:[%s279 + $0x110] sm:$0xff]
        %v5238 = vld [vmem:[%s279 + $0x118] sm:$0xff]
        %v5239 = vld [vmem:[%s279 + $0x120] sm:$0xff]
        %v5240 = vld [vmem:[%s279 + $0x128] sm:$0xff]
        %v5241 = vld [vmem:[%s279 + $0x130] sm:$0xff]
        %v5242 = vld [vmem:[%s279 + $0x138] sm:$0xff]
        %v5243 = vld [vmem:[%s279 + $0x140] sm:$0xff]
        %v5244 = vld [vmem:[%s279 + $0x148] sm:$0xff]
        %v5245 = vld [vmem:[%s279 + $0x150] sm:$0xff]
        %v5246 = vld [vmem:[%s279 + $0x158] sm:$0xff]
        %v5247 = vld [vmem:[%s279 + $0x160] sm:$0xff]
        %v5248 = vld [vmem:[%s279 + $0x168] sm:$0xff]
        %v5249 = vld [vmem:[%s279 + $0x170] sm:$0xff]
        %v5250 = vld [vmem:[%s279 + $0x178] sm:$0xff]
        %v5251 = vld [vmem:[%s279 + $0x180] sm:$0xff]
        %v5252 = vld [vmem:[%s279 + $0x188] sm:$0xff]
        %v5253 = vld [vmem:[%s279 + $0x190] sm:$0xff]
        %v5254 = vld [vmem:[%s279 + $0x198] sm:$0xff]
        %v5255 = vld [vmem:[%s279 + $0x1a0] sm:$0xff]
        %v5256 = vld [vmem:[%s279 + $0x1a8] sm:$0xff]
        %v5257 = vld [vmem:[%s279 + $0x1b0] sm:$0xff]
        %v5258 = vld [vmem:[%s279 + $0x1b8] sm:$0xff]
        %v5259 = vld [vmem:[%s279 + $0x1c0] sm:$0xff]
        %v5260 = vld [vmem:[%s279 + $0x1c8] sm:$0xff]
        %v5261 = vld [vmem:[%s279 + $0x1d0] sm:$0xff]
        %v5262 = vld [vmem:[%s279 + $0x1d8] sm:$0xff]
        %v5263 = vld [vmem:[%s279 + $0x1e0] sm:$0xff]
        %v5264 = vld [vmem:[%s279 + $0x1e8] sm:$0xff]
        %v5265 = vld [vmem:[%s279 + $0x1f0] sm:$0xff]
        %v5266 = vld [vmem:[%s279 + $0x1f8] sm:$0xff]
        %v5267 = vld [vmem:[%s279 + $0x200] sm:$0xff]
        %v5268 = vld [vmem:[%s279 + $0x208] sm:$0xff]
        %v5269 = vld [vmem:[%s279 + $0x210] sm:$0xff]
        %v5270 = vld [vmem:[%s279 + $0x218] sm:$0xff]
        %v5271 = vld [vmem:[%s279 + $0x220] sm:$0xff]
        %v5272 = vld [vmem:[%s279 + $0x228] sm:$0xff]
        %v5273 = vld [vmem:[%s279 + $0x230] sm:$0xff]
        %v5274 = vld [vmem:[%s279 + $0x238] sm:$0xff]
        %v5275 = vld [vmem:[%s279 + $0x240] sm:$0xff]
        %v5276 = vld [vmem:[%s279 + $0x248] sm:$0xff]
        %v5277 = vld [vmem:[%s279 + $0x250] sm:$0xff]
        %v5278 = vld [vmem:[%s279 + $0x258] sm:$0xff]
        %v5279 = vld [vmem:[%s279 + $0x260] sm:$0xff]
        %v5280 = vld [vmem:[%s279 + $0x268] sm:$0xff]
        %v5281 = vld [vmem:[%s279 + $0x270] sm:$0xff]
        %v5282 = vld [vmem:[%s279 + $0x278] sm:$0xff]
        %v5283 = vld [vmem:[%s279 + $0x280] sm:$0xff]
        %v5284 = vld [vmem:[%s279 + $0x288] sm:$0xff]
        %v5285 = vld [vmem:[%s279 + $0x290] sm:$0xff]
        %v5286 = vld [vmem:[%s279 + $0x298] sm:$0xff]
        %v5287 = vld [vmem:[%s279 + $0x2a0] sm:$0xff]
        %v5288 = vld [vmem:[%s279 + $0x2a8] sm:$0xff]
        %v5289 = vld [vmem:[%s279 + $0x2b0] sm:$0xff]
        %v5290 = vld [vmem:[%s279 + $0x2b8] sm:$0xff]
        %v5291 = vld [vmem:[%s279 + $0x2c0] sm:$0xff]
        %v5292 = vld [vmem:[%s279 + $0x2c8] sm:$0xff]
        %v5293 = vld [vmem:[%s279 + $0x2d0] sm:$0xff]
        %v5294 = vld [vmem:[%s279 + $0x2d8] sm:$0xff]
        %v5295 = vld [vmem:[%s279 + $0x2e0] sm:$0xff]
        %v5296 = vld [vmem:[%s279 + $0x2e8] sm:$0xff]
        %v5297 = vld [vmem:[%s279 + $0x2f0] sm:$0xff]
        %v5298 = vld [vmem:[%s279 + $0x2f8] sm:$0xff]
        %v5299 = vld [vmem:[%s279 + $0x300] sm:$0xff]
        %v5300 = vld [vmem:[%s279 + $0x308] sm:$0xff]
        %v5301 = vld [vmem:[%s279 + $0x310] sm:$0xff]
        %v5302 = vld [vmem:[%s279 + $0x318] sm:$0xff]
        %v5303 = vld [vmem:[%s279 + $0x320] sm:$0xff]
        %v5304 = vld [vmem:[%s279 + $0x328] sm:$0xff]
        %v5305 = vld [vmem:[%s279 + $0x330] sm:$0xff]
        %v5306 = vld [vmem:[%s279 + $0x338] sm:$0xff]
        %v5307 = vld [vmem:[%s279 + $0x340] sm:$0xff]
        %v5308 = vld [vmem:[%s279 + $0x348] sm:$0xff]
        %v5309 = vld [vmem:[%s279 + $0x350] sm:$0xff]
        %v5310 = vld [vmem:[%s279 + $0x358] sm:$0xff]
        %v5311 = vld [vmem:[%s279 + $0x360] sm:$0xff]
        %v5312 = vld [vmem:[%s279 + $0x368] sm:$0xff]
        %v5313 = vld [vmem:[%s279 + $0x370] sm:$0xff]
        %v5314 = vld [vmem:[%s279 + $0x378] sm:$0xff]
        %v5315 = vld [vmem:[%s279 + $0x380] sm:$0xff]
        %v5316 = vld [vmem:[%s279 + $0x388] sm:$0xff]
        %v5317 = vld [vmem:[%s279 + $0x390] sm:$0xff]
        %v5318 = vld [vmem:[%s279 + $0x398] sm:$0xff]
        %v5319 = vld [vmem:[%s279 + $0x3a0] sm:$0xff]
        %v5320 = vld [vmem:[%s279 + $0x3a8] sm:$0xff]
        %v5321 = vld [vmem:[%s279 + $0x3b0] sm:$0xff]
        %v5322 = vld [vmem:[%s279 + $0x3b8] sm:$0xff]
        %v5323 = vld [vmem:[%s279 + $0x3c0] sm:$0xff]
        %v5324 = vld [vmem:[%s279 + $0x3c8] sm:$0xff]
        %v5325 = vld [vmem:[%s279 + $0x3d0] sm:$0xff]
        %v5326 = vld [vmem:[%s279 + $0x3d8] sm:$0xff]
        %v5327 = vld [vmem:[%s279 + $0x3e0] sm:$0xff]
        %v5328 = vld [vmem:[%s279 + $0x3e8] sm:$0xff]
        %v5329 = vld [vmem:[%s279 + $0x3f0] sm:$0xff]
        %v5330 = vld [vmem:[%s279 + $0x3f8] sm:$0xff]
        %v5331 = vld [vmem:[%s279 + $0x400] sm:$0xff]
        %v5332 = vld [vmem:[%s279 + $0x408] sm:$0xff]
        %v5333 = vld [vmem:[%s279 + $0x410] sm:$0xff]
        %v5334 = vld [vmem:[%s279 + $0x418] sm:$0xff]
        %v5335 = vld [vmem:[%s279 + $0x420] sm:$0xff]
        %v5336 = vld [vmem:[%s279 + $0x428] sm:$0xff]
        %v5337 = vld [vmem:[%s279 + $0x430] sm:$0xff]
        %v5338 = vld [vmem:[%s279 + $0x438] sm:$0xff]
        %v5339 = vld [vmem:[%s279 + $0x440] sm:$0xff]
        %v5340 = vld [vmem:[%s279 + $0x448] sm:$0xff]
        %v5341 = vld [vmem:[%s279 + $0x450] sm:$0xff]
        %v5342 = vld [vmem:[%s279 + $0x458] sm:$0xff]
        %v5343 = vld [vmem:[%s279 + $0x460] sm:$0xff]
        %v5344 = vld [vmem:[%s279 + $0x468] sm:$0xff]
        %v5345 = vld [vmem:[%s279 + $0x470] sm:$0xff]
        %v5346 = vld [vmem:[%s279 + $0x478] sm:$0xff]
        %v5347 = vld [vmem:[%s279 + $0x480] sm:$0xff]
        %v5348 = vld [vmem:[%s279 + $0x488] sm:$0xff]
        %v5349 = vld [vmem:[%s279 + $0x490] sm:$0xff]
        %v5350 = vld [vmem:[%s279 + $0x498] sm:$0xff]
        %v5351 = vld [vmem:[%s279 + $0x4a0] sm:$0xff]
        %v5352 = vld [vmem:[%s279 + $0x4a8] sm:$0xff]
        %v5353 = vld [vmem:[%s279 + $0x4b0] sm:$0xff]
        %v5354 = vld [vmem:[%s279 + $0x4b8] sm:$0xff]
        %v5355 = vld [vmem:[%s279 + $0x4c0] sm:$0xff]
        %v5356 = vld [vmem:[%s279 + $0x4c8] sm:$0xff]
        %v5357 = vld [vmem:[%s279 + $0x4d0] sm:$0xff]
        %v5358 = vld [vmem:[%s279 + $0x4d8] sm:$0xff]
        %v5359 = vld [vmem:[%s279 + $0x4e0] sm:$0xff]
        %v5360 = vld [vmem:[%s279 + $0x4e8] sm:$0xff]
        %v5361 = vld [vmem:[%s279 + $0x4f0] sm:$0xff]
        %v5362 = vld [vmem:[%s279 + $0x4f8] sm:$0xff]
        %v5363 = vld [vmem:[%s279 + $0x500] sm:$0xff]
        %v5364 = vld [vmem:[%s279 + $0x508] sm:$0xff]
        %v5365 = vld [vmem:[%s279 + $0x510] sm:$0xff]
        %v5366 = vld [vmem:[%s279 + $0x518] sm:$0xff]
        %v5367 = vld [vmem:[%s279 + $0x520] sm:$0xff]
        %v5368 = vld [vmem:[%s279 + $0x528] sm:$0xff]
        %v5369 = vld [vmem:[%s279 + $0x530] sm:$0xff]
        %v5370 = vld [vmem:[%s279 + $0x538] sm:$0xff]
        %v5371 = vld [vmem:[%s279 + $0x540] sm:$0xff]
        %v5372 = vld [vmem:[%s279 + $0x548] sm:$0xff]
        %v5373 = vld [vmem:[%s279 + $0x550] sm:$0xff]
        %v5374 = vld [vmem:[%s279 + $0x558] sm:$0xff]
        %v5375 = vld [vmem:[%s279 + $0x560] sm:$0xff]
        %v5376 = vld [vmem:[%s279 + $0x568] sm:$0xff]
        %v5377 = vld [vmem:[%s279 + $0x570] sm:$0xff]
        %v5378 = vld [vmem:[%s279 + $0x578] sm:$0xff]
        %v5379 = vld [vmem:[%s279 + $0x580] sm:$0xff]
        %v5380 = vld [vmem:[%s279 + $0x588] sm:$0xff]
        %v5381 = vld [vmem:[%s279 + $0x590] sm:$0xff]
        %v5382 = vld [vmem:[%s279 + $0x598] sm:$0xff]
        %v5383 = vld [vmem:[%s279 + $0x5a0] sm:$0xff]
        %v5384 = vld [vmem:[%s279 + $0x5a8] sm:$0xff]
        %v5385 = vld [vmem:[%s279 + $0x5b0] sm:$0xff]
        %v5386 = vld [vmem:[%s279 + $0x5b8] sm:$0xff]
        %v5387 = vld [vmem:[%s279 + $0x5c0] sm:$0xff]
        %v5388 = vld [vmem:[%s279 + $0x5c8] sm:$0xff]
        %v5389 = vld [vmem:[%s279 + $0x5d0] sm:$0xff]
        %v5390 = vld [vmem:[%s279 + $0x5d8] sm:$0xff]
        %v5391 = vld [vmem:[%s279 + $0x5e0] sm:$0xff]
        %v5392 = vld [vmem:[%s279 + $0x5e8] sm:$0xff]
        %v5393 = vld [vmem:[%s279 + $0x5f0] sm:$0xff]
        %v5394 = vld [vmem:[%s279 + $0x5f8] sm:$0xff]
        %v5395 = vld [vmem:[%s279 + $0x600] sm:$0xff]
        %v5396 = vld [vmem:[%s279 + $0x608] sm:$0xff]
        %v5397 = vld [vmem:[%s279 + $0x610] sm:$0xff]
        %v5398 = vld [vmem:[%s279 + $0x618] sm:$0xff]
        %v5399 = vld [vmem:[%s279 + $0x620] sm:$0xff]
        %v5400 = vld [vmem:[%s279 + $0x628] sm:$0xff]
        %v5401 = vld [vmem:[%s279 + $0x630] sm:$0xff]
        %v5402 = vld [vmem:[%s279 + $0x638] sm:$0xff]
        %v5403 = vld [vmem:[%s279 + $0x640] sm:$0xff]
        %v5404 = vld [vmem:[%s279 + $0x648] sm:$0xff]
        %v5405 = vld [vmem:[%s279 + $0x650] sm:$0xff]
        %v5406 = vld [vmem:[%s279 + $0x658] sm:$0xff]
        %v5407 = vld [vmem:[%s279 + $0x660] sm:$0xff]
        %v5408 = vld [vmem:[%s279 + $0x668] sm:$0xff]
        %v5409 = vld [vmem:[%s279 + $0x670] sm:$0xff]
        %v5410 = vld [vmem:[%s279 + $0x678] sm:$0xff]
        %v5411 = vld [vmem:[%s279 + $0x680] sm:$0xff]
        %v5412 = vld [vmem:[%s279 + $0x688] sm:$0xff]
        %v5413 = vld [vmem:[%s279 + $0x690] sm:$0xff]
        %v5414 = vld [vmem:[%s279 + $0x698] sm:$0xff]
        %v5415 = vld [vmem:[%s279 + $0x6a0] sm:$0xff]
        %v5416 = vld [vmem:[%s279 + $0x6a8] sm:$0xff]
        %v5417 = vld [vmem:[%s279 + $0x6b0] sm:$0xff]
        %v5418 = vld [vmem:[%s279 + $0x6b8] sm:$0xff]
        %v5419 = vld [vmem:[%s279 + $0x6c0] sm:$0xff]
        %v5420 = vld [vmem:[%s279 + $0x6c8] sm:$0xff]
        %v5421 = vld [vmem:[%s279 + $0x6d0] sm:$0xff]
        %v5422 = vld [vmem:[%s279 + $0x6d8] sm:$0xff]
        %v5423 = vld [vmem:[%s279 + $0x6e0] sm:$0xff]
        %v5424 = vld [vmem:[%s279 + $0x6e8] sm:$0xff]
        %v5425 = vld [vmem:[%s279 + $0x6f0] sm:$0xff]
        %v5426 = vld [vmem:[%s279 + $0x6f8] sm:$0xff]
        %v5427 = vld [vmem:[%s279 + $0x700] sm:$0xff]
        %v5428 = vld [vmem:[%s279 + $0x708] sm:$0xff]
        %v5429 = vld [vmem:[%s279 + $0x710] sm:$0xff]
        %v5430 = vld [vmem:[%s279 + $0x718] sm:$0xff]
        %v5431 = vld [vmem:[%s279 + $0x720] sm:$0xff]
        %v5432 = vld [vmem:[%s279 + $0x728] sm:$0xff]
        %v5433 = vld [vmem:[%s279 + $0x730] sm:$0xff]
        %v5434 = vld [vmem:[%s279 + $0x738] sm:$0xff]
        %v5435 = vld [vmem:[%s279 + $0x740] sm:$0xff]
        %v5436 = vld [vmem:[%s279 + $0x748] sm:$0xff]
        %v5437 = vld [vmem:[%s279 + $0x750] sm:$0xff]
        %v5438 = vld [vmem:[%s279 + $0x758] sm:$0xff]
        %v5439 = vld [vmem:[%s279 + $0x760] sm:$0xff]
        %v5440 = vld [vmem:[%s279 + $0x768] sm:$0xff]
        %v5441 = vld [vmem:[%s279 + $0x770] sm:$0xff]
        %v5442 = vld [vmem:[%s279 + $0x778] sm:$0xff]
        %v5443 = vld [vmem:[%s279 + $0x780] sm:$0xff]
        %v5444 = vld [vmem:[%s279 + $0x788] sm:$0xff]
        %v5445 = vld [vmem:[%s279 + $0x790] sm:$0xff]
        %v5446 = vld [vmem:[%s279 + $0x798] sm:$0xff]
        %v5447 = vld [vmem:[%s279 + $0x7a0] sm:$0xff]
        %v5448 = vld [vmem:[%s279 + $0x7a8] sm:$0xff]
        %v5449 = vld [vmem:[%s279 + $0x7b0] sm:$0xff]
        %v5450 = vld [vmem:[%s279 + $0x7b8] sm:$0xff]
        %v5451 = vld [vmem:[%s279 + $0x7c0] sm:$0xff]
        %v5452 = vld [vmem:[%s279 + $0x7c8] sm:$0xff]
        %v5453 = vld [vmem:[%s279 + $0x7d0] sm:$0xff]
        %v5454 = vld [vmem:[%s279 + $0x7d8] sm:$0xff]
        %v5455 = vld [vmem:[%s279 + $0x7e0] sm:$0xff]
        %v5456 = vld [vmem:[%s279 + $0x7e8] sm:$0xff]
        %v5457 = vld [vmem:[%s279 + $0x7f0] sm:$0xff]
        %v5458 = vld [vmem:[%s279 + $0x7f8] sm:$0xff]
        %v5459 = vld [vmem:[%s279 + $0x800] sm:$0xff]
        %v5460 = vld [vmem:[%s279 + $0x808] sm:$0xff]
        %v5461 = vld [vmem:[%s279 + $0x810] sm:$0xff]
        %v5462 = vld [vmem:[%s279 + $0x818] sm:$0xff]
        %v5463 = vld [vmem:[%s279 + $0x820] sm:$0xff]
        %v5464 = vld [vmem:[%s279 + $0x828] sm:$0xff]
        %v5465 = vld [vmem:[%s279 + $0x830] sm:$0xff]
        %v5466 = vld [vmem:[%s279 + $0x838] sm:$0xff]
        %v5467 = vld [vmem:[%s279 + $0x840] sm:$0xff]
        %v5468 = vld [vmem:[%s279 + $0x848] sm:$0xff]
        %v5469 = vld [vmem:[%s279 + $0x850] sm:$0xff]
        %v5470 = vld [vmem:[%s279 + $0x858] sm:$0xff]
        %v5471 = vld [vmem:[%s279 + $0x860] sm:$0xff]
        %v5472 = vld [vmem:[%s279 + $0x868] sm:$0xff]
        %v5473 = vld [vmem:[%s279 + $0x870] sm:$0xff]
        %v5474 = vld [vmem:[%s279 + $0x878] sm:$0xff]
        %v5475 = vld [vmem:[%s279 + $0x880] sm:$0xff]
        %v5476 = vld [vmem:[%s279 + $0x888] sm:$0xff]
        %v5477 = vld [vmem:[%s279 + $0x890] sm:$0xff]
        %v5478 = vld [vmem:[%s279 + $0x898] sm:$0xff]
        %v5479 = vld [vmem:[%s279 + $0x8a0] sm:$0xff]
        %v5480 = vld [vmem:[%s279 + $0x8a8] sm:$0xff]
        %v5481 = vld [vmem:[%s279 + $0x8b0] sm:$0xff]
        %v5482 = vld [vmem:[%s279 + $0x8b8] sm:$0xff]
        %v5483 = vld [vmem:[%s279 + $0x8c0] sm:$0xff]
        %v5484 = vld [vmem:[%s279 + $0x8c8] sm:$0xff]
        %v5485 = vld [vmem:[%s279 + $0x8d0] sm:$0xff]
        %v5486 = vld [vmem:[%s279 + $0x8d8] sm:$0xff]
        %v5487 = vld [vmem:[%s279 + $0x8e0] sm:$0xff]
        %v5488 = vld [vmem:[%s279 + $0x8e8] sm:$0xff]
        %v5489 = vld [vmem:[%s279 + $0x8f0] sm:$0xff]
        %v5490 = vld [vmem:[%s279 + $0x8f8] sm:$0xff]
        %v5491 = vld [vmem:[%s279 + $0x900] sm:$0xff]
        %v5492 = vld [vmem:[%s279 + $0x908] sm:$0xff]
        %v5493 = vld [vmem:[%s279 + $0x910] sm:$0xff]
        %v5494 = vld [vmem:[%s279 + $0x918] sm:$0xff]
        %v5495 = vld [vmem:[%s279 + $0x920] sm:$0xff]
        %v5496 = vld [vmem:[%s279 + $0x928] sm:$0xff]
        %v5497 = vld [vmem:[%s279 + $0x930] sm:$0xff]
        %v5498 = vld [vmem:[%s279 + $0x938] sm:$0xff]
        %v5499 = vld [vmem:[%s279 + $0x940] sm:$0xff]
        %v5500 = vld [vmem:[%s279 + $0x948] sm:$0xff]
        %v5501 = vld [vmem:[%s279 + $0x950] sm:$0xff]
        %v5502 = vld [vmem:[%s279 + $0x958] sm:$0xff]
        %v5503 = vld [vmem:[%s279 + $0x960] sm:$0xff]
        %v5504 = vld [vmem:[%s279 + $0x968] sm:$0xff]
        %v5505 = vld [vmem:[%s279 + $0x970] sm:$0xff]
        %v5506 = vld [vmem:[%s279 + $0x978] sm:$0xff]
        %v5507 = vld [vmem:[%s279 + $0x980] sm:$0xff]
        %v5508 = vld [vmem:[%s279 + $0x988] sm:$0xff]
        %v5509 = vld [vmem:[%s279 + $0x990] sm:$0xff]
        %v5510 = vld [vmem:[%s279 + $0x998] sm:$0xff]
        %v5511 = vld [vmem:[%s279 + $0x9a0] sm:$0xff]
        %v5512 = vld [vmem:[%s279 + $0x9a8] sm:$0xff]
        %v5513 = vld [vmem:[%s279 + $0x9b0] sm:$0xff]
        %v5514 = vld [vmem:[%s279 + $0x9b8] sm:$0xff]
        %v5515 = vld [vmem:[%s279 + $0x9c0] sm:$0xff]
        %v5516 = vld [vmem:[%s279 + $0x9c8] sm:$0xff]
        %v5517 = vld [vmem:[%s279 + $0x9d0] sm:$0xff]
        %v5518 = vld [vmem:[%s279 + $0x9d8] sm:$0xff]
        %v5519 = vld [vmem:[%s279 + $0x9e0] sm:$0xff]
        %v5520 = vld [vmem:[%s279 + $0x9e8] sm:$0xff]
        %v5521 = vld [vmem:[%s279 + $0x9f0] sm:$0xff]
        %v5522 = vld [vmem:[%s279 + $0x9f8] sm:$0xff]
        %v5523 = vld [vmem:[%s279 + $0xa00] sm:$0xff]
        %v5524 = vld [vmem:[%s279 + $0xa08] sm:$0xff]
        %v5525 = vld [vmem:[%s279 + $0xa10] sm:$0xff]
        %v5526 = vld [vmem:[%s279 + $0xa18] sm:$0xff]
        %v5527 = vld [vmem:[%s279 + $0xa20] sm:$0xff]
        %v5528 = vld [vmem:[%s279 + $0xa28] sm:$0xff]
        %v5529 = vld [vmem:[%s279 + $0xa30] sm:$0xff]
        %v5530 = vld [vmem:[%s279 + $0xa38] sm:$0xff]
        %v5531 = vld [vmem:[%s279 + $0xa40] sm:$0xff]
        %v5532 = vld [vmem:[%s279 + $0xa48] sm:$0xff]
        %v5533 = vld [vmem:[%s279 + $0xa50] sm:$0xff]
        %v5534 = vld [vmem:[%s279 + $0xa58] sm:$0xff]
        %v5535 = vld [vmem:[%s279 + $0xa60] sm:$0xff]
        %v5536 = vld [vmem:[%s279 + $0xa68] sm:$0xff]
        %v5537 = vld [vmem:[%s279 + $0xa70] sm:$0xff]
        %v5538 = vld [vmem:[%s279 + $0xa78] sm:$0xff]
        %v5539 = vld [vmem:[%s279 + $0xa80] sm:$0xff]
        %v5540 = vld [vmem:[%s279 + $0xa88] sm:$0xff]
        %v5541 = vld [vmem:[%s279 + $0xa90] sm:$0xff]
        %v5542 = vld [vmem:[%s279 + $0xa98] sm:$0xff]
        %v5543 = vld [vmem:[%s279 + $0xaa0] sm:$0xff]
        %v5544 = vld [vmem:[%s279 + $0xaa8] sm:$0xff]
        %v5545 = vld [vmem:[%s279 + $0xab0] sm:$0xff]
        %v5546 = vld [vmem:[%s279 + $0xab8] sm:$0xff]
        %v5547 = vld [vmem:[%s279 + $0xac0] sm:$0xff]
        %v5548 = vld [vmem:[%s279 + $0xac8] sm:$0xff]
        %v5549 = vld [vmem:[%s279 + $0xad0] sm:$0xff]
        %v5550 = vld [vmem:[%s279 + $0xad8] sm:$0xff]
        %v5551 = vld [vmem:[%s279 + $0xae0] sm:$0xff]
        %v5552 = vld [vmem:[%s279 + $0xae8] sm:$0xff]
        %v5553 = vld [vmem:[%s279 + $0xaf0] sm:$0xff]
        %v5554 = vld [vmem:[%s279 + $0xaf8] sm:$0xff]
        %v5555 = vld [vmem:[%s279 + $0xb00] sm:$0xff]
        %v5556 = vld [vmem:[%s279 + $0xb08] sm:$0xff]
        %v5557 = vld [vmem:[%s279 + $0xb10] sm:$0xff]
        %v5558 = vld [vmem:[%s279 + $0xb18] sm:$0xff]
        %v5559 = vld [vmem:[%s279 + $0xb20] sm:$0xff]
        %v5560 = vld [vmem:[%s279 + $0xb28] sm:$0xff]
        %v5561 = vld [vmem:[%s279 + $0xb30] sm:$0xff]
        %v5562 = vld [vmem:[%s279 + $0xb38] sm:$0xff]
        %v5563 = vld [vmem:[%s279 + $0xb40] sm:$0xff]
        %v5564 = vld [vmem:[%s279 + $0xb48] sm:$0xff]
        %v5565 = vld [vmem:[%s279 + $0xb50] sm:$0xff]
        %v5566 = vld [vmem:[%s279 + $0xb58] sm:$0xff]
        %v5567 = vld [vmem:[%s279 + $0xb60] sm:$0xff]
        %v5568 = vld [vmem:[%s279 + $0xb68] sm:$0xff]
        %v5569 = vld [vmem:[%s279 + $0xb70] sm:$0xff]
        %v5570 = vld [vmem:[%s279 + $0xb78] sm:$0xff]
        %v5571 = vld [vmem:[%s279 + $0xb80] sm:$0xff]
        %v5572 = vld [vmem:[%s279 + $0xb88] sm:$0xff]
        %v5573 = vld [vmem:[%s279 + $0xb90] sm:$0xff]
        %v5574 = vld [vmem:[%s279 + $0xb98] sm:$0xff]
        %v5575 = vld [vmem:[%s279 + $0xba0] sm:$0xff]
        %v5576 = vld [vmem:[%s279 + $0xba8] sm:$0xff]
        %v5577 = vld [vmem:[%s279 + $0xbb0] sm:$0xff]
        %v5578 = vld [vmem:[%s279 + $0xbb8] sm:$0xff]
        %v5579 = vld [vmem:[%s279 + $0xbc0] sm:$0xff]
        %v5580 = vld [vmem:[%s279 + $0xbc8] sm:$0xff]
        %v5581 = vld [vmem:[%s279 + $0xbd0] sm:$0xff]
        %v5582 = vld [vmem:[%s279 + $0xbd8] sm:$0xff]
        %v5583 = vld [vmem:[%s279 + $0xbe0] sm:$0xff]
        %v5584 = vld [vmem:[%s279 + $0xbe8] sm:$0xff]
        %v5585 = vld [vmem:[%s279 + $0xbf0] sm:$0xff]
        %v5586 = vld [vmem:[%s279 + $0xbf8] sm:$0xff]
        %v5971 = vunpack.c.l.b16 %v5203
        %v5972 = vunpack.c.h.b16 %v5203
        %v5973 = vunpack.c.l.b16 %v5204
        %v5974 = vunpack.c.h.b16 %v5204
        %v5975 = vunpack.c.l.b16 %v5205
        %v5976 = vunpack.c.h.b16 %v5205
        %v5977 = vunpack.c.l.b16 %v5206
        %v5978 = vunpack.c.h.b16 %v5206
        %v5979 = vunpack.c.l.b16 %v5207
        %v5980 = vunpack.c.h.b16 %v5207
        %v5981 = vunpack.c.l.b16 %v5208
        %v5982 = vunpack.c.h.b16 %v5208
        %v5983 = vunpack.c.l.b16 %v5209
        %v5984 = vunpack.c.h.b16 %v5209
        %v5985 = vunpack.c.l.b16 %v5210
        %v5986 = vunpack.c.h.b16 %v5210
        %v5987 = vunpack.c.l.b16 %v5211
        %v5988 = vunpack.c.h.b16 %v5211
        %v5989 = vunpack.c.l.b16 %v5212
        %v5990 = vunpack.c.h.b16 %v5212
        %v5991 = vunpack.c.l.b16 %v5213
        %v5992 = vunpack.c.h.b16 %v5213
        %v5993 = vunpack.c.l.b16 %v5214
        %v5994 = vunpack.c.h.b16 %v5214
        %v5995 = vunpack.c.l.b16 %v5215
        %v5996 = vunpack.c.h.b16 %v5215
        %v5997 = vunpack.c.l.b16 %v5216
        %v5998 = vunpack.c.h.b16 %v5216
        %v5999 = vunpack.c.l.b16 %v5217
        %v6000 = vunpack.c.h.b16 %v5217
        %v6001 = vunpack.c.l.b16 %v5218
        %v6002 = vunpack.c.h.b16 %v5218
        %v6003 = vunpack.c.l.b16 %v5219
        %v6004 = vunpack.c.h.b16 %v5219
        %v6005 = vunpack.c.l.b16 %v5220
        %v6006 = vunpack.c.h.b16 %v5220
        %v6007 = vunpack.c.l.b16 %v5221
        %v6008 = vunpack.c.h.b16 %v5221
        %v6009 = vunpack.c.l.b16 %v5222
        %v6010 = vunpack.c.h.b16 %v5222
        %v6011 = vunpack.c.l.b16 %v5223
        %v6012 = vunpack.c.h.b16 %v5223
        %v6013 = vunpack.c.l.b16 %v5224
        %v6014 = vunpack.c.h.b16 %v5224
        %v6015 = vunpack.c.l.b16 %v5225
        %v6016 = vunpack.c.h.b16 %v5225
        %v6017 = vunpack.c.l.b16 %v5226
        %v6018 = vunpack.c.h.b16 %v5226
        %v6019 = vunpack.c.l.b16 %v5227
        %v6020 = vunpack.c.h.b16 %v5227
        %v6021 = vunpack.c.l.b16 %v5228
        %v6022 = vunpack.c.h.b16 %v5228
        %v6023 = vunpack.c.l.b16 %v5229
        %v6024 = vunpack.c.h.b16 %v5229
        %v6025 = vunpack.c.l.b16 %v5230
        %v6026 = vunpack.c.h.b16 %v5230
        %v6027 = vunpack.c.l.b16 %v5231
        %v6028 = vunpack.c.h.b16 %v5231
        %v6029 = vunpack.c.l.b16 %v5232
        %v6030 = vunpack.c.h.b16 %v5232
        %v6031 = vunpack.c.l.b16 %v5233
        %v6032 = vunpack.c.h.b16 %v5233
        %v6033 = vunpack.c.l.b16 %v5234
        %v6034 = vunpack.c.h.b16 %v5234
        %v6035 = vunpack.c.l.b16 %v5235
        %v6036 = vunpack.c.h.b16 %v5235
        %v6037 = vunpack.c.l.b16 %v5236
        %v6038 = vunpack.c.h.b16 %v5236
        %v6039 = vunpack.c.l.b16 %v5237
        %v6040 = vunpack.c.h.b16 %v5237
        %v6041 = vunpack.c.l.b16 %v5238
        %v6042 = vunpack.c.h.b16 %v5238
        %v6043 = vunpack.c.l.b16 %v5239
        %v6044 = vunpack.c.h.b16 %v5239
        %v6045 = vunpack.c.l.b16 %v5240
        %v6046 = vunpack.c.h.b16 %v5240
        %v6047 = vunpack.c.l.b16 %v5241
        %v6048 = vunpack.c.h.b16 %v5241
        %v6049 = vunpack.c.l.b16 %v5242
        %v6050 = vunpack.c.h.b16 %v5242
        %v6051 = vunpack.c.l.b16 %v5243
        %v6052 = vunpack.c.h.b16 %v5243
        %v6053 = vunpack.c.l.b16 %v5244
        %v6054 = vunpack.c.h.b16 %v5244
        %v6055 = vunpack.c.l.b16 %v5245
        %v6056 = vunpack.c.h.b16 %v5245
        %v6057 = vunpack.c.l.b16 %v5246
        %v6058 = vunpack.c.h.b16 %v5246
        %v6059 = vunpack.c.l.b16 %v5247
        %v6060 = vunpack.c.h.b16 %v5247
        %v6061 = vunpack.c.l.b16 %v5248
        %v6062 = vunpack.c.h.b16 %v5248
        %v6063 = vunpack.c.l.b16 %v5249
        %v6064 = vunpack.c.h.b16 %v5249
        %v6065 = vunpack.c.l.b16 %v5250
        %v6066 = vunpack.c.h.b16 %v5250
        %v6067 = vunpack.c.l.b16 %v5251
        %v6068 = vunpack.c.h.b16 %v5251
        %v6069 = vunpack.c.l.b16 %v5252
        %v6070 = vunpack.c.h.b16 %v5252
        %v6071 = vunpack.c.l.b16 %v5253
        %v6072 = vunpack.c.h.b16 %v5253
        %v6073 = vunpack.c.l.b16 %v5254
        %v6074 = vunpack.c.h.b16 %v5254
        %v6075 = vunpack.c.l.b16 %v5255
        %v6076 = vunpack.c.h.b16 %v5255
        %v6077 = vunpack.c.l.b16 %v5256
        %v6078 = vunpack.c.h.b16 %v5256
        %v6079 = vunpack.c.l.b16 %v5257
        %v6080 = vunpack.c.h.b16 %v5257
        %v6081 = vunpack.c.l.b16 %v5258
        %v6082 = vunpack.c.h.b16 %v5258
        %v6083 = vunpack.c.l.b16 %v5259
        %v6084 = vunpack.c.h.b16 %v5259
        %v6085 = vunpack.c.l.b16 %v5260
        %v6086 = vunpack.c.h.b16 %v5260
        %v6087 = vunpack.c.l.b16 %v5261
        %v6088 = vunpack.c.h.b16 %v5261
        %v6089 = vunpack.c.l.b16 %v5262
        %v6090 = vunpack.c.h.b16 %v5262
        %v6091 = vunpack.c.l.b16 %v5263
        %v6092 = vunpack.c.h.b16 %v5263
        %v6093 = vunpack.c.l.b16 %v5264
        %v6094 = vunpack.c.h.b16 %v5264
        %v6095 = vunpack.c.l.b16 %v5265
        %v6096 = vunpack.c.h.b16 %v5265
        %v6097 = vunpack.c.l.b16 %v5266
        %v6098 = vunpack.c.h.b16 %v5266
        %v6099 = vunpack.c.l.b16 %v5267
        %v6100 = vunpack.c.h.b16 %v5267
        %v6101 = vunpack.c.l.b16 %v5268
        %v6102 = vunpack.c.h.b16 %v5268
        %v6103 = vunpack.c.l.b16 %v5269
        %v6104 = vunpack.c.h.b16 %v5269
        %v6105 = vunpack.c.l.b16 %v5270
        %v6106 = vunpack.c.h.b16 %v5270
        %v6107 = vunpack.c.l.b16 %v5271
        %v6108 = vunpack.c.h.b16 %v5271
        %v6109 = vunpack.c.l.b16 %v5272
        %v6110 = vunpack.c.h.b16 %v5272
        %v6111 = vunpack.c.l.b16 %v5273
        %v6112 = vunpack.c.h.b16 %v5273
        %v6113 = vunpack.c.l.b16 %v5274
        %v6114 = vunpack.c.h.b16 %v5274
        %v6115 = vunpack.c.l.b16 %v5275
        %v6116 = vunpack.c.h.b16 %v5275
        %v6117 = vunpack.c.l.b16 %v5276
        %v6118 = vunpack.c.h.b16 %v5276
        %v6119 = vunpack.c.l.b16 %v5277
        %v6120 = vunpack.c.h.b16 %v5277
        %v6121 = vunpack.c.l.b16 %v5278
        %v6122 = vunpack.c.h.b16 %v5278
        %v6123 = vunpack.c.l.b16 %v5279
        %v6124 = vunpack.c.h.b16 %v5279
        %v6125 = vunpack.c.l.b16 %v5280
        %v6126 = vunpack.c.h.b16 %v5280
        %v6127 = vunpack.c.l.b16 %v5281
        %v6128 = vunpack.c.h.b16 %v5281
        %v6129 = vunpack.c.l.b16 %v5282
        %v6130 = vunpack.c.h.b16 %v5282
        %v6131 = vunpack.c.l.b16 %v5283
        %v6132 = vunpack.c.h.b16 %v5283
        %v6133 = vunpack.c.l.b16 %v5284
        %v6134 = vunpack.c.h.b16 %v5284
        %v6135 = vunpack.c.l.b16 %v5285
        %v6136 = vunpack.c.h.b16 %v5285
        %v6137 = vunpack.c.l.b16 %v5286
        %v6138 = vunpack.c.h.b16 %v5286
        %v6139 = vunpack.c.l.b16 %v5287
        %v6140 = vunpack.c.h.b16 %v5287
        %v6141 = vunpack.c.l.b16 %v5288
        %v6142 = vunpack.c.h.b16 %v5288
        %v6143 = vunpack.c.l.b16 %v5289
        %v6144 = vunpack.c.h.b16 %v5289
        %v6145 = vunpack.c.l.b16 %v5290
        %v6146 = vunpack.c.h.b16 %v5290
        %v6147 = vunpack.c.l.b16 %v5291
        %v6148 = vunpack.c.h.b16 %v5291
        %v6149 = vunpack.c.l.b16 %v5292
        %v6150 = vunpack.c.h.b16 %v5292
        %v6151 = vunpack.c.l.b16 %v5293
        %v6152 = vunpack.c.h.b16 %v5293
        %v6153 = vunpack.c.l.b16 %v5294
        %v6154 = vunpack.c.h.b16 %v5294
        %v6155 = vunpack.c.l.b16 %v5295
        %v6156 = vunpack.c.h.b16 %v5295
        %v6157 = vunpack.c.l.b16 %v5296
        %v6158 = vunpack.c.h.b16 %v5296
        %v6159 = vunpack.c.l.b16 %v5297
        %v6160 = vunpack.c.h.b16 %v5297
        %v6161 = vunpack.c.l.b16 %v5298
        %v6162 = vunpack.c.h.b16 %v5298
        %v6163 = vunpack.c.l.b16 %v5299
        %v6164 = vunpack.c.h.b16 %v5299
        %v6165 = vunpack.c.l.b16 %v5300
        %v6166 = vunpack.c.h.b16 %v5300
        %v6167 = vunpack.c.l.b16 %v5301
        %v6168 = vunpack.c.h.b16 %v5301
        %v6169 = vunpack.c.l.b16 %v5302
        %v6170 = vunpack.c.h.b16 %v5302
        %v6171 = vunpack.c.l.b16 %v5303
        %v6172 = vunpack.c.h.b16 %v5303
        %v6173 = vunpack.c.l.b16 %v5304
        %v6174 = vunpack.c.h.b16 %v5304
        %v6175 = vunpack.c.l.b16 %v5305
        %v6176 = vunpack.c.h.b16 %v5305
        %v6177 = vunpack.c.l.b16 %v5306
        %v6178 = vunpack.c.h.b16 %v5306
        %v6179 = vunpack.c.l.b16 %v5307
        %v6180 = vunpack.c.h.b16 %v5307
        %v6181 = vunpack.c.l.b16 %v5308
        %v6182 = vunpack.c.h.b16 %v5308
        %v6183 = vunpack.c.l.b16 %v5309
        %v6184 = vunpack.c.h.b16 %v5309
        %v6185 = vunpack.c.l.b16 %v5310
        %v6186 = vunpack.c.h.b16 %v5310
        %v6187 = vunpack.c.l.b16 %v5311
        %v6188 = vunpack.c.h.b16 %v5311
        %v6189 = vunpack.c.l.b16 %v5312
        %v6190 = vunpack.c.h.b16 %v5312
        %v6191 = vunpack.c.l.b16 %v5313
        %v6192 = vunpack.c.h.b16 %v5313
        %v6193 = vunpack.c.l.b16 %v5314
        %v6194 = vunpack.c.h.b16 %v5314
        %v6195 = vunpack.c.l.b16 %v5315
        %v6196 = vunpack.c.h.b16 %v5315
        %v6197 = vunpack.c.l.b16 %v5316
        %v6198 = vunpack.c.h.b16 %v5316
        %v6199 = vunpack.c.l.b16 %v5317
        %v6200 = vunpack.c.h.b16 %v5317
        %v6201 = vunpack.c.l.b16 %v5318
        %v6202 = vunpack.c.h.b16 %v5318
        %v6203 = vunpack.c.l.b16 %v5319
        %v6204 = vunpack.c.h.b16 %v5319
        %v6205 = vunpack.c.l.b16 %v5320
        %v6206 = vunpack.c.h.b16 %v5320
        %v6207 = vunpack.c.l.b16 %v5321
        %v6208 = vunpack.c.h.b16 %v5321
        %v6209 = vunpack.c.l.b16 %v5322
        %v6210 = vunpack.c.h.b16 %v5322
        %v6211 = vunpack.c.l.b16 %v5323
        %v6212 = vunpack.c.h.b16 %v5323
        %v6213 = vunpack.c.l.b16 %v5324
        %v6214 = vunpack.c.h.b16 %v5324
        %v6215 = vunpack.c.l.b16 %v5325
        %v6216 = vunpack.c.h.b16 %v5325
        %v6217 = vunpack.c.l.b16 %v5326
        %v6218 = vunpack.c.h.b16 %v5326
        %v6219 = vunpack.c.l.b16 %v5327
        %v6220 = vunpack.c.h.b16 %v5327
        %v6221 = vunpack.c.l.b16 %v5328
        %v6222 = vunpack.c.h.b16 %v5328
        %v6223 = vunpack.c.l.b16 %v5329
        %v6224 = vunpack.c.h.b16 %v5329
        %v6225 = vunpack.c.l.b16 %v5330
        %v6226 = vunpack.c.h.b16 %v5330
        %v6227 = vunpack.c.l.b16 %v5331
        %v6228 = vunpack.c.h.b16 %v5331
        %v6229 = vunpack.c.l.b16 %v5332
        %v6230 = vunpack.c.h.b16 %v5332
        %v6231 = vunpack.c.l.b16 %v5333
        %v6232 = vunpack.c.h.b16 %v5333
        %v6233 = vunpack.c.l.b16 %v5334
        %v6234 = vunpack.c.h.b16 %v5334
        %v6235 = vunpack.c.l.b16 %v5335
        %v6236 = vunpack.c.h.b16 %v5335
        %v6237 = vunpack.c.l.b16 %v5336
        %v6238 = vunpack.c.h.b16 %v5336
        %v6239 = vunpack.c.l.b16 %v5337
        %v6240 = vunpack.c.h.b16 %v5337
        %v6241 = vunpack.c.l.b16 %v5338
        %v6242 = vunpack.c.h.b16 %v5338
        %v6243 = vunpack.c.l.b16 %v5339
        %v6244 = vunpack.c.h.b16 %v5339
        %v6245 = vunpack.c.l.b16 %v5340
        %v6246 = vunpack.c.h.b16 %v5340
        %v6247 = vunpack.c.l.b16 %v5341
        %v6248 = vunpack.c.h.b16 %v5341
        %v6249 = vunpack.c.l.b16 %v5342
        %v6250 = vunpack.c.h.b16 %v5342
        %v6251 = vunpack.c.l.b16 %v5343
        %v6252 = vunpack.c.h.b16 %v5343
        %v6253 = vunpack.c.l.b16 %v5344
        %v6254 = vunpack.c.h.b16 %v5344
        %v6255 = vunpack.c.l.b16 %v5345
        %v6256 = vunpack.c.h.b16 %v5345
        %v6257 = vunpack.c.l.b16 %v5346
        %v6258 = vunpack.c.h.b16 %v5346
        %v6259 = vunpack.c.l.b16 %v5347
        %v6260 = vunpack.c.h.b16 %v5347
        %v6261 = vunpack.c.l.b16 %v5348
        %v6262 = vunpack.c.h.b16 %v5348
        %v6263 = vunpack.c.l.b16 %v5349
        %v6264 = vunpack.c.h.b16 %v5349
        %v6265 = vunpack.c.l.b16 %v5350
        %v6266 = vunpack.c.h.b16 %v5350
        %v6267 = vunpack.c.l.b16 %v5351
        %v6268 = vunpack.c.h.b16 %v5351
        %v6269 = vunpack.c.l.b16 %v5352
        %v6270 = vunpack.c.h.b16 %v5352
        %v6271 = vunpack.c.l.b16 %v5353
        %v6272 = vunpack.c.h.b16 %v5353
        %v6273 = vunpack.c.l.b16 %v5354
        %v6274 = vunpack.c.h.b16 %v5354
        %v6275 = vunpack.c.l.b16 %v5355
        %v6276 = vunpack.c.h.b16 %v5355
        %v6277 = vunpack.c.l.b16 %v5356
        %v6278 = vunpack.c.h.b16 %v5356
        %v6279 = vunpack.c.l.b16 %v5357
        %v6280 = vunpack.c.h.b16 %v5357
        %v6281 = vunpack.c.l.b16 %v5358
        %v6282 = vunpack.c.h.b16 %v5358
        %v6283 = vunpack.c.l.b16 %v5359
        %v6284 = vunpack.c.h.b16 %v5359
        %v6285 = vunpack.c.l.b16 %v5360
        %v6286 = vunpack.c.h.b16 %v5360
        %v6287 = vunpack.c.l.b16 %v5361
        %v6288 = vunpack.c.h.b16 %v5361
        %v6289 = vunpack.c.l.b16 %v5362
        %v6290 = vunpack.c.h.b16 %v5362
        %v6291 = vunpack.c.l.b16 %v5363
        %v6292 = vunpack.c.h.b16 %v5363
        %v6293 = vunpack.c.l.b16 %v5364
        %v6294 = vunpack.c.h.b16 %v5364
        %v6295 = vunpack.c.l.b16 %v5365
        %v6296 = vunpack.c.h.b16 %v5365
        %v6297 = vunpack.c.l.b16 %v5366
        %v6298 = vunpack.c.h.b16 %v5366
        %v6299 = vunpack.c.l.b16 %v5367
        %v6300 = vunpack.c.h.b16 %v5367
        %v6301 = vunpack.c.l.b16 %v5368
        %v6302 = vunpack.c.h.b16 %v5368
        %v6303 = vunpack.c.l.b16 %v5369
        %v6304 = vunpack.c.h.b16 %v5369
        %v6305 = vunpack.c.l.b16 %v5370
        %v6306 = vunpack.c.h.b16 %v5370
        %v6307 = vunpack.c.l.b16 %v5371
        %v6308 = vunpack.c.h.b16 %v5371
        %v6309 = vunpack.c.l.b16 %v5372
        %v6310 = vunpack.c.h.b16 %v5372
        %v6311 = vunpack.c.l.b16 %v5373
        %v6312 = vunpack.c.h.b16 %v5373
        %v6313 = vunpack.c.l.b16 %v5374
        %v6314 = vunpack.c.h.b16 %v5374
        %v6315 = vunpack.c.l.b16 %v5375
        %v6316 = vunpack.c.h.b16 %v5375
        %v6317 = vunpack.c.l.b16 %v5376
        %v6318 = vunpack.c.h.b16 %v5376
        %v6319 = vunpack.c.l.b16 %v5377
        %v6320 = vunpack.c.h.b16 %v5377
        %v6321 = vunpack.c.l.b16 %v5378
        %v6322 = vunpack.c.h.b16 %v5378
        %v6323 = vunpack.c.l.b16 %v5379
        %v6324 = vunpack.c.h.b16 %v5379
        %v6325 = vunpack.c.l.b16 %v5380
        %v6326 = vunpack.c.h.b16 %v5380
        %v6327 = vunpack.c.l.b16 %v5381
        %v6328 = vunpack.c.h.b16 %v5381
        %v6329 = vunpack.c.l.b16 %v5382
        %v6330 = vunpack.c.h.b16 %v5382
        %v6331 = vunpack.c.l.b16 %v5383
        %v6332 = vunpack.c.h.b16 %v5383
        %v6333 = vunpack.c.l.b16 %v5384
        %v6334 = vunpack.c.h.b16 %v5384
        %v6335 = vunpack.c.l.b16 %v5385
        %v6336 = vunpack.c.h.b16 %v5385
        %v6337 = vunpack.c.l.b16 %v5386
        %v6338 = vunpack.c.h.b16 %v5386
        %v6339 = vunpack.c.l.b16 %v5387
        %v6340 = vunpack.c.h.b16 %v5387
        %v6341 = vunpack.c.l.b16 %v5388
        %v6342 = vunpack.c.h.b16 %v5388
        %v6343 = vunpack.c.l.b16 %v5389
        %v6344 = vunpack.c.h.b16 %v5389
        %v6345 = vunpack.c.l.b16 %v5390
        %v6346 = vunpack.c.h.b16 %v5390
        %v6347 = vunpack.c.l.b16 %v5391
        %v6348 = vunpack.c.h.b16 %v5391
        %v6349 = vunpack.c.l.b16 %v5392
        %v6350 = vunpack.c.h.b16 %v5392
        %v6351 = vunpack.c.l.b16 %v5393
        %v6352 = vunpack.c.h.b16 %v5393
        %v6353 = vunpack.c.l.b16 %v5394
        %v6354 = vunpack.c.h.b16 %v5394
        %v6355 = vunpack.c.l.b16 %v5395
        %v6356 = vunpack.c.h.b16 %v5395
        %v6357 = vunpack.c.l.b16 %v5396
        %v6358 = vunpack.c.h.b16 %v5396
        %v6359 = vunpack.c.l.b16 %v5397
        %v6360 = vunpack.c.h.b16 %v5397
        %v6361 = vunpack.c.l.b16 %v5398
        %v6362 = vunpack.c.h.b16 %v5398
        %v6363 = vunpack.c.l.b16 %v5399
        %v6364 = vunpack.c.h.b16 %v5399
        %v6365 = vunpack.c.l.b16 %v5400
        %v6366 = vunpack.c.h.b16 %v5400
        %v6367 = vunpack.c.l.b16 %v5401
        %v6368 = vunpack.c.h.b16 %v5401
        %v6369 = vunpack.c.l.b16 %v5402
        %v6370 = vunpack.c.h.b16 %v5402
        %v6371 = vunpack.c.l.b16 %v5403
        %v6372 = vunpack.c.h.b16 %v5403
        %v6373 = vunpack.c.l.b16 %v5404
        %v6374 = vunpack.c.h.b16 %v5404
        %v6375 = vunpack.c.l.b16 %v5405
        %v6376 = vunpack.c.h.b16 %v5405
        %v6377 = vunpack.c.l.b16 %v5406
        %v6378 = vunpack.c.h.b16 %v5406
        %v6379 = vunpack.c.l.b16 %v5407
        %v6380 = vunpack.c.h.b16 %v5407
        %v6381 = vunpack.c.l.b16 %v5408
        %v6382 = vunpack.c.h.b16 %v5408
        %v6383 = vunpack.c.l.b16 %v5409
        %v6384 = vunpack.c.h.b16 %v5409
        %v6385 = vunpack.c.l.b16 %v5410
        %v6386 = vunpack.c.h.b16 %v5410
        %v6387 = vunpack.c.l.b16 %v5411
        %v6388 = vunpack.c.h.b16 %v5411
        %v6389 = vunpack.c.l.b16 %v5412
        %v6390 = vunpack.c.h.b16 %v5412
        %v6391 = vunpack.c.l.b16 %v5413
        %v6392 = vunpack.c.h.b16 %v5413
        %v6393 = vunpack.c.l.b16 %v5414
        %v6394 = vunpack.c.h.b16 %v5414
        %v6395 = vunpack.c.l.b16 %v5415
        %v6396 = vunpack.c.h.b16 %v5415
        %v6397 = vunpack.c.l.b16 %v5416
        %v6398 = vunpack.c.h.b16 %v5416
        %v6399 = vunpack.c.l.b16 %v5417
        %v6400 = vunpack.c.h.b16 %v5417
        %v6401 = vunpack.c.l.b16 %v5418
        %v6402 = vunpack.c.h.b16 %v5418
        %v6403 = vunpack.c.l.b16 %v5419
        %v6404 = vunpack.c.h.b16 %v5419
        %v6405 = vunpack.c.l.b16 %v5420
        %v6406 = vunpack.c.h.b16 %v5420
        %v6407 = vunpack.c.l.b16 %v5421
        %v6408 = vunpack.c.h.b16 %v5421
        %v6409 = vunpack.c.l.b16 %v5422
        %v6410 = vunpack.c.h.b16 %v5422
        %v6411 = vunpack.c.l.b16 %v5423
        %v6412 = vunpack.c.h.b16 %v5423
        %v6413 = vunpack.c.l.b16 %v5424
        %v6414 = vunpack.c.h.b16 %v5424
        %v6415 = vunpack.c.l.b16 %v5425
        %v6416 = vunpack.c.h.b16 %v5425
        %v6417 = vunpack.c.l.b16 %v5426
        %v6418 = vunpack.c.h.b16 %v5426
        %v6419 = vunpack.c.l.b16 %v5427
        %v6420 = vunpack.c.h.b16 %v5427
        %v6421 = vunpack.c.l.b16 %v5428
        %v6422 = vunpack.c.h.b16 %v5428
        %v6423 = vunpack.c.l.b16 %v5429
        %v6424 = vunpack.c.h.b16 %v5429
        %v6425 = vunpack.c.l.b16 %v5430
        %v6426 = vunpack.c.h.b16 %v5430
        %v6427 = vunpack.c.l.b16 %v5431
        %v6428 = vunpack.c.h.b16 %v5431
        %v6429 = vunpack.c.l.b16 %v5432
        %v6430 = vunpack.c.h.b16 %v5432
        %v6431 = vunpack.c.l.b16 %v5433
        %v6432 = vunpack.c.h.b16 %v5433
        %v6433 = vunpack.c.l.b16 %v5434
        %v6434 = vunpack.c.h.b16 %v5434
        %v6435 = vunpack.c.l.b16 %v5435
        %v6436 = vunpack.c.h.b16 %v5435
        %v6437 = vunpack.c.l.b16 %v5436
        %v6438 = vunpack.c.h.b16 %v5436
        %v6439 = vunpack.c.l.b16 %v5437
        %v6440 = vunpack.c.h.b16 %v5437
        %v6441 = vunpack.c.l.b16 %v5438
        %v6442 = vunpack.c.h.b16 %v5438
        %v6443 = vunpack.c.l.b16 %v5439
        %v6444 = vunpack.c.h.b16 %v5439
        %v6445 = vunpack.c.l.b16 %v5440
        %v6446 = vunpack.c.h.b16 %v5440
        %v6447 = vunpack.c.l.b16 %v5441
        %v6448 = vunpack.c.h.b16 %v5441
        %v6449 = vunpack.c.l.b16 %v5442
        %v6450 = vunpack.c.h.b16 %v5442
        %v6451 = vunpack.c.l.b16 %v5443
        %v6452 = vunpack.c.h.b16 %v5443
        %v6453 = vunpack.c.l.b16 %v5444
        %v6454 = vunpack.c.h.b16 %v5444
        %v6455 = vunpack.c.l.b16 %v5445
        %v6456 = vunpack.c.h.b16 %v5445
        %v6457 = vunpack.c.l.b16 %v5446
        %v6458 = vunpack.c.h.b16 %v5446
        %v6459 = vunpack.c.l.b16 %v5447
        %v6460 = vunpack.c.h.b16 %v5447
        %v6461 = vunpack.c.l.b16 %v5448
        %v6462 = vunpack.c.h.b16 %v5448
        %v6463 = vunpack.c.l.b16 %v5449
        %v6464 = vunpack.c.h.b16 %v5449
        %v6465 = vunpack.c.l.b16 %v5450
        %v6466 = vunpack.c.h.b16 %v5450
        %v6467 = vunpack.c.l.b16 %v5451
        %v6468 = vunpack.c.h.b16 %v5451
        %v6469 = vunpack.c.l.b16 %v5452
        %v6470 = vunpack.c.h.b16 %v5452
        %v6471 = vunpack.c.l.b16 %v5453
        %v6472 = vunpack.c.h.b16 %v5453
        %v6473 = vunpack.c.l.b16 %v5454
        %v6474 = vunpack.c.h.b16 %v5454
        %v6475 = vunpack.c.l.b16 %v5455
        %v6476 = vunpack.c.h.b16 %v5455
        %v6477 = vunpack.c.l.b16 %v5456
        %v6478 = vunpack.c.h.b16 %v5456
        %v6479 = vunpack.c.l.b16 %v5457
        %v6480 = vunpack.c.h.b16 %v5457
        %v6481 = vunpack.c.l.b16 %v5458
        %v6482 = vunpack.c.h.b16 %v5458
        %v6483 = vunpack.c.l.b16 %v5459
        %v6484 = vunpack.c.h.b16 %v5459
        %v6485 = vunpack.c.l.b16 %v5460
        %v6486 = vunpack.c.h.b16 %v5460
        %v6487 = vunpack.c.l.b16 %v5461
        %v6488 = vunpack.c.h.b16 %v5461
        %v6489 = vunpack.c.l.b16 %v5462
        %v6490 = vunpack.c.h.b16 %v5462
        %v6491 = vunpack.c.l.b16 %v5463
        %v6492 = vunpack.c.h.b16 %v5463
        %v6493 = vunpack.c.l.b16 %v5464
        %v6494 = vunpack.c.h.b16 %v5464
        %v6495 = vunpack.c.l.b16 %v5465
        %v6496 = vunpack.c.h.b16 %v5465
        %v6497 = vunpack.c.l.b16 %v5466
        %v6498 = vunpack.c.h.b16 %v5466
        %v6499 = vunpack.c.l.b16 %v5467
        %v6500 = vunpack.c.h.b16 %v5467
        %v6501 = vunpack.c.l.b16 %v5468
        %v6502 = vunpack.c.h.b16 %v5468
        %v6503 = vunpack.c.l.b16 %v5469
        %v6504 = vunpack.c.h.b16 %v5469
        %v6505 = vunpack.c.l.b16 %v5470
        %v6506 = vunpack.c.h.b16 %v5470
        %v6507 = vunpack.c.l.b16 %v5471
        %v6508 = vunpack.c.h.b16 %v5471
        %v6509 = vunpack.c.l.b16 %v5472
        %v6510 = vunpack.c.h.b16 %v5472
        %v6511 = vunpack.c.l.b16 %v5473
        %v6512 = vunpack.c.h.b16 %v5473
        %v6513 = vunpack.c.l.b16 %v5474
        %v6514 = vunpack.c.h.b16 %v5474
        %v6515 = vunpack.c.l.b16 %v5475
        %v6516 = vunpack.c.h.b16 %v5475
        %v6517 = vunpack.c.l.b16 %v5476
        %v6518 = vunpack.c.h.b16 %v5476
        %v6519 = vunpack.c.l.b16 %v5477
        %v6520 = vunpack.c.h.b16 %v5477
        %v6521 = vunpack.c.l.b16 %v5478
        %v6522 = vunpack.c.h.b16 %v5478
        %v6523 = vunpack.c.l.b16 %v5479
        %v6524 = vunpack.c.h.b16 %v5479
        %v6525 = vunpack.c.l.b16 %v5480
        %v6526 = vunpack.c.h.b16 %v5480
        %v6527 = vunpack.c.l.b16 %v5481
        %v6528 = vunpack.c.h.b16 %v5481
        %v6529 = vunpack.c.l.b16 %v5482
        %v6530 = vunpack.c.h.b16 %v5482
        %v6531 = vunpack.c.l.b16 %v5483
        %v6532 = vunpack.c.h.b16 %v5483
        %v6533 = vunpack.c.l.b16 %v5484
        %v6534 = vunpack.c.h.b16 %v5484
        %v6535 = vunpack.c.l.b16 %v5485
        %v6536 = vunpack.c.h.b16 %v5485
        %v6537 = vunpack.c.l.b16 %v5486
        %v6538 = vunpack.c.h.b16 %v5486
        %v6539 = vunpack.c.l.b16 %v5487
        %v6540 = vunpack.c.h.b16 %v5487
        %v6541 = vunpack.c.l.b16 %v5488
        %v6542 = vunpack.c.h.b16 %v5488
        %v6543 = vunpack.c.l.b16 %v5489
        %v6544 = vunpack.c.h.b16 %v5489
        %v6545 = vunpack.c.l.b16 %v5490
        %v6546 = vunpack.c.h.b16 %v5490
        %v6547 = vunpack.c.l.b16 %v5491
        %v6548 = vunpack.c.h.b16 %v5491
        %v6549 = vunpack.c.l.b16 %v5492
        %v6550 = vunpack.c.h.b16 %v5492
        %v6551 = vunpack.c.l.b16 %v5493
        %v6552 = vunpack.c.h.b16 %v5493
        %v6553 = vunpack.c.l.b16 %v5494
        %v6554 = vunpack.c.h.b16 %v5494
        %v6555 = vunpack.c.l.b16 %v5495
        %v6556 = vunpack.c.h.b16 %v5495
        %v6557 = vunpack.c.l.b16 %v5496
        %v6558 = vunpack.c.h.b16 %v5496
        %v6559 = vunpack.c.l.b16 %v5497
        %v6560 = vunpack.c.h.b16 %v5497
        %v6561 = vunpack.c.l.b16 %v5498
        %v6562 = vunpack.c.h.b16 %v5498
        %v6563 = vunpack.c.l.b16 %v5499
        %v6564 = vunpack.c.h.b16 %v5499
        %v6565 = vunpack.c.l.b16 %v5500
        %v6566 = vunpack.c.h.b16 %v5500
        %v6567 = vunpack.c.l.b16 %v5501
        %v6568 = vunpack.c.h.b16 %v5501
        %v6569 = vunpack.c.l.b16 %v5502
        %v6570 = vunpack.c.h.b16 %v5502
        %v6571 = vunpack.c.l.b16 %v5503
        %v6572 = vunpack.c.h.b16 %v5503
        %v6573 = vunpack.c.l.b16 %v5504
        %v6574 = vunpack.c.h.b16 %v5504
        %v6575 = vunpack.c.l.b16 %v5505
        %v6576 = vunpack.c.h.b16 %v5505
        %v6577 = vunpack.c.l.b16 %v5506
        %v6578 = vunpack.c.h.b16 %v5506
        %v6579 = vunpack.c.l.b16 %v5507
        %v6580 = vunpack.c.h.b16 %v5507
        %v6581 = vunpack.c.l.b16 %v5508
        %v6582 = vunpack.c.h.b16 %v5508
        %v6583 = vunpack.c.l.b16 %v5509
        %v6584 = vunpack.c.h.b16 %v5509
        %v6585 = vunpack.c.l.b16 %v5510
        %v6586 = vunpack.c.h.b16 %v5510
        %v6587 = vunpack.c.l.b16 %v5511
        %v6588 = vunpack.c.h.b16 %v5511
        %v6589 = vunpack.c.l.b16 %v5512
        %v6590 = vunpack.c.h.b16 %v5512
        %v6591 = vunpack.c.l.b16 %v5513
        %v6592 = vunpack.c.h.b16 %v5513
        %v6593 = vunpack.c.l.b16 %v5514
        %v6594 = vunpack.c.h.b16 %v5514
        %v6595 = vunpack.c.l.b16 %v5515
        %v6596 = vunpack.c.h.b16 %v5515
        %v6597 = vunpack.c.l.b16 %v5516
        %v6598 = vunpack.c.h.b16 %v5516
        %v6599 = vunpack.c.l.b16 %v5517
        %v6600 = vunpack.c.h.b16 %v5517
        %v6601 = vunpack.c.l.b16 %v5518
        %v6602 = vunpack.c.h.b16 %v5518
        %v6603 = vunpack.c.l.b16 %v5519
        %v6604 = vunpack.c.h.b16 %v5519
        %v6605 = vunpack.c.l.b16 %v5520
        %v6606 = vunpack.c.h.b16 %v5520
        %v6607 = vunpack.c.l.b16 %v5521
        %v6608 = vunpack.c.h.b16 %v5521
        %v6609 = vunpack.c.l.b16 %v5522
        %v6610 = vunpack.c.h.b16 %v5522
        %v6611 = vunpack.c.l.b16 %v5523
        %v6612 = vunpack.c.h.b16 %v5523
        %v6613 = vunpack.c.l.b16 %v5524
        %v6614 = vunpack.c.h.b16 %v5524
        %v6615 = vunpack.c.l.b16 %v5525
        %v6616 = vunpack.c.h.b16 %v5525
        %v6617 = vunpack.c.l.b16 %v5526
        %v6618 = vunpack.c.h.b16 %v5526
        %v6619 = vunpack.c.l.b16 %v5527
        %v6620 = vunpack.c.h.b16 %v5527
        %v6621 = vunpack.c.l.b16 %v5528
        %v6622 = vunpack.c.h.b16 %v5528
        %v6623 = vunpack.c.l.b16 %v5529
        %v6624 = vunpack.c.h.b16 %v5529
        %v6625 = vunpack.c.l.b16 %v5530
        %v6626 = vunpack.c.h.b16 %v5530
        %v6627 = vunpack.c.l.b16 %v5531
        %v6628 = vunpack.c.h.b16 %v5531
        %v6629 = vunpack.c.l.b16 %v5532
        %v6630 = vunpack.c.h.b16 %v5532
        %v6631 = vunpack.c.l.b16 %v5533
        %v6632 = vunpack.c.h.b16 %v5533
        %v6633 = vunpack.c.l.b16 %v5534
        %v6634 = vunpack.c.h.b16 %v5534
        %v6635 = vunpack.c.l.b16 %v5535
        %v6636 = vunpack.c.h.b16 %v5535
        %v6637 = vunpack.c.l.b16 %v5536
        %v6638 = vunpack.c.h.b16 %v5536
        %v6639 = vunpack.c.l.b16 %v5537
        %v6640 = vunpack.c.h.b16 %v5537
        %v6641 = vunpack.c.l.b16 %v5538
        %v6642 = vunpack.c.h.b16 %v5538
        %v6643 = vunpack.c.l.b16 %v5539
        %v6644 = vunpack.c.h.b16 %v5539
        %v6645 = vunpack.c.l.b16 %v5540
        %v6646 = vunpack.c.h.b16 %v5540
        %v6647 = vunpack.c.l.b16 %v5541
        %v6648 = vunpack.c.h.b16 %v5541
        %v6649 = vunpack.c.l.b16 %v5542
        %v6650 = vunpack.c.h.b16 %v5542
        %v6651 = vunpack.c.l.b16 %v5543
        %v6652 = vunpack.c.h.b16 %v5543
        %v6653 = vunpack.c.l.b16 %v5544
        %v6654 = vunpack.c.h.b16 %v5544
        %v6655 = vunpack.c.l.b16 %v5545
        %v6656 = vunpack.c.h.b16 %v5545
        %v6657 = vunpack.c.l.b16 %v5546
        %v6658 = vunpack.c.h.b16 %v5546
        %v6659 = vunpack.c.l.b16 %v5547
        %v6660 = vunpack.c.h.b16 %v5547
        %v6661 = vunpack.c.l.b16 %v5548
        %v6662 = vunpack.c.h.b16 %v5548
        %v6663 = vunpack.c.l.b16 %v5549
        %v6664 = vunpack.c.h.b16 %v5549
        %v6665 = vunpack.c.l.b16 %v5550
        %v6666 = vunpack.c.h.b16 %v5550
        %v6667 = vunpack.c.l.b16 %v5551
        %v6668 = vunpack.c.h.b16 %v5551
        %v6669 = vunpack.c.l.b16 %v5552
        %v6670 = vunpack.c.h.b16 %v5552
        %v6671 = vunpack.c.l.b16 %v5553
        %v6672 = vunpack.c.h.b16 %v5553
        %v6673 = vunpack.c.l.b16 %v5554
        %v6674 = vunpack.c.h.b16 %v5554
        %v6675 = vunpack.c.l.b16 %v5555
        %v6676 = vunpack.c.h.b16 %v5555
        %v6677 = vunpack.c.l.b16 %v5556
        %v6678 = vunpack.c.h.b16 %v5556
        %v6679 = vunpack.c.l.b16 %v5557
        %v6680 = vunpack.c.h.b16 %v5557
        %v6681 = vunpack.c.l.b16 %v5558
        %v6682 = vunpack.c.h.b16 %v5558
        %v6683 = vunpack.c.l.b16 %v5559
        %v6684 = vunpack.c.h.b16 %v5559
        %v6685 = vunpack.c.l.b16 %v5560
        %v6686 = vunpack.c.h.b16 %v5560
        %v6687 = vunpack.c.l.b16 %v5561
        %v6688 = vunpack.c.h.b16 %v5561
        %v6689 = vunpack.c.l.b16 %v5562
        %v6690 = vunpack.c.h.b16 %v5562
        %v6691 = vunpack.c.l.b16 %v5563
        %v6692 = vunpack.c.h.b16 %v5563
        %v6693 = vunpack.c.l.b16 %v5564
        %v6694 = vunpack.c.h.b16 %v5564
        %v6695 = vunpack.c.l.b16 %v5565
        %v6696 = vunpack.c.h.b16 %v5565
        %v6697 = vunpack.c.l.b16 %v5566
        %v6698 = vunpack.c.h.b16 %v5566
        %v6699 = vunpack.c.l.b16 %v5567
        %v6700 = vunpack.c.h.b16 %v5567
        %v6701 = vunpack.c.l.b16 %v5568
        %v6702 = vunpack.c.h.b16 %v5568
        %v6703 = vunpack.c.l.b16 %v5569
        %v6704 = vunpack.c.h.b16 %v5569
        %v6705 = vunpack.c.l.b16 %v5570
        %v6706 = vunpack.c.h.b16 %v5570
        %v6707 = vunpack.c.l.b16 %v5571
        %v6708 = vunpack.c.h.b16 %v5571
        %v6709 = vunpack.c.l.b16 %v5572
        %v6710 = vunpack.c.h.b16 %v5572
        %v6711 = vunpack.c.l.b16 %v5573
        %v6712 = vunpack.c.h.b16 %v5573
        %v6713 = vunpack.c.l.b16 %v5574
        %v6714 = vunpack.c.h.b16 %v5574
        %v6715 = vunpack.c.l.b16 %v5575
        %v6716 = vunpack.c.h.b16 %v5575
        %v6717 = vunpack.c.l.b16 %v5576
        %v6718 = vunpack.c.h.b16 %v5576
        %v6719 = vunpack.c.l.b16 %v5577
        %v6720 = vunpack.c.h.b16 %v5577
        %v6721 = vunpack.c.l.b16 %v5578
        %v6722 = vunpack.c.h.b16 %v5578
        %v6723 = vunpack.c.l.b16 %v5579
        %v6724 = vunpack.c.h.b16 %v5579
        %v6725 = vunpack.c.l.b16 %v5580
        %v6726 = vunpack.c.h.b16 %v5580
        %v6727 = vunpack.c.l.b16 %v5581
        %v6728 = vunpack.c.h.b16 %v5581
        %v6729 = vunpack.c.l.b16 %v5582
        %v6730 = vunpack.c.h.b16 %v5582
        %v6731 = vunpack.c.l.b16 %v5583
        %v6732 = vunpack.c.h.b16 %v5583
        %v6733 = vunpack.c.l.b16 %v5584
        %v6734 = vunpack.c.h.b16 %v5584
        %v6735 = vunpack.c.l.b16 %v5585
        %v6736 = vunpack.c.h.b16 %v5585
        %v6737 = vunpack.c.l.b16 %v5586
        %v6738 = vunpack.c.h.b16 %v5586
        %v6739 = vpack.c.b16 %v5975, %v5971
        %v6740 = vpack.c.b16 %v5976, %v5972
        %v6741 = vpack.c.b16 %v5977, %v5973
        %v6742 = vpack.c.b16 %v5978, %v5974
        %v6743 = vpack.c.b16 %v5983, %v5979
        %v6744 = vpack.c.b16 %v5984, %v5980
        %v6745 = vpack.c.b16 %v5985, %v5981
        %v6746 = vpack.c.b16 %v5986, %v5982
        %v6747 = vpack.c.b16 %v5991, %v5987
        %v6748 = vpack.c.b16 %v5992, %v5988
        %v6749 = vpack.c.b16 %v5993, %v5989
        %v6750 = vpack.c.b16 %v5994, %v5990
        %v6751 = vpack.c.b16 %v5999, %v5995
        %v6752 = vpack.c.b16 %v6000, %v5996
        %v6753 = vpack.c.b16 %v6001, %v5997
        %v6754 = vpack.c.b16 %v6002, %v5998
        %v6755 = vpack.c.b16 %v6007, %v6003
        %v6756 = vpack.c.b16 %v6008, %v6004
        %v6757 = vpack.c.b16 %v6009, %v6005
        %v6758 = vpack.c.b16 %v6010, %v6006
        %v6759 = vpack.c.b16 %v6015, %v6011
        %v6760 = vpack.c.b16 %v6016, %v6012
        %v6761 = vpack.c.b16 %v6017, %v6013
        %v6762 = vpack.c.b16 %v6018, %v6014
        %v6763 = vpack.c.b16 %v6023, %v6019
        %v6764 = vpack.c.b16 %v6024, %v6020
        %v6765 = vpack.c.b16 %v6025, %v6021
        %v6766 = vpack.c.b16 %v6026, %v6022
        %v6767 = vpack.c.b16 %v6031, %v6027
        %v6768 = vpack.c.b16 %v6032, %v6028
        %v6769 = vpack.c.b16 %v6033, %v6029
        %v6770 = vpack.c.b16 %v6034, %v6030
        %v6771 = vpack.c.b16 %v6039, %v6035
        %v6772 = vpack.c.b16 %v6040, %v6036
        %v6773 = vpack.c.b16 %v6041, %v6037
        %v6774 = vpack.c.b16 %v6042, %v6038
        %v6775 = vpack.c.b16 %v6047, %v6043
        %v6776 = vpack.c.b16 %v6048, %v6044
        %v6777 = vpack.c.b16 %v6049, %v6045
        %v6778 = vpack.c.b16 %v6050, %v6046
        %v6779 = vpack.c.b16 %v6055, %v6051
        %v6780 = vpack.c.b16 %v6056, %v6052
        %v6781 = vpack.c.b16 %v6057, %v6053
        %v6782 = vpack.c.b16 %v6058, %v6054
        %v6783 = vpack.c.b16 %v6063, %v6059
        %v6784 = vpack.c.b16 %v6064, %v6060
        %v6785 = vpack.c.b16 %v6065, %v6061
        %v6786 = vpack.c.b16 %v6066, %v6062
        %v6787 = vpack.c.b16 %v6071, %v6067
        %v6788 = vpack.c.b16 %v6072, %v6068
        %v6789 = vpack.c.b16 %v6073, %v6069
        %v6790 = vpack.c.b16 %v6074, %v6070
        %v6791 = vpack.c.b16 %v6079, %v6075
        %v6792 = vpack.c.b16 %v6080, %v6076
        %v6793 = vpack.c.b16 %v6081, %v6077
        %v6794 = vpack.c.b16 %v6082, %v6078
        %v6795 = vpack.c.b16 %v6087, %v6083
        %v6796 = vpack.c.b16 %v6088, %v6084
        %v6797 = vpack.c.b16 %v6089, %v6085
        %v6798 = vpack.c.b16 %v6090, %v6086
        %v6799 = vpack.c.b16 %v6095, %v6091
        %v6800 = vpack.c.b16 %v6096, %v6092
        %v6801 = vpack.c.b16 %v6097, %v6093
        %v6802 = vpack.c.b16 %v6098, %v6094
        %v6803 = vpack.c.b16 %v6103, %v6099
        %v6804 = vpack.c.b16 %v6104, %v6100
        %v6805 = vpack.c.b16 %v6105, %v6101
        %v6806 = vpack.c.b16 %v6106, %v6102
        %v6807 = vpack.c.b16 %v6111, %v6107
        %v6808 = vpack.c.b16 %v6112, %v6108
        %v6809 = vpack.c.b16 %v6113, %v6109
        %v6810 = vpack.c.b16 %v6114, %v6110
        %v6811 = vpack.c.b16 %v6119, %v6115
        %v6812 = vpack.c.b16 %v6120, %v6116
        %v6813 = vpack.c.b16 %v6121, %v6117
        %v6814 = vpack.c.b16 %v6122, %v6118
        %v6815 = vpack.c.b16 %v6127, %v6123
        %v6816 = vpack.c.b16 %v6128, %v6124
        %v6817 = vpack.c.b16 %v6129, %v6125
        %v6818 = vpack.c.b16 %v6130, %v6126
        %v6819 = vpack.c.b16 %v6135, %v6131
        %v6820 = vpack.c.b16 %v6136, %v6132
        %v6821 = vpack.c.b16 %v6137, %v6133
        %v6822 = vpack.c.b16 %v6138, %v6134
        %v6823 = vpack.c.b16 %v6143, %v6139
        %v6824 = vpack.c.b16 %v6144, %v6140
        %v6825 = vpack.c.b16 %v6145, %v6141
        %v6826 = vpack.c.b16 %v6146, %v6142
        %v6827 = vpack.c.b16 %v6151, %v6147
        %v6828 = vpack.c.b16 %v6152, %v6148
        %v6829 = vpack.c.b16 %v6153, %v6149
        %v6830 = vpack.c.b16 %v6154, %v6150
        %v6831 = vpack.c.b16 %v6159, %v6155
        %v6832 = vpack.c.b16 %v6160, %v6156
        %v6833 = vpack.c.b16 %v6161, %v6157
        %v6834 = vpack.c.b16 %v6162, %v6158
        %v6835 = vpack.c.b16 %v6167, %v6163
        %v6836 = vpack.c.b16 %v6168, %v6164
        %v6837 = vpack.c.b16 %v6169, %v6165
        %v6838 = vpack.c.b16 %v6170, %v6166
        %v6839 = vpack.c.b16 %v6175, %v6171
        %v6840 = vpack.c.b16 %v6176, %v6172
        %v6841 = vpack.c.b16 %v6177, %v6173
        %v6842 = vpack.c.b16 %v6178, %v6174
        %v6843 = vpack.c.b16 %v6183, %v6179
        %v6844 = vpack.c.b16 %v6184, %v6180
        %v6845 = vpack.c.b16 %v6185, %v6181
        %v6846 = vpack.c.b16 %v6186, %v6182
        %v6847 = vpack.c.b16 %v6191, %v6187
        %v6848 = vpack.c.b16 %v6192, %v6188
        %v6849 = vpack.c.b16 %v6193, %v6189
        %v6850 = vpack.c.b16 %v6194, %v6190
        %v6851 = vpack.c.b16 %v6199, %v6195
        %v6852 = vpack.c.b16 %v6200, %v6196
        %v6853 = vpack.c.b16 %v6201, %v6197
        %v6854 = vpack.c.b16 %v6202, %v6198
        %v6855 = vpack.c.b16 %v6207, %v6203
        %v6856 = vpack.c.b16 %v6208, %v6204
        %v6857 = vpack.c.b16 %v6209, %v6205
        %v6858 = vpack.c.b16 %v6210, %v6206
        %v6859 = vpack.c.b16 %v6215, %v6211
        %v6860 = vpack.c.b16 %v6216, %v6212
        %v6861 = vpack.c.b16 %v6217, %v6213
        %v6862 = vpack.c.b16 %v6218, %v6214
        %v6863 = vpack.c.b16 %v6223, %v6219
        %v6864 = vpack.c.b16 %v6224, %v6220
        %v6865 = vpack.c.b16 %v6225, %v6221
        %v6866 = vpack.c.b16 %v6226, %v6222
        %v6867 = vpack.c.b16 %v6231, %v6227
        %v6868 = vpack.c.b16 %v6232, %v6228
        %v6869 = vpack.c.b16 %v6233, %v6229
        %v6870 = vpack.c.b16 %v6234, %v6230
        %v6871 = vpack.c.b16 %v6239, %v6235
        %v6872 = vpack.c.b16 %v6240, %v6236
        %v6873 = vpack.c.b16 %v6241, %v6237
        %v6874 = vpack.c.b16 %v6242, %v6238
        %v6875 = vpack.c.b16 %v6247, %v6243
        %v6876 = vpack.c.b16 %v6248, %v6244
        %v6877 = vpack.c.b16 %v6249, %v6245
        %v6878 = vpack.c.b16 %v6250, %v6246
        %v6879 = vpack.c.b16 %v6255, %v6251
        %v6880 = vpack.c.b16 %v6256, %v6252
        %v6881 = vpack.c.b16 %v6257, %v6253
        %v6882 = vpack.c.b16 %v6258, %v6254
        %v6883 = vpack.c.b16 %v6263, %v6259
        %v6884 = vpack.c.b16 %v6264, %v6260
        %v6885 = vpack.c.b16 %v6265, %v6261
        %v6886 = vpack.c.b16 %v6266, %v6262
        %v6887 = vpack.c.b16 %v6271, %v6267
        %v6888 = vpack.c.b16 %v6272, %v6268
        %v6889 = vpack.c.b16 %v6273, %v6269
        %v6890 = vpack.c.b16 %v6274, %v6270
        %v6891 = vpack.c.b16 %v6279, %v6275
        %v6892 = vpack.c.b16 %v6280, %v6276
        %v6893 = vpack.c.b16 %v6281, %v6277
        %v6894 = vpack.c.b16 %v6282, %v6278
        %v6895 = vpack.c.b16 %v6287, %v6283
        %v6896 = vpack.c.b16 %v6288, %v6284
        %v6897 = vpack.c.b16 %v6289, %v6285
        %v6898 = vpack.c.b16 %v6290, %v6286
        %v6899 = vpack.c.b16 %v6295, %v6291
        %v6900 = vpack.c.b16 %v6296, %v6292
        %v6901 = vpack.c.b16 %v6297, %v6293
        %v6902 = vpack.c.b16 %v6298, %v6294
        %v6903 = vpack.c.b16 %v6303, %v6299
        %v6904 = vpack.c.b16 %v6304, %v6300
        %v6905 = vpack.c.b16 %v6305, %v6301
        %v6906 = vpack.c.b16 %v6306, %v6302
        %v6907 = vpack.c.b16 %v6311, %v6307
        %v6908 = vpack.c.b16 %v6312, %v6308
        %v6909 = vpack.c.b16 %v6313, %v6309
        %v6910 = vpack.c.b16 %v6314, %v6310
        %v6911 = vpack.c.b16 %v6319, %v6315
        %v6912 = vpack.c.b16 %v6320, %v6316
        %v6913 = vpack.c.b16 %v6321, %v6317
        %v6914 = vpack.c.b16 %v6322, %v6318
        %v6915 = vpack.c.b16 %v6327, %v6323
        %v6916 = vpack.c.b16 %v6328, %v6324
        %v6917 = vpack.c.b16 %v6329, %v6325
        %v6918 = vpack.c.b16 %v6330, %v6326
        %v6919 = vpack.c.b16 %v6335, %v6331
        %v6920 = vpack.c.b16 %v6336, %v6332
        %v6921 = vpack.c.b16 %v6337, %v6333
        %v6922 = vpack.c.b16 %v6338, %v6334
        %v6923 = vpack.c.b16 %v6343, %v6339
        %v6924 = vpack.c.b16 %v6344, %v6340
        %v6925 = vpack.c.b16 %v6345, %v6341
        %v6926 = vpack.c.b16 %v6346, %v6342
        %v6927 = vpack.c.b16 %v6351, %v6347
        %v6928 = vpack.c.b16 %v6352, %v6348
        %v6929 = vpack.c.b16 %v6353, %v6349
        %v6930 = vpack.c.b16 %v6354, %v6350
        %v6931 = vpack.c.b16 %v6359, %v6355
        %v6932 = vpack.c.b16 %v6360, %v6356
        %v6933 = vpack.c.b16 %v6361, %v6357
        %v6934 = vpack.c.b16 %v6362, %v6358
        %v6935 = vpack.c.b16 %v6367, %v6363
        %v6936 = vpack.c.b16 %v6368, %v6364
        %v6937 = vpack.c.b16 %v6369, %v6365
        %v6938 = vpack.c.b16 %v6370, %v6366
        %v6939 = vpack.c.b16 %v6375, %v6371
        %v6940 = vpack.c.b16 %v6376, %v6372
        %v6941 = vpack.c.b16 %v6377, %v6373
        %v6942 = vpack.c.b16 %v6378, %v6374
        %v6943 = vpack.c.b16 %v6383, %v6379
        %v6944 = vpack.c.b16 %v6384, %v6380
        %v6945 = vpack.c.b16 %v6385, %v6381
        %v6946 = vpack.c.b16 %v6386, %v6382
        %v6947 = vpack.c.b16 %v6391, %v6387
        %v6948 = vpack.c.b16 %v6392, %v6388
        %v6949 = vpack.c.b16 %v6393, %v6389
        %v6950 = vpack.c.b16 %v6394, %v6390
        %v6951 = vpack.c.b16 %v6399, %v6395
        %v6952 = vpack.c.b16 %v6400, %v6396
        %v6953 = vpack.c.b16 %v6401, %v6397
        %v6954 = vpack.c.b16 %v6402, %v6398
        %v6955 = vpack.c.b16 %v6407, %v6403
        %v6956 = vpack.c.b16 %v6408, %v6404
        %v6957 = vpack.c.b16 %v6409, %v6405
        %v6958 = vpack.c.b16 %v6410, %v6406
        %v6959 = vpack.c.b16 %v6415, %v6411
        %v6960 = vpack.c.b16 %v6416, %v6412
        %v6961 = vpack.c.b16 %v6417, %v6413
        %v6962 = vpack.c.b16 %v6418, %v6414
        %v6963 = vpack.c.b16 %v6423, %v6419
        %v6964 = vpack.c.b16 %v6424, %v6420
        %v6965 = vpack.c.b16 %v6425, %v6421
        %v6966 = vpack.c.b16 %v6426, %v6422
        %v6967 = vpack.c.b16 %v6431, %v6427
        %v6968 = vpack.c.b16 %v6432, %v6428
        %v6969 = vpack.c.b16 %v6433, %v6429
        %v6970 = vpack.c.b16 %v6434, %v6430
        %v6971 = vpack.c.b16 %v6439, %v6435
        %v6972 = vpack.c.b16 %v6440, %v6436
        %v6973 = vpack.c.b16 %v6441, %v6437
        %v6974 = vpack.c.b16 %v6442, %v6438
        %v6975 = vpack.c.b16 %v6447, %v6443
        %v6976 = vpack.c.b16 %v6448, %v6444
        %v6977 = vpack.c.b16 %v6449, %v6445
        %v6978 = vpack.c.b16 %v6450, %v6446
        %v6979 = vpack.c.b16 %v6455, %v6451
        %v6980 = vpack.c.b16 %v6456, %v6452
        %v6981 = vpack.c.b16 %v6457, %v6453
        %v6982 = vpack.c.b16 %v6458, %v6454
        %v6983 = vpack.c.b16 %v6463, %v6459
        %v6984 = vpack.c.b16 %v6464, %v6460
        %v6985 = vpack.c.b16 %v6465, %v6461
        %v6986 = vpack.c.b16 %v6466, %v6462
        %v6987 = vpack.c.b16 %v6471, %v6467
        %v6988 = vpack.c.b16 %v6472, %v6468
        %v6989 = vpack.c.b16 %v6473, %v6469
        %v6990 = vpack.c.b16 %v6474, %v6470
        %v6991 = vpack.c.b16 %v6479, %v6475
        %v6992 = vpack.c.b16 %v6480, %v6476
        %v6993 = vpack.c.b16 %v6481, %v6477
        %v6994 = vpack.c.b16 %v6482, %v6478
        %v6995 = vpack.c.b16 %v6487, %v6483
        %v6996 = vpack.c.b16 %v6488, %v6484
        %v6997 = vpack.c.b16 %v6489, %v6485
        %v6998 = vpack.c.b16 %v6490, %v6486
        %v6999 = vpack.c.b16 %v6495, %v6491
        %v7000 = vpack.c.b16 %v6496, %v6492
        %v7001 = vpack.c.b16 %v6497, %v6493
        %v7002 = vpack.c.b16 %v6498, %v6494
        %v7003 = vpack.c.b16 %v6503, %v6499
        %v7004 = vpack.c.b16 %v6504, %v6500
        %v7005 = vpack.c.b16 %v6505, %v6501
        %v7006 = vpack.c.b16 %v6506, %v6502
        %v7007 = vpack.c.b16 %v6511, %v6507
        %v7008 = vpack.c.b16 %v6512, %v6508
        %v7009 = vpack.c.b16 %v6513, %v6509
        %v7010 = vpack.c.b16 %v6514, %v6510
        %v7011 = vpack.c.b16 %v6519, %v6515
        %v7012 = vpack.c.b16 %v6520, %v6516
        %v7013 = vpack.c.b16 %v6521, %v6517
        %v7014 = vpack.c.b16 %v6522, %v6518
        %v7015 = vpack.c.b16 %v6527, %v6523
        %v7016 = vpack.c.b16 %v6528, %v6524
        %v7017 = vpack.c.b16 %v6529, %v6525
        %v7018 = vpack.c.b16 %v6530, %v6526
        %v7019 = vpack.c.b16 %v6535, %v6531
        %v7020 = vpack.c.b16 %v6536, %v6532
        %v7021 = vpack.c.b16 %v6537, %v6533
        %v7022 = vpack.c.b16 %v6538, %v6534
        %v7023 = vpack.c.b16 %v6543, %v6539
        %v7024 = vpack.c.b16 %v6544, %v6540
        %v7025 = vpack.c.b16 %v6545, %v6541
        %v7026 = vpack.c.b16 %v6546, %v6542
        %v7027 = vpack.c.b16 %v6551, %v6547
        %v7028 = vpack.c.b16 %v6552, %v6548
        %v7029 = vpack.c.b16 %v6553, %v6549
        %v7030 = vpack.c.b16 %v6554, %v6550
        %v7031 = vpack.c.b16 %v6559, %v6555
        %v7032 = vpack.c.b16 %v6560, %v6556
        %v7033 = vpack.c.b16 %v6561, %v6557
        %v7034 = vpack.c.b16 %v6562, %v6558
        %v7035 = vpack.c.b16 %v6567, %v6563
        %v7036 = vpack.c.b16 %v6568, %v6564
        %v7037 = vpack.c.b16 %v6569, %v6565
        %v7038 = vpack.c.b16 %v6570, %v6566
        %v7039 = vpack.c.b16 %v6575, %v6571
        %v7040 = vpack.c.b16 %v6576, %v6572
        %v7041 = vpack.c.b16 %v6577, %v6573
        %v7042 = vpack.c.b16 %v6578, %v6574
        %v7043 = vpack.c.b16 %v6583, %v6579
        %v7044 = vpack.c.b16 %v6584, %v6580
        %v7045 = vpack.c.b16 %v6585, %v6581
        %v7046 = vpack.c.b16 %v6586, %v6582
        %v7047 = vpack.c.b16 %v6591, %v6587
        %v7048 = vpack.c.b16 %v6592, %v6588
        %v7049 = vpack.c.b16 %v6593, %v6589
        %v7050 = vpack.c.b16 %v6594, %v6590
        %v7051 = vpack.c.b16 %v6599, %v6595
        %v7052 = vpack.c.b16 %v6600, %v6596
        %v7053 = vpack.c.b16 %v6601, %v6597
        %v7054 = vpack.c.b16 %v6602, %v6598
        %v7055 = vpack.c.b16 %v6607, %v6603
        %v7056 = vpack.c.b16 %v6608, %v6604
        %v7057 = vpack.c.b16 %v6609, %v6605
        %v7058 = vpack.c.b16 %v6610, %v6606
        %v7059 = vpack.c.b16 %v6615, %v6611
        %v7060 = vpack.c.b16 %v6616, %v6612
        %v7061 = vpack.c.b16 %v6617, %v6613
        %v7062 = vpack.c.b16 %v6618, %v6614
        %v7063 = vpack.c.b16 %v6623, %v6619
        %v7064 = vpack.c.b16 %v6624, %v6620
        %v7065 = vpack.c.b16 %v6625, %v6621
        %v7066 = vpack.c.b16 %v6626, %v6622
        %v7067 = vpack.c.b16 %v6631, %v6627
        %v7068 = vpack.c.b16 %v6632, %v6628
        %v7069 = vpack.c.b16 %v6633, %v6629
        %v7070 = vpack.c.b16 %v6634, %v6630
        %v7071 = vpack.c.b16 %v6639, %v6635
        %v7072 = vpack.c.b16 %v6640, %v6636
        %v7073 = vpack.c.b16 %v6641, %v6637
        %v7074 = vpack.c.b16 %v6642, %v6638
        %v7075 = vpack.c.b16 %v6647, %v6643
        %v7076 = vpack.c.b16 %v6648, %v6644
        %v7077 = vpack.c.b16 %v6649, %v6645
        %v7078 = vpack.c.b16 %v6650, %v6646
        %v7079 = vpack.c.b16 %v6655, %v6651
        %v7080 = vpack.c.b16 %v6656, %v6652
        %v7081 = vpack.c.b16 %v6657, %v6653
        %v7082 = vpack.c.b16 %v6658, %v6654
        %v7083 = vpack.c.b16 %v6663, %v6659
        %v7084 = vpack.c.b16 %v6664, %v6660
        %v7085 = vpack.c.b16 %v6665, %v6661
        %v7086 = vpack.c.b16 %v6666, %v6662
        %v7087 = vpack.c.b16 %v6671, %v6667
        %v7088 = vpack.c.b16 %v6672, %v6668
        %v7089 = vpack.c.b16 %v6673, %v6669
        %v7090 = vpack.c.b16 %v6674, %v6670
        %v7091 = vpack.c.b16 %v6679, %v6675
        %v7092 = vpack.c.b16 %v6680, %v6676
        %v7093 = vpack.c.b16 %v6681, %v6677
        %v7094 = vpack.c.b16 %v6682, %v6678
        %v7095 = vpack.c.b16 %v6687, %v6683
        %v7096 = vpack.c.b16 %v6688, %v6684
        %v7097 = vpack.c.b16 %v6689, %v6685
        %v7098 = vpack.c.b16 %v6690, %v6686
        %v7099 = vpack.c.b16 %v6695, %v6691
        %v7100 = vpack.c.b16 %v6696, %v6692
        %v7101 = vpack.c.b16 %v6697, %v6693
        %v7102 = vpack.c.b16 %v6698, %v6694
        %v7103 = vpack.c.b16 %v6703, %v6699
        %v7104 = vpack.c.b16 %v6704, %v6700
        %v7105 = vpack.c.b16 %v6705, %v6701
        %v7106 = vpack.c.b16 %v6706, %v6702
        %v7107 = vpack.c.b16 %v6711, %v6707
        %v7108 = vpack.c.b16 %v6712, %v6708
        %v7109 = vpack.c.b16 %v6713, %v6709
        %v7110 = vpack.c.b16 %v6714, %v6710
        %v7111 = vpack.c.b16 %v6719, %v6715
        %v7112 = vpack.c.b16 %v6720, %v6716
        %v7113 = vpack.c.b16 %v6721, %v6717
        %v7114 = vpack.c.b16 %v6722, %v6718
        %v7115 = vpack.c.b16 %v6727, %v6723
        %v7116 = vpack.c.b16 %v6728, %v6724
        %v7117 = vpack.c.b16 %v6729, %v6725
        %v7118 = vpack.c.b16 %v6730, %v6726
        %v7119 = vpack.c.b16 %v6735, %v6731
        %v7120 = vpack.c.b16 %v6736, %v6732
        %v7121 = vpack.c.b16 %v6737, %v6733
        %v7122 = vpack.c.b16 %v6738, %v6734
        %7507 = vmatprep.subr.bf16.mxu0 %v6740
        %7508 = vmatpush1.bf16.xpose.msra.mxu0 %v6739
        %7509 = vmatprep.subr.bf16.mxu0 %v6744
        %7510 = vmatpush1.bf16.xpose.msra.mxu0 %v6743
        %7511 = vmatprep.subr.bf16.mxu0 %v6748
        %7512 = vmatpush1.bf16.xpose.msra.mxu0 %v6747
        %7513 = vmatprep.subr.bf16.mxu0 %v6752
        %7514 = vmatpush1.bf16.xpose.msra.mxu0 %v6751
        %7515 = vmatprep.subr.bf16.mxu0 %v6756
        %7516 = vmatpush1.bf16.xpose.msra.mxu0 %v6755
        %7517 = vmatprep.subr.bf16.mxu0 %v6760
        %7518 = vmatpush1.bf16.xpose.msra.mxu0 %v6759
        %7519 = vmatprep.subr.bf16.mxu0 %v6764
        %7520 = vmatpush1.bf16.xpose.msra.mxu0 %v6763
        %7521 = vmatprep.subr.bf16.mxu0 %v6768
        %7522 = vmatpush1.bf16.xpose.msra.mxu0 %v6767
        %7523 = vmatprep.subr.bf16.mxu0 %v6772
        %7524 = vmatpush1.bf16.xpose.msra.mxu0 %v6771
        %7525 = vmatprep.subr.bf16.mxu0 %v6776
        %7526 = vmatpush1.bf16.xpose.msra.mxu0 %v6775
        %7527 = vmatprep.subr.bf16.mxu0 %v6780
        %7528 = vmatpush1.bf16.xpose.msra.mxu0 %v6779
        %7529 = vmatprep.subr.bf16.mxu0 %v6784
        %7530 = vmatpush1.bf16.xpose.msra.mxu0 %v6783
        %7531 = vmatprep.subr.bf16.mxu0 %v6788
        %7532 = vmatpush1.bf16.xpose.msra.mxu0 %v6787
        %7533 = vmatprep.subr.bf16.mxu0 %v6792
        %7534 = vmatpush1.bf16.xpose.msra.mxu0 %v6791
        %7535 = vmatprep.subr.bf16.mxu0 %v6796
        %7536 = vmatpush1.bf16.xpose.msra.mxu0 %v6795
        %7537 = vmatprep.subr.bf16.mxu0 %v6800
        %7538 = vmatpush1.bf16.xpose.msra.mxu0 %v6799
        %7539 = vmatprep.mubr.bf16.mxu0 %v5188
        %7540 = vmatmul.mubr.bf16.gmra.mrb[0].mxu0 %v5187
        %v7541 = vpop.f32.mrb[0].mxu0
        %v7542 = vadd.f32 0.0, %v7541
        %v7543 = vpop.f32.mrb[0].mxu0
        %v7544 = vadd.f32 0.0, %v7543
        %v7545 = vpop.f32.mrb[0].mxu0
        %v7546 = vadd.f32 0.0, %v7545
        %v7547 = vpop.f32.mrb[0].mxu0
        %v7548 = vadd.f32 0.0, %v7547
        %7549 = vmatprep.mubr.bf16.mxu0 %v5192
        %7550 = vmatmul.mubr.bf16.gmra.mrb[0].mxu0 %v5191
        %v7551 = vpop.f32.mrb[0].mxu0
        %v7552 = vadd.f32 0.0, %v7551
        %v7553 = vpop.f32.mrb[0].mxu0
        %v7554 = vadd.f32 0.0, %v7553
        %v7555 = vpop.f32.mrb[0].mxu0
        %v7556 = vadd.f32 0.0, %v7555
        %v7557 = vpop.f32.mrb[0].mxu0
        %v7558 = vadd.f32 0.0, %v7557
        %7559 = vmatprep.mubr.bf16.mxu0 %v5196
        %7560 = vmatmul.mubr.bf16.gmra.mrb[0].mxu0 %v5195
        %v7561 = vpop.f32.mrb[0].mxu0
        %v7562 = vadd.f32 0.0, %v7561
        %v7563 = vpop.f32.mrb[0].mxu0
        %v7564 = vadd.f32 0.0, %v7563
        %v7565 = vpop.f32.mrb[0].mxu0
        %v7566 = vadd.f32 0.0, %v7565
        %v7567 = vpop.f32.mrb[0].mxu0
        %v7568 = vadd.f32 0.0, %v7567
        %7569 = vmatprep.mubr.bf16.mxu0 %v5200
        %7570 = vmatmul.mubr.bf16.gmra.mrb[0].mxu0 %v5199
        %v7571 = vpop.f32.mrb[0].mxu0
        %v7572 = vadd.f32 0.0, %v7571
        %v7573 = vpop.f32.mrb[0].mxu0
        %v7574 = vadd.f32 0.0, %v7573
        %v7575 = vpop.f32.mrb[0].mxu0
        %v7576 = vadd.f32 0.0, %v7575
        %v7577 = vpop.f32.mrb[0].mxu0
        %v7578 = vadd.f32 0.0, %v7577
        %7579 = vdwg.mxu0
        %7580 = vmatprep.subr.bf16.mxu0 %v6742
        %7581 = vmatpush1.bf16.xpose.msra.mxu0 %v6741
        %7582 = vmatprep.subr.bf16.mxu0 %v6746
        %7583 = vmatpush1.bf16.xpose.msra.mxu0 %v6745
        %7584 = vmatprep.subr.bf16.mxu0 %v6750
        %7585 = vmatpush1.bf16.xpose.msra.mxu0 %v6749
        %7586 = vmatprep.subr.bf16.mxu0 %v6754
        %7587 = vmatpush1.bf16.xpose.msra.mxu0 %v6753
        %7588 = vmatprep.subr.bf16.mxu0 %v6758
        %7589 = vmatpush1.bf16.xpose.msra.mxu0 %v6757
        %7590 = vmatprep.subr.bf16.mxu0 %v6762
        %7591 = vmatpush1.bf16.xpose.msra.mxu0 %v6761
        %7592 = vmatprep.subr.bf16.mxu0 %v6766
        %7593 = vmatpush1.bf16.xpose.msra.mxu0 %v6765
        %7594 = vmatprep.subr.bf16.mxu0 %v6770
        %7595 = vmatpush1.bf16.xpose.msra.mxu0 %v6769
        %7596 = vmatprep.subr.bf16.mxu0 %v6774
        %7597 = vmatpush1.bf16.xpose.msra.mxu0 %v6773
        %7598 = vmatprep.subr.bf16.mxu0 %v6778
        %7599 = vmatpush1.bf16.xpose.msra.mxu0 %v6777
        %7600 = vmatprep.subr.bf16.mxu0 %v6782
        %7601 = vmatpush1.bf16.xpose.msra.mxu0 %v6781
        %7602 = vmatprep.subr.bf16.mxu0 %v6786
        %7603 = vmatpush1.bf16.xpose.msra.mxu0 %v6785
        %7604 = vmatprep.subr.bf16.mxu0 %v6790
        %7605 = vmatpush1.bf16.xpose.msra.mxu0 %v6789
        %7606 = vmatprep.subr.bf16.mxu0 %v6794
        %7607 = vmatpush1.bf16.xpose.msra.mxu0 %v6793
        %7608 = vmatprep.subr.bf16.mxu0 %v6798
        %7609 = vmatpush1.bf16.xpose.msra.mxu0 %v6797
        %7610 = vmatprep.subr.bf16.mxu0 %v6802
        %7611 = vmatpush1.bf16.xpose.msra.mxu0 %v6801
        %7612 = vmatprep.mubr.bf16.mxu0 %v5190
        %7613 = vmatmul.mubr.bf16.gmra.mrb[0].mxu0 %v5189
        %v7614 = vpop.f32.mrb[0].mxu0
        %v7615 = vadd.f32 %v7542, %v7614
        %v7616 = vpop.f32.mrb[0].mxu0
        %v7617 = vadd.f32 %v7544, %v7616
        %v7618 = vpop.f32.mrb[0].mxu0
        %v7619 = vadd.f32 %v7546, %v7618
        %v7620 = vpop.f32.mrb[0].mxu0
        %v7621 = vadd.f32 %v7548, %v7620
        %7622 = vmatprep.mubr.bf16.mxu0 %v5194
        %7623 = vmatmul.mubr.bf16.gmra.mrb[0].mxu0 %v5193
        %v7624 = vpop.f32.mrb[0].mxu0
        %v7625 = vadd.f32 %v7552, %v7624
        %v7626 = vpop.f32.mrb[0].mxu0
        %v7627 = vadd.f32 %v7554, %v7626
        %v7628 = vpop.f32.mrb[0].mxu0
        %v7629 = vadd.f32 %v7556, %v7628
        %v7630 = vpop.f32.mrb[0].mxu0
        %v7631 = vadd.f32 %v7558, %v7630
        %7632 = vmatprep.mubr.bf16.mxu0 %v5198
        %7633 = vmatmul.mubr.bf16.gmra.mrb[0].mxu0 %v5197
        %v7634 = vpop.f32.mrb[0].mxu0
        %v7635 = vadd.f32 %v7562, %v7634
        %v7636 = vpop.f32.mrb[0].mxu0
        %v7637 = vadd.f32 %v7564, %v7636
        %v7638 = vpop.f32.mrb[0].mxu0
        %v7639 = vadd.f32 %v7566, %v7638
        %v7640 = vpop.f32.mrb[0].mxu0
        %v7641 = vadd.f32 %v7568, %v7640
        %7642 = vmatprep.mubr.bf16.mxu0 %v5202
        %7643 = vmatmul.mubr.bf16.gmra.mrb[0].mxu0 %v5201
        %v7644 = vpop.f32.mrb[0].mxu0
        %v7645 = vadd.f32 %v7572, %v7644
        %v7646 = vpop.f32.mrb[0].mxu0
        %v7647 = vadd.f32 %v7574, %v7646
        %v7648 = vpop.f32.mrb[0].mxu0
        %v7649 = vadd.f32 %v7576, %v7648
        %v7650 = vpop.f32.mrb[0].mxu0
        %v7651 = vadd.f32 %v7578, %v7650
        %7652 = vdwg.mxu0
        %7653 = vmatprep.subr.bf16.mxu0 %v6804
        %7654 = vmatpush1.bf16.xpose.msra.mxu0 %v6803
        %7655 = vmatprep.subr.bf16.mxu0 %v6808
        %7656 = vmatpush1.bf16.xpose.msra.mxu0 %v6807
        %7657 = vmatprep.subr.bf16.mxu0 %v6812
        %7658 = vmatpush1.bf16.xpose.msra.mxu0 %v6811
        %7659 = vmatprep.subr.bf16.mxu0 %v6816
        %7660 = vmatpush1.bf16.xpose.msra.mxu0 %v6815
        %7661 = vmatprep.subr.bf16.mxu0 %v6820
        %7662 = vmatpush1.bf16.xpose.msra.mxu0 %v6819
        %7663 = vmatprep.subr.bf16.mxu0 %v6824
        %7664 = vmatpush1.bf16.xpose.msra.mxu0 %v6823
        %7665 = vmatprep.subr.bf16.mxu0 %v6828
        %7666 = vmatpush1.bf16.xpose.msra.mxu0 %v6827
        %7667 = vmatprep.subr.bf16.mxu0 %v6832
        %7668 = vmatpush1.bf16.xpose.msra.mxu0 %v6831
        %7669 = vmatprep.subr.bf16.mxu0 %v6836
        %7670 = vmatpush1.bf16.xpose.msra.mxu0 %v6835
        %7671 = vmatprep.subr.bf16.mxu0 %v6840
        %7672 = vmatpush1.bf16.xpose.msra.mxu0 %v6839
        %7673 = vmatprep.subr.bf16.mxu0 %v6844
        %7674 = vmatpush1.bf16.xpose.msra.mxu0 %v6843
        %7675 = vmatprep.subr.bf16.mxu0 %v6848
        %7676 = vmatpush1.bf16.xpose.msra.mxu0 %v6847
        %7677 = vmatprep.subr.bf16.mxu0 %v6852
        %7678 = vmatpush1.bf16.xpose.msra.mxu0 %v6851
        %7679 = vmatprep.subr.bf16.mxu0 %v6856
        %7680 = vmatpush1.bf16.xpose.msra.mxu0 %v6855
        %7681 = vmatprep.subr.bf16.mxu0 %v6860
        %7682 = vmatpush1.bf16.xpose.msra.mxu0 %v6859
        %7683 = vmatprep.subr.bf16.mxu0 %v6864
        %7684 = vmatpush1.bf16.xpose.msra.mxu0 %v6863
        %7685 = vmatprep.mubr.bf16.mxu0 %v5188
        %7686 = vmatmul.mubr.bf16.gmra.mrb[0].mxu0 %v5187
        %v7687 = vpop.f32.mrb[0].mxu0
        %v7688 = vadd.f32 0.0, %v7687
        %v7689 = vpop.f32.mrb[0].mxu0
        %v7690 = vadd.f32 0.0, %v7689
        %v7691 = vpop.f32.mrb[0].mxu0
        %v7692 = vadd.f32 0.0, %v7691
        %v7693 = vpop.f32.mrb[0].mxu0
        %v7694 = vadd.f32 0.0, %v7693
        %7695 = vmatprep.mubr.bf16.mxu0 %v5192
        %7696 = vmatmul.mubr.bf16.gmra.mrb[0].mxu0 %v5191
        %v7697 = vpop.f32.mrb[0].mxu0
        %v7698 = vadd.f32 0.0, %v7697
        %v7699 = vpop.f32.mrb[0].mxu0
        %v7700 = vadd.f32 0.0, %v7699
        %v7701 = vpop.f32.mrb[0].mxu0
        %v7702 = vadd.f32 0.0, %v7701
        %v7703 = vpop.f32.mrb[0].mxu0
        %v7704 = vadd.f32 0.0, %v7703
        %7705 = vmatprep.mubr.bf16.mxu0 %v5196
        %7706 = vmatmul.mubr.bf16.gmra.mrb[0].mxu0 %v5195
        %v7707 = vpop.f32.mrb[0].mxu0
        %v7708 = vadd.f32 0.0, %v7707
        %v7709 = vpop.f32.mrb[0].mxu0
        %v7710 = vadd.f32 0.0, %v7709
        %v7711 = vpop.f32.mrb[0].mxu0
        %v7712 = vadd.f32 0.0, %v7711
        %v7713 = vpop.f32.mrb[0].mxu0
        %v7714 = vadd.f32 0.0, %v7713
        %7715 = vmatprep.mubr.bf16.mxu0 %v5200
        %7716 = vmatmul.mubr.bf16.gmra.mrb[0].mxu0 %v5199
        %v7717 = vpop.f32.mrb[0].mxu0
        %v7718 = vadd.f32 0.0, %v7717
        %v7719 = vpop.f32.mrb[0].mxu0
        %v7720 = vadd.f32 0.0, %v7719
        %v7721 = vpop.f32.mrb[0].mxu0
        %v7722 = vadd.f32 0.0, %v7721
        %v7723 = vpop.f32.mrb[0].mxu0
        %v7724 = vadd.f32 0.0, %v7723
        %7725 = vdwg.mxu0
        %7726 = vmatprep.subr.bf16.mxu0 %v6806
        %7727 = vmatpush1.bf16.xpose.msra.mxu0 %v6805
        %7728 = vmatprep.subr.bf16.mxu0 %v6810
        %7729 = vmatpush1.bf16.xpose.msra.mxu0 %v6809
        %7730 = vmatprep.subr.bf16.mxu0 %v6814
        %7731 = vmatpush1.bf16.xpose.msra.mxu0 %v6813
        %7732 = vmatprep.subr.bf16.mxu0 %v6818
        %7733 = vmatpush1.bf16.xpose.msra.mxu0 %v6817
        %7734 = vmatprep.subr.bf16.mxu0 %v6822
        %7735 = vmatpush1.bf16.xpose.msra.mxu0 %v6821
        %7736 = vmatprep.subr.bf16.mxu0 %v6826
        %7737 = vmatpush1.bf16.xpose.msra.mxu0 %v6825
        %7738 = vmatprep.subr.bf16.mxu0 %v6830
        %7739 = vmatpush1.bf16.xpose.msra.mxu0 %v6829
        %7740 = vmatprep.subr.bf16.mxu0 %v6834
        %7741 = vmatpush1.bf16.xpose.msra.mxu0 %v6833
        %7742 = vmatprep.subr.bf16.mxu0 %v6838
        %7743 = vmatpush1.bf16.xpose.msra.mxu0 %v6837
        %7744 = vmatprep.subr.bf16.mxu0 %v6842
        %7745 = vmatpush1.bf16.xpose.msra.mxu0 %v6841
        %7746 = vmatprep.subr.bf16.mxu0 %v6846
        %7747 = vmatpush1.bf16.xpose.msra.mxu0 %v6845
        %7748 = vmatprep.subr.bf16.mxu0 %v6850
        %7749 = vmatpush1.bf16.xpose.msra.mxu0 %v6849
        %7750 = vmatprep.subr.bf16.mxu0 %v6854
        %7751 = vmatpush1.bf16.xpose.msra.mxu0 %v6853
        %7752 = vmatprep.subr.bf16.mxu0 %v6858
        %7753 = vmatpush1.bf16.xpose.msra.mxu0 %v6857
        %7754 = vmatprep.subr.bf16.mxu0 %v6862
        %7755 = vmatpush1.bf16.xpose.msra.mxu0 %v6861
        %7756 = vmatprep.subr.bf16.mxu0 %v6866
        %7757 = vmatpush1.bf16.xpose.msra.mxu0 %v6865
        %7758 = vmatprep.mubr.bf16.mxu0 %v5190
        %7759 = vmatmul.mubr.bf16.gmra.mrb[0].mxu0 %v5189
        %v7760 = vpop.f32.mrb[0].mxu0
        %v7761 = vadd.f32 %v7688, %v7760
        %v7762 = vpop.f32.mrb[0].mxu0
        %v7763 = vadd.f32 %v7690, %v7762
        %v7764 = vpop.f32.mrb[0].mxu0
        %v7765 = vadd.f32 %v7692, %v7764
        %v7766 = vpop.f32.mrb[0].mxu0
        %v7767 = vadd.f32 %v7694, %v7766
        %7768 = vmatprep.mubr.bf16.mxu0 %v5194
        %7769 = vmatmul.mubr.bf16.gmra.mrb[0].mxu0 %v5193
        %v7770 = vpop.f32.mrb[0].mxu0
        %v7771 = vadd.f32 %v7698, %v7770
        %v7772 = vpop.f32.mrb[0].mxu0
        %v7773 = vadd.f32 %v7700, %v7772
        %v7774 = vpop.f32.mrb[0].mxu0
        %v7775 = vadd.f32 %v7702, %v7774
        %v7776 = vpop.f32.mrb[0].mxu0
        %v7777 = vadd.f32 %v7704, %v7776
        %7778 = vmatprep.mubr.bf16.mxu0 %v5198
        %7779 = vmatmul.mubr.bf16.gmra.mrb[0].mxu0 %v5197
        %v7780 = vpop.f32.mrb[0].mxu0
        %v7781 = vadd.f32 %v7708, %v7780
        %v7782 = vpop.f32.mrb[0].mxu0
        %v7783 = vadd.f32 %v7710, %v7782
        %v7784 = vpop.f32.mrb[0].mxu0
        %v7785 = vadd.f32 %v7712, %v7784
        %v7786 = vpop.f32.mrb[0].mxu0
        %v7787 = vadd.f32 %v7714, %v7786
        %7788 = vmatprep.mubr.bf16.mxu0 %v5202
        %7789 = vmatmul.mubr.bf16.gmra.mrb[0].mxu0 %v5201
        %v7790 = vpop.f32.mrb[0].mxu0
        %v7791 = vadd.f32 %v7718, %v7790
        %v7792 = vpop.f32.mrb[0].mxu0
        %v7793 = vadd.f32 %v7720, %v7792
        %v7794 = vpop.f32.mrb[0].mxu0
        %v7795 = vadd.f32 %v7722, %v7794
        %v7796 = vpop.f32.mrb[0].mxu0
        %v7797 = vadd.f32 %v7724, %v7796
        %7798 = vdwg.mxu0
        %7799 = vmatprep.subr.bf16.mxu0 %v6868
        %7800 = vmatpush1.bf16.xpose.msra.mxu0 %v6867
        %7801 = vmatprep.subr.bf16.mxu0 %v6872
        %7802 = vmatpush1.bf16.xpose.msra.mxu0 %v6871
        %7803 = vmatprep.subr.bf16.mxu0 %v6876
        %7804 = vmatpush1.bf16.xpose.msra.mxu0 %v6875
        %7805 = vmatprep.subr.bf16.mxu0 %v6880
        %7806 = vmatpush1.bf16.xpose.msra.mxu0 %v6879
        %7807 = vmatprep.subr.bf16.mxu0 %v6884
        %7808 = vmatpush1.bf16.xpose.msra.mxu0 %v6883
        %7809 = vmatprep.subr.bf16.mxu0 %v6888
        %7810 = vmatpush1.bf16.xpose.msra.mxu0 %v6887
        %7811 = vmatprep.subr.bf16.mxu0 %v6892
        %7812 = vmatpush1.bf16.xpose.msra.mxu0 %v6891
        %7813 = vmatprep.subr.bf16.mxu0 %v6896
        %7814 = vmatpush1.bf16.xpose.msra.mxu0 %v6895
        %7815 = vmatprep.subr.bf16.mxu0 %v6900
        %7816 = vmatpush1.bf16.xpose.msra.mxu0 %v6899
        %7817 = vmatprep.subr.bf16.mxu0 %v6904
        %7818 = vmatpush1.bf16.xpose.msra.mxu0 %v6903
        %7819 = vmatprep.subr.bf16.mxu0 %v6908
        %7820 = vmatpush1.bf16.xpose.msra.mxu0 %v6907
        %7821 = vmatprep.subr.bf16.mxu0 %v6912
        %7822 = vmatpush1.bf16.xpose.msra.mxu0 %v6911
        %7823 = vmatprep.subr.bf16.mxu0 %v6916
        %7824 = vmatpush1.bf16.xpose.msra.mxu0 %v6915
        %7825 = vmatprep.subr.bf16.mxu0 %v6920
        %7826 = vmatpush1.bf16.xpose.msra.mxu0 %v6919
        %7827 = vmatprep.subr.bf16.mxu0 %v6924
        %7828 = vmatpush1.bf16.xpose.msra.mxu0 %v6923
        %7829 = vmatprep.subr.bf16.mxu0 %v6928
        %7830 = vmatpush1.bf16.xpose.msra.mxu0 %v6927
        %7831 = vmatprep.mubr.bf16.mxu0 %v5188
        %7832 = vmatmul.mubr.bf16.gmra.mrb[0].mxu0 %v5187
        %v7833 = vpop.f32.mrb[0].mxu0
        %v7834 = vadd.f32 0.0, %v7833
        %v7835 = vpop.f32.mrb[0].mxu0
        %v7836 = vadd.f32 0.0, %v7835
        %v7837 = vpop.f32.mrb[0].mxu0
        %v7838 = vadd.f32 0.0, %v7837
        %v7839 = vpop.f32.mrb[0].mxu0
        %v7840 = vadd.f32 0.0, %v7839
        %7841 = vmatprep.mubr.bf16.mxu0 %v5192
        %7842 = vmatmul.mubr.bf16.gmra.mrb[0].mxu0 %v5191
        %v7843 = vpop.f32.mrb[0].mxu0
        %v7844 = vadd.f32 0.0, %v7843
        %v7845 = vpop.f32.mrb[0].mxu0
        %v7846 = vadd.f32 0.0, %v7845
        %v7847 = vpop.f32.mrb[0].mxu0
        %v7848 = vadd.f32 0.0, %v7847
        %v7849 = vpop.f32.mrb[0].mxu0
        %v7850 = vadd.f32 0.0, %v7849
        %7851 = vmatprep.mubr.bf16.mxu0 %v5196
        %7852 = vmatmul.mubr.bf16.gmra.mrb[0].mxu0 %v5195
        %v7853 = vpop.f32.mrb[0].mxu0
        %v7854 = vadd.f32 0.0, %v7853
        %v7855 = vpop.f32.mrb[0].mxu0
        %v7856 = vadd.f32 0.0, %v7855
        %v7857 = vpop.f32.mrb[0].mxu0
        %v7858 = vadd.f32 0.0, %v7857
        %v7859 = vpop.f32.mrb[0].mxu0
        %v7860 = vadd.f32 0.0, %v7859
        %7861 = vmatprep.mubr.bf16.mxu0 %v5200
        %7862 = vmatmul.mubr.bf16.gmra.mrb[0].mxu0 %v5199
        %v7863 = vpop.f32.mrb[0].mxu0
        %v7864 = vadd.f32 0.0, %v7863
        %v7865 = vpop.f32.mrb[0].mxu0
        %v7866 = vadd.f32 0.0, %v7865
        %v7867 = vpop.f32.mrb[0].mxu0
        %v7868 = vadd.f32 0.0, %v7867
        %v7869 = vpop.f32.mrb[0].mxu0
        %v7870 = vadd.f32 0.0, %v7869
        %7871 = vdwg.mxu0
        %7872 = vmatprep.subr.bf16.mxu0 %v6870
        %7873 = vmatpush1.bf16.xpose.msra.mxu0 %v6869
        %7874 = vmatprep.subr.bf16.mxu0 %v6874
        %7875 = vmatpush1.bf16.xpose.msra.mxu0 %v6873
        %7876 = vmatprep.subr.bf16.mxu0 %v6878
        %7877 = vmatpush1.bf16.xpose.msra.mxu0 %v6877
        %7878 = vmatprep.subr.bf16.mxu0 %v6882
        %7879 = vmatpush1.bf16.xpose.msra.mxu0 %v6881
        %7880 = vmatprep.subr.bf16.mxu0 %v6886
        %7881 = vmatpush1.bf16.xpose.msra.mxu0 %v6885
        %7882 = vmatprep.subr.bf16.mxu0 %v6890
        %7883 = vmatpush1.bf16.xpose.msra.mxu0 %v6889
        %7884 = vmatprep.subr.bf16.mxu0 %v6894
        %7885 = vmatpush1.bf16.xpose.msra.mxu0 %v6893
        %7886 = vmatprep.subr.bf16.mxu0 %v6898
        %7887 = vmatpush1.bf16.xpose.msra.mxu0 %v6897
        %7888 = vmatprep.subr.bf16.mxu0 %v6902
        %7889 = vmatpush1.bf16.xpose.msra.mxu0 %v6901
        %7890 = vmatprep.subr.bf16.mxu0 %v6906
        %7891 = vmatpush1.bf16.xpose.msra.mxu0 %v6905
        %7892 = vmatprep.subr.bf16.mxu0 %v6910
        %7893 = vmatpush1.bf16.xpose.msra.mxu0 %v6909
        %7894 = vmatprep.subr.bf16.mxu0 %v6914
        %7895 = vmatpush1.bf16.xpose.msra.mxu0 %v6913
        %7896 = vmatprep.subr.bf16.mxu0 %v6918
        %7897 = vmatpush1.bf16.xpose.msra.mxu0 %v6917
        %7898 = vmatprep.subr.bf16.mxu0 %v6922
        %7899 = vmatpush1.bf16.xpose.msra.mxu0 %v6921
        %7900 = vmatprep.subr.bf16.mxu0 %v6926
        %7901 = vmatpush1.bf16.xpose.msra.mxu0 %v6925
        %7902 = vmatprep.subr.bf16.mxu0 %v6930
        %7903 = vmatpush1.bf16.xpose.msra.mxu0 %v6929
        %7904 = vmatprep.mubr.bf16.mxu0 %v5190
        %7905 = vmatmul.mubr.bf16.gmra.mrb[0].mxu0 %v5189
        %v7906 = vpop.f32.mrb[0].mxu0
        %v7907 = vadd.f32 %v7834, %v7906
        %v7908 = vpop.f32.mrb[0].mxu0
        %v7909 = vadd.f32 %v7836, %v7908
        %v7910 = vpop.f32.mrb[0].mxu0
        %v7911 = vadd.f32 %v7838, %v7910
        %v7912 = vpop.f32.mrb[0].mxu0
        %v7913 = vadd.f32 %v7840, %v7912
        %7914 = vmatprep.mubr.bf16.mxu0 %v5194
        %7915 = vmatmul.mubr.bf16.gmra.mrb[0].mxu0 %v5193
        %v7916 = vpop.f32.mrb[0].mxu0
        %v7917 = vadd.f32 %v7844, %v7916
        %v7918 = vpop.f32.mrb[0].mxu0
        %v7919 = vadd.f32 %v7846, %v7918
        %v7920 = vpop.f32.mrb[0].mxu0
        %v7921 = vadd.f32 %v7848, %v7920
        %v7922 = vpop.f32.mrb[0].mxu0
        %v7923 = vadd.f32 %v7850, %v7922
        %7924 = vmatprep.mubr.bf16.mxu0 %v5198
        %7925 = vmatmul.mubr.bf16.gmra.mrb[0].mxu0 %v5197
        %v7926 = vpop.f32.mrb[0].mxu0
        %v7927 = vadd.f32 %v7854, %v7926
        %v7928 = vpop.f32.mrb[0].mxu0
        %v7929 = vadd.f32 %v7856, %v7928
        %v7930 = vpop.f32.mrb[0].mxu0
        %v7931 = vadd.f32 %v7858, %v7930
        %v7932 = vpop.f32.mrb[0].mxu0
        %v7933 = vadd.f32 %v7860, %v7932
        %7934 = vmatprep.mubr.bf16.mxu0 %v5202
        %7935 = vmatmul.mubr.bf16.gmra.mrb[0].mxu0 %v5201
        %v7936 = vpop.f32.mrb[0].mxu0
        %v7937 = vadd.f32 %v7864, %v7936
        %v7938 = vpop.f32.mrb[0].mxu0
        %v7939 = vadd.f32 %v7866, %v7938
        %v7940 = vpop.f32.mrb[0].mxu0
        %v7941 = vadd.f32 %v7868, %v7940
        %v7942 = vpop.f32.mrb[0].mxu0
        %v7943 = vadd.f32 %v7870, %v7942
        %7944 = vdwg.mxu0
        %7945 = vmatprep.subr.bf16.mxu0 %v6932
        %7946 = vmatpush1.bf16.xpose.msra.mxu0 %v6931
        %7947 = vmatprep.subr.bf16.mxu0 %v6936
        %7948 = vmatpush1.bf16.xpose.msra.mxu0 %v6935
        %7949 = vmatprep.subr.bf16.mxu0 %v6940
        %7950 = vmatpush1.bf16.xpose.msra.mxu0 %v6939
        %7951 = vmatprep.subr.bf16.mxu0 %v6944
        %7952 = vmatpush1.bf16.xpose.msra.mxu0 %v6943
        %7953 = vmatprep.subr.bf16.mxu0 %v6948
        %7954 = vmatpush1.bf16.xpose.msra.mxu0 %v6947
        %7955 = vmatprep.subr.bf16.mxu0 %v6952
        %7956 = vmatpush1.bf16.xpose.msra.mxu0 %v6951
        %7957 = vmatprep.subr.bf16.mxu0 %v6956
        %7958 = vmatpush1.bf16.xpose.msra.mxu0 %v6955
        %7959 = vmatprep.subr.bf16.mxu0 %v6960
        %7960 = vmatpush1.bf16.xpose.msra.mxu0 %v6959
        %7961 = vmatprep.subr.bf16.mxu0 %v6964
        %7962 = vmatpush1.bf16.xpose.msra.mxu0 %v6963
        %7963 = vmatprep.subr.bf16.mxu0 %v6968
        %7964 = vmatpush1.bf16.xpose.msra.mxu0 %v6967
        %7965 = vmatprep.subr.bf16.mxu0 %v6972
        %7966 = vmatpush1.bf16.xpose.msra.mxu0 %v6971
        %7967 = vmatprep.subr.bf16.mxu0 %v6976
        %7968 = vmatpush1.bf16.xpose.msra.mxu0 %v6975
        %7969 = vmatprep.subr.bf16.mxu0 %v6980
        %7970 = vmatpush1.bf16.xpose.msra.mxu0 %v6979
        %7971 = vmatprep.subr.bf16.mxu0 %v6984
        %7972 = vmatpush1.bf16.xpose.msra.mxu0 %v6983
        %7973 = vmatprep.subr.bf16.mxu0 %v6988
        %7974 = vmatpush1.bf16.xpose.msra.mxu0 %v6987
        %7975 = vmatprep.subr.bf16.mxu0 %v6992
        %7976 = vmatpush1.bf16.xpose.msra.mxu0 %v6991
        %7977 = vmatprep.mubr.bf16.mxu0 %v5188
        %7978 = vmatmul.mubr.bf16.gmra.mrb[0].mxu0 %v5187
        %v7979 = vpop.f32.mrb[0].mxu0
        %v7980 = vadd.f32 0.0, %v7979
        %v7981 = vpop.f32.mrb[0].mxu0
        %v7982 = vadd.f32 0.0, %v7981
        %v7983 = vpop.f32.mrb[0].mxu0
        %v7984 = vadd.f32 0.0, %v7983
        %v7985 = vpop.f32.mrb[0].mxu0
        %v7986 = vadd.f32 0.0, %v7985
        %7987 = vmatprep.mubr.bf16.mxu0 %v5192
        %7988 = vmatmul.mubr.bf16.gmra.mrb[0].mxu0 %v5191
        %v7989 = vpop.f32.mrb[0].mxu0
        %v7990 = vadd.f32 0.0, %v7989
        %v7991 = vpop.f32.mrb[0].mxu0
        %v7992 = vadd.f32 0.0, %v7991
        %v7993 = vpop.f32.mrb[0].mxu0
        %v7994 = vadd.f32 0.0, %v7993
        %v7995 = vpop.f32.mrb[0].mxu0
        %v7996 = vadd.f32 0.0, %v7995
        %7997 = vmatprep.mubr.bf16.mxu0 %v5196
        %7998 = vmatmul.mubr.bf16.gmra.mrb[0].mxu0 %v5195
        %v7999 = vpop.f32.mrb[0].mxu0
        %v8000 = vadd.f32 0.0, %v7999
        %v8001 = vpop.f32.mrb[0].mxu0
        %v8002 = vadd.f32 0.0, %v8001
        %v8003 = vpop.f32.mrb[0].mxu0
        %v8004 = vadd.f32 0.0, %v8003
        %v8005 = vpop.f32.mrb[0].mxu0
        %v8006 = vadd.f32 0.0, %v8005
        %8007 = vmatprep.mubr.bf16.mxu0 %v5200
        %8008 = vmatmul.mubr.bf16.gmra.mrb[0].mxu0 %v5199
        %v8009 = vpop.f32.mrb[0].mxu0
        %v8010 = vadd.f32 0.0, %v8009
        %v8011 = vpop.f32.mrb[0].mxu0
        %v8012 = vadd.f32 0.0, %v8011
        %v8013 = vpop.f32.mrb[0].mxu0
        %v8014 = vadd.f32 0.0, %v8013
        %v8015 = vpop.f32.mrb[0].mxu0
        %v8016 = vadd.f32 0.0, %v8015
        %8017 = vdwg.mxu0
        %8018 = vmatprep.subr.bf16.mxu0 %v6934
        %8019 = vmatpush1.bf16.xpose.msra.mxu0 %v6933
        %8020 = vmatprep.subr.bf16.mxu0 %v6938
        %8021 = vmatpush1.bf16.xpose.msra.mxu0 %v6937
        %8022 = vmatprep.subr.bf16.mxu0 %v6942
        %8023 = vmatpush1.bf16.xpose.msra.mxu0 %v6941
        %8024 = vmatprep.subr.bf16.mxu0 %v6946
        %8025 = vmatpush1.bf16.xpose.msra.mxu0 %v6945
        %8026 = vmatprep.subr.bf16.mxu0 %v6950
        %8027 = vmatpush1.bf16.xpose.msra.mxu0 %v6949
        %8028 = vmatprep.subr.bf16.mxu0 %v6954
        %8029 = vmatpush1.bf16.xpose.msra.mxu0 %v6953
        %8030 = vmatprep.subr.bf16.mxu0 %v6958
        %8031 = vmatpush1.bf16.xpose.msra.mxu0 %v6957
        %8032 = vmatprep.subr.bf16.mxu0 %v6962
        %8033 = vmatpush1.bf16.xpose.msra.mxu0 %v6961
        %8034 = vmatprep.subr.bf16.mxu0 %v6966
        %8035 = vmatpush1.bf16.xpose.msra.mxu0 %v6965
        %8036 = vmatprep.subr.bf16.mxu0 %v6970
        %8037 = vmatpush1.bf16.xpose.msra.mxu0 %v6969
        %8038 = vmatprep.subr.bf16.mxu0 %v6974
        %8039 = vmatpush1.bf16.xpose.msra.mxu0 %v6973
        %8040 = vmatprep.subr.bf16.mxu0 %v6978
        %8041 = vmatpush1.bf16.xpose.msra.mxu0 %v6977
        %8042 = vmatprep.subr.bf16.mxu0 %v6982
        %8043 = vmatpush1.bf16.xpose.msra.mxu0 %v6981
        %8044 = vmatprep.subr.bf16.mxu0 %v6986
        %8045 = vmatpush1.bf16.xpose.msra.mxu0 %v6985
        %8046 = vmatprep.subr.bf16.mxu0 %v6990
        %8047 = vmatpush1.bf16.xpose.msra.mxu0 %v6989
        %8048 = vmatprep.subr.bf16.mxu0 %v6994
        %8049 = vmatpush1.bf16.xpose.msra.mxu0 %v6993
        %8050 = vmatprep.mubr.bf16.mxu0 %v5190
        %8051 = vmatmul.mubr.bf16.gmra.mrb[0].mxu0 %v5189
        %v8052 = vpop.f32.mrb[0].mxu0
        %v8053 = vadd.f32 %v7980, %v8052
        %v8054 = vpop.f32.mrb[0].mxu0
        %v8055 = vadd.f32 %v7982, %v8054
        %v8056 = vpop.f32.mrb[0].mxu0
        %v8057 = vadd.f32 %v7984, %v8056
        %v8058 = vpop.f32.mrb[0].mxu0
        %v8059 = vadd.f32 %v7986, %v8058
        %8060 = vmatprep.mubr.bf16.mxu0 %v5194
        %8061 = vmatmul.mubr.bf16.gmra.mrb[0].mxu0 %v5193
        %v8062 = vpop.f32.mrb[0].mxu0
        %v8063 = vadd.f32 %v7990, %v8062
        %v8064 = vpop.f32.mrb[0].mxu0
        %v8065 = vadd.f32 %v7992, %v8064
        %v8066 = vpop.f32.mrb[0].mxu0
        %v8067 = vadd.f32 %v7994, %v8066
        %v8068 = vpop.f32.mrb[0].mxu0
        %v8069 = vadd.f32 %v7996, %v8068
        %8070 = vmatprep.mubr.bf16.mxu0 %v5198
        %8071 = vmatmul.mubr.bf16.gmra.mrb[0].mxu0 %v5197
        %v8072 = vpop.f32.mrb[0].mxu0
        %v8073 = vadd.f32 %v8000, %v8072
        %v8074 = vpop.f32.mrb[0].mxu0
        %v8075 = vadd.f32 %v8002, %v8074
        %v8076 = vpop.f32.mrb[0].mxu0
        %v8077 = vadd.f32 %v8004, %v8076
        %v8078 = vpop.f32.mrb[0].mxu0
        %v8079 = vadd.f32 %v8006, %v8078
        %8080 = vmatprep.mubr.bf16.mxu0 %v5202
        %8081 = vmatmul.mubr.bf16.gmra.mrb[0].mxu0 %v5201
        %v8082 = vpop.f32.mrb[0].mxu0
        %v8083 = vadd.f32 %v8010, %v8082
        %v8084 = vpop.f32.mrb[0].mxu0
        %v8085 = vadd.f32 %v8012, %v8084
        %v8086 = vpop.f32.mrb[0].mxu0
        %v8087 = vadd.f32 %v8014, %v8086
        %v8088 = vpop.f32.mrb[0].mxu0
        %v8089 = vadd.f32 %v8016, %v8088
        %8090 = vdwg.mxu0
        %8091 = vmatprep.subr.bf16.mxu0 %v6996
        %8092 = vmatpush1.bf16.xpose.msra.mxu0 %v6995
        %8093 = vmatprep.subr.bf16.mxu0 %v7000
        %8094 = vmatpush1.bf16.xpose.msra.mxu0 %v6999
        %8095 = vmatprep.subr.bf16.mxu0 %v7004
        %8096 = vmatpush1.bf16.xpose.msra.mxu0 %v7003
        %8097 = vmatprep.subr.bf16.mxu0 %v7008
        %8098 = vmatpush1.bf16.xpose.msra.mxu0 %v7007
        %8099 = vmatprep.subr.bf16.mxu0 %v7012
        %8100 = vmatpush1.bf16.xpose.msra.mxu0 %v7011
        %8101 = vmatprep.subr.bf16.mxu0 %v7016
        %8102 = vmatpush1.bf16.xpose.msra.mxu0 %v7015
        %8103 = vmatprep.subr.bf16.mxu0 %v7020
        %8104 = vmatpush1.bf16.xpose.msra.mxu0 %v7019
        %8105 = vmatprep.subr.bf16.mxu0 %v7024
        %8106 = vmatpush1.bf16.xpose.msra.mxu0 %v7023
        %8107 = vmatprep.subr.bf16.mxu0 %v7028
        %8108 = vmatpush1.bf16.xpose.msra.mxu0 %v7027
        %8109 = vmatprep.subr.bf16.mxu0 %v7032
        %8110 = vmatpush1.bf16.xpose.msra.mxu0 %v7031
        %8111 = vmatprep.subr.bf16.mxu0 %v7036
        %8112 = vmatpush1.bf16.xpose.msra.mxu0 %v7035
        %8113 = vmatprep.subr.bf16.mxu0 %v7040
        %8114 = vmatpush1.bf16.xpose.msra.mxu0 %v7039
        %8115 = vmatprep.subr.bf16.mxu0 %v7044
        %8116 = vmatpush1.bf16.xpose.msra.mxu0 %v7043
        %8117 = vmatprep.subr.bf16.mxu0 %v7048
        %8118 = vmatpush1.bf16.xpose.msra.mxu0 %v7047
        %8119 = vmatprep.subr.bf16.mxu0 %v7052
        %8120 = vmatpush1.bf16.xpose.msra.mxu0 %v7051
        %8121 = vmatprep.subr.bf16.mxu0 %v7056
        %8122 = vmatpush1.bf16.xpose.msra.mxu0 %v7055
        %8123 = vmatprep.mubr.bf16.mxu0 %v5188
        %8124 = vmatmul.mubr.bf16.gmra.mrb[0].mxu0 %v5187
        %v8125 = vpop.f32.mrb[0].mxu0
        %v8126 = vadd.f32 0.0, %v8125
        %v8127 = vpop.f32.mrb[0].mxu0
        %v8128 = vadd.f32 0.0, %v8127
        %v8129 = vpop.f32.mrb[0].mxu0
        %v8130 = vadd.f32 0.0, %v8129
        %v8131 = vpop.f32.mrb[0].mxu0
        %v8132 = vadd.f32 0.0, %v8131
        %8133 = vmatprep.mubr.bf16.mxu0 %v5192
        %8134 = vmatmul.mubr.bf16.gmra.mrb[0].mxu0 %v5191
        %v8135 = vpop.f32.mrb[0].mxu0
        %v8136 = vadd.f32 0.0, %v8135
        %v8137 = vpop.f32.mrb[0].mxu0
        %v8138 = vadd.f32 0.0, %v8137
        %v8139 = vpop.f32.mrb[0].mxu0
        %v8140 = vadd.f32 0.0, %v8139
        %v8141 = vpop.f32.mrb[0].mxu0
        %v8142 = vadd.f32 0.0, %v8141
        %8143 = vmatprep.mubr.bf16.mxu0 %v5196
        %8144 = vmatmul.mubr.bf16.gmra.mrb[0].mxu0 %v5195
        %v8145 = vpop.f32.mrb[0].mxu0
        %v8146 = vadd.f32 0.0, %v8145
        %v8147 = vpop.f32.mrb[0].mxu0
        %v8148 = vadd.f32 0.0, %v8147
        %v8149 = vpop.f32.mrb[0].mxu0
        %v8150 = vadd.f32 0.0, %v8149
        %v8151 = vpop.f32.mrb[0].mxu0
        %v8152 = vadd.f32 0.0, %v8151
        %8153 = vmatprep.mubr.bf16.mxu0 %v5200
        %8154 = vmatmul.mubr.bf16.gmra.mrb[0].mxu0 %v5199
        %v8155 = vpop.f32.mrb[0].mxu0
        %v8156 = vadd.f32 0.0, %v8155
        %v8157 = vpop.f32.mrb[0].mxu0
        %v8158 = vadd.f32 0.0, %v8157
        %v8159 = vpop.f32.mrb[0].mxu0
        %v8160 = vadd.f32 0.0, %v8159
        %v8161 = vpop.f32.mrb[0].mxu0
        %v8162 = vadd.f32 0.0, %v8161
        %8163 = vdwg.mxu0
        %8164 = vmatprep.subr.bf16.mxu0 %v6998
        %8165 = vmatpush1.bf16.xpose.msra.mxu0 %v6997
        %8166 = vmatprep.subr.bf16.mxu0 %v7002
        %8167 = vmatpush1.bf16.xpose.msra.mxu0 %v7001
        %8168 = vmatprep.subr.bf16.mxu0 %v7006
        %8169 = vmatpush1.bf16.xpose.msra.mxu0 %v7005
        %8170 = vmatprep.subr.bf16.mxu0 %v7010
        %8171 = vmatpush1.bf16.xpose.msra.mxu0 %v7009
        %8172 = vmatprep.subr.bf16.mxu0 %v7014
        %8173 = vmatpush1.bf16.xpose.msra.mxu0 %v7013
        %8174 = vmatprep.subr.bf16.mxu0 %v7018
        %8175 = vmatpush1.bf16.xpose.msra.mxu0 %v7017
        %8176 = vmatprep.subr.bf16.mxu0 %v7022
        %8177 = vmatpush1.bf16.xpose.msra.mxu0 %v7021
        %8178 = vmatprep.subr.bf16.mxu0 %v7026
        %8179 = vmatpush1.bf16.xpose.msra.mxu0 %v7025
        %8180 = vmatprep.subr.bf16.mxu0 %v7030
        %8181 = vmatpush1.bf16.xpose.msra.mxu0 %v7029
        %8182 = vmatprep.subr.bf16.mxu0 %v7034
        %8183 = vmatpush1.bf16.xpose.msra.mxu0 %v7033
        %8184 = vmatprep.subr.bf16.mxu0 %v7038
        %8185 = vmatpush1.bf16.xpose.msra.mxu0 %v7037
        %8186 = vmatprep.subr.bf16.mxu0 %v7042
        %8187 = vmatpush1.bf16.xpose.msra.mxu0 %v7041
        %8188 = vmatprep.subr.bf16.mxu0 %v7046
        %8189 = vmatpush1.bf16.xpose.msra.mxu0 %v7045
        %8190 = vmatprep.subr.bf16.mxu0 %v7050
        %8191 = vmatpush1.bf16.xpose.msra.mxu0 %v7049
        %8192 = vmatprep.subr.bf16.mxu0 %v7054
        %8193 = vmatpush1.bf16.xpose.msra.mxu0 %v7053
        %8194 = vmatprep.subr.bf16.mxu0 %v7058
        %8195 = vmatpush1.bf16.xpose.msra.mxu0 %v7057
        %8196 = vmatprep.mubr.bf16.mxu0 %v5190
        %8197 = vmatmul.mubr.bf16.gmra.mrb[0].mxu0 %v5189
        %v8198 = vpop.f32.mrb[0].mxu0
        %v8199 = vadd.f32 %v8126, %v8198
        %v8200 = vpop.f32.mrb[0].mxu0
        %v8201 = vadd.f32 %v8128, %v8200
        %v8202 = vpop.f32.mrb[0].mxu0
        %v8203 = vadd.f32 %v8130, %v8202
        %v8204 = vpop.f32.mrb[0].mxu0
        %v8205 = vadd.f32 %v8132, %v8204
        %8206 = vmatprep.mubr.bf16.mxu0 %v5194
        %8207 = vmatmul.mubr.bf16.gmra.mrb[0].mxu0 %v5193
        %v8208 = vpop.f32.mrb[0].mxu0
        %v8209 = vadd.f32 %v8136, %v8208
        %v8210 = vpop.f32.mrb[0].mxu0
        %v8211 = vadd.f32 %v8138, %v8210
        %v8212 = vpop.f32.mrb[0].mxu0
        %v8213 = vadd.f32 %v8140, %v8212
        %v8214 = vpop.f32.mrb[0].mxu0
        %v8215 = vadd.f32 %v8142, %v8214
        %8216 = vmatprep.mubr.bf16.mxu0 %v5198
        %8217 = vmatmul.mubr.bf16.gmra.mrb[0].mxu0 %v5197
        %v8218 = vpop.f32.mrb[0].mxu0
        %v8219 = vadd.f32 %v8146, %v8218
        %v8220 = vpop.f32.mrb[0].mxu0
        %v8221 = vadd.f32 %v8148, %v8220
        %v8222 = vpop.f32.mrb[0].mxu0
        %v8223 = vadd.f32 %v8150, %v8222
        %v8224 = vpop.f32.mrb[0].mxu0
        %v8225 = vadd.f32 %v8152, %v8224
        %8226 = vmatprep.mubr.bf16.mxu0 %v5202
        %8227 = vmatmul.mubr.bf16.gmra.mrb[0].mxu0 %v5201
        %v8228 = vpop.f32.mrb[0].mxu0
        %v8229 = vadd.f32 %v8156, %v8228
        %v8230 = vpop.f32.mrb[0].mxu0
        %v8231 = vadd.f32 %v8158, %v8230
        %v8232 = vpop.f32.mrb[0].mxu0
        %v8233 = vadd.f32 %v8160, %v8232
        %v8234 = vpop.f32.mrb[0].mxu0
        %v8235 = vadd.f32 %v8162, %v8234
        %8236 = vdwg.mxu0
        %8237 = vmatprep.subr.bf16.mxu0 %v7060
        %8238 = vmatpush1.bf16.xpose.msra.mxu0 %v7059
        %8239 = vmatprep.subr.bf16.mxu0 %v7064
        %8240 = vmatpush1.bf16.xpose.msra.mxu0 %v7063
        %8241 = vmatprep.subr.bf16.mxu0 %v7068
        %8242 = vmatpush1.bf16.xpose.msra.mxu0 %v7067
        %8243 = vmatprep.subr.bf16.mxu0 %v7072
        %8244 = vmatpush1.bf16.xpose.msra.mxu0 %v7071
        %8245 = vmatprep.subr.bf16.mxu0 %v7076
        %8246 = vmatpush1.bf16.xpose.msra.mxu0 %v7075
        %8247 = vmatprep.subr.bf16.mxu0 %v7080
        %8248 = vmatpush1.bf16.xpose.msra.mxu0 %v7079
        %8249 = vmatprep.subr.bf16.mxu0 %v7084
        %8250 = vmatpush1.bf16.xpose.msra.mxu0 %v7083
        %8251 = vmatprep.subr.bf16.mxu0 %v7088
        %8252 = vmatpush1.bf16.xpose.msra.mxu0 %v7087
        %8253 = vmatprep.subr.bf16.mxu0 %v7092
        %8254 = vmatpush1.bf16.xpose.msra.mxu0 %v7091
        %8255 = vmatprep.subr.bf16.mxu0 %v7096
        %8256 = vmatpush1.bf16.xpose.msra.mxu0 %v7095
        %8257 = vmatprep.subr.bf16.mxu0 %v7100
        %8258 = vmatpush1.bf16.xpose.msra.mxu0 %v7099
        %8259 = vmatprep.subr.bf16.mxu0 %v7104
        %8260 = vmatpush1.bf16.xpose.msra.mxu0 %v7103
        %8261 = vmatprep.subr.bf16.mxu0 %v7108
        %8262 = vmatpush1.bf16.xpose.msra.mxu0 %v7107
        %8263 = vmatprep.subr.bf16.mxu0 %v7112
        %8264 = vmatpush1.bf16.xpose.msra.mxu0 %v7111
        %8265 = vmatprep.subr.bf16.mxu0 %v7116
        %8266 = vmatpush1.bf16.xpose.msra.mxu0 %v7115
        %8267 = vmatprep.subr.bf16.mxu0 %v7120
        %8268 = vmatpush1.bf16.xpose.msra.mxu0 %v7119
        %8269 = vmatprep.mubr.bf16.mxu0 %v5188
        %8270 = vmatmul.mubr.bf16.gmra.mrb[0].mxu0 %v5187
        %v8271 = vpop.f32.mrb[0].mxu0
        %v8272 = vadd.f32 0.0, %v8271
        %v8273 = vpop.f32.mrb[0].mxu0
        %v8274 = vadd.f32 0.0, %v8273
        %v8275 = vpop.f32.mrb[0].mxu0
        %v8276 = vadd.f32 0.0, %v8275
        %v8277 = vpop.f32.mrb[0].mxu0
        %v8278 = vadd.f32 0.0, %v8277
        %8279 = vmatprep.mubr.bf16.mxu0 %v5192
        %8280 = vmatmul.mubr.bf16.gmra.mrb[0].mxu0 %v5191
        %v8281 = vpop.f32.mrb[0].mxu0
        %v8282 = vadd.f32 0.0, %v8281
        %v8283 = vpop.f32.mrb[0].mxu0
        %v8284 = vadd.f32 0.0, %v8283
        %v8285 = vpop.f32.mrb[0].mxu0
        %v8286 = vadd.f32 0.0, %v8285
        %v8287 = vpop.f32.mrb[0].mxu0
        %v8288 = vadd.f32 0.0, %v8287
        %8289 = vmatprep.mubr.bf16.mxu0 %v5196
        %8290 = vmatmul.mubr.bf16.gmra.mrb[0].mxu0 %v5195
        %v8291 = vpop.f32.mrb[0].mxu0
        %v8292 = vadd.f32 0.0, %v8291
        %v8293 = vpop.f32.mrb[0].mxu0
        %v8294 = vadd.f32 0.0, %v8293
        %v8295 = vpop.f32.mrb[0].mxu0
        %v8296 = vadd.f32 0.0, %v8295
        %v8297 = vpop.f32.mrb[0].mxu0
        %v8298 = vadd.f32 0.0, %v8297
        %8299 = vmatprep.mubr.bf16.mxu0 %v5200
        %8300 = vmatmul.mubr.bf16.gmra.mrb[0].mxu0 %v5199
        %v8301 = vpop.f32.mrb[0].mxu0
        %v8302 = vadd.f32 0.0, %v8301
        %v8303 = vpop.f32.mrb[0].mxu0
        %v8304 = vadd.f32 0.0, %v8303
        %v8305 = vpop.f32.mrb[0].mxu0
        %v8306 = vadd.f32 0.0, %v8305
        %v8307 = vpop.f32.mrb[0].mxu0
        %v8308 = vadd.f32 0.0, %v8307
        %8309 = vdwg.mxu0
        %8310 = vmatprep.subr.bf16.mxu0 %v7062
        %8311 = vmatpush1.bf16.xpose.msra.mxu0 %v7061
        %8312 = vmatprep.subr.bf16.mxu0 %v7066
        %8313 = vmatpush1.bf16.xpose.msra.mxu0 %v7065
        %8314 = vmatprep.subr.bf16.mxu0 %v7070
        %8315 = vmatpush1.bf16.xpose.msra.mxu0 %v7069
        %8316 = vmatprep.subr.bf16.mxu0 %v7074
        %8317 = vmatpush1.bf16.xpose.msra.mxu0 %v7073
        %8318 = vmatprep.subr.bf16.mxu0 %v7078
        %8319 = vmatpush1.bf16.xpose.msra.mxu0 %v7077
        %8320 = vmatprep.subr.bf16.mxu0 %v7082
        %8321 = vmatpush1.bf16.xpose.msra.mxu0 %v7081
        %8322 = vmatprep.subr.bf16.mxu0 %v7086
        %8323 = vmatpush1.bf16.xpose.msra.mxu0 %v7085
        %8324 = vmatprep.subr.bf16.mxu0 %v7090
        %8325 = vmatpush1.bf16.xpose.msra.mxu0 %v7089
        %8326 = vmatprep.subr.bf16.mxu0 %v7094
        %8327 = vmatpush1.bf16.xpose.msra.mxu0 %v7093
        %8328 = vmatprep.subr.bf16.mxu0 %v7098
        %8329 = vmatpush1.bf16.xpose.msra.mxu0 %v7097
        %8330 = vmatprep.subr.bf16.mxu0 %v7102
        %8331 = vmatpush1.bf16.xpose.msra.mxu0 %v7101
        %8332 = vmatprep.subr.bf16.mxu0 %v7106
        %8333 = vmatpush1.bf16.xpose.msra.mxu0 %v7105
        %8334 = vmatprep.subr.bf16.mxu0 %v7110
        %8335 = vmatpush1.bf16.xpose.msra.mxu0 %v7109
        %8336 = vmatprep.subr.bf16.mxu0 %v7114
        %8337 = vmatpush1.bf16.xpose.msra.mxu0 %v7113
        %8338 = vmatprep.subr.bf16.mxu0 %v7118
        %8339 = vmatpush1.bf16.xpose.msra.mxu0 %v7117
        %8340 = vmatprep.subr.bf16.mxu0 %v7122
        %8341 = vmatpush1.bf16.xpose.msra.mxu0 %v7121
        %8342 = vmatprep.mubr.bf16.mxu0 %v5190
        %8343 = vmatmul.mubr.bf16.gmra.mrb[0].mxu0 %v5189
        %v8344 = vpop.f32.mrb[0].mxu0
        %v8345 = vadd.f32 %v8272, %v8344
        %v8346 = vpop.f32.mrb[0].mxu0
        %v8347 = vadd.f32 %v8274, %v8346
        %v8348 = vpop.f32.mrb[0].mxu0
        %v8349 = vadd.f32 %v8276, %v8348
        %v8350 = vpop.f32.mrb[0].mxu0
        %v8351 = vadd.f32 %v8278, %v8350
        %8352 = vmatprep.mubr.bf16.mxu0 %v5194
        %8353 = vmatmul.mubr.bf16.gmra.mrb[0].mxu0 %v5193
        %v8354 = vpop.f32.mrb[0].mxu0
        %v8355 = vadd.f32 %v8282, %v8354
        %v8356 = vpop.f32.mrb[0].mxu0
        %v8357 = vadd.f32 %v8284, %v8356
        %v8358 = vpop.f32.mrb[0].mxu0
        %v8359 = vadd.f32 %v8286, %v8358
        %v8360 = vpop.f32.mrb[0].mxu0
        %v8361 = vadd.f32 %v8288, %v8360
        %8362 = vmatprep.mubr.bf16.mxu0 %v5198
        %8363 = vmatmul.mubr.bf16.gmra.mrb[0].mxu0 %v5197
        %v8364 = vpop.f32.mrb[0].mxu0
        %v8365 = vadd.f32 %v8292, %v8364
        %v8366 = vpop.f32.mrb[0].mxu0
        %v8367 = vadd.f32 %v8294, %v8366
        %v8368 = vpop.f32.mrb[0].mxu0
        %v8369 = vadd.f32 %v8296, %v8368
        %v8370 = vpop.f32.mrb[0].mxu0
        %v8371 = vadd.f32 %v8298, %v8370
        %8372 = vmatprep.mubr.bf16.mxu0 %v5202
        %8373 = vmatmul.mubr.bf16.gmra.mrb[0].mxu0 %v5201
        %v8374 = vpop.f32.mrb[0].mxu0
        %v8375 = vadd.f32 %v8302, %v8374
        %v8376 = vpop.f32.mrb[0].mxu0
        %v8377 = vadd.f32 %v8304, %v8376
        %v8378 = vpop.f32.mrb[0].mxu0
        %v8379 = vadd.f32 %v8306, %v8378
        %v8380 = vpop.f32.mrb[0].mxu0
        %v8381 = vadd.f32 %v8308, %v8380
        %8382 = vdwg.mxu0
        %8383 = vst [vmem:[%s306] sm:$0xff] %v7615
        %8384 = vst [vmem:[%s306 + $0x8] sm:$0xff] %v7617
        %8385 = vst [vmem:[%s306 + $0x10] sm:$0xff] %v7761
        %8386 = vst [vmem:[%s306 + $0x18] sm:$0xff] %v7763
        %8387 = vst [vmem:[%s306 + $0x20] sm:$0xff] %v7907
        %8388 = vst [vmem:[%s306 + $0x28] sm:$0xff] %v7909
        %8389 = vst [vmem:[%s306 + $0x30] sm:$0xff] %v8053
        %8390 = vst [vmem:[%s306 + $0x38] sm:$0xff] %v8055
        %8391 = vst [vmem:[%s306 + $0x40] sm:$0xff] %v8199
        %8392 = vst [vmem:[%s306 + $0x48] sm:$0xff] %v8201
        %8393 = vst [vmem:[%s306 + $0x50] sm:$0xff] %v8345
        %8394 = vst [vmem:[%s306 + $0x58] sm:$0xff] %v8347
        %8395 = vst [vmem:[%s306 + $0x60] sm:$0xff] %v7619
        %8396 = vst [vmem:[%s306 + $0x68] sm:$0xff] %v7621
        %8397 = vst [vmem:[%s306 + $0x70] sm:$0xff] %v7765
        %8398 = vst [vmem:[%s306 + $0x78] sm:$0xff] %v7767
        %8399 = vst [vmem:[%s306 + $0x80] sm:$0xff] %v7911
        %8400 = vst [vmem:[%s306 + $0x88] sm:$0xff] %v7913
        %8401 = vst [vmem:[%s306 + $0x90] sm:$0xff] %v8057
        %8402 = vst [vmem:[%s306 + $0x98] sm:$0xff] %v8059
        %8403 = vst [vmem:[%s306 + $0xa0] sm:$0xff] %v8203
        %8404 = vst [vmem:[%s306 + $0xa8] sm:$0xff] %v8205
        %8405 = vst [vmem:[%s306 + $0xb0] sm:$0xff] %v8349
        %8406 = vst [vmem:[%s306 + $0xb8] sm:$0xff] %v8351
        %8407 = vst [vmem:[%s306 + $0xc0] sm:$0xff] %v7625
        %8408 = vst [vmem:[%s306 + $0xc8] sm:$0xff] %v7627
        %8409 = vst [vmem:[%s306 + $0xd0] sm:$0xff] %v7771
        %8410 = vst [vmem:[%s306 + $0xd8] sm:$0xff] %v7773
        %8411 = vst [vmem:[%s306 + $0xe0] sm:$0xff] %v7917
        %8412 = vst [vmem:[%s306 + $0xe8] sm:$0xff] %v7919
        %8413 = vst [vmem:[%s306 + $0xf0] sm:$0xff] %v8063
        %8414 = vst [vmem:[%s306 + $0xf8] sm:$0xff] %v8065
        %8415 = vst [vmem:[%s306 + $0x100] sm:$0xff] %v8209
        %8416 = vst [vmem:[%s306 + $0x108] sm:$0xff] %v8211
        %8417 = vst [vmem:[%s306 + $0x110] sm:$0xff] %v8355
        %8418 = vst [vmem:[%s306 + $0x118] sm:$0xff] %v8357
        %8419 = vst [vmem:[%s306 + $0x120] sm:$0xff] %v7629
        %8420 = vst [vmem:[%s306 + $0x128] sm:$0xff] %v7631
        %8421 = vst [vmem:[%s306 + $0x130] sm:$0xff] %v7775
        %8422 = vst [vmem:[%s306 + $0x138] sm:$0xff] %v7777
        %8423 = vst [vmem:[%s306 + $0x140] sm:$0xff] %v7921
        %8424 = vst [vmem:[%s306 + $0x148] sm:$0xff] %v7923
        %8425 = vst [vmem:[%s306 + $0x150] sm:$0xff] %v8067
        %8426 = vst [vmem:[%s306 + $0x158] sm:$0xff] %v8069
        %8427 = vst [vmem:[%s306 + $0x160] sm:$0xff] %v8213
        %8428 = vst [vmem:[%s306 + $0x168] sm:$0xff] %v8215
        %8429 = vst [vmem:[%s306 + $0x170] sm:$0xff] %v8359
        %8430 = vst [vmem:[%s306 + $0x178] sm:$0xff] %v8361
        %8431 = vst [vmem:[%s306 + $0x180] sm:$0xff] %v7635
        %8432 = vst [vmem:[%s306 + $0x188] sm:$0xff] %v7637
        %8433 = vst [vmem:[%s306 + $0x190] sm:$0xff] %v7781
        %8434 = vst [vmem:[%s306 + $0x198] sm:$0xff] %v7783
        %8435 = vst [vmem:[%s306 + $0x1a0] sm:$0xff] %v7927
        %8436 = vst [vmem:[%s306 + $0x1a8] sm:$0xff] %v7929
        %8437 = vst [vmem:[%s306 + $0x1b0] sm:$0xff] %v8073
        %8438 = vst [vmem:[%s306 + $0x1b8] sm:$0xff] %v8075
        %8439 = vst [vmem:[%s306 + $0x1c0] sm:$0xff] %v8219
        %8440 = vst [vmem:[%s306 + $0x1c8] sm:$0xff] %v8221
        %8441 = vst [vmem:[%s306 + $0x1d0] sm:$0xff] %v8365
        %8442 = vst [vmem:[%s306 + $0x1d8] sm:$0xff] %v8367
        %8443 = vst [vmem:[%s306 + $0x1e0] sm:$0xff] %v7639
        %8444 = vst [vmem:[%s306 + $0x1e8] sm:$0xff] %v7641
        %8445 = vst [vmem:[%s306 + $0x1f0] sm:$0xff] %v7785
        %8446 = vst [vmem:[%s306 + $0x1f8] sm:$0xff] %v7787
        %8447 = vst [vmem:[%s306 + $0x200] sm:$0xff] %v7931
        %8448 = vst [vmem:[%s306 + $0x208] sm:$0xff] %v7933
        %8449 = vst [vmem:[%s306 + $0x210] sm:$0xff] %v8077
        %8450 = vst [vmem:[%s306 + $0x218] sm:$0xff] %v8079
        %8451 = vst [vmem:[%s306 + $0x220] sm:$0xff] %v8223
        %8452 = vst [vmem:[%s306 + $0x228] sm:$0xff] %v8225
        %8453 = vst [vmem:[%s306 + $0x230] sm:$0xff] %v8369
        %8454 = vst [vmem:[%s306 + $0x238] sm:$0xff] %v8371
        %8455 = vst [vmem:[%s306 + $0x240] sm:$0xff] %v7645
        %8456 = vst [vmem:[%s306 + $0x248] sm:$0xff] %v7647
        %8457 = vst [vmem:[%s306 + $0x250] sm:$0xff] %v7791
        %8458 = vst [vmem:[%s306 + $0x258] sm:$0xff] %v7793
        %8459 = vst [vmem:[%s306 + $0x260] sm:$0xff] %v7937
        %8460 = vst [vmem:[%s306 + $0x268] sm:$0xff] %v7939
        %8461 = vst [vmem:[%s306 + $0x270] sm:$0xff] %v8083
        %8462 = vst [vmem:[%s306 + $0x278] sm:$0xff] %v8085
        %8463 = vst [vmem:[%s306 + $0x280] sm:$0xff] %v8229
        %8464 = vst [vmem:[%s306 + $0x288] sm:$0xff] %v8231
        %8465 = vst [vmem:[%s306 + $0x290] sm:$0xff] %v8375
        %8466 = vst [vmem:[%s306 + $0x298] sm:$0xff] %v8377
        %8467 = vst [vmem:[%s306 + $0x2a0] sm:$0xff] %v7649
        %8468 = vst [vmem:[%s306 + $0x2a8] sm:$0xff] %v7651
        %8469 = vst [vmem:[%s306 + $0x2b0] sm:$0xff] %v7795
        %8470 = vst [vmem:[%s306 + $0x2b8] sm:$0xff] %v7797
        %8471 = vst [vmem:[%s306 + $0x2c0] sm:$0xff] %v7941
        %8472 = vst [vmem:[%s306 + $0x2c8] sm:$0xff] %v7943
        %8473 = vst [vmem:[%s306 + $0x2d0] sm:$0xff] %v8087
        %8474 = vst [vmem:[%s306 + $0x2d8] sm:$0xff] %v8089
        %8475 = vst [vmem:[%s306 + $0x2e0] sm:$0xff] %v8233
        %8476 = vst [vmem:[%s306 + $0x2e8] sm:$0xff] %v8235
        %8477 = vst [vmem:[%s306 + $0x2f0] sm:$0xff] %v8379
        %8478 = vst [vmem:[%s306 + $0x2f8] sm:$0xff] %v8381
        %s8479 = sand.u32 %s161, 1
        %s8480 = sand.u32 %s161, 1
        %s8481 = smul.addr %s8480, 768
        %s8482 = scalar_lea.vmem [#allocation9], %s8481
        // Predicated region
        $region61: #{model_forward.1} parent=43 // pred_check
          %p8483 = pneg %p171
        $region62: #{model_forward.1} parent=43 // pred_check_branch
          %8485 = sbr.rel (%p8483) target = $region64
        $region63: #{model_forward.1} parent=43 // pred_region
          %s8486 = smul.u32 12, %s22
          %s8487 = smul.addr %s8486, 8
          %s8488 = scalar_lea.vmem %s6, %s8487
          // Predicated region
          $region65: #{model_forward.1} parent=63 // pred_check
            _
          $region66: #{model_forward.1} parent=63 // pred_check_branch
            %8490 = sbr.rel (0) target = $region68
          $region67: #{model_forward.1} parent=63 // pred_region
            // Predicated region
            $region69: #{model_forward.1} parent=67 // pred_check
              _
            $region70: #{model_forward.1} parent=67 // pred_check_branch
              %8492 = sbr.rel (0) target = $region72
            $region71: #{model_forward.1} parent=67 // pred_region
              loop: start=0, step=1, limit=1
              $region73: #{model_forward.1} parent=71 // loop_pre_header
                _
              $region74: #{model_forward.1} parent=71 // loop_header
                %s8494 = sphi 0, %s8498
                %p8495 = scmp.ge.s32.totalorder %s8494, 1
                %s8499 = sphi %s8482, %s8482
                %s8500 = sphi %s8488, %s8488
              $region75: #{model_forward.1} parent=71 // loop_header_branch
                %8497 = sbr.rel (%p8495) target = $region79
              $region76: #{model_forward.1} parent=71 // loop_body
                %v8501 = vld [vmem:[%s8499] sm:$0xff]
                %8502 = vst [vmem:[%s8500] sm:$0xff] %v8501
                %v8503 = vld [vmem:[%s8499 + $0x8] sm:$0xff]
                %8504 = vst [vmem:[%s8500 + $0x8] sm:$0xff] %v8503
                %v8505 = vld [vmem:[%s8499 + $0x10] sm:$0xff]
                %8506 = vst [vmem:[%s8500 + $0x10] sm:$0xff] %v8505
                %v8507 = vld [vmem:[%s8499 + $0x18] sm:$0xff]
                %8508 = vst [vmem:[%s8500 + $0x18] sm:$0xff] %v8507
                %v8509 = vld [vmem:[%s8499 + $0x20] sm:$0xff]
                %8510 = vst [vmem:[%s8500 + $0x20] sm:$0xff] %v8509
                %v8511 = vld [vmem:[%s8499 + $0x28] sm:$0xff]
                %8512 = vst [vmem:[%s8500 + $0x28] sm:$0xff] %v8511
                %v8513 = vld [vmem:[%s8499 + $0x30] sm:$0xff]
                %8514 = vst [vmem:[%s8500 + $0x30] sm:$0xff] %v8513
                %v8515 = vld [vmem:[%s8499 + $0x38] sm:$0xff]
                %8516 = vst [vmem:[%s8500 + $0x38] sm:$0xff] %v8515
                %v8517 = vld [vmem:[%s8499 + $0x40] sm:$0xff]
                %8518 = vst [vmem:[%s8500 + $0x40] sm:$0xff] %v8517
                %v8519 = vld [vmem:[%s8499 + $0x48] sm:$0xff]
                %8520 = vst [vmem:[%s8500 + $0x48] sm:$0xff] %v8519
                %v8521 = vld [vmem:[%s8499 + $0x50] sm:$0xff]
                %8522 = vst [vmem:[%s8500 + $0x50] sm:$0xff] %v8521
                %v8523 = vld [vmem:[%s8499 + $0x58] sm:$0xff]
                %8524 = vst [vmem:[%s8500 + $0x58] sm:$0xff] %v8523
                %v8525 = vld [vmem:[%s8499 + $0x60] sm:$0xff]
                %8526 = vst [vmem:[%s8500 + $0xc0] sm:$0xff] %v8525
                %v8527 = vld [vmem:[%s8499 + $0x68] sm:$0xff]
                %8528 = vst [vmem:[%s8500 + $0xc8] sm:$0xff] %v8527
                %v8529 = vld [vmem:[%s8499 + $0x70] sm:$0xff]
                %8530 = vst [vmem:[%s8500 + $0xd0] sm:$0xff] %v8529
                %v8531 = vld [vmem:[%s8499 + $0x78] sm:$0xff]
                %8532 = vst [vmem:[%s8500 + $0xd8] sm:$0xff] %v8531
                %v8533 = vld [vmem:[%s8499 + $0x80] sm:$0xff]
                %8534 = vst [vmem:[%s8500 + $0xe0] sm:$0xff] %v8533
                %v8535 = vld [vmem:[%s8499 + $0x88] sm:$0xff]
                %8536 = vst [vmem:[%s8500 + $0xe8] sm:$0xff] %v8535
                %v8537 = vld [vmem:[%s8499 + $0x90] sm:$0xff]
                %8538 = vst [vmem:[%s8500 + $0xf0] sm:$0xff] %v8537
                %v8539 = vld [vmem:[%s8499 + $0x98] sm:$0xff]
                %8540 = vst [vmem:[%s8500 + $0xf8] sm:$0xff] %v8539
                %v8541 = vld [vmem:[%s8499 + $0xa0] sm:$0xff]
                %8542 = vst [vmem:[%s8500 + $0x100] sm:$0xff] %v8541
                %v8543 = vld [vmem:[%s8499 + $0xa8] sm:$0xff]
                %8544 = vst [vmem:[%s8500 + $0x108] sm:$0xff] %v8543
                %v8545 = vld [vmem:[%s8499 + $0xb0] sm:$0xff]
                %8546 = vst [vmem:[%s8500 + $0x110] sm:$0xff] %v8545
                %v8547 = vld [vmem:[%s8499 + $0xb8] sm:$0xff]
                %8548 = vst [vmem:[%s8500 + $0x118] sm:$0xff] %v8547
                %v8549 = vld [vmem:[%s8499 + $0xc0] sm:$0xff]
                %8550 = vst [vmem:[%s8500 + $0x180] sm:$0xff] %v8549
                %v8551 = vld [vmem:[%s8499 + $0xc8] sm:$0xff]
                %8552 = vst [vmem:[%s8500 + $0x188] sm:$0xff] %v8551
                %v8553 = vld [vmem:[%s8499 + $0xd0] sm:$0xff]
                %8554 = vst [vmem:[%s8500 + $0x190] sm:$0xff] %v8553
                %v8555 = vld [vmem:[%s8499 + $0xd8] sm:$0xff]
                %8556 = vst [vmem:[%s8500 + $0x198] sm:$0xff] %v8555
                %v8557 = vld [vmem:[%s8499 + $0xe0] sm:$0xff]
                %8558 = vst [vmem:[%s8500 + $0x1a0] sm:$0xff] %v8557
                %v8559 = vld [vmem:[%s8499 + $0xe8] sm:$0xff]
                %8560 = vst [vmem:[%s8500 + $0x1a8] sm:$0xff] %v8559
                %v8561 = vld [vmem:[%s8499 + $0xf0] sm:$0xff]
                %8562 = vst [vmem:[%s8500 + $0x1b0] sm:$0xff] %v8561
                %v8563 = vld [vmem:[%s8499 + $0xf8] sm:$0xff]
                %8564 = vst [vmem:[%s8500 + $0x1b8] sm:$0xff] %v8563
                %v8565 = vld [vmem:[%s8499 + $0x100] sm:$0xff]
                %8566 = vst [vmem:[%s8500 + $0x1c0] sm:$0xff] %v8565
                %v8567 = vld [vmem:[%s8499 + $0x108] sm:$0xff]
                %8568 = vst [vmem:[%s8500 + $0x1c8] sm:$0xff] %v8567
                %v8569 = vld [vmem:[%s8499 + $0x110] sm:$0xff]
                %8570 = vst [vmem:[%s8500 + $0x1d0] sm:$0xff] %v8569
                %v8571 = vld [vmem:[%s8499 + $0x118] sm:$0xff]
                %8572 = vst [vmem:[%s8500 + $0x1d8] sm:$0xff] %v8571
                %v8573 = vld [vmem:[%s8499 + $0x120] sm:$0xff]
                %8574 = vst [vmem:[%s8500 + $0x240] sm:$0xff] %v8573
                %v8575 = vld [vmem:[%s8499 + $0x128] sm:$0xff]
                %8576 = vst [vmem:[%s8500 + $0x248] sm:$0xff] %v8575
                %v8577 = vld [vmem:[%s8499 + $0x130] sm:$0xff]
                %8578 = vst [vmem:[%s8500 + $0x250] sm:$0xff] %v8577
                %v8579 = vld [vmem:[%s8499 + $0x138] sm:$0xff]
                %8580 = vst [vmem:[%s8500 + $0x258] sm:$0xff] %v8579
                %v8581 = vld [vmem:[%s8499 + $0x140] sm:$0xff]
                %8582 = vst [vmem:[%s8500 + $0x260] sm:$0xff] %v8581
                %v8583 = vld [vmem:[%s8499 + $0x148] sm:$0xff]
                %8584 = vst [vmem:[%s8500 + $0x268] sm:$0xff] %v8583
                %v8585 = vld [vmem:[%s8499 + $0x150] sm:$0xff]
                %8586 = vst [vmem:[%s8500 + $0x270] sm:$0xff] %v8585
                %v8587 = vld [vmem:[%s8499 + $0x158] sm:$0xff]
                %8588 = vst [vmem:[%s8500 + $0x278] sm:$0xff] %v8587
                %v8589 = vld [vmem:[%s8499 + $0x160] sm:$0xff]
                %8590 = vst [vmem:[%s8500 + $0x280] sm:$0xff] %v8589
                %v8591 = vld [vmem:[%s8499 + $0x168] sm:$0xff]
                %8592 = vst [vmem:[%s8500 + $0x288] sm:$0xff] %v8591
                %v8593 = vld [vmem:[%s8499 + $0x170] sm:$0xff]
                %8594 = vst [vmem:[%s8500 + $0x290] sm:$0xff] %v8593
                %v8595 = vld [vmem:[%s8499 + $0x178] sm:$0xff]
                %8596 = vst [vmem:[%s8500 + $0x298] sm:$0xff] %v8595
                %v8597 = vld [vmem:[%s8499 + $0x180] sm:$0xff]
                %8598 = vst [vmem:[%s8500 + $0x300] sm:$0xff] %v8597
                %v8599 = vld [vmem:[%s8499 + $0x188] sm:$0xff]
                %8600 = vst [vmem:[%s8500 + $0x308] sm:$0xff] %v8599
                %v8601 = vld [vmem:[%s8499 + $0x190] sm:$0xff]
                %8602 = vst [vmem:[%s8500 + $0x310] sm:$0xff] %v8601
                %v8603 = vld [vmem:[%s8499 + $0x198] sm:$0xff]
                %8604 = vst [vmem:[%s8500 + $0x318] sm:$0xff] %v8603
                %v8605 = vld [vmem:[%s8499 + $0x1a0] sm:$0xff]
                %8606 = vst [vmem:[%s8500 + $0x320] sm:$0xff] %v8605
                %v8607 = vld [vmem:[%s8499 + $0x1a8] sm:$0xff]
                %8608 = vst [vmem:[%s8500 + $0x328] sm:$0xff] %v8607
                %v8609 = vld [vmem:[%s8499 + $0x1b0] sm:$0xff]
                %8610 = vst [vmem:[%s8500 + $0x330] sm:$0xff] %v8609
                %v8611 = vld [vmem:[%s8499 + $0x1b8] sm:$0xff]
                %8612 = vst [vmem:[%s8500 + $0x338] sm:$0xff] %v8611
                %v8613 = vld [vmem:[%s8499 + $0x1c0] sm:$0xff]
                %8614 = vst [vmem:[%s8500 + $0x340] sm:$0xff] %v8613
                %v8615 = vld [vmem:[%s8499 + $0x1c8] sm:$0xff]
                %8616 = vst [vmem:[%s8500 + $0x348] sm:$0xff] %v8615
                %v8617 = vld [vmem:[%s8499 + $0x1d0] sm:$0xff]
                %8618 = vst [vmem:[%s8500 + $0x350] sm:$0xff] %v8617
                %v8619 = vld [vmem:[%s8499 + $0x1d8] sm:$0xff]
                %8620 = vst [vmem:[%s8500 + $0x358] sm:$0xff] %v8619
                %v8621 = vld [vmem:[%s8499 + $0x1e0] sm:$0xff]
                %8622 = vst [vmem:[%s8500 + $0x3c0] sm:$0xff] %v8621
                %v8623 = vld [vmem:[%s8499 + $0x1e8] sm:$0xff]
                %8624 = vst [vmem:[%s8500 + $0x3c8] sm:$0xff] %v8623
                %v8625 = vld [vmem:[%s8499 + $0x1f0] sm:$0xff]
                %8626 = vst [vmem:[%s8500 + $0x3d0] sm:$0xff] %v8625
                %v8627 = vld [vmem:[%s8499 + $0x1f8] sm:$0xff]
                %8628 = vst [vmem:[%s8500 + $0x3d8] sm:$0xff] %v8627
                %v8629 = vld [vmem:[%s8499 + $0x200] sm:$0xff]
                %8630 = vst [vmem:[%s8500 + $0x3e0] sm:$0xff] %v8629
                %v8631 = vld [vmem:[%s8499 + $0x208] sm:$0xff]
                %8632 = vst [vmem:[%s8500 + $0x3e8] sm:$0xff] %v8631
                %v8633 = vld [vmem:[%s8499 + $0x210] sm:$0xff]
                %8634 = vst [vmem:[%s8500 + $0x3f0] sm:$0xff] %v8633
                %v8635 = vld [vmem:[%s8499 + $0x218] sm:$0xff]
                %8636 = vst [vmem:[%s8500 + $0x3f8] sm:$0xff] %v8635
                %v8637 = vld [vmem:[%s8499 + $0x220] sm:$0xff]
                %8638 = vst [vmem:[%s8500 + $0x400] sm:$0xff] %v8637
                %v8639 = vld [vmem:[%s8499 + $0x228] sm:$0xff]
                %8640 = vst [vmem:[%s8500 + $0x408] sm:$0xff] %v8639
                %v8641 = vld [vmem:[%s8499 + $0x230] sm:$0xff]
                %8642 = vst [vmem:[%s8500 + $0x410] sm:$0xff] %v8641
                %v8643 = vld [vmem:[%s8499 + $0x238] sm:$0xff]
                %8644 = vst [vmem:[%s8500 + $0x418] sm:$0xff] %v8643
                %v8645 = vld [vmem:[%s8499 + $0x240] sm:$0xff]
                %8646 = vst [vmem:[%s8500 + $0x480] sm:$0xff] %v8645
                %v8647 = vld [vmem:[%s8499 + $0x248] sm:$0xff]
                %8648 = vst [vmem:[%s8500 + $0x488] sm:$0xff] %v8647
                %v8649 = vld [vmem:[%s8499 + $0x250] sm:$0xff]
                %8650 = vst [vmem:[%s8500 + $0x490] sm:$0xff] %v8649
                %v8651 = vld [vmem:[%s8499 + $0x258] sm:$0xff]
                %8652 = vst [vmem:[%s8500 + $0x498] sm:$0xff] %v8651
                %v8653 = vld [vmem:[%s8499 + $0x260] sm:$0xff]
                %8654 = vst [vmem:[%s8500 + $0x4a0] sm:$0xff] %v8653
                %v8655 = vld [vmem:[%s8499 + $0x268] sm:$0xff]
                %8656 = vst [vmem:[%s8500 + $0x4a8] sm:$0xff] %v8655
                %v8657 = vld [vmem:[%s8499 + $0x270] sm:$0xff]
                %8658 = vst [vmem:[%s8500 + $0x4b0] sm:$0xff] %v8657
                %v8659 = vld [vmem:[%s8499 + $0x278] sm:$0xff]
                %8660 = vst [vmem:[%s8500 + $0x4b8] sm:$0xff] %v8659
                %v8661 = vld [vmem:[%s8499 + $0x280] sm:$0xff]
                %8662 = vst [vmem:[%s8500 + $0x4c0] sm:$0xff] %v8661
                %v8663 = vld [vmem:[%s8499 + $0x288] sm:$0xff]
                %8664 = vst [vmem:[%s8500 + $0x4c8] sm:$0xff] %v8663
                %v8665 = vld [vmem:[%s8499 + $0x290] sm:$0xff]
                %8666 = vst [vmem:[%s8500 + $0x4d0] sm:$0xff] %v8665
                %v8667 = vld [vmem:[%s8499 + $0x298] sm:$0xff]
                %8668 = vst [vmem:[%s8500 + $0x4d8] sm:$0xff] %v8667
                %v8669 = vld [vmem:[%s8499 + $0x2a0] sm:$0xff]
                %8670 = vst [vmem:[%s8500 + $0x540] sm:$0xff] %v8669
                %v8671 = vld [vmem:[%s8499 + $0x2a8] sm:$0xff]
                %8672 = vst [vmem:[%s8500 + $0x548] sm:$0xff] %v8671
                %v8673 = vld [vmem:[%s8499 + $0x2b0] sm:$0xff]
                %8674 = vst [vmem:[%s8500 + $0x550] sm:$0xff] %v8673
                %v8675 = vld [vmem:[%s8499 + $0x2b8] sm:$0xff]
                %8676 = vst [vmem:[%s8500 + $0x558] sm:$0xff] %v8675
                %v8677 = vld [vmem:[%s8499 + $0x2c0] sm:$0xff]
                %8678 = vst [vmem:[%s8500 + $0x560] sm:$0xff] %v8677
                %v8679 = vld [vmem:[%s8499 + $0x2c8] sm:$0xff]
                %8680 = vst [vmem:[%s8500 + $0x568] sm:$0xff] %v8679
                %v8681 = vld [vmem:[%s8499 + $0x2d0] sm:$0xff]
                %8682 = vst [vmem:[%s8500 + $0x570] sm:$0xff] %v8681
                %v8683 = vld [vmem:[%s8499 + $0x2d8] sm:$0xff]
                %8684 = vst [vmem:[%s8500 + $0x578] sm:$0xff] %v8683
                %v8685 = vld [vmem:[%s8499 + $0x2e0] sm:$0xff]
                %8686 = vst [vmem:[%s8500 + $0x580] sm:$0xff] %v8685
                %v8687 = vld [vmem:[%s8499 + $0x2e8] sm:$0xff]
                %8688 = vst [vmem:[%s8500 + $0x588] sm:$0xff] %v8687
                %v8689 = vld [vmem:[%s8499 + $0x2f0] sm:$0xff]
                %8690 = vst [vmem:[%s8500 + $0x590] sm:$0xff] %v8689
                %v8691 = vld [vmem:[%s8499 + $0x2f8] sm:$0xff]
                %8692 = vst [vmem:[%s8500 + $0x598] sm:$0xff] %v8691
              $region77: #{model_forward.1} parent=71 // loop_footer
                %s8498 = sadd.s32 1, %s8494
              $region78: #{model_forward.1} parent=71 // loop_footer_branch
                %8493 = sbr.rel target = $region74
              $region79: #{model_forward.1} parent=71 // loop_exit
                _
            $region72: #{model_forward.1} parent=67 // pred_fallthru
              _
            // Predicated region
            $region80: #{model_forward.1} parent=67 // pred_check
              _
            $region81: #{model_forward.1} parent=67 // pred_check_branch
              %8694 = sbr.rel target = $region83
            $region82: #{model_forward.1} parent=67 // pred_region
              _
            $region83: #{model_forward.1} parent=67 // pred_fallthru
              _
          $region68: #{model_forward.1} parent=63 // pred_fallthru
            _
          %8695 = vnop
        $region64: #{model_forward.1} parent=43 // pred_fallthru
          _
      $region44: #{model_forward.1} parent=5 // pred_fallthru
        _
      %p8696 = scmp.le.s32.totalorder 2, %s17
      // Predicated region
      $region84: #{model_forward.1} parent=5 // pred_check
        %p8697 = pneg %p8696
      $region85: #{model_forward.1} parent=5 // pred_check_branch
        %8699 = sbr.rel (%p8697) target = $region87
      $region86: #{model_forward.1} parent=5 // pred_region
        %s8700 = ssub.s32 %s17, 2
        // Predicated region
        $region88: #{model_forward.1} parent=86 // pred_check
          %p8701 = pneg %p177
        $region89: #{model_forward.1} parent=86 // pred_check_branch
          %8703 = sbr.rel (%p8701) target = $region91
        $region90: #{model_forward.1} parent=86 // pred_region
          %s8704 = sand.u32 %s162, 1
          %s8705 = sand.u32 %s162, 1
          %s8706 = smul.addr %s8705, 768
          %s8707 = scalar_lea.vmem [#allocation9], %s8706
        $region91: #{model_forward.1} parent=86 // pred_fallthru
          _
      $region87: #{model_forward.1} parent=5 // pred_fallthru
        _
    $region6: #{model_forward.1} parent=1 // loop_footer
      %s21 = sadd.s32 1, %s17
    $region7: #{model_forward.1} parent=1 // loop_footer_branch
      %16 = sbr.rel target = $region3
    $region8: #{model_forward.1} parent=1 // loop_exit
      _
    %8708 = vsyncpa [#allocation3], 1
    %s8709 = scalar_lea.sflag [#allocation3], 1
    %8710 = vsyncpa %s8709, 1
    %8711 = vsyncpa [#allocation5], 1
    %8712 = vsyncpa [#allocation8], 1
    %s8713 = scalar_lea.sflag [#allocation8], 1
    %8714 = vsyncpa %s8713, 1

</llo_original>
